<compile_context>
chip_gen: v6e
topology: v6e:2x2x1
jax: 0.10.0
libtpu: 0.0.40
codegen_flags: <defaults>
</compile_context>

<pallas_src>
import jax
import jax.numpy as jnp
from jax import lax
from jax.experimental import pallas as pl
from jax.experimental.pallas import tpu as pltpu

# Small shapes consistent with the module (num_routes shrunk from 32*6*6=1152
# to 128; both are multiples of 128, so the lane layout is identical).
BATCH = 4          # small demo batch; even, so we keep 2 parallel grid steps
NUM_ROUTES = 128   # num_capsules_in  (lane axis)
IN_CH = 8          # input capsule dim
NUM_CAPS = 10      # num_capsules_out
OUT_CH = 16        # output capsule dim
ROUTING_ITERS = 3


def routing_kernel(x_ref, w_ref, bias_ref, out_ref):
    # Layouts (all float32, Bt batch elements per grid step):
    #   x_ref    : [Bt, IN_CH, NUM_ROUTES]                 x_t[b, c, i] = x[b, i, c]
    #   w_ref    : [IN_CH, NUM_CAPS, OUT_CH, NUM_ROUTES]   w_k[c, j, o, i] = W[0, i, j, o, c]
    #   bias_ref : [NUM_CAPS, OUT_CH]
    #   out_ref  : [Bt, NUM_CAPS, OUT_CH]                  v_j[b, j, o]
    # NUM_ROUTES (multiple of 128) sits on the lane axis; OUT_CH / NUM_CAPS on
    # the sublane axis, so every reduction is a plain lane/sublane reduction.
    bt = x_ref.shape[0]

    # Hoisted once per grid step (grid/batch invariant).
    bias_row = bias_ref[...]                 # [NUM_CAPS, OUT_CH]     (OUT_CH on lanes)
    bias_col = bias_row[:, :, None]          # [NUM_CAPS, OUT_CH, 1]  (OUT_CH on sublanes)

    def softmax_j(logits):
        # softmax over the output-capsule axis j (axis 0 in this layout)
        m = jnp.max(logits, axis=0, keepdims=True)
        e = jnp.exp(logits - m)
        return e / jnp.sum(e, axis=0, keepdims=True)

    def one_batch(b, carry):
        x_b = x_ref[b]                       # [IN_CH, NUM_ROUTES] -- one vreg
        # Hoist the row broadcasts out of the accumulation loop (JAX does not
        # CSE broadcast_in_dim): each unrolled step below is then a pure
        # multiply-add of one replicated row against the 20 W vregs.
        x_rows = x_b[:, None, :]             # [IN_CH, 1, NUM_ROUTES]

        # u_hat[j, o, i] = sum_c W[0, i, j, o, c] * x[b, i, c]
        u_hat = x_rows[0] * w_ref[0]         # [NUM_CAPS, OUT_CH, NUM_ROUTES]
        for c in range(1, IN_CH):
            u_hat = u_hat + x_rows[c] * w_ref[c]

        b_ij = jnp.zeros((NUM_CAPS, NUM_ROUTES), jnp.float32)

        # All but the last routing iteration: stay in the (j, o, routes)
        # orientation of u_hat (no per-iteration relayout of v_j).
        for _ in range(ROUTING_ITERS - 1):
            c_ij = softmax_j(b_ij)                                         # [NUM_CAPS, NUM_ROUTES]
            s_j = jnp.sum(c_ij[:, None, :] * u_hat, axis=2,
                          keepdims=True) + bias_col                        # [NUM_CAPS, OUT_CH, 1]
            nsq = jnp.sum(s_j * s_j, axis=1, keepdims=True)                # [NUM_CAPS, 1, 1]
            v_j = s_j * nsq / ((1.0 + nsq) * jnp.sqrt(nsq))                # squash over o
            # delta[j, i] = sum_o u_hat[j, o, i] * v_j[j, o]
            b_ij = b_ij + jnp.sum(u_hat * v_j, axis=1)                     # [NUM_CAPS, NUM_ROUTES]

        # Final iteration: v_j is only needed for the output, so produce it
        # directly in the (j, o)-on-lanes layout used by the store.
        c_ij = softmax_j(b_ij)
        s_j = jnp.sum(c_ij[:, None, :] * u_hat, axis=2) + bias_row         # [NUM_CAPS, OUT_CH]
        nsq = jnp.sum(s_j * s_j, axis=1, keepdims=True)                    # [NUM_CAPS, 1]
        v_out = s_j * nsq / ((1.0 + nsq) * jnp.sqrt(nsq))                  # [NUM_CAPS, OUT_CH]

        out_ref[b] = v_out
        return carry

    lax.fori_loop(0, bt, one_batch, 0, unroll=True)


def prepare_params(W, bias):
    """One-time parameter relayout -- hoisted out of the forward path.

    W    : [1, NUM_ROUTES, NUM_CAPS, OUT_CH, IN_CH]  (torch layout)
    bias : [1, 1, NUM_CAPS, OUT_CH]
    """
    w_k = jnp.transpose(W[0].astype(jnp.float32), (3, 1, 2, 0))   # [IN_CH, NUM_CAPS, OUT_CH, NUM_ROUTES]
    bias_k = bias.reshape(NUM_CAPS, OUT_CH).astype(jnp.float32)
    return w_k, bias_k


def _param_spec(block_shape, index_map, single_buffer):
    # Grid-invariant parameter: single-buffer it (double-buffering a block
    # whose index_map never changes only doubles its VMEM footprint).
    if single_buffer:
        try:
            return pl.BlockSpec(block_shape, index_map, pipeline_mode=pl.Buffered(1))
        except Exception:
            pass  # pipeline_mode / Buffered(1) not supported here
    return pl.BlockSpec(block_shape, index_map)


def _build_forward(B, Bt, single_buffer):
    return pl.pallas_call(
        routing_kernel,
        out_shape=jax.ShapeDtypeStruct((B, NUM_CAPS, OUT_CH), jnp.float32),
        grid=(B // Bt,),
        in_specs=[
            pl.BlockSpec((Bt, IN_CH, NUM_ROUTES), lambda g: (g, 0, 0)),
            _param_spec((IN_CH, NUM_CAPS, OUT_CH, NUM_ROUTES),
                        lambda g: (0, 0, 0, 0), single_buffer),
            _param_spec((NUM_CAPS, OUT_CH), lambda g: (0, 0), single_buffer),
        ],
        out_specs=pl.BlockSpec((Bt, NUM_CAPS, OUT_CH), lambda g: (g, 0, 0)),
        compiler_params=pltpu.CompilerParams(
            dimension_semantics=("parallel",),      # batch steps shard across v7x's 2 TCs
            vmem_limit_bytes=32 * 1024 * 1024,      # explicit; safe on v5e/v6e/v7x, >> actual use (~2 MB)
        ),
    )


def class_capsules_forward(x, w_k, bias_k, *, batch_tile=None):
    """ClassCapsules.forward with pre-relayouted parameters (see prepare_params).

    x : [B, NUM_ROUTES, IN_CH]
    returns [B, NUM_CAPS, OUT_CH, 1]   (matches torch forward for B > 1; torch's
    .squeeze() would additionally drop a batch dim of 1)
    """
    B = x.shape[0]
    if batch_tile is None:
        # Keep >= 2 "parallel" grid steps when possible so both v7x TensorCores
        # get work; 2 steps of ~0.35 us overhead are negligible on 1-TC v5e/v6e.
        batch_tile = B // 2 if (B >= 2 and B % 2 == 0) else 1
    assert B % batch_tile == 0, "batch must be divisible by batch_tile"

    # Layout plumbing only: put NUM_ROUTES on the 128-lane axis.
    x_t = jnp.transpose(x.astype(jnp.float32), (0, 2, 1))            # [B, IN_CH, NUM_ROUTES]

    try:
        out = _build_forward(B, batch_tile, single_buffer=True)(x_t, w_k, bias_k)
    except Exception:
        # Single-buffering of the grid-invariant params was rejected by this
        # JAX/Mosaic version: fall back to default double-buffering
        # (costs ~640 KB extra VMEM at these shapes, nothing else).
        out = _build_forward(B, batch_tile, single_buffer=False)(x_t, w_k, bias_k)
    return out[..., None]


def reference_forward(x, W, bias):
    """Pure-JAX mirror of the PyTorch routing_algorithm / ClassCapsules.forward."""
    u_hat = jnp.einsum("ijoc,bic->bijo", W[0], x)                     # [B, N_in, J, O]
    b_ij = jnp.zeros((x.shape[0], NUM_ROUTES, NUM_CAPS, 1), jnp.float32)
    v_j = None
    for it in range(ROUTING_ITERS):
        c_ij = jax.nn.softmax(b_ij, axis=2)
        s_j = jnp.sum(c_ij * u_hat, axis=1, keepdims=True) + bias     # [B, 1, J, O]
        nsq = jnp.sum(s_j * s_j, axis=-1, keepdims=True)
        v_j = s_j * nsq / ((1.0 + nsq) * jnp.sqrt(nsq))
        if it < ROUTING_ITERS - 1:
            b_ij = b_ij + jnp.sum(u_hat * v_j, axis=-1, keepdims=True)
    return jnp.squeeze(v_j, axis=1)[..., None]                        # [B, J, O, 1]


if __name__ == "__main__":
    key = jax.random.PRNGKey(0)
    kx, kw, kb = jax.random.split(key, 3)
    # Input capsules (output of a previous capsule/conv layer).
    x = jax.random.normal(kx, (BATCH, NUM_ROUTES, IN_CH), jnp.float32)
    # Parameters: torch.rand -> uniform [0, 1), deterministic here.
    W = jax.random.uniform(kw, (1, NUM_ROUTES, NUM_CAPS, OUT_CH, IN_CH), jnp.float32)
    bias = jax.random.uniform(kb, (1, 1, NUM_CAPS, OUT_CH), jnp.float32)

    # One-time parameter relayout (init-time, NOT per forward call).
    w_k, bias_k = prepare_params(W, bias)

    out = class_capsules_forward(x, w_k, bias_k)
    jax.block_until_ready(out)

    ref = reference_forward(x, W, bias)
    assert out.shape == (BATCH, NUM_CAPS, OUT_CH, 1), out.shape
    err = float(jnp.max(jnp.abs(out - ref)))
    assert jnp.allclose(out, ref, rtol=1e-3, atol=1e-4), err
    print("KERNEL_OK")
</pallas_src>

<mosaic_0001>
module attributes {stable_mosaic.version = 11 : i64} {
  func.func @routing_kernel(%arg0: i32, %arg1: memref<2x8x128xf32, #tpu.memory_space<vmem>>, %arg2: memref<8x10x16x128xf32, #tpu.memory_space<vmem>>, %arg3: memref<10x16xf32, #tpu.memory_space<vmem>>, %arg4: memref<2x10x16xf32, #tpu.memory_space<vmem>>) attributes {dimension_semantics = [#tpu.dimension_semantics<parallel>], iteration_bounds = array<i64: 2>, scalar_prefetch = 0 : i64, scratch_operands = 0 : i64, tpu.core_type = #tpu.core_type<tc>, window_params = [{transform_indices = @transform_0, window_bounds = array<i64: 2, 8, 128>}, {pipeline_mode = #tpu.pipeline_mode<synchronous>, transform_indices = @transform_1, window_bounds = array<i64: 8, 10, 16, 128>}, {pipeline_mode = #tpu.pipeline_mode<synchronous>, transform_indices = @transform_2, window_bounds = array<i64: 10, 16>}, {transform_indices = @transform_3, window_bounds = array<i64: 2, 10, 16>}]} {
    %c0 = arith.constant 0 : index
    %c0_0 = arith.constant 0 : index
    %0 = vector.load %arg3[%c0, %c0_0] : memref<10x16xf32, #tpu.memory_space<vmem>>, vector<10x16xf32>
    %1 = vector.shape_cast %0 : vector<10x16xf32> to vector<10x16x1xf32>
    %c0_i32 = arith.constant 0 : i32
    %2 = arith.index_cast %c0_i32 : i32 to index
    %c0_1 = arith.constant 0 : index
    %c0_2 = arith.constant 0 : index
    %3 = vector.load %arg1[%2, %c0_1, %c0_2] : memref<2x8x128xf32, #tpu.memory_space<vmem>>, vector<1x8x128xf32>
    %4 = vector.shape_cast %3 : vector<1x8x128xf32> to vector<8x128xf32>
    %5 = vector.shape_cast %4 : vector<8x128xf32> to vector<8x1x128xf32>
    %6 = vector.extract_strided_slice %5 {offsets = [0, 0, 0], sizes = [1, 1, 128], strides = [1, 1, 1]} : vector<8x1x128xf32> to vector<1x1x128xf32>
    %7 = vector.shape_cast %6 : vector<1x1x128xf32> to vector<1x128xf32>
    %c0_3 = arith.constant 0 : index
    %c0_4 = arith.constant 0 : index
    %c0_5 = arith.constant 0 : index
    %c0_6 = arith.constant 0 : index
    %8 = vector.load %arg2[%c0_3, %c0_4, %c0_5, %c0_6] : memref<8x10x16x128xf32, #tpu.memory_space<vmem>>, vector<1x10x16x128xf32>
    %9 = vector.shape_cast %8 : vector<1x10x16x128xf32> to vector<10x16x128xf32>
    %10 = vector.shape_cast %7 : vector<1x128xf32> to vector<1x1x128xf32>
    %11 = vector.broadcast %10 : vector<1x1x128xf32> to vector<10x16x128xf32>
    %12 = arith.mulf %11, %9 : vector<10x16x128xf32>
    %13 = vector.extract_strided_slice %5 {offsets = [1, 0, 0], sizes = [1, 1, 128], strides = [1, 1, 1]} : vector<8x1x128xf32> to vector<1x1x128xf32>
    %14 = vector.shape_cast %13 : vector<1x1x128xf32> to vector<1x128xf32>
    %c1 = arith.constant 1 : index
    %c0_7 = arith.constant 0 : index
    %c0_8 = arith.constant 0 : index
    %c0_9 = arith.constant 0 : index
    %15 = vector.load %arg2[%c1, %c0_7, %c0_8, %c0_9] : memref<8x10x16x128xf32, #tpu.memory_space<vmem>>, vector<1x10x16x128xf32>
    %16 = vector.shape_cast %15 : vector<1x10x16x128xf32> to vector<10x16x128xf32>
    %17 = vector.shape_cast %14 : vector<1x128xf32> to vector<1x1x128xf32>
    %18 = vector.broadcast %17 : vector<1x1x128xf32> to vector<10x16x128xf32>
    %19 = arith.mulf %18, %16 : vector<10x16x128xf32>
    %20 = arith.addf %12, %19 : vector<10x16x128xf32>
    %21 = vector.extract_strided_slice %5 {offsets = [2, 0, 0], sizes = [1, 1, 128], strides = [1, 1, 1]} : vector<8x1x128xf32> to vector<1x1x128xf32>
    %22 = vector.shape_cast %21 : vector<1x1x128xf32> to vector<1x128xf32>
    %c2 = arith.constant 2 : index
    %c0_10 = arith.constant 0 : index
    %c0_11 = arith.constant 0 : index
    %c0_12 = arith.constant 0 : index
    %23 = vector.load %arg2[%c2, %c0_10, %c0_11, %c0_12] : memref<8x10x16x128xf32, #tpu.memory_space<vmem>>, vector<1x10x16x128xf32>
    %24 = vector.shape_cast %23 : vector<1x10x16x128xf32> to vector<10x16x128xf32>
    %25 = vector.shape_cast %22 : vector<1x128xf32> to vector<1x1x128xf32>
    %26 = vector.broadcast %25 : vector<1x1x128xf32> to vector<10x16x128xf32>
    %27 = arith.mulf %26, %24 : vector<10x16x128xf32>
    %28 = arith.addf %20, %27 : vector<10x16x128xf32>
    %29 = vector.extract_strided_slice %5 {offsets = [3, 0, 0], sizes = [1, 1, 128], strides = [1, 1, 1]} : vector<8x1x128xf32> to vector<1x1x128xf32>
    %30 = vector.shape_cast %29 : vector<1x1x128xf32> to vector<1x128xf32>
    %c3 = arith.constant 3 : index
    %c0_13 = arith.constant 0 : index
    %c0_14 = arith.constant 0 : index
    %c0_15 = arith.constant 0 : index
    %31 = vector.load %arg2[%c3, %c0_13, %c0_14, %c0_15] : memref<8x10x16x128xf32, #tpu.memory_space<vmem>>, vector<1x10x16x128xf32>
    %32 = vector.shape_cast %31 : vector<1x10x16x128xf32> to vector<10x16x128xf32>
    %33 = vector.shape_cast %30 : vector<1x128xf32> to vector<1x1x128xf32>
    %34 = vector.broadcast %33 : vector<1x1x128xf32> to vector<10x16x128xf32>
    %35 = arith.mulf %34, %32 : vector<10x16x128xf32>
    %36 = arith.addf %28, %35 : vector<10x16x128xf32>
    %37 = vector.extract_strided_slice %5 {offsets = [4, 0, 0], sizes = [1, 1, 128], strides = [1, 1, 1]} : vector<8x1x128xf32> to vector<1x1x128xf32>
    %38 = vector.shape_cast %37 : vector<1x1x128xf32> to vector<1x128xf32>
    %c4 = arith.constant 4 : index
    %c0_16 = arith.constant 0 : index
    %c0_17 = arith.constant 0 : index
    %c0_18 = arith.constant 0 : index
    %39 = vector.load %arg2[%c4, %c0_16, %c0_17, %c0_18] : memref<8x10x16x128xf32, #tpu.memory_space<vmem>>, vector<1x10x16x128xf32>
    %40 = vector.shape_cast %39 : vector<1x10x16x128xf32> to vector<10x16x128xf32>
    %41 = vector.shape_cast %38 : vector<1x128xf32> to vector<1x1x128xf32>
    %42 = vector.broadcast %41 : vector<1x1x128xf32> to vector<10x16x128xf32>
    %43 = arith.mulf %42, %40 : vector<10x16x128xf32>
    %44 = arith.addf %36, %43 : vector<10x16x128xf32>
    %45 = vector.extract_strided_slice %5 {offsets = [5, 0, 0], sizes = [1, 1, 128], strides = [1, 1, 1]} : vector<8x1x128xf32> to vector<1x1x128xf32>
    %46 = vector.shape_cast %45 : vector<1x1x128xf32> to vector<1x128xf32>
    %c5 = arith.constant 5 : index
    %c0_19 = arith.constant 0 : index
    %c0_20 = arith.constant 0 : index
    %c0_21 = arith.constant 0 : index
    %47 = vector.load %arg2[%c5, %c0_19, %c0_20, %c0_21] : memref<8x10x16x128xf32, #tpu.memory_space<vmem>>, vector<1x10x16x128xf32>
    %48 = vector.shape_cast %47 : vector<1x10x16x128xf32> to vector<10x16x128xf32>
    %49 = vector.shape_cast %46 : vector<1x128xf32> to vector<1x1x128xf32>
    %50 = vector.broadcast %49 : vector<1x1x128xf32> to vector<10x16x128xf32>
    %51 = arith.mulf %50, %48 : vector<10x16x128xf32>
    %52 = arith.addf %44, %51 : vector<10x16x128xf32>
    %53 = vector.extract_strided_slice %5 {offsets = [6, 0, 0], sizes = [1, 1, 128], strides = [1, 1, 1]} : vector<8x1x128xf32> to vector<1x1x128xf32>
    %54 = vector.shape_cast %53 : vector<1x1x128xf32> to vector<1x128xf32>
    %c6 = arith.constant 6 : index
    %c0_22 = arith.constant 0 : index
    %c0_23 = arith.constant 0 : index
    %c0_24 = arith.constant 0 : index
    %55 = vector.load %arg2[%c6, %c0_22, %c0_23, %c0_24] : memref<8x10x16x128xf32, #tpu.memory_space<vmem>>, vector<1x10x16x128xf32>
    %56 = vector.shape_cast %55 : vector<1x10x16x128xf32> to vector<10x16x128xf32>
    %57 = vector.shape_cast %54 : vector<1x128xf32> to vector<1x1x128xf32>
    %58 = vector.broadcast %57 : vector<1x1x128xf32> to vector<10x16x128xf32>
    %59 = arith.mulf %58, %56 : vector<10x16x128xf32>
    %60 = arith.addf %52, %59 : vector<10x16x128xf32>
    %61 = vector.extract_strided_slice %5 {offsets = [7, 0, 0], sizes = [1, 1, 128], strides = [1, 1, 1]} : vector<8x1x128xf32> to vector<1x1x128xf32>
    %62 = vector.shape_cast %61 : vector<1x1x128xf32> to vector<1x128xf32>
    %c7 = arith.constant 7 : index
    %c0_25 = arith.constant 0 : index
    %c0_26 = arith.constant 0 : index
    %c0_27 = arith.constant 0 : index
    %63 = vector.load %arg2[%c7, %c0_25, %c0_26, %c0_27] : memref<8x10x16x128xf32, #tpu.memory_space<vmem>>, vector<1x10x16x128xf32>
    %64 = vector.shape_cast %63 : vector<1x10x16x128xf32> to vector<10x16x128xf32>
    %65 = vector.shape_cast %62 : vector<1x128xf32> to vector<1x1x128xf32>
    %66 = vector.broadcast %65 : vector<1x1x128xf32> to vector<10x16x128xf32>
    %67 = arith.mulf %66, %64 : vector<10x16x128xf32>
    %68 = arith.addf %60, %67 : vector<10x16x128xf32>
    %cst = arith.constant 0.000000e+00 : f32
    %69 = vector.broadcast %cst : f32 to vector<10x128xf32>
    %cst_28 = arith.constant dense<0xFF800000> : vector<128xf32>
    %70 = vector.multi_reduction <maximumf>, %69, %cst_28 [0] : vector<10x128xf32> to vector<128xf32>
    %71 = vector.shape_cast %70 : vector<128xf32> to vector<1x128xf32>
    %72 = vector.broadcast %71 : vector<1x128xf32> to vector<10x128xf32>
    %73 = arith.subf %69, %72 : vector<10x128xf32>
    %74 = math.exp %73 : vector<10x128xf32>
    %cst_29 = arith.constant dense<0.000000e+00> : vector<128xf32>
    %75 = vector.multi_reduction <add>, %74, %cst_29 [0] : vector<10x128xf32> to vector<128xf32>
    %76 = vector.shape_cast %75 : vector<128xf32> to vector<1x128xf32>
    %77 = vector.broadcast %76 : vector<1x128xf32> to vector<10x128xf32>
    %78 = arith.divf %74, %77 : vector<10x128xf32>
    %79 = vector.shape_cast %78 : vector<10x128xf32> to vector<10x1x128xf32>
    %80 = vector.broadcast %79 : vector<10x1x128xf32> to vector<10x16x128xf32>
    %81 = arith.mulf %80, %68 : vector<10x16x128xf32>
    %cst_30 = arith.constant dense<0.000000e+00> : vector<10x16xf32>
    %82 = vector.multi_reduction <add>, %81, %cst_30 [2] : vector<10x16x128xf32> to vector<10x16xf32>
    %83 = vector.shape_cast %82 : vector<10x16xf32> to vector<10x16x1xf32>
    %84 = arith.addf %83, %1 : vector<10x16x1xf32>
    %85 = arith.mulf %84, %84 : vector<10x16x1xf32>
    %cst_31 = arith.constant dense<0.000000e+00> : vector<10x1xf32>
    %86 = vector.multi_reduction <add>, %85, %cst_31 [1] : vector<10x16x1xf32> to vector<10x1xf32>
    %87 = vector.shape_cast %86 : vector<10x1xf32> to vector<10x1x1xf32>
    %88 = vector.broadcast %87 : vector<10x1x1xf32> to vector<10x16x1xf32>
    %89 = arith.mulf %84, %88 : vector<10x16x1xf32>
    %cst_32 = arith.constant 1.000000e+00 : f32
    %90 = vector.broadcast %cst_32 : f32 to vector<10x1x1xf32>
    %91 = arith.addf %90, %87 : vector<10x1x1xf32>
    %92 = math.sqrt %87 : vector<10x1x1xf32>
    %93 = arith.mulf %91, %92 : vector<10x1x1xf32>
    %94 = vector.broadcast %93 : vector<10x1x1xf32> to vector<10x16x1xf32>
    %95 = arith.divf %89, %94 : vector<10x16x1xf32>
    %96 = vector.broadcast %95 : vector<10x16x1xf32> to vector<10x16x128xf32>
    %97 = arith.mulf %68, %96 : vector<10x16x128xf32>
    %cst_33 = arith.constant dense<0.000000e+00> : vector<10x128xf32>
    %98 = vector.multi_reduction <add>, %97, %cst_33 [1] : vector<10x16x128xf32> to vector<10x128xf32>
    %99 = arith.addf %69, %98 : vector<10x128xf32>
    %cst_34 = arith.constant dense<0xFF800000> : vector<128xf32>
    %100 = vector.multi_reduction <maximumf>, %99, %cst_34 [0] : vector<10x128xf32> to vector<128xf32>
    %101 = vector.shape_cast %100 : vector<128xf32> to vector<1x128xf32>
    %102 = vector.broadcast %101 : vector<1x128xf32> to vector<10x128xf32>
    %103 = arith.subf %99, %102 : vector<10x128xf32>
    %104 = math.exp %103 : vector<10x128xf32>
    %cst_35 = arith.constant dense<0.000000e+00> : vector<128xf32>
    %105 = vector.multi_reduction <add>, %104, %cst_35 [0] : vector<10x128xf32> to vector<128xf32>
    %106 = vector.shape_cast %105 : vector<128xf32> to vector<1x128xf32>
    %107 = vector.broadcast %106 : vector<1x128xf32> to vector<10x128xf32>
    %108 = arith.divf %104, %107 : vector<10x128xf32>
    %109 = vector.shape_cast %108 : vector<10x128xf32> to vector<10x1x128xf32>
    %110 = vector.broadcast %109 : vector<10x1x128xf32> to vector<10x16x128xf32>
    %111 = arith.mulf %110, %68 : vector<10x16x128xf32>
    %cst_36 = arith.constant dense<0.000000e+00> : vector<10x16xf32>
    %112 = vector.multi_reduction <add>, %111, %cst_36 [2] : vector<10x16x128xf32> to vector<10x16xf32>
    %113 = vector.shape_cast %112 : vector<10x16xf32> to vector<10x16x1xf32>
    %114 = arith.addf %113, %1 : vector<10x16x1xf32>
    %115 = arith.mulf %114, %114 : vector<10x16x1xf32>
    %cst_37 = arith.constant dense<0.000000e+00> : vector<10x1xf32>
    %116 = vector.multi_reduction <add>, %115, %cst_37 [1] : vector<10x16x1xf32> to vector<10x1xf32>
    %117 = vector.shape_cast %116 : vector<10x1xf32> to vector<10x1x1xf32>
    %118 = vector.broadcast %117 : vector<10x1x1xf32> to vector<10x16x1xf32>
    %119 = arith.mulf %114, %118 : vector<10x16x1xf32>
    %cst_38 = arith.constant 1.000000e+00 : f32
    %120 = vector.broadcast %cst_38 : f32 to vector<10x1x1xf32>
    %121 = arith.addf %120, %117 : vector<10x1x1xf32>
    %122 = math.sqrt %117 : vector<10x1x1xf32>
    %123 = arith.mulf %121, %122 : vector<10x1x1xf32>
    %124 = vector.broadcast %123 : vector<10x1x1xf32> to vector<10x16x1xf32>
    %125 = arith.divf %119, %124 : vector<10x16x1xf32>
    %126 = vector.broadcast %125 : vector<10x16x1xf32> to vector<10x16x128xf32>
    %127 = arith.mulf %68, %126 : vector<10x16x128xf32>
    %cst_39 = arith.constant dense<0.000000e+00> : vector<10x128xf32>
    %128 = vector.multi_reduction <add>, %127, %cst_39 [1] : vector<10x16x128xf32> to vector<10x128xf32>
    %129 = arith.addf %99, %128 : vector<10x128xf32>
    %cst_40 = arith.constant dense<0xFF800000> : vector<128xf32>
    %130 = vector.multi_reduction <maximumf>, %129, %cst_40 [0] : vector<10x128xf32> to vector<128xf32>
    %131 = vector.shape_cast %130 : vector<128xf32> to vector<1x128xf32>
    %132 = vector.broadcast %131 : vector<1x128xf32> to vector<10x128xf32>
    %133 = arith.subf %129, %132 : vector<10x128xf32>
    %134 = math.exp %133 : vector<10x128xf32>
    %cst_41 = arith.constant dense<0.000000e+00> : vector<128xf32>
    %135 = vector.multi_reduction <add>, %134, %cst_41 [0] : vector<10x128xf32> to vector<128xf32>
    %136 = vector.shape_cast %135 : vector<128xf32> to vector<1x128xf32>
    %137 = vector.broadcast %136 : vector<1x128xf32> to vector<10x128xf32>
    %138 = arith.divf %134, %137 : vector<10x128xf32>
    %139 = vector.shape_cast %138 : vector<10x128xf32> to vector<10x1x128xf32>
    %140 = vector.broadcast %139 : vector<10x1x128xf32> to vector<10x16x128xf32>
    %141 = arith.mulf %140, %68 : vector<10x16x128xf32>
    %cst_42 = arith.constant dense<0.000000e+00> : vector<10x16xf32>
    %142 = vector.multi_reduction <add>, %141, %cst_42 [2] : vector<10x16x128xf32> to vector<10x16xf32>
    %143 = arith.addf %142, %0 : vector<10x16xf32>
    %144 = arith.mulf %143, %143 : vector<10x16xf32>
    %cst_43 = arith.constant dense<0.000000e+00> : vector<10xf32>
    %145 = vector.multi_reduction <add>, %144, %cst_43 [1] : vector<10x16xf32> to vector<10xf32>
    %146 = vector.shape_cast %145 : vector<10xf32> to vector<10x1xf32>
    %147 = vector.broadcast %146 : vector<10x1xf32> to vector<10x16xf32>
    %148 = arith.mulf %143, %147 : vector<10x16xf32>
    %cst_44 = arith.constant 1.000000e+00 : f32
    %149 = vector.broadcast %cst_44 : f32 to vector<10x1xf32>
    %150 = arith.addf %149, %146 : vector<10x1xf32>
    %151 = math.sqrt %146 : vector<10x1xf32>
    %152 = arith.mulf %150, %151 : vector<10x1xf32>
    %153 = vector.broadcast %152 : vector<10x1xf32> to vector<10x16xf32>
    %154 = arith.divf %148, %153 : vector<10x16xf32>
    %155 = arith.index_cast %c0_i32 : i32 to index
    %c0_45 = arith.constant 0 : index
    %c0_46 = arith.constant 0 : index
    %156 = vector.load %arg4[%155, %c0_45, %c0_46] : memref<2x10x16xf32, #tpu.memory_space<vmem>>, vector<1x10x16xf32>
    %157 = vector.shape_cast %156 : vector<1x10x16xf32> to vector<10x16xf32>
    %158 = vector.shape_cast %154 : vector<10x16xf32> to vector<1x10x16xf32>
    tpu.vector_store %arg4[%155, %c0_45, %c0_46], %158 {strides = array<i32>} : memref<2x10x16xf32, #tpu.memory_space<vmem>>, vector<1x10x16xf32>,
    %c1_i32 = arith.constant 1 : i32
    %159 = arith.index_cast %c1_i32 : i32 to index
    %c0_47 = arith.constant 0 : index
    %c0_48 = arith.constant 0 : index
    %160 = vector.load %arg1[%159, %c0_47, %c0_48] : memref<2x8x128xf32, #tpu.memory_space<vmem>>, vector<1x8x128xf32>
    %161 = vector.shape_cast %160 : vector<1x8x128xf32> to vector<8x128xf32>
    %162 = vector.shape_cast %161 : vector<8x128xf32> to vector<8x1x128xf32>
    %163 = vector.extract_strided_slice %162 {offsets = [0, 0, 0], sizes = [1, 1, 128], strides = [1, 1, 1]} : vector<8x1x128xf32> to vector<1x1x128xf32>
    %164 = vector.shape_cast %163 : vector<1x1x128xf32> to vector<1x128xf32>
    %c0_49 = arith.constant 0 : index
    %c0_50 = arith.constant 0 : index
    %c0_51 = arith.constant 0 : index
    %c0_52 = arith.constant 0 : index
    %165 = vector.load %arg2[%c0_49, %c0_50, %c0_51, %c0_52] : memref<8x10x16x128xf32, #tpu.memory_space<vmem>>, vector<1x10x16x128xf32>
    %166 = vector.shape_cast %165 : vector<1x10x16x128xf32> to vector<10x16x128xf32>
    %167 = vector.shape_cast %164 : vector<1x128xf32> to vector<1x1x128xf32>
    %168 = vector.broadcast %167 : vector<1x1x128xf32> to vector<10x16x128xf32>
    %169 = arith.mulf %168, %166 : vector<10x16x128xf32>
    %170 = vector.extract_strided_slice %162 {offsets = [1, 0, 0], sizes = [1, 1, 128], strides = [1, 1, 1]} : vector<8x1x128xf32> to vector<1x1x128xf32>
    %171 = vector.shape_cast %170 : vector<1x1x128xf32> to vector<1x128xf32>
    %c1_53 = arith.constant 1 : index
    %c0_54 = arith.constant 0 : index
    %c0_55 = arith.constant 0 : index
    %c0_56 = arith.constant 0 : index
    %172 = vector.load %arg2[%c1_53, %c0_54, %c0_55, %c0_56] : memref<8x10x16x128xf32, #tpu.memory_space<vmem>>, vector<1x10x16x128xf32>
    %173 = vector.shape_cast %172 : vector<1x10x16x128xf32> to vector<10x16x128xf32>
    %174 = vector.shape_cast %171 : vector<1x128xf32> to vector<1x1x128xf32>
    %175 = vector.broadcast %174 : vector<1x1x128xf32> to vector<10x16x128xf32>
    %176 = arith.mulf %175, %173 : vector<10x16x128xf32>
    %177 = arith.addf %169, %176 : vector<10x16x128xf32>
    %178 = vector.extract_strided_slice %162 {offsets = [2, 0, 0], sizes = [1, 1, 128], strides = [1, 1, 1]} : vector<8x1x128xf32> to vector<1x1x128xf32>
    %179 = vector.shape_cast %178 : vector<1x1x128xf32> to vector<1x128xf32>
    %c2_57 = arith.constant 2 : index
    %c0_58 = arith.constant 0 : index
    %c0_59 = arith.constant 0 : index
    %c0_60 = arith.constant 0 : index
    %180 = vector.load %arg2[%c2_57, %c0_58, %c0_59, %c0_60] : memref<8x10x16x128xf32, #tpu.memory_space<vmem>>, vector<1x10x16x128xf32>
    %181 = vector.shape_cast %180 : vector<1x10x16x128xf32> to vector<10x16x128xf32>
    %182 = vector.shape_cast %179 : vector<1x128xf32> to vector<1x1x128xf32>
    %183 = vector.broadcast %182 : vector<1x1x128xf32> to vector<10x16x128xf32>
    %184 = arith.mulf %183, %181 : vector<10x16x128xf32>
    %185 = arith.addf %177, %184 : vector<10x16x128xf32>
    %186 = vector.extract_strided_slice %162 {offsets = [3, 0, 0], sizes = [1, 1, 128], strides = [1, 1, 1]} : vector<8x1x128xf32> to vector<1x1x128xf32>
    %187 = vector.shape_cast %186 : vector<1x1x128xf32> to vector<1x128xf32>
    %c3_61 = arith.constant 3 : index
    %c0_62 = arith.constant 0 : index
    %c0_63 = arith.constant 0 : index
    %c0_64 = arith.constant 0 : index
    %188 = vector.load %arg2[%c3_61, %c0_62, %c0_63, %c0_64] : memref<8x10x16x128xf32, #tpu.memory_space<vmem>>, vector<1x10x16x128xf32>
    %189 = vector.shape_cast %188 : vector<1x10x16x128xf32> to vector<10x16x128xf32>
    %190 = vector.shape_cast %187 : vector<1x128xf32> to vector<1x1x128xf32>
    %191 = vector.broadcast %190 : vector<1x1x128xf32> to vector<10x16x128xf32>
    %192 = arith.mulf %191, %189 : vector<10x16x128xf32>
    %193 = arith.addf %185, %192 : vector<10x16x128xf32>
    %194 = vector.extract_strided_slice %162 {offsets = [4, 0, 0], sizes = [1, 1, 128], strides = [1, 1, 1]} : vector<8x1x128xf32> to vector<1x1x128xf32>
    %195 = vector.shape_cast %194 : vector<1x1x128xf32> to vector<1x128xf32>
    %c4_65 = arith.constant 4 : index
    %c0_66 = arith.constant 0 : index
    %c0_67 = arith.constant 0 : index
    %c0_68 = arith.constant 0 : index
    %196 = vector.load %arg2[%c4_65, %c0_66, %c0_67, %c0_68] : memref<8x10x16x128xf32, #tpu.memory_space<vmem>>, vector<1x10x16x128xf32>
    %197 = vector.shape_cast %196 : vector<1x10x16x128xf32> to vector<10x16x128xf32>
    %198 = vector.shape_cast %195 : vector<1x128xf32> to vector<1x1x128xf32>
    %199 = vector.broadcast %198 : vector<1x1x128xf32> to vector<10x16x128xf32>
    %200 = arith.mulf %199, %197 : vector<10x16x128xf32>
    %201 = arith.addf %193, %200 : vector<10x16x128xf32>
    %202 = vector.extract_strided_slice %162 {offsets = [5, 0, 0], sizes = [1, 1, 128], strides = [1, 1, 1]} : vector<8x1x128xf32> to vector<1x1x128xf32>
    %203 = vector.shape_cast %202 : vector<1x1x128xf32> to vector<1x128xf32>
    %c5_69 = arith.constant 5 : index
    %c0_70 = arith.constant 0 : index
    %c0_71 = arith.constant 0 : index
    %c0_72 = arith.constant 0 : index
    %204 = vector.load %arg2[%c5_69, %c0_70, %c0_71, %c0_72] : memref<8x10x16x128xf32, #tpu.memory_space<vmem>>, vector<1x10x16x128xf32>
    %205 = vector.shape_cast %204 : vector<1x10x16x128xf32> to vector<10x16x128xf32>
    %206 = vector.shape_cast %203 : vector<1x128xf32> to vector<1x1x128xf32>
    %207 = vector.broadcast %206 : vector<1x1x128xf32> to vector<10x16x128xf32>
    %208 = arith.mulf %207, %205 : vector<10x16x128xf32>
    %209 = arith.addf %201, %208 : vector<10x16x128xf32>
    %210 = vector.extract_strided_slice %162 {offsets = [6, 0, 0], sizes = [1, 1, 128], strides = [1, 1, 1]} : vector<8x1x128xf32> to vector<1x1x128xf32>
    %211 = vector.shape_cast %210 : vector<1x1x128xf32> to vector<1x128xf32>
    %c6_73 = arith.constant 6 : index
    %c0_74 = arith.constant 0 : index
    %c0_75 = arith.constant 0 : index
    %c0_76 = arith.constant 0 : index
    %212 = vector.load %arg2[%c6_73, %c0_74, %c0_75, %c0_76] : memref<8x10x16x128xf32, #tpu.memory_space<vmem>>, vector<1x10x16x128xf32>
    %213 = vector.shape_cast %212 : vector<1x10x16x128xf32> to vector<10x16x128xf32>
    %214 = vector.shape_cast %211 : vector<1x128xf32> to vector<1x1x128xf32>
    %215 = vector.broadcast %214 : vector<1x1x128xf32> to vector<10x16x128xf32>
    %216 = arith.mulf %215, %213 : vector<10x16x128xf32>
    %217 = arith.addf %209, %216 : vector<10x16x128xf32>
    %218 = vector.extract_strided_slice %162 {offsets = [7, 0, 0], sizes = [1, 1, 128], strides = [1, 1, 1]} : vector<8x1x128xf32> to vector<1x1x128xf32>
    %219 = vector.shape_cast %218 : vector<1x1x128xf32> to vector<1x128xf32>
    %c7_77 = arith.constant 7 : index
    %c0_78 = arith.constant 0 : index
    %c0_79 = arith.constant 0 : index
    %c0_80 = arith.constant 0 : index
    %220 = vector.load %arg2[%c7_77, %c0_78, %c0_79, %c0_80] : memref<8x10x16x128xf32, #tpu.memory_space<vmem>>, vector<1x10x16x128xf32>
    %221 = vector.shape_cast %220 : vector<1x10x16x128xf32> to vector<10x16x128xf32>
    %222 = vector.shape_cast %219 : vector<1x128xf32> to vector<1x1x128xf32>
    %223 = vector.broadcast %222 : vector<1x1x128xf32> to vector<10x16x128xf32>
    %224 = arith.mulf %223, %221 : vector<10x16x128xf32>
    %225 = arith.addf %217, %224 : vector<10x16x128xf32>
    %cst_81 = arith.constant 0.000000e+00 : f32
    %226 = vector.broadcast %cst_81 : f32 to vector<10x128xf32>
    %cst_82 = arith.constant dense<0xFF800000> : vector<128xf32>
    %227 = vector.multi_reduction <maximumf>, %226, %cst_82 [0] : vector<10x128xf32> to vector<128xf32>
    %228 = vector.shape_cast %227 : vector<128xf32> to vector<1x128xf32>
    %229 = vector.broadcast %228 : vector<1x128xf32> to vector<10x128xf32>
    %230 = arith.subf %226, %229 : vector<10x128xf32>
    %231 = math.exp %230 : vector<10x128xf32>
    %cst_83 = arith.constant dense<0.000000e+00> : vector<128xf32>
    %232 = vector.multi_reduction <add>, %231, %cst_83 [0] : vector<10x128xf32> to vector<128xf32>
    %233 = vector.shape_cast %232 : vector<128xf32> to vector<1x128xf32>
    %234 = vector.broadcast %233 : vector<1x128xf32> to vector<10x128xf32>
    %235 = arith.divf %231, %234 : vector<10x128xf32>
    %236 = vector.shape_cast %235 : vector<10x128xf32> to vector<10x1x128xf32>
    %237 = vector.broadcast %236 : vector<10x1x128xf32> to vector<10x16x128xf32>
    %238 = arith.mulf %237, %225 : vector<10x16x128xf32>
    %cst_84 = arith.constant dense<0.000000e+00> : vector<10x16xf32>
    %239 = vector.multi_reduction <add>, %238, %cst_84 [2] : vector<10x16x128xf32> to vector<10x16xf32>
    %240 = vector.shape_cast %239 : vector<10x16xf32> to vector<10x16x1xf32>
    %241 = arith.addf %240, %1 : vector<10x16x1xf32>
    %242 = arith.mulf %241, %241 : vector<10x16x1xf32>
    %cst_85 = arith.constant dense<0.000000e+00> : vector<10x1xf32>
    %243 = vector.multi_reduction <add>, %242, %cst_85 [1] : vector<10x16x1xf32> to vector<10x1xf32>
    %244 = vector.shape_cast %243 : vector<10x1xf32> to vector<10x1x1xf32>
    %245 = vector.broadcast %244 : vector<10x1x1xf32> to vector<10x16x1xf32>
    %246 = arith.mulf %241, %245 : vector<10x16x1xf32>
    %cst_86 = arith.constant 1.000000e+00 : f32
    %247 = vector.broadcast %cst_86 : f32 to vector<10x1x1xf32>
    %248 = arith.addf %247, %244 : vector<10x1x1xf32>
    %249 = math.sqrt %244 : vector<10x1x1xf32>
    %250 = arith.mulf %248, %249 : vector<10x1x1xf32>
    %251 = vector.broadcast %250 : vector<10x1x1xf32> to vector<10x16x1xf32>
    %252 = arith.divf %246, %251 : vector<10x16x1xf32>
    %253 = vector.broadcast %252 : vector<10x16x1xf32> to vector<10x16x128xf32>
    %254 = arith.mulf %225, %253 : vector<10x16x128xf32>
    %cst_87 = arith.constant dense<0.000000e+00> : vector<10x128xf32>
    %255 = vector.multi_reduction <add>, %254, %cst_87 [1] : vector<10x16x128xf32> to vector<10x128xf32>
    %256 = arith.addf %226, %255 : vector<10x128xf32>
    %cst_88 = arith.constant dense<0xFF800000> : vector<128xf32>
    %257 = vector.multi_reduction <maximumf>, %256, %cst_88 [0] : vector<10x128xf32> to vector<128xf32>
    %258 = vector.shape_cast %257 : vector<128xf32> to vector<1x128xf32>
    %259 = vector.broadcast %258 : vector<1x128xf32> to vector<10x128xf32>
    %260 = arith.subf %256, %259 : vector<10x128xf32>
    %261 = math.exp %260 : vector<10x128xf32>
    %cst_89 = arith.constant dense<0.000000e+00> : vector<128xf32>
    %262 = vector.multi_reduction <add>, %261, %cst_89 [0] : vector<10x128xf32> to vector<128xf32>
    %263 = vector.shape_cast %262 : vector<128xf32> to vector<1x128xf32>
    %264 = vector.broadcast %263 : vector<1x128xf32> to vector<10x128xf32>
    %265 = arith.divf %261, %264 : vector<10x128xf32>
    %266 = vector.shape_cast %265 : vector<10x128xf32> to vector<10x1x128xf32>
    %267 = vector.broadcast %266 : vector<10x1x128xf32> to vector<10x16x128xf32>
    %268 = arith.mulf %267, %225 : vector<10x16x128xf32>
    %cst_90 = arith.constant dense<0.000000e+00> : vector<10x16xf32>
    %269 = vector.multi_reduction <add>, %268, %cst_90 [2] : vector<10x16x128xf32> to vector<10x16xf32>
    %270 = vector.shape_cast %269 : vector<10x16xf32> to vector<10x16x1xf32>
    %271 = arith.addf %270, %1 : vector<10x16x1xf32>
    %272 = arith.mulf %271, %271 : vector<10x16x1xf32>
    %cst_91 = arith.constant dense<0.000000e+00> : vector<10x1xf32>
    %273 = vector.multi_reduction <add>, %272, %cst_91 [1] : vector<10x16x1xf32> to vector<10x1xf32>
    %274 = vector.shape_cast %273 : vector<10x1xf32> to vector<10x1x1xf32>
    %275 = vector.broadcast %274 : vector<10x1x1xf32> to vector<10x16x1xf32>
    %276 = arith.mulf %271, %275 : vector<10x16x1xf32>
    %cst_92 = arith.constant 1.000000e+00 : f32
    %277 = vector.broadcast %cst_92 : f32 to vector<10x1x1xf32>
    %278 = arith.addf %277, %274 : vector<10x1x1xf32>
    %279 = math.sqrt %274 : vector<10x1x1xf32>
    %280 = arith.mulf %278, %279 : vector<10x1x1xf32>
    %281 = vector.broadcast %280 : vector<10x1x1xf32> to vector<10x16x1xf32>
    %282 = arith.divf %276, %281 : vector<10x16x1xf32>
    %283 = vector.broadcast %282 : vector<10x16x1xf32> to vector<10x16x128xf32>
    %284 = arith.mulf %225, %283 : vector<10x16x128xf32>
    %cst_93 = arith.constant dense<0.000000e+00> : vector<10x128xf32>
    %285 = vector.multi_reduction <add>, %284, %cst_93 [1] : vector<10x16x128xf32> to vector<10x128xf32>
    %286 = arith.addf %256, %285 : vector<10x128xf32>
    %cst_94 = arith.constant dense<0xFF800000> : vector<128xf32>
    %287 = vector.multi_reduction <maximumf>, %286, %cst_94 [0] : vector<10x128xf32> to vector<128xf32>
    %288 = vector.shape_cast %287 : vector<128xf32> to vector<1x128xf32>
    %289 = vector.broadcast %288 : vector<1x128xf32> to vector<10x128xf32>
    %290 = arith.subf %286, %289 : vector<10x128xf32>
    %291 = math.exp %290 : vector<10x128xf32>
    %cst_95 = arith.constant dense<0.000000e+00> : vector<128xf32>
    %292 = vector.multi_reduction <add>, %291, %cst_95 [0] : vector<10x128xf32> to vector<128xf32>
    %293 = vector.shape_cast %292 : vector<128xf32> to vector<1x128xf32>
    %294 = vector.broadcast %293 : vector<1x128xf32> to vector<10x128xf32>
    %295 = arith.divf %291, %294 : vector<10x128xf32>
    %296 = vector.shape_cast %295 : vector<10x128xf32> to vector<10x1x128xf32>
    %297 = vector.broadcast %296 : vector<10x1x128xf32> to vector<10x16x128xf32>
    %298 = arith.mulf %297, %225 : vector<10x16x128xf32>
    %cst_96 = arith.constant dense<0.000000e+00> : vector<10x16xf32>
    %299 = vector.multi_reduction <add>, %298, %cst_96 [2] : vector<10x16x128xf32> to vector<10x16xf32>
    %300 = arith.addf %299, %0 : vector<10x16xf32>
    %301 = arith.mulf %300, %300 : vector<10x16xf32>
    %cst_97 = arith.constant dense<0.000000e+00> : vector<10xf32>
    %302 = vector.multi_reduction <add>, %301, %cst_97 [1] : vector<10x16xf32> to vector<10xf32>
    %303 = vector.shape_cast %302 : vector<10xf32> to vector<10x1xf32>
    %304 = vector.broadcast %303 : vector<10x1xf32> to vector<10x16xf32>
    %305 = arith.mulf %300, %304 : vector<10x16xf32>
    %cst_98 = arith.constant 1.000000e+00 : f32
    %306 = vector.broadcast %cst_98 : f32 to vector<10x1xf32>
    %307 = arith.addf %306, %303 : vector<10x1xf32>
    %308 = math.sqrt %303 : vector<10x1xf32>
    %309 = arith.mulf %307, %308 : vector<10x1xf32>
    %310 = vector.broadcast %309 : vector<10x1xf32> to vector<10x16xf32>
    %311 = arith.divf %305, %310 : vector<10x16xf32>
    %312 = arith.index_cast %c1_i32 : i32 to index
    %c0_99 = arith.constant 0 : index
    %c0_100 = arith.constant 0 : index
    %313 = vector.load %arg4[%312, %c0_99, %c0_100] : memref<2x10x16xf32, #tpu.memory_space<vmem>>, vector<1x10x16xf32>
    %314 = vector.shape_cast %313 : vector<1x10x16xf32> to vector<10x16xf32>
    %315 = vector.shape_cast %311 : vector<10x16xf32> to vector<1x10x16xf32>
    tpu.vector_store %arg4[%312, %c0_99, %c0_100], %315 {strides = array<i32>} : memref<2x10x16xf32, #tpu.memory_space<vmem>>, vector<1x10x16xf32>,
    %c2_i32 = arith.constant 2 : i32
    return
  }
  func.func @transform_0(%arg0: i32) -> (i32, i32, i32) {
    %c0_i32 = arith.constant 0 : i32
    %c0_i32_0 = arith.constant 0 : i32
    %c0_i32_1 = arith.constant 0 : i32
    return %arg0, %c0_i32, %c0_i32_0 : i32, i32, i32
  }
  func.func @transform_1(%arg0: i32) -> (i32, i32, i32, i32) {
    %c0_i32 = arith.constant 0 : i32
    %c0_i32_0 = arith.constant 0 : i32
    %c0_i32_1 = arith.constant 0 : i32
    %c0_i32_2 = arith.constant 0 : i32
    %c0_i32_3 = arith.constant 0 : i32
    return %c0_i32, %c0_i32_0, %c0_i32_1, %c0_i32_2 : i32, i32, i32, i32
  }
  func.func @transform_2(%arg0: i32) -> (i32, i32) {
    %c0_i32 = arith.constant 0 : i32
    %c0_i32_0 = arith.constant 0 : i32
    %c0_i32_1 = arith.constant 0 : i32
    return %c0_i32, %c0_i32_0 : i32, i32
  }
  func.func @transform_3(%arg0: i32) -> (i32, i32, i32) {
    %c0_i32 = arith.constant 0 : i32
    %c0_i32_0 = arith.constant 0 : i32
    %c0_i32_1 = arith.constant 0 : i32
    return %arg0, %c0_i32, %c0_i32_0 : i32, i32, i32
  }
}

module attributes {stable_mosaic.version = 11 : i64} {
  func.func @routing_kernel(%arg0: i32, %arg1: memref<2x8x128xf32, #tpu.memory_space<vmem>>, %arg2: memref<8x10x16x128xf32, #tpu.memory_space<vmem>>, %arg3: memref<10x16xf32, #tpu.memory_space<vmem>>, %arg4: memref<2x10x16xf32, #tpu.memory_space<vmem>>) attributes {dimension_semantics = [#tpu.dimension_semantics<parallel>], iteration_bounds = array<i64: 2>, scalar_prefetch = 0 : i64, scratch_operands = 0 : i64, tpu.core_type = #tpu.core_type<tc>, window_params = [{transform_indices = @transform_0, window_bounds = array<i64: 2, 8, 128>}, {pipeline_mode = #tpu.pipeline_mode<synchronous>, transform_indices = @transform_1, window_bounds = array<i64: 8, 10, 16, 128>}, {pipeline_mode = #tpu.pipeline_mode<synchronous>, transform_indices = @transform_2, window_bounds = array<i64: 10, 16>}, {transform_indices = @transform_3, window_bounds = array<i64: 2, 10, 16>}]} {
    %c0 = arith.constant 0 : index
    %c0_0 = arith.constant 0 : index
    %0 = vector.load %arg3[%c0, %c0_0] : memref<10x16xf32, #tpu.memory_space<vmem>>, vector<10x16xf32>
    %1 = vector.shape_cast %0 : vector<10x16xf32> to vector<10x16x1xf32>
    %c0_i32 = arith.constant 0 : i32
    %2 = arith.index_cast %c0_i32 : i32 to index
    %c0_1 = arith.constant 0 : index
    %c0_2 = arith.constant 0 : index
    %3 = vector.load %arg1[%2, %c0_1, %c0_2] : memref<2x8x128xf32, #tpu.memory_space<vmem>>, vector<1x8x128xf32>
    %4 = vector.shape_cast %3 : vector<1x8x128xf32> to vector<8x128xf32>
    %5 = vector.shape_cast %4 : vector<8x128xf32> to vector<8x1x128xf32>
    %6 = vector.extract_strided_slice %5 {offsets = [0, 0, 0], sizes = [1, 1, 128], strides = [1, 1, 1]} : vector<8x1x128xf32> to vector<1x1x128xf32>
    %7 = vector.shape_cast %6 : vector<1x1x128xf32> to vector<1x128xf32>
    %c0_3 = arith.constant 0 : index
    %c0_4 = arith.constant 0 : index
    %c0_5 = arith.constant 0 : index
    %c0_6 = arith.constant 0 : index
    %8 = vector.load %arg2[%c0_3, %c0_4, %c0_5, %c0_6] : memref<8x10x16x128xf32, #tpu.memory_space<vmem>>, vector<1x10x16x128xf32>
    %9 = vector.shape_cast %8 : vector<1x10x16x128xf32> to vector<10x16x128xf32>
    %10 = vector.shape_cast %7 : vector<1x128xf32> to vector<1x1x128xf32>
    %11 = vector.broadcast %10 : vector<1x1x128xf32> to vector<10x16x128xf32>
    %12 = arith.mulf %11, %9 : vector<10x16x128xf32>
    %13 = vector.extract_strided_slice %5 {offsets = [1, 0, 0], sizes = [1, 1, 128], strides = [1, 1, 1]} : vector<8x1x128xf32> to vector<1x1x128xf32>
    %14 = vector.shape_cast %13 : vector<1x1x128xf32> to vector<1x128xf32>
    %c1 = arith.constant 1 : index
    %c0_7 = arith.constant 0 : index
    %c0_8 = arith.constant 0 : index
    %c0_9 = arith.constant 0 : index
    %15 = vector.load %arg2[%c1, %c0_7, %c0_8, %c0_9] : memref<8x10x16x128xf32, #tpu.memory_space<vmem>>, vector<1x10x16x128xf32>
    %16 = vector.shape_cast %15 : vector<1x10x16x128xf32> to vector<10x16x128xf32>
    %17 = vector.shape_cast %14 : vector<1x128xf32> to vector<1x1x128xf32>
    %18 = vector.broadcast %17 : vector<1x1x128xf32> to vector<10x16x128xf32>
    %19 = arith.mulf %18, %16 : vector<10x16x128xf32>
    %20 = arith.addf %12, %19 : vector<10x16x128xf32>
    %21 = vector.extract_strided_slice %5 {offsets = [2, 0, 0], sizes = [1, 1, 128], strides = [1, 1, 1]} : vector<8x1x128xf32> to vector<1x1x128xf32>
    %22 = vector.shape_cast %21 : vector<1x1x128xf32> to vector<1x128xf32>
    %c2 = arith.constant 2 : index
    %c0_10 = arith.constant 0 : index
    %c0_11 = arith.constant 0 : index
    %c0_12 = arith.constant 0 : index
    %23 = vector.load %arg2[%c2, %c0_10, %c0_11, %c0_12] : memref<8x10x16x128xf32, #tpu.memory_space<vmem>>, vector<1x10x16x128xf32>
    %24 = vector.shape_cast %23 : vector<1x10x16x128xf32> to vector<10x16x128xf32>
    %25 = vector.shape_cast %22 : vector<1x128xf32> to vector<1x1x128xf32>
    %26 = vector.broadcast %25 : vector<1x1x128xf32> to vector<10x16x128xf32>
    %27 = arith.mulf %26, %24 : vector<10x16x128xf32>
    %28 = arith.addf %20, %27 : vector<10x16x128xf32>
    %29 = vector.extract_strided_slice %5 {offsets = [3, 0, 0], sizes = [1, 1, 128], strides = [1, 1, 1]} : vector<8x1x128xf32> to vector<1x1x128xf32>
    %30 = vector.shape_cast %29 : vector<1x1x128xf32> to vector<1x128xf32>
    %c3 = arith.constant 3 : index
    %c0_13 = arith.constant 0 : index
    %c0_14 = arith.constant 0 : index
    %c0_15 = arith.constant 0 : index
    %31 = vector.load %arg2[%c3, %c0_13, %c0_14, %c0_15] : memref<8x10x16x128xf32, #tpu.memory_space<vmem>>, vector<1x10x16x128xf32>
    %32 = vector.shape_cast %31 : vector<1x10x16x128xf32> to vector<10x16x128xf32>
    %33 = vector.shape_cast %30 : vector<1x128xf32> to vector<1x1x128xf32>
    %34 = vector.broadcast %33 : vector<1x1x128xf32> to vector<10x16x128xf32>
    %35 = arith.mulf %34, %32 : vector<10x16x128xf32>
    %36 = arith.addf %28, %35 : vector<10x16x128xf32>
    %37 = vector.extract_strided_slice %5 {offsets = [4, 0, 0], sizes = [1, 1, 128], strides = [1, 1, 1]} : vector<8x1x128xf32> to vector<1x1x128xf32>
    %38 = vector.shape_cast %37 : vector<1x1x128xf32> to vector<1x128xf32>
    %c4 = arith.constant 4 : index
    %c0_16 = arith.constant 0 : index
    %c0_17 = arith.constant 0 : index
    %c0_18 = arith.constant 0 : index
    %39 = vector.load %arg2[%c4, %c0_16, %c0_17, %c0_18] : memref<8x10x16x128xf32, #tpu.memory_space<vmem>>, vector<1x10x16x128xf32>
    %40 = vector.shape_cast %39 : vector<1x10x16x128xf32> to vector<10x16x128xf32>
    %41 = vector.shape_cast %38 : vector<1x128xf32> to vector<1x1x128xf32>
    %42 = vector.broadcast %41 : vector<1x1x128xf32> to vector<10x16x128xf32>
    %43 = arith.mulf %42, %40 : vector<10x16x128xf32>
    %44 = arith.addf %36, %43 : vector<10x16x128xf32>
    %45 = vector.extract_strided_slice %5 {offsets = [5, 0, 0], sizes = [1, 1, 128], strides = [1, 1, 1]} : vector<8x1x128xf32> to vector<1x1x128xf32>
    %46 = vector.shape_cast %45 : vector<1x1x128xf32> to vector<1x128xf32>
    %c5 = arith.constant 5 : index
    %c0_19 = arith.constant 0 : index
    %c0_20 = arith.constant 0 : index
    %c0_21 = arith.constant 0 : index
    %47 = vector.load %arg2[%c5, %c0_19, %c0_20, %c0_21] : memref<8x10x16x128xf32, #tpu.memory_space<vmem>>, vector<1x10x16x128xf32>
    %48 = vector.shape_cast %47 : vector<1x10x16x128xf32> to vector<10x16x128xf32>
    %49 = vector.shape_cast %46 : vector<1x128xf32> to vector<1x1x128xf32>
    %50 = vector.broadcast %49 : vector<1x1x128xf32> to vector<10x16x128xf32>
    %51 = arith.mulf %50, %48 : vector<10x16x128xf32>
    %52 = arith.addf %44, %51 : vector<10x16x128xf32>
    %53 = vector.extract_strided_slice %5 {offsets = [6, 0, 0], sizes = [1, 1, 128], strides = [1, 1, 1]} : vector<8x1x128xf32> to vector<1x1x128xf32>
    %54 = vector.shape_cast %53 : vector<1x1x128xf32> to vector<1x128xf32>
    %c6 = arith.constant 6 : index
    %c0_22 = arith.constant 0 : index
    %c0_23 = arith.constant 0 : index
    %c0_24 = arith.constant 0 : index
    %55 = vector.load %arg2[%c6, %c0_22, %c0_23, %c0_24] : memref<8x10x16x128xf32, #tpu.memory_space<vmem>>, vector<1x10x16x128xf32>
    %56 = vector.shape_cast %55 : vector<1x10x16x128xf32> to vector<10x16x128xf32>
    %57 = vector.shape_cast %54 : vector<1x128xf32> to vector<1x1x128xf32>
    %58 = vector.broadcast %57 : vector<1x1x128xf32> to vector<10x16x128xf32>
    %59 = arith.mulf %58, %56 : vector<10x16x128xf32>
    %60 = arith.addf %52, %59 : vector<10x16x128xf32>
    %61 = vector.extract_strided_slice %5 {offsets = [7, 0, 0], sizes = [1, 1, 128], strides = [1, 1, 1]} : vector<8x1x128xf32> to vector<1x1x128xf32>
    %62 = vector.shape_cast %61 : vector<1x1x128xf32> to vector<1x128xf32>
    %c7 = arith.constant 7 : index
    %c0_25 = arith.constant 0 : index
    %c0_26 = arith.constant 0 : index
    %c0_27 = arith.constant 0 : index
    %63 = vector.load %arg2[%c7, %c0_25, %c0_26, %c0_27] : memref<8x10x16x128xf32, #tpu.memory_space<vmem>>, vector<1x10x16x128xf32>
    %64 = vector.shape_cast %63 : vector<1x10x16x128xf32> to vector<10x16x128xf32>
    %65 = vector.shape_cast %62 : vector<1x128xf32> to vector<1x1x128xf32>
    %66 = vector.broadcast %65 : vector<1x1x128xf32> to vector<10x16x128xf32>
    %67 = arith.mulf %66, %64 : vector<10x16x128xf32>
    %68 = arith.addf %60, %67 : vector<10x16x128xf32>
    %cst = arith.constant 0.000000e+00 : f32
    %69 = vector.broadcast %cst : f32 to vector<10x128xf32>
    %cst_28 = arith.constant dense<0xFF800000> : vector<128xf32>
    %70 = vector.multi_reduction <maximumf>, %69, %cst_28 [0] : vector<10x128xf32> to vector<128xf32>
    %71 = vector.shape_cast %70 : vector<128xf32> to vector<1x128xf32>
    %72 = vector.broadcast %71 : vector<1x128xf32> to vector<10x128xf32>
    %73 = arith.subf %69, %72 : vector<10x128xf32>
    %74 = math.exp %73 : vector<10x128xf32>
    %cst_29 = arith.constant dense<0.000000e+00> : vector<128xf32>
    %75 = vector.multi_reduction <add>, %74, %cst_29 [0] : vector<10x128xf32> to vector<128xf32>
    %76 = vector.shape_cast %75 : vector<128xf32> to vector<1x128xf32>
    %77 = vector.broadcast %76 : vector<1x128xf32> to vector<10x128xf32>
    %78 = arith.divf %74, %77 : vector<10x128xf32>
    %79 = vector.shape_cast %78 : vector<10x128xf32> to vector<10x1x128xf32>
    %80 = vector.broadcast %79 : vector<10x1x128xf32> to vector<10x16x128xf32>
    %81 = arith.mulf %80, %68 : vector<10x16x128xf32>
    %cst_30 = arith.constant dense<0.000000e+00> : vector<10x16xf32>
    %82 = vector.multi_reduction <add>, %81, %cst_30 [2] : vector<10x16x128xf32> to vector<10x16xf32>
    %83 = vector.shape_cast %82 : vector<10x16xf32> to vector<10x16x1xf32>
    %84 = arith.addf %83, %1 : vector<10x16x1xf32>
    %85 = arith.mulf %84, %84 : vector<10x16x1xf32>
    %cst_31 = arith.constant dense<0.000000e+00> : vector<10x1xf32>
    %86 = vector.multi_reduction <add>, %85, %cst_31 [1] : vector<10x16x1xf32> to vector<10x1xf32>
    %87 = vector.shape_cast %86 : vector<10x1xf32> to vector<10x1x1xf32>
    %88 = vector.broadcast %87 : vector<10x1x1xf32> to vector<10x16x1xf32>
    %89 = arith.mulf %84, %88 : vector<10x16x1xf32>
    %cst_32 = arith.constant 1.000000e+00 : f32
    %90 = vector.broadcast %cst_32 : f32 to vector<10x1x1xf32>
    %91 = arith.addf %90, %87 : vector<10x1x1xf32>
    %92 = math.sqrt %87 : vector<10x1x1xf32>
    %93 = arith.mulf %91, %92 : vector<10x1x1xf32>
    %94 = vector.broadcast %93 : vector<10x1x1xf32> to vector<10x16x1xf32>
    %95 = arith.divf %89, %94 : vector<10x16x1xf32>
    %96 = vector.broadcast %95 : vector<10x16x1xf32> to vector<10x16x128xf32>
    %97 = arith.mulf %68, %96 : vector<10x16x128xf32>
    %cst_33 = arith.constant dense<0.000000e+00> : vector<10x128xf32>
    %98 = vector.multi_reduction <add>, %97, %cst_33 [1] : vector<10x16x128xf32> to vector<10x128xf32>
    %99 = arith.addf %69, %98 : vector<10x128xf32>
    %cst_34 = arith.constant dense<0xFF800000> : vector<128xf32>
    %100 = vector.multi_reduction <maximumf>, %99, %cst_34 [0] : vector<10x128xf32> to vector<128xf32>
    %101 = vector.shape_cast %100 : vector<128xf32> to vector<1x128xf32>
    %102 = vector.broadcast %101 : vector<1x128xf32> to vector<10x128xf32>
    %103 = arith.subf %99, %102 : vector<10x128xf32>
    %104 = math.exp %103 : vector<10x128xf32>
    %cst_35 = arith.constant dense<0.000000e+00> : vector<128xf32>
    %105 = vector.multi_reduction <add>, %104, %cst_35 [0] : vector<10x128xf32> to vector<128xf32>
    %106 = vector.shape_cast %105 : vector<128xf32> to vector<1x128xf32>
    %107 = vector.broadcast %106 : vector<1x128xf32> to vector<10x128xf32>
    %108 = arith.divf %104, %107 : vector<10x128xf32>
    %109 = vector.shape_cast %108 : vector<10x128xf32> to vector<10x1x128xf32>
    %110 = vector.broadcast %109 : vector<10x1x128xf32> to vector<10x16x128xf32>
    %111 = arith.mulf %110, %68 : vector<10x16x128xf32>
    %cst_36 = arith.constant dense<0.000000e+00> : vector<10x16xf32>
    %112 = vector.multi_reduction <add>, %111, %cst_36 [2] : vector<10x16x128xf32> to vector<10x16xf32>
    %113 = vector.shape_cast %112 : vector<10x16xf32> to vector<10x16x1xf32>
    %114 = arith.addf %113, %1 : vector<10x16x1xf32>
    %115 = arith.mulf %114, %114 : vector<10x16x1xf32>
    %cst_37 = arith.constant dense<0.000000e+00> : vector<10x1xf32>
    %116 = vector.multi_reduction <add>, %115, %cst_37 [1] : vector<10x16x1xf32> to vector<10x1xf32>
    %117 = vector.shape_cast %116 : vector<10x1xf32> to vector<10x1x1xf32>
    %118 = vector.broadcast %117 : vector<10x1x1xf32> to vector<10x16x1xf32>
    %119 = arith.mulf %114, %118 : vector<10x16x1xf32>
    %cst_38 = arith.constant 1.000000e+00 : f32
    %120 = vector.broadcast %cst_38 : f32 to vector<10x1x1xf32>
    %121 = arith.addf %120, %117 : vector<10x1x1xf32>
    %122 = math.sqrt %117 : vector<10x1x1xf32>
    %123 = arith.mulf %121, %122 : vector<10x1x1xf32>
    %124 = vector.broadcast %123 : vector<10x1x1xf32> to vector<10x16x1xf32>
    %125 = arith.divf %119, %124 : vector<10x16x1xf32>
    %126 = vector.broadcast %125 : vector<10x16x1xf32> to vector<10x16x128xf32>
    %127 = arith.mulf %68, %126 : vector<10x16x128xf32>
    %cst_39 = arith.constant dense<0.000000e+00> : vector<10x128xf32>
    %128 = vector.multi_reduction <add>, %127, %cst_39 [1] : vector<10x16x128xf32> to vector<10x128xf32>
    %129 = arith.addf %99, %128 : vector<10x128xf32>
    %cst_40 = arith.constant dense<0xFF800000> : vector<128xf32>
    %130 = vector.multi_reduction <maximumf>, %129, %cst_40 [0] : vector<10x128xf32> to vector<128xf32>
    %131 = vector.shape_cast %130 : vector<128xf32> to vector<1x128xf32>
    %132 = vector.broadcast %131 : vector<1x128xf32> to vector<10x128xf32>
    %133 = arith.subf %129, %132 : vector<10x128xf32>
    %134 = math.exp %133 : vector<10x128xf32>
    %cst_41 = arith.constant dense<0.000000e+00> : vector<128xf32>
    %135 = vector.multi_reduction <add>, %134, %cst_41 [0] : vector<10x128xf32> to vector<128xf32>
    %136 = vector.shape_cast %135 : vector<128xf32> to vector<1x128xf32>
    %137 = vector.broadcast %136 : vector<1x128xf32> to vector<10x128xf32>
    %138 = arith.divf %134, %137 : vector<10x128xf32>
    %139 = vector.shape_cast %138 : vector<10x128xf32> to vector<10x1x128xf32>
    %140 = vector.broadcast %139 : vector<10x1x128xf32> to vector<10x16x128xf32>
    %141 = arith.mulf %140, %68 : vector<10x16x128xf32>
    %cst_42 = arith.constant dense<0.000000e+00> : vector<10x16xf32>
    %142 = vector.multi_reduction <add>, %141, %cst_42 [2] : vector<10x16x128xf32> to vector<10x16xf32>
    %143 = arith.addf %142, %0 : vector<10x16xf32>
    %144 = arith.mulf %143, %143 : vector<10x16xf32>
    %cst_43 = arith.constant dense<0.000000e+00> : vector<10xf32>
    %145 = vector.multi_reduction <add>, %144, %cst_43 [1] : vector<10x16xf32> to vector<10xf32>
    %146 = vector.shape_cast %145 : vector<10xf32> to vector<10x1xf32>
    %147 = vector.broadcast %146 : vector<10x1xf32> to vector<10x16xf32>
    %148 = arith.mulf %143, %147 : vector<10x16xf32>
    %cst_44 = arith.constant 1.000000e+00 : f32
    %149 = vector.broadcast %cst_44 : f32 to vector<10x1xf32>
    %150 = arith.addf %149, %146 : vector<10x1xf32>
    %151 = math.sqrt %146 : vector<10x1xf32>
    %152 = arith.mulf %150, %151 : vector<10x1xf32>
    %153 = vector.broadcast %152 : vector<10x1xf32> to vector<10x16xf32>
    %154 = arith.divf %148, %153 : vector<10x16xf32>
    %155 = arith.index_cast %c0_i32 : i32 to index
    %c0_45 = arith.constant 0 : index
    %c0_46 = arith.constant 0 : index
    %156 = vector.load %arg4[%155, %c0_45, %c0_46] : memref<2x10x16xf32, #tpu.memory_space<vmem>>, vector<1x10x16xf32>
    %157 = vector.shape_cast %156 : vector<1x10x16xf32> to vector<10x16xf32>
    %158 = vector.shape_cast %154 : vector<10x16xf32> to vector<1x10x16xf32>
    tpu.vector_store %arg4[%155, %c0_45, %c0_46], %158 {strides = array<i32>} : memref<2x10x16xf32, #tpu.memory_space<vmem>>, vector<1x10x16xf32>,
    %c1_i32 = arith.constant 1 : i32
    %159 = arith.index_cast %c1_i32 : i32 to index
    %c0_47 = arith.constant 0 : index
    %c0_48 = arith.constant 0 : index
    %160 = vector.load %arg1[%159, %c0_47, %c0_48] : memref<2x8x128xf32, #tpu.memory_space<vmem>>, vector<1x8x128xf32>
    %161 = vector.shape_cast %160 : vector<1x8x128xf32> to vector<8x128xf32>
    %162 = vector.shape_cast %161 : vector<8x128xf32> to vector<8x1x128xf32>
    %163 = vector.extract_strided_slice %162 {offsets = [0, 0, 0], sizes = [1, 1, 128], strides = [1, 1, 1]} : vector<8x1x128xf32> to vector<1x1x128xf32>
    %164 = vector.shape_cast %163 : vector<1x1x128xf32> to vector<1x128xf32>
    %c0_49 = arith.constant 0 : index
    %c0_50 = arith.constant 0 : index
    %c0_51 = arith.constant 0 : index
    %c0_52 = arith.constant 0 : index
    %165 = vector.load %arg2[%c0_49, %c0_50, %c0_51, %c0_52] : memref<8x10x16x128xf32, #tpu.memory_space<vmem>>, vector<1x10x16x128xf32>
    %166 = vector.shape_cast %165 : vector<1x10x16x128xf32> to vector<10x16x128xf32>
    %167 = vector.shape_cast %164 : vector<1x128xf32> to vector<1x1x128xf32>
    %168 = vector.broadcast %167 : vector<1x1x128xf32> to vector<10x16x128xf32>
    %169 = arith.mulf %168, %166 : vector<10x16x128xf32>
    %170 = vector.extract_strided_slice %162 {offsets = [1, 0, 0], sizes = [1, 1, 128], strides = [1, 1, 1]} : vector<8x1x128xf32> to vector<1x1x128xf32>
    %171 = vector.shape_cast %170 : vector<1x1x128xf32> to vector<1x128xf32>
    %c1_53 = arith.constant 1 : index
    %c0_54 = arith.constant 0 : index
    %c0_55 = arith.constant 0 : index
    %c0_56 = arith.constant 0 : index
    %172 = vector.load %arg2[%c1_53, %c0_54, %c0_55, %c0_56] : memref<8x10x16x128xf32, #tpu.memory_space<vmem>>, vector<1x10x16x128xf32>
    %173 = vector.shape_cast %172 : vector<1x10x16x128xf32> to vector<10x16x128xf32>
    %174 = vector.shape_cast %171 : vector<1x128xf32> to vector<1x1x128xf32>
    %175 = vector.broadcast %174 : vector<1x1x128xf32> to vector<10x16x128xf32>
    %176 = arith.mulf %175, %173 : vector<10x16x128xf32>
    %177 = arith.addf %169, %176 : vector<10x16x128xf32>
    %178 = vector.extract_strided_slice %162 {offsets = [2, 0, 0], sizes = [1, 1, 128], strides = [1, 1, 1]} : vector<8x1x128xf32> to vector<1x1x128xf32>
    %179 = vector.shape_cast %178 : vector<1x1x128xf32> to vector<1x128xf32>
    %c2_57 = arith.constant 2 : index
    %c0_58 = arith.constant 0 : index
    %c0_59 = arith.constant 0 : index
    %c0_60 = arith.constant 0 : index
    %180 = vector.load %arg2[%c2_57, %c0_58, %c0_59, %c0_60] : memref<8x10x16x128xf32, #tpu.memory_space<vmem>>, vector<1x10x16x128xf32>
    %181 = vector.shape_cast %180 : vector<1x10x16x128xf32> to vector<10x16x128xf32>
    %182 = vector.shape_cast %179 : vector<1x128xf32> to vector<1x1x128xf32>
    %183 = vector.broadcast %182 : vector<1x1x128xf32> to vector<10x16x128xf32>
    %184 = arith.mulf %183, %181 : vector<10x16x128xf32>
    %185 = arith.addf %177, %184 : vector<10x16x128xf32>
    %186 = vector.extract_strided_slice %162 {offsets = [3, 0, 0], sizes = [1, 1, 128], strides = [1, 1, 1]} : vector<8x1x128xf32> to vector<1x1x128xf32>
    %187 = vector.shape_cast %186 : vector<1x1x128xf32> to vector<1x128xf32>
    %c3_61 = arith.constant 3 : index
    %c0_62 = arith.constant 0 : index
    %c0_63 = arith.constant 0 : index
    %c0_64 = arith.constant 0 : index
    %188 = vector.load %arg2[%c3_61, %c0_62, %c0_63, %c0_64] : memref<8x10x16x128xf32, #tpu.memory_space<vmem>>, vector<1x10x16x128xf32>
    %189 = vector.shape_cast %188 : vector<1x10x16x128xf32> to vector<10x16x128xf32>
    %190 = vector.shape_cast %187 : vector<1x128xf32> to vector<1x1x128xf32>
    %191 = vector.broadcast %190 : vector<1x1x128xf32> to vector<10x16x128xf32>
    %192 = arith.mulf %191, %189 : vector<10x16x128xf32>
    %193 = arith.addf %185, %192 : vector<10x16x128xf32>
    %194 = vector.extract_strided_slice %162 {offsets = [4, 0, 0], sizes = [1, 1, 128], strides = [1, 1, 1]} : vector<8x1x128xf32> to vector<1x1x128xf32>
    %195 = vector.shape_cast %194 : vector<1x1x128xf32> to vector<1x128xf32>
    %c4_65 = arith.constant 4 : index
    %c0_66 = arith.constant 0 : index
    %c0_67 = arith.constant 0 : index
    %c0_68 = arith.constant 0 : index
    %196 = vector.load %arg2[%c4_65, %c0_66, %c0_67, %c0_68] : memref<8x10x16x128xf32, #tpu.memory_space<vmem>>, vector<1x10x16x128xf32>
    %197 = vector.shape_cast %196 : vector<1x10x16x128xf32> to vector<10x16x128xf32>
    %198 = vector.shape_cast %195 : vector<1x128xf32> to vector<1x1x128xf32>
    %199 = vector.broadcast %198 : vector<1x1x128xf32> to vector<10x16x128xf32>
    %200 = arith.mulf %199, %197 : vector<10x16x128xf32>
    %201 = arith.addf %193, %200 : vector<10x16x128xf32>
    %202 = vector.extract_strided_slice %162 {offsets = [5, 0, 0], sizes = [1, 1, 128], strides = [1, 1, 1]} : vector<8x1x128xf32> to vector<1x1x128xf32>
    %203 = vector.shape_cast %202 : vector<1x1x128xf32> to vector<1x128xf32>
    %c5_69 = arith.constant 5 : index
    %c0_70 = arith.constant 0 : index
    %c0_71 = arith.constant 0 : index
    %c0_72 = arith.constant 0 : index
    %204 = vector.load %arg2[%c5_69, %c0_70, %c0_71, %c0_72] : memref<8x10x16x128xf32, #tpu.memory_space<vmem>>, vector<1x10x16x128xf32>
    %205 = vector.shape_cast %204 : vector<1x10x16x128xf32> to vector<10x16x128xf32>
    %206 = vector.shape_cast %203 : vector<1x128xf32> to vector<1x1x128xf32>
    %207 = vector.broadcast %206 : vector<1x1x128xf32> to vector<10x16x128xf32>
    %208 = arith.mulf %207, %205 : vector<10x16x128xf32>
    %209 = arith.addf %201, %208 : vector<10x16x128xf32>
    %210 = vector.extract_strided_slice %162 {offsets = [6, 0, 0], sizes = [1, 1, 128], strides = [1, 1, 1]} : vector<8x1x128xf32> to vector<1x1x128xf32>
    %211 = vector.shape_cast %210 : vector<1x1x128xf32> to vector<1x128xf32>
    %c6_73 = arith.constant 6 : index
    %c0_74 = arith.constant 0 : index
    %c0_75 = arith.constant 0 : index
    %c0_76 = arith.constant 0 : index
    %212 = vector.load %arg2[%c6_73, %c0_74, %c0_75, %c0_76] : memref<8x10x16x128xf32, #tpu.memory_space<vmem>>, vector<1x10x16x128xf32>
    %213 = vector.shape_cast %212 : vector<1x10x16x128xf32> to vector<10x16x128xf32>
    %214 = vector.shape_cast %211 : vector<1x128xf32> to vector<1x1x128xf32>
    %215 = vector.broadcast %214 : vector<1x1x128xf32> to vector<10x16x128xf32>
    %216 = arith.mulf %215, %213 : vector<10x16x128xf32>
    %217 = arith.addf %209, %216 : vector<10x16x128xf32>
    %218 = vector.extract_strided_slice %162 {offsets = [7, 0, 0], sizes = [1, 1, 128], strides = [1, 1, 1]} : vector<8x1x128xf32> to vector<1x1x128xf32>
    %219 = vector.shape_cast %218 : vector<1x1x128xf32> to vector<1x128xf32>
    %c7_77 = arith.constant 7 : index
    %c0_78 = arith.constant 0 : index
    %c0_79 = arith.constant 0 : index
    %c0_80 = arith.constant 0 : index
    %220 = vector.load %arg2[%c7_77, %c0_78, %c0_79, %c0_80] : memref<8x10x16x128xf32, #tpu.memory_space<vmem>>, vector<1x10x16x128xf32>
    %221 = vector.shape_cast %220 : vector<1x10x16x128xf32> to vector<10x16x128xf32>
    %222 = vector.shape_cast %219 : vector<1x128xf32> to vector<1x1x128xf32>
    %223 = vector.broadcast %222 : vector<1x1x128xf32> to vector<10x16x128xf32>
    %224 = arith.mulf %223, %221 : vector<10x16x128xf32>
    %225 = arith.addf %217, %224 : vector<10x16x128xf32>
    %cst_81 = arith.constant 0.000000e+00 : f32
    %226 = vector.broadcast %cst_81 : f32 to vector<10x128xf32>
    %cst_82 = arith.constant dense<0xFF800000> : vector<128xf32>
    %227 = vector.multi_reduction <maximumf>, %226, %cst_82 [0] : vector<10x128xf32> to vector<128xf32>
    %228 = vector.shape_cast %227 : vector<128xf32> to vector<1x128xf32>
    %229 = vector.broadcast %228 : vector<1x128xf32> to vector<10x128xf32>
    %230 = arith.subf %226, %229 : vector<10x128xf32>
    %231 = math.exp %230 : vector<10x128xf32>
    %cst_83 = arith.constant dense<0.000000e+00> : vector<128xf32>
    %232 = vector.multi_reduction <add>, %231, %cst_83 [0] : vector<10x128xf32> to vector<128xf32>
    %233 = vector.shape_cast %232 : vector<128xf32> to vector<1x128xf32>
    %234 = vector.broadcast %233 : vector<1x128xf32> to vector<10x128xf32>
    %235 = arith.divf %231, %234 : vector<10x128xf32>
    %236 = vector.shape_cast %235 : vector<10x128xf32> to vector<10x1x128xf32>
    %237 = vector.broadcast %236 : vector<10x1x128xf32> to vector<10x16x128xf32>
    %238 = arith.mulf %237, %225 : vector<10x16x128xf32>
    %cst_84 = arith.constant dense<0.000000e+00> : vector<10x16xf32>
    %239 = vector.multi_reduction <add>, %238, %cst_84 [2] : vector<10x16x128xf32> to vector<10x16xf32>
    %240 = vector.shape_cast %239 : vector<10x16xf32> to vector<10x16x1xf32>
    %241 = arith.addf %240, %1 : vector<10x16x1xf32>
    %242 = arith.mulf %241, %241 : vector<10x16x1xf32>
    %cst_85 = arith.constant dense<0.000000e+00> : vector<10x1xf32>
    %243 = vector.multi_reduction <add>, %242, %cst_85 [1] : vector<10x16x1xf32> to vector<10x1xf32>
    %244 = vector.shape_cast %243 : vector<10x1xf32> to vector<10x1x1xf32>
    %245 = vector.broadcast %244 : vector<10x1x1xf32> to vector<10x16x1xf32>
    %246 = arith.mulf %241, %245 : vector<10x16x1xf32>
    %cst_86 = arith.constant 1.000000e+00 : f32
    %247 = vector.broadcast %cst_86 : f32 to vector<10x1x1xf32>
    %248 = arith.addf %247, %244 : vector<10x1x1xf32>
    %249 = math.sqrt %244 : vector<10x1x1xf32>
    %250 = arith.mulf %248, %249 : vector<10x1x1xf32>
    %251 = vector.broadcast %250 : vector<10x1x1xf32> to vector<10x16x1xf32>
    %252 = arith.divf %246, %251 : vector<10x16x1xf32>
    %253 = vector.broadcast %252 : vector<10x16x1xf32> to vector<10x16x128xf32>
    %254 = arith.mulf %225, %253 : vector<10x16x128xf32>
    %cst_87 = arith.constant dense<0.000000e+00> : vector<10x128xf32>
    %255 = vector.multi_reduction <add>, %254, %cst_87 [1] : vector<10x16x128xf32> to vector<10x128xf32>
    %256 = arith.addf %226, %255 : vector<10x128xf32>
    %cst_88 = arith.constant dense<0xFF800000> : vector<128xf32>
    %257 = vector.multi_reduction <maximumf>, %256, %cst_88 [0] : vector<10x128xf32> to vector<128xf32>
    %258 = vector.shape_cast %257 : vector<128xf32> to vector<1x128xf32>
    %259 = vector.broadcast %258 : vector<1x128xf32> to vector<10x128xf32>
    %260 = arith.subf %256, %259 : vector<10x128xf32>
    %261 = math.exp %260 : vector<10x128xf32>
    %cst_89 = arith.constant dense<0.000000e+00> : vector<128xf32>
    %262 = vector.multi_reduction <add>, %261, %cst_89 [0] : vector<10x128xf32> to vector<128xf32>
    %263 = vector.shape_cast %262 : vector<128xf32> to vector<1x128xf32>
    %264 = vector.broadcast %263 : vector<1x128xf32> to vector<10x128xf32>
    %265 = arith.divf %261, %264 : vector<10x128xf32>
    %266 = vector.shape_cast %265 : vector<10x128xf32> to vector<10x1x128xf32>
    %267 = vector.broadcast %266 : vector<10x1x128xf32> to vector<10x16x128xf32>
    %268 = arith.mulf %267, %225 : vector<10x16x128xf32>
    %cst_90 = arith.constant dense<0.000000e+00> : vector<10x16xf32>
    %269 = vector.multi_reduction <add>, %268, %cst_90 [2] : vector<10x16x128xf32> to vector<10x16xf32>
    %270 = vector.shape_cast %269 : vector<10x16xf32> to vector<10x16x1xf32>
    %271 = arith.addf %270, %1 : vector<10x16x1xf32>
    %272 = arith.mulf %271, %271 : vector<10x16x1xf32>
    %cst_91 = arith.constant dense<0.000000e+00> : vector<10x1xf32>
    %273 = vector.multi_reduction <add>, %272, %cst_91 [1] : vector<10x16x1xf32> to vector<10x1xf32>
    %274 = vector.shape_cast %273 : vector<10x1xf32> to vector<10x1x1xf32>
    %275 = vector.broadcast %274 : vector<10x1x1xf32> to vector<10x16x1xf32>
    %276 = arith.mulf %271, %275 : vector<10x16x1xf32>
    %cst_92 = arith.constant 1.000000e+00 : f32
    %277 = vector.broadcast %cst_92 : f32 to vector<10x1x1xf32>
    %278 = arith.addf %277, %274 : vector<10x1x1xf32>
    %279 = math.sqrt %274 : vector<10x1x1xf32>
    %280 = arith.mulf %278, %279 : vector<10x1x1xf32>
    %281 = vector.broadcast %280 : vector<10x1x1xf32> to vector<10x16x1xf32>
    %282 = arith.divf %276, %281 : vector<10x16x1xf32>
    %283 = vector.broadcast %282 : vector<10x16x1xf32> to vector<10x16x128xf32>
    %284 = arith.mulf %225, %283 : vector<10x16x128xf32>
    %cst_93 = arith.constant dense<0.000000e+00> : vector<10x128xf32>
    %285 = vector.multi_reduction <add>, %284, %cst_93 [1] : vector<10x16x128xf32> to vector<10x128xf32>
    %286 = arith.addf %256, %285 : vector<10x128xf32>
    %cst_94 = arith.constant dense<0xFF800000> : vector<128xf32>
    %287 = vector.multi_reduction <maximumf>, %286, %cst_94 [0] : vector<10x128xf32> to vector<128xf32>
    %288 = vector.shape_cast %287 : vector<128xf32> to vector<1x128xf32>
    %289 = vector.broadcast %288 : vector<1x128xf32> to vector<10x128xf32>
    %290 = arith.subf %286, %289 : vector<10x128xf32>
    %291 = math.exp %290 : vector<10x128xf32>
    %cst_95 = arith.constant dense<0.000000e+00> : vector<128xf32>
    %292 = vector.multi_reduction <add>, %291, %cst_95 [0] : vector<10x128xf32> to vector<128xf32>
    %293 = vector.shape_cast %292 : vector<128xf32> to vector<1x128xf32>
    %294 = vector.broadcast %293 : vector<1x128xf32> to vector<10x128xf32>
    %295 = arith.divf %291, %294 : vector<10x128xf32>
    %296 = vector.shape_cast %295 : vector<10x128xf32> to vector<10x1x128xf32>
    %297 = vector.broadcast %296 : vector<10x1x128xf32> to vector<10x16x128xf32>
    %298 = arith.mulf %297, %225 : vector<10x16x128xf32>
    %cst_96 = arith.constant dense<0.000000e+00> : vector<10x16xf32>
    %299 = vector.multi_reduction <add>, %298, %cst_96 [2] : vector<10x16x128xf32> to vector<10x16xf32>
    %300 = arith.addf %299, %0 : vector<10x16xf32>
    %301 = arith.mulf %300, %300 : vector<10x16xf32>
    %cst_97 = arith.constant dense<0.000000e+00> : vector<10xf32>
    %302 = vector.multi_reduction <add>, %301, %cst_97 [1] : vector<10x16xf32> to vector<10xf32>
    %303 = vector.shape_cast %302 : vector<10xf32> to vector<10x1xf32>
    %304 = vector.broadcast %303 : vector<10x1xf32> to vector<10x16xf32>
    %305 = arith.mulf %300, %304 : vector<10x16xf32>
    %cst_98 = arith.constant 1.000000e+00 : f32
    %306 = vector.broadcast %cst_98 : f32 to vector<10x1xf32>
    %307 = arith.addf %306, %303 : vector<10x1xf32>
    %308 = math.sqrt %303 : vector<10x1xf32>
    %309 = arith.mulf %307, %308 : vector<10x1xf32>
    %310 = vector.broadcast %309 : vector<10x1xf32> to vector<10x16xf32>
    %311 = arith.divf %305, %310 : vector<10x16xf32>
    %312 = arith.index_cast %c1_i32 : i32 to index
    %c0_99 = arith.constant 0 : index
    %c0_100 = arith.constant 0 : index
    %313 = vector.load %arg4[%312, %c0_99, %c0_100] : memref<2x10x16xf32, #tpu.memory_space<vmem>>, vector<1x10x16xf32>
    %314 = vector.shape_cast %313 : vector<1x10x16xf32> to vector<10x16xf32>
    %315 = vector.shape_cast %311 : vector<10x16xf32> to vector<1x10x16xf32>
    tpu.vector_store %arg4[%312, %c0_99, %c0_100], %315 {strides = array<i32>} : memref<2x10x16xf32, #tpu.memory_space<vmem>>, vector<1x10x16xf32>,
    %c2_i32 = arith.constant 2 : i32
    return
  }
  func.func @transform_0(%arg0: i32) -> (i32, i32, i32) {
    %c0_i32 = arith.constant 0 : i32
    %c0_i32_0 = arith.constant 0 : i32
    %c0_i32_1 = arith.constant 0 : i32
    return %arg0, %c0_i32, %c0_i32_0 : i32, i32, i32
  }
  func.func @transform_1(%arg0: i32) -> (i32, i32, i32, i32) {
    %c0_i32 = arith.constant 0 : i32
    %c0_i32_0 = arith.constant 0 : i32
    %c0_i32_1 = arith.constant 0 : i32
    %c0_i32_2 = arith.constant 0 : i32
    %c0_i32_3 = arith.constant 0 : i32
    return %c0_i32, %c0_i32_0, %c0_i32_1, %c0_i32_2 : i32, i32, i32, i32
  }
  func.func @transform_2(%arg0: i32) -> (i32, i32) {
    %c0_i32 = arith.constant 0 : i32
    %c0_i32_0 = arith.constant 0 : i32
    %c0_i32_1 = arith.constant 0 : i32
    return %c0_i32, %c0_i32_0 : i32, i32
  }
  func.func @transform_3(%arg0: i32) -> (i32, i32, i32) {
    %c0_i32 = arith.constant 0 : i32
    %c0_i32_0 = arith.constant 0 : i32
    %c0_i32_1 = arith.constant 0 : i32
    return %arg0, %c0_i32, %c0_i32_0 : i32, i32, i32
  }
}

</mosaic_0001>

<llo_original>
// kernel: tpu_custom_call.1
$region0: #{tpu_custom_call.1}
  #allocation0 [shape = 'u32[]', space=smem, size = 0x4, offset = 0x4, fixed_abs, tag = 'smem constant byte address 0x4 - core index']
  #allocation1 [shape = 'u32[144,128]{1,0:T(1,128)}', space=vmem, size = 0x12000, scoped, tag = 'internal scratch']
  %s0 = inlined_call_operand.hbm [shape: f32[4,8,128], index: 0, kind: input, shape index: {}]
  %s1 = inlined_call_operand.hbm [shape: f32[8,10,16,128], index: 1, kind: input, shape index: {}]
  %s2 = inlined_call_operand.hbm [shape: f32[10,16], index: 2, kind: input, shape index: {}]
  %s3 = inlined_call_operand.vmem [shape: f32[4,10,16], index: 3, kind: output, shape index: {}]
  %s4 = sld [smem:[#allocation0]]
  $region57: #{tpu_custom_call.1} parent=0
    _
  %s6 = ssub.s32 1, %s4
  %s7 = scalar_select 0, %s6, %s4
  $region1: #{tpu_custom_call.1} parent=0
    #allocation2 [shape = 'u8[16384]{0}', space=vmem, size = 0x4000, scoped, tag = 'input window, operand 0']
    #allocation3 [shape = 's32[2]{0}', space=sflag, size = 0x8, scoped, tag = 'scoped memory for tpu_custom_call.1']
    #allocation4 [shape = 'u8[655360]{0}', space=vmem, size = 0xa0000, scoped, tag = 'input window, operand 1, single buffered']
    #allocation5 [shape = 's32[1]{0}', space=sflag, size = 0x4, scoped, tag = 'scoped memory for tpu_custom_call.1']
    #allocation6 [shape = 'u8[8192]{0}', space=vmem, size = 0x2000, scoped, tag = 'input window, operand 2, single buffered']
    %8 = vsyncpa [#allocation3], 0
    %s9 = scalar_lea.sflag [#allocation3], 1
    %10 = vsyncpa %s9, 0
    %11 = vsyncpa [#allocation5], 0
    loop: start=0, step=1, limit=4
    $region2: #{tpu_custom_call.1} parent=1 // loop_pre_header
      _
    $region3: #{tpu_custom_call.1} parent=1 // loop_header
      %s13 = sphi 0, %s17
      %p14 = scmp.ge.s32.totalorder %s13, 4
      %s23 = sphi 0, %s25
      %s26 = sphi 0, %s23
      %s27 = sphi 0, %s26
      %s43 = sphi 0, %s27
      %s47 = sphi 0, %s47
      %s49 = sphi 0, %s47
      %s50 = sphi 0, %s49
      %s64 = sphi 0, %s50
      %s68 = sphi 0, %s68
      %s70 = sphi 0, %s68
      %s71 = sphi 0, %s70
      %s85 = sphi 0, %s71
      %s91 = sphi 0, %s93
      %s94 = sphi 0, %s91
      %s95 = sphi 0, %s94
      %s111 = sphi 0, %s95
    $region4: #{tpu_custom_call.1} parent=1 // loop_header_branch
      %16 = sbr.rel (%p14) target = $region8
    $region5: #{tpu_custom_call.1} parent=1 // loop_body
      %s18 = ssub.s32 %s13, 1
      %s19 = ssub.s32 %s13, 2
      %s20 = sadd.s32 %s13, 1
      %s21 = ssub.s32 %s13, %s20
      %p22 = scmp.eq.s32.totalorder %s21, 0
      %s24 = sadd.s32 %s23, 1
      %s25 = scalar_select %p22, %s23, %s24
      %p28 = pneg %p22
      %p29 = scmp.eq.s32.totalorder %s13, 1
      %p30 = por %p28, %p29
      %p31 = scmp.ne.s32.totalorder %s23, %s26
      %p32 = scmp.eq.s32.totalorder %s13, 0
      %p33 = por %p31, %p32
      %p34 = scmp.ne.s32.totalorder %s23, %s26
      %p35 = scmp.eq.s32.totalorder %s18, 1
      %p36 = por %p34, %p35
      %p37 = scmp.ne.s32.totalorder %s26, %s27
      %p38 = scmp.eq.s32.totalorder %s18, 0
      %p39 = por %p37, %p38
      %p40 = scmp.ne.s32.totalorder %s26, %s27
      %p41 = scmp.eq.s32.totalorder %s19, 1
      %p42 = por %p40, %p41
      %p44 = scmp.ne.s32.totalorder %s27, %s43
      %p45 = scmp.eq.s32.totalorder %s19, 0
      %p46 = por %p44, %p45
      %s48 = sadd.s32 %s47, 1
      %p51 = scmp.eq.s32.totalorder %s13, 1
      %p52 = scmp.ne.s32.totalorder %s47, %s49
      %p53 = scmp.eq.s32.totalorder %s13, 0
      %p54 = por %p52, %p53
      %p55 = scmp.ne.s32.totalorder %s47, %s49
      %p56 = scmp.eq.s32.totalorder %s18, 1
      %p57 = por %p55, %p56
      %p58 = scmp.ne.s32.totalorder %s49, %s50
      %p59 = scmp.eq.s32.totalorder %s18, 0
      %p60 = por %p58, %p59
      %p61 = scmp.ne.s32.totalorder %s49, %s50
      %p62 = scmp.eq.s32.totalorder %s19, 1
      %p63 = por %p61, %p62
      %p65 = scmp.ne.s32.totalorder %s50, %s64
      %p66 = scmp.eq.s32.totalorder %s19, 0
      %p67 = por %p65, %p66
      %s69 = sadd.s32 %s68, 1
      %p72 = scmp.eq.s32.totalorder %s13, 1
      %p73 = scmp.ne.s32.totalorder %s68, %s70
      %p74 = scmp.eq.s32.totalorder %s13, 0
      %p75 = por %p73, %p74
      %p76 = scmp.ne.s32.totalorder %s68, %s70
      %p77 = scmp.eq.s32.totalorder %s18, 1
      %p78 = por %p76, %p77
      %p79 = scmp.ne.s32.totalorder %s70, %s71
      %p80 = scmp.eq.s32.totalorder %s18, 0
      %p81 = por %p79, %p80
      %p82 = scmp.ne.s32.totalorder %s70, %s71
      %p83 = scmp.eq.s32.totalorder %s19, 1
      %p84 = por %p82, %p83
      %p86 = scmp.ne.s32.totalorder %s71, %s85
      %p87 = scmp.eq.s32.totalorder %s19, 0
      %p88 = por %p86, %p87
      %s89 = ssub.s32 %s13, %s20
      %p90 = scmp.eq.s32.totalorder %s89, 0
      %s92 = sadd.s32 %s91, 1
      %s93 = scalar_select %p90, %s91, %s92
      %p96 = pneg %p90
      %p97 = scmp.eq.s32.totalorder %s13, 1
      %p98 = por %p96, %p97
      %p99 = scmp.ne.s32.totalorder %s91, %s94
      %p100 = scmp.eq.s32.totalorder %s13, 0
      %p101 = por %p99, %p100
      %p102 = scmp.ne.s32.totalorder %s91, %s94
      %p103 = scmp.eq.s32.totalorder %s18, 1
      %p104 = por %p102, %p103
      %p105 = scmp.ne.s32.totalorder %s94, %s95
      %p106 = scmp.eq.s32.totalorder %s18, 0
      %p107 = por %p105, %p106
      %p108 = scmp.ne.s32.totalorder %s94, %s95
      %p109 = scmp.eq.s32.totalorder %s19, 1
      %p110 = por %p108, %p109
      %p112 = scmp.ne.s32.totalorder %s95, %s111
      %p113 = scmp.eq.s32.totalorder %s19, 0
      %p114 = por %p112, %p113
      %p115 = scmp.le.s32.totalorder 1, %s13
      %p116 = scmp.lt.s32.totalorder %s13, 3
      %p117 = pnand %p115, %p116
      %p118 = pneg %p117
      // Predicated region
      $region9: #{tpu_custom_call.1} parent=5 // pred_check
        _
      $region10: #{tpu_custom_call.1} parent=5 // pred_check_branch
        %120 = sbr.rel (%p117) target = $region12
      $region11: #{tpu_custom_call.1} parent=5 // pred_region
        %s121 = ssub.s32 %s13, 1
        // Predicated region
        $region13: #{tpu_custom_call.1} parent=11 // pred_check
          %p122 = pneg %p60
        $region14: #{tpu_custom_call.1} parent=11 // pred_check_branch
          %124 = sbr.rel (%p122) target = $region16
        $region15: #{tpu_custom_call.1} parent=11 // pred_region
          %s126 = ssub.s32 20480, 20480
          %127 = vsyncadd [#allocation5], %s126
          %s128 = sshll.u32 [#allocation4], 4
          %s129 = int_to_ptr.vmem [resolvable:$true] %s128
          %134 = dma.hbm_to_vmem [thread:$0]  %s1, 20480, %s129, [#allocation5], 128, 128, 8
        $region16: #{tpu_custom_call.1} parent=11 // pred_fallthru
          _
        // Predicated region
        $region17: #{tpu_custom_call.1} parent=11 // pred_check
          %p135 = pneg %p81
        $region18: #{tpu_custom_call.1} parent=11 // pred_check_branch
          %137 = sbr.rel (%p135) target = $region20
        $region19: #{tpu_custom_call.1} parent=11 // pred_region
          %s139 = ssub.s32 256, 256
          %140 = vsyncadd [#allocation5], %s139
          %s141 = sshll.u32 [#allocation6], 4
          %s142 = int_to_ptr.vmem [resolvable:$true] %s141
          %147 = dma.hbm_to_vmem [thread:$0]  %s2, 256, %s142, [#allocation5], 128, 128, 8
        $region20: #{tpu_custom_call.1} parent=11 // pred_fallthru
          _
      $region12: #{tpu_custom_call.1} parent=5 // pred_fallthru
        _
      %p148 = scmp.lt.s32.totalorder %s13, 2
      // Predicated region
      $region21: #{tpu_custom_call.1} parent=5 // pred_check
        %p149 = pneg %p148
      $region22: #{tpu_custom_call.1} parent=5 // pred_check_branch
        %151 = sbr.rel (%p149) target = $region24
      $region23: #{tpu_custom_call.1} parent=5 // pred_region
        // Predicated region
        $region25: #{tpu_custom_call.1} parent=23 // pred_check
          %p152 = pneg %p33
        $region26: #{tpu_custom_call.1} parent=23 // pred_check_branch
          %154 = sbr.rel (%p152) target = $region28
        $region27: #{tpu_custom_call.1} parent=23 // pred_region
          %s155 = sand.u32 %s23, 1
          %s156 = scalar_lea.sflag [#allocation3], %s155
          %s157 = sand.u32 %s23, 1
          %s158 = smul.addr %s157, 16
          %s159 = scalar_lea.vmem [#allocation2], %s158
          %s160 = smul.u32 2, %s13
          %s162 = ssub.s32 256, 256
          %163 = vsyncadd %s156, %s162
          %s164 = smul.addr %s160, 128
          %s165 = scalar_lea.hbm %s0, %s164
          %s166 = sshll.u32 %s159, 4
          %s167 = int_to_ptr.vmem [resolvable:$true] %s166
          %172 = dma.hbm_to_vmem [thread:$0]  %s165, 256, %s167, %s156, 128, 128, 8
        $region28: #{tpu_custom_call.1} parent=23 // pred_fallthru
          _
      $region24: #{tpu_custom_call.1} parent=5 // pred_fallthru
        _
      %p173 = scmp.le.s32.totalorder 1, %s13
      %p174 = scmp.lt.s32.totalorder %s13, 3
      %p175 = pnand %p173, %p174
      %p176 = pneg %p175
      // Predicated region
      $region29: #{tpu_custom_call.1} parent=5 // pred_check
        _
      $region30: #{tpu_custom_call.1} parent=5 // pred_check_branch
        %178 = sbr.rel (%p175) target = $region32
      $region31: #{tpu_custom_call.1} parent=5 // pred_region
        %s179 = ssub.s32 %s13, 1
        %s180 = sand.u32 %s26, 1
        %s181 = scalar_lea.sflag [#allocation3], %s180
        %s182 = sand.u32 %s26, 1
        %s183 = smul.addr %s182, 16
        %s184 = scalar_lea.vmem [#allocation2], %s183
        // Predicated region
        $region33: #{tpu_custom_call.1} parent=31 // pred_check
          %p185 = pneg %p39
        $region34: #{tpu_custom_call.1} parent=31 // pred_check_branch
          %187 = sbr.rel (%p185) target = $region36
        $region35: #{tpu_custom_call.1} parent=31 // pred_region
          %188 = dma.done %s181, 256
        $region36: #{tpu_custom_call.1} parent=31 // pred_fallthru
          _
        // Predicated region
        $region37: #{tpu_custom_call.1} parent=31 // pred_check
          %p189 = pneg %p60
        $region38: #{tpu_custom_call.1} parent=31 // pred_check_branch
          %191 = sbr.rel (%p189) target = $region40
        $region39: #{tpu_custom_call.1} parent=31 // pred_region
          %192 = dma.done [#allocation5], 20480
        $region40: #{tpu_custom_call.1} parent=31 // pred_fallthru
          _
        // Predicated region
        $region41: #{tpu_custom_call.1} parent=31 // pred_check
          %p193 = pneg %p81
        $region42: #{tpu_custom_call.1} parent=31 // pred_check_branch
          %195 = sbr.rel (%p193) target = $region44
        $region43: #{tpu_custom_call.1} parent=31 // pred_region
          %196 = dma.done [#allocation5], 256
        $region44: #{tpu_custom_call.1} parent=31 // pred_fallthru
          _
        %s197 = sand.u32 %s26, 1
        %s198 = scalar_lea.sflag [#allocation3], %s197
        %s199 = sand.u32 %s26, 1
        %s200 = smul.addr %s199, 16
        %s201 = scalar_lea.vmem [#allocation2], %s200
        %p202 = pneg %p39
        %p203 = pneg %p36
        %p204 = pneg %p60
        %p205 = pneg %p57
        %p206 = pneg %p81
        %p207 = pneg %p78
        %p208 = pneg %p107
        %p209 = pneg %p104
        %s210 = smul.u32 2, %s18
        %p211 = scmp.lt.s32.totalorder %s210, 3
        %s212 = scalar_select %p211, %s210, 3
        %s213 = smul.addr %s212, 2
        %s214 = smul.addr %s213, 8
        %s215 = scalar_lea.vmem %s3, %s214
        %s216 = smul.u32 2, %s18
        %s217 = smul.u32 2, %s18
        %p218 = scmp.lt.s32.totalorder %s217, 3
        %s219 = scalar_select %p218, %s217, 3
        %s220 = smul.addr %s219, 2
        %s221 = smul.addr %s220, 8
        %s222 = scalar_lea.vmem %s3, %s221
        %s223 = smul.u32 2, %s18
        %v224 = vld [vmem:[#allocation6] sm:$0xff]
        %v225 = vld [vmem:[#allocation6 + $0x8] sm:$0x3]
        %v226 = vlaneseq
        %v227 = vshrl.u32 %v226, 7
        %v228 = vsub.s32 0, %v227
        %v229 = vrot.slane %v224, %v228
        %231 = vbcast.lane.b32.xlu0 %v229, 256
        %v232 = vpop.permute.xlu0 %231
        %s234 = sor.u32 256, 8
        %235 = vbcast.lane.b32.xlu0 %v229, %s234
        %v236 = vpop.permute.xlu0 %235
        %v237 = vlaneseq
        %v238 = vshrl.u32 %v237, 7
        %v239 = vsub.s32 1, %v238
        %v240 = vrot.slane %v224, %v239
        %242 = vbcast.lane.b32.xlu0 %v240, 256
        %v243 = vpop.permute.xlu0 %242
        %s245 = sor.u32 256, 8
        %246 = vbcast.lane.b32.xlu0 %v240, %s245
        %v247 = vpop.permute.xlu0 %246
        %v248 = vlaneseq
        %v249 = vshrl.u32 %v248, 7
        %v250 = vsub.s32 2, %v249
        %v251 = vrot.slane %v224, %v250
        %253 = vbcast.lane.b32.xlu0 %v251, 256
        %v254 = vpop.permute.xlu0 %253
        %s256 = sor.u32 256, 8
        %257 = vbcast.lane.b32.xlu0 %v251, %s256
        %v258 = vpop.permute.xlu0 %257
        %v259 = vlaneseq
        %v260 = vshrl.u32 %v259, 7
        %v261 = vsub.s32 3, %v260
        %v262 = vrot.slane %v224, %v261
        %264 = vbcast.lane.b32.xlu0 %v262, 256
        %v265 = vpop.permute.xlu0 %264
        %s267 = sor.u32 256, 8
        %268 = vbcast.lane.b32.xlu0 %v262, %s267
        %v269 = vpop.permute.xlu0 %268
        %v270 = vlaneseq
        %v271 = vshrl.u32 %v270, 7
        %v272 = vsub.s32 4, %v271
        %v273 = vrot.slane %v224, %v272
        %275 = vbcast.lane.b32.xlu0 %v273, 256
        %v276 = vpop.permute.xlu0 %275
        %s278 = sor.u32 256, 8
        %279 = vbcast.lane.b32.xlu0 %v273, %s278
        %v280 = vpop.permute.xlu0 %279
        %v281 = vlaneseq
        %v282 = vshrl.u32 %v281, 7
        %v283 = vsub.s32 5, %v282
        %v284 = vrot.slane %v224, %v283
        %286 = vbcast.lane.b32.xlu0 %v284, 256
        %v287 = vpop.permute.xlu0 %286
        %s289 = sor.u32 256, 8
        %290 = vbcast.lane.b32.xlu0 %v284, %s289
        %v291 = vpop.permute.xlu0 %290
        %v292 = vlaneseq
        %v293 = vshrl.u32 %v292, 7
        %v294 = vsub.s32 6, %v293
        %v295 = vrot.slane %v224, %v294
        %297 = vbcast.lane.b32.xlu0 %v295, 256
        %v298 = vpop.permute.xlu0 %297
        %s300 = sor.u32 256, 8
        %301 = vbcast.lane.b32.xlu0 %v295, %s300
        %v302 = vpop.permute.xlu0 %301
        %v303 = vlaneseq
        %v304 = vshrl.u32 %v303, 7
        %v305 = vsub.s32 7, %v304
        %v306 = vrot.slane %v224, %v305
        %308 = vbcast.lane.b32.xlu0 %v306, 256
        %v309 = vpop.permute.xlu0 %308
        %s311 = sor.u32 256, 8
        %312 = vbcast.lane.b32.xlu0 %v306, %s311
        %v313 = vpop.permute.xlu0 %312
        %v314 = vlaneseq
        %v315 = vshrl.u32 %v314, 7
        %v316 = vsub.s32 0, %v315
        %v317 = vrot.slane %v225, %v316
        %319 = vbcast.lane.b32.xlu0 %v317, 256
        %v320 = vpop.permute.xlu0 %319
        %s322 = sor.u32 256, 8
        %323 = vbcast.lane.b32.xlu0 %v317, %s322
        %v324 = vpop.permute.xlu0 %323
        %v325 = vlaneseq
        %v326 = vshrl.u32 %v325, 7
        %v327 = vsub.s32 1, %v326
        %v328 = vrot.slane %v225, %v327
        %330 = vbcast.lane.b32.xlu0 %v328, 256
        %v331 = vpop.permute.xlu0 %330
        %s333 = sor.u32 256, 8
        %334 = vbcast.lane.b32.xlu0 %v328, %s333
        %v335 = vpop.permute.xlu0 %334
        %v336 = vld [vmem:[%s184] sm:$0xff]
        %v337 = vld [vmem:[#allocation4] sm:$0xff]
        %v338 = vld [vmem:[#allocation4 + $0x8] sm:$0xff]
        %v339 = vld [vmem:[#allocation4 + $0x10] sm:$0xff]
        %v340 = vld [vmem:[#allocation4 + $0x18] sm:$0xff]
        %v341 = vld [vmem:[#allocation4 + $0x20] sm:$0xff]
        %v342 = vld [vmem:[#allocation4 + $0x28] sm:$0xff]
        %v343 = vld [vmem:[#allocation4 + $0x30] sm:$0xff]
        %v344 = vld [vmem:[#allocation4 + $0x38] sm:$0xff]
        %v345 = vld [vmem:[#allocation4 + $0x40] sm:$0xff]
        %v346 = vld [vmem:[#allocation4 + $0x48] sm:$0xff]
        %v347 = vld [vmem:[#allocation4 + $0x50] sm:$0xff]
        %v348 = vld [vmem:[#allocation4 + $0x58] sm:$0xff]
        %v349 = vld [vmem:[#allocation4 + $0x60] sm:$0xff]
        %v350 = vld [vmem:[#allocation4 + $0x68] sm:$0xff]
        %v351 = vld [vmem:[#allocation4 + $0x70] sm:$0xff]
        %v352 = vld [vmem:[#allocation4 + $0x78] sm:$0xff]
        %v353 = vld [vmem:[#allocation4 + $0x80] sm:$0xff]
        %v354 = vld [vmem:[#allocation4 + $0x88] sm:$0xff]
        %v355 = vld [vmem:[#allocation4 + $0x90] sm:$0xff]
        %v356 = vld [vmem:[#allocation4 + $0x98] sm:$0xff]
        %v357 = vlaneseq
        %v358 = vshrl.u32 %v357, 7
        %v359 = vsub.s32 0, %v358
        %v360 = vrot.slane %v336, %v359
        %v361 = vmul.f32 %v360, %v337
        %v362 = vmul.f32 %v360, %v338
        %v363 = vmul.f32 %v360, %v339
        %v364 = vmul.f32 %v360, %v340
        %v365 = vmul.f32 %v360, %v341
        %v366 = vmul.f32 %v360, %v342
        %v367 = vmul.f32 %v360, %v343
        %v368 = vmul.f32 %v360, %v344
        %v369 = vmul.f32 %v360, %v345
        %v370 = vmul.f32 %v360, %v346
        %v371 = vmul.f32 %v360, %v347
        %v372 = vmul.f32 %v360, %v348
        %v373 = vmul.f32 %v360, %v349
        %v374 = vmul.f32 %v360, %v350
        %v375 = vmul.f32 %v360, %v351
        %v376 = vmul.f32 %v360, %v352
        %v377 = vmul.f32 %v360, %v353
        %v378 = vmul.f32 %v360, %v354
        %v379 = vmul.f32 %v360, %v355
        %v380 = vmul.f32 %v360, %v356
        %s381 = scalar_lea.vmem [#allocation4], 160
        %v382 = vld [vmem:[%s381] sm:$0xff]
        %v383 = vld [vmem:[%s381 + $0x8] sm:$0xff]
        %v384 = vld [vmem:[%s381 + $0x10] sm:$0xff]
        %v385 = vld [vmem:[%s381 + $0x18] sm:$0xff]
        %v386 = vld [vmem:[%s381 + $0x20] sm:$0xff]
        %v387 = vld [vmem:[%s381 + $0x28] sm:$0xff]
        %v388 = vld [vmem:[%s381 + $0x30] sm:$0xff]
        %v389 = vld [vmem:[%s381 + $0x38] sm:$0xff]
        %v390 = vld [vmem:[%s381 + $0x40] sm:$0xff]
        %v391 = vld [vmem:[%s381 + $0x48] sm:$0xff]
        %v392 = vld [vmem:[%s381 + $0x50] sm:$0xff]
        %v393 = vld [vmem:[%s381 + $0x58] sm:$0xff]
        %v394 = vld [vmem:[%s381 + $0x60] sm:$0xff]
        %v395 = vld [vmem:[%s381 + $0x68] sm:$0xff]
        %v396 = vld [vmem:[%s381 + $0x70] sm:$0xff]
        %v397 = vld [vmem:[%s381 + $0x78] sm:$0xff]
        %v398 = vld [vmem:[%s381 + $0x80] sm:$0xff]
        %v399 = vld [vmem:[%s381 + $0x88] sm:$0xff]
        %v400 = vld [vmem:[%s381 + $0x90] sm:$0xff]
        %v401 = vld [vmem:[%s381 + $0x98] sm:$0xff]
        %v402 = vlaneseq
        %v403 = vshrl.u32 %v402, 7
        %v404 = vsub.s32 1, %v403
        %v405 = vrot.slane %v336, %v404
        %v406 = vmul.f32 %v405, %v382
        %v407 = vmul.f32 %v405, %v383
        %v408 = vmul.f32 %v405, %v384
        %v409 = vmul.f32 %v405, %v385
        %v410 = vmul.f32 %v405, %v386
        %v411 = vmul.f32 %v405, %v387
        %v412 = vmul.f32 %v405, %v388
        %v413 = vmul.f32 %v405, %v389
        %v414 = vmul.f32 %v405, %v390
        %v415 = vmul.f32 %v405, %v391
        %v416 = vmul.f32 %v405, %v392
        %v417 = vmul.f32 %v405, %v393
        %v418 = vmul.f32 %v405, %v394
        %v419 = vmul.f32 %v405, %v395
        %v420 = vmul.f32 %v405, %v396
        %v421 = vmul.f32 %v405, %v397
        %v422 = vmul.f32 %v405, %v398
        %v423 = vmul.f32 %v405, %v399
        %v424 = vmul.f32 %v405, %v400
        %v425 = vmul.f32 %v405, %v401
        %v426 = vadd.f32 %v361, %v406
        %v427 = vadd.f32 %v362, %v407
        %v428 = vadd.f32 %v363, %v408
        %v429 = vadd.f32 %v364, %v409
        %v430 = vadd.f32 %v365, %v410
        %v431 = vadd.f32 %v366, %v411
        %v432 = vadd.f32 %v367, %v412
        %v433 = vadd.f32 %v368, %v413
        %v434 = vadd.f32 %v369, %v414
        %v435 = vadd.f32 %v370, %v415
        %v436 = vadd.f32 %v371, %v416
        %v437 = vadd.f32 %v372, %v417
        %v438 = vadd.f32 %v373, %v418
        %v439 = vadd.f32 %v374, %v419
        %v440 = vadd.f32 %v375, %v420
        %v441 = vadd.f32 %v376, %v421
        %v442 = vadd.f32 %v377, %v422
        %v443 = vadd.f32 %v378, %v423
        %v444 = vadd.f32 %v379, %v424
        %v445 = vadd.f32 %v380, %v425
        %s446 = scalar_lea.vmem [#allocation4], 320
        %v447 = vld [vmem:[%s446] sm:$0xff]
        %v448 = vld [vmem:[%s446 + $0x8] sm:$0xff]
        %v449 = vld [vmem:[%s446 + $0x10] sm:$0xff]
        %v450 = vld [vmem:[%s446 + $0x18] sm:$0xff]
        %v451 = vld [vmem:[%s446 + $0x20] sm:$0xff]
        %v452 = vld [vmem:[%s446 + $0x28] sm:$0xff]
        %v453 = vld [vmem:[%s446 + $0x30] sm:$0xff]
        %v454 = vld [vmem:[%s446 + $0x38] sm:$0xff]
        %v455 = vld [vmem:[%s446 + $0x40] sm:$0xff]
        %v456 = vld [vmem:[%s446 + $0x48] sm:$0xff]
        %v457 = vld [vmem:[%s446 + $0x50] sm:$0xff]
        %v458 = vld [vmem:[%s446 + $0x58] sm:$0xff]
        %v459 = vld [vmem:[%s446 + $0x60] sm:$0xff]
        %v460 = vld [vmem:[%s446 + $0x68] sm:$0xff]
        %v461 = vld [vmem:[%s446 + $0x70] sm:$0xff]
        %v462 = vld [vmem:[%s446 + $0x78] sm:$0xff]
        %v463 = vld [vmem:[%s446 + $0x80] sm:$0xff]
        %v464 = vld [vmem:[%s446 + $0x88] sm:$0xff]
        %v465 = vld [vmem:[%s446 + $0x90] sm:$0xff]
        %v466 = vld [vmem:[%s446 + $0x98] sm:$0xff]
        %v467 = vlaneseq
        %v468 = vshrl.u32 %v467, 7
        %v469 = vsub.s32 2, %v468
        %v470 = vrot.slane %v336, %v469
        %v471 = vmul.f32 %v470, %v447
        %v472 = vmul.f32 %v470, %v448
        %v473 = vmul.f32 %v470, %v449
        %v474 = vmul.f32 %v470, %v450
        %v475 = vmul.f32 %v470, %v451
        %v476 = vmul.f32 %v470, %v452
        %v477 = vmul.f32 %v470, %v453
        %v478 = vmul.f32 %v470, %v454
        %v479 = vmul.f32 %v470, %v455
        %v480 = vmul.f32 %v470, %v456
        %v481 = vmul.f32 %v470, %v457
        %v482 = vmul.f32 %v470, %v458
        %v483 = vmul.f32 %v470, %v459
        %v484 = vmul.f32 %v470, %v460
        %v485 = vmul.f32 %v470, %v461
        %v486 = vmul.f32 %v470, %v462
        %v487 = vmul.f32 %v470, %v463
        %v488 = vmul.f32 %v470, %v464
        %v489 = vmul.f32 %v470, %v465
        %v490 = vmul.f32 %v470, %v466
        %v491 = vadd.f32 %v426, %v471
        %v492 = vadd.f32 %v427, %v472
        %v493 = vadd.f32 %v428, %v473
        %v494 = vadd.f32 %v429, %v474
        %v495 = vadd.f32 %v430, %v475
        %v496 = vadd.f32 %v431, %v476
        %v497 = vadd.f32 %v432, %v477
        %v498 = vadd.f32 %v433, %v478
        %v499 = vadd.f32 %v434, %v479
        %v500 = vadd.f32 %v435, %v480
        %v501 = vadd.f32 %v436, %v481
        %v502 = vadd.f32 %v437, %v482
        %v503 = vadd.f32 %v438, %v483
        %v504 = vadd.f32 %v439, %v484
        %v505 = vadd.f32 %v440, %v485
        %v506 = vadd.f32 %v441, %v486
        %v507 = vadd.f32 %v442, %v487
        %v508 = vadd.f32 %v443, %v488
        %v509 = vadd.f32 %v444, %v489
        %v510 = vadd.f32 %v445, %v490
        %s511 = scalar_lea.vmem [#allocation4], 480
        %v512 = vld [vmem:[%s511] sm:$0xff]
        %v513 = vld [vmem:[%s511 + $0x8] sm:$0xff]
        %v514 = vld [vmem:[%s511 + $0x10] sm:$0xff]
        %v515 = vld [vmem:[%s511 + $0x18] sm:$0xff]
        %v516 = vld [vmem:[%s511 + $0x20] sm:$0xff]
        %v517 = vld [vmem:[%s511 + $0x28] sm:$0xff]
        %v518 = vld [vmem:[%s511 + $0x30] sm:$0xff]
        %v519 = vld [vmem:[%s511 + $0x38] sm:$0xff]
        %v520 = vld [vmem:[%s511 + $0x40] sm:$0xff]
        %v521 = vld [vmem:[%s511 + $0x48] sm:$0xff]
        %v522 = vld [vmem:[%s511 + $0x50] sm:$0xff]
        %v523 = vld [vmem:[%s511 + $0x58] sm:$0xff]
        %v524 = vld [vmem:[%s511 + $0x60] sm:$0xff]
        %v525 = vld [vmem:[%s511 + $0x68] sm:$0xff]
        %v526 = vld [vmem:[%s511 + $0x70] sm:$0xff]
        %v527 = vld [vmem:[%s511 + $0x78] sm:$0xff]
        %v528 = vld [vmem:[%s511 + $0x80] sm:$0xff]
        %v529 = vld [vmem:[%s511 + $0x88] sm:$0xff]
        %v530 = vld [vmem:[%s511 + $0x90] sm:$0xff]
        %v531 = vld [vmem:[%s511 + $0x98] sm:$0xff]
        %v532 = vlaneseq
        %v533 = vshrl.u32 %v532, 7
        %v534 = vsub.s32 3, %v533
        %v535 = vrot.slane %v336, %v534
        %v536 = vmul.f32 %v535, %v512
        %v537 = vmul.f32 %v535, %v513
        %v538 = vmul.f32 %v535, %v514
        %v539 = vmul.f32 %v535, %v515
        %v540 = vmul.f32 %v535, %v516
        %v541 = vmul.f32 %v535, %v517
        %v542 = vmul.f32 %v535, %v518
        %v543 = vmul.f32 %v535, %v519
        %v544 = vmul.f32 %v535, %v520
        %v545 = vmul.f32 %v535, %v521
        %v546 = vmul.f32 %v535, %v522
        %v547 = vmul.f32 %v535, %v523
        %v548 = vmul.f32 %v535, %v524
        %v549 = vmul.f32 %v535, %v525
        %v550 = vmul.f32 %v535, %v526
        %v551 = vmul.f32 %v535, %v527
        %v552 = vmul.f32 %v535, %v528
        %v553 = vmul.f32 %v535, %v529
        %v554 = vmul.f32 %v535, %v530
        %v555 = vmul.f32 %v535, %v531
        %v556 = vadd.f32 %v491, %v536
        %v557 = vadd.f32 %v492, %v537
        %v558 = vadd.f32 %v493, %v538
        %v559 = vadd.f32 %v494, %v539
        %v560 = vadd.f32 %v495, %v540
        %v561 = vadd.f32 %v496, %v541
        %v562 = vadd.f32 %v497, %v542
        %v563 = vadd.f32 %v498, %v543
        %v564 = vadd.f32 %v499, %v544
        %v565 = vadd.f32 %v500, %v545
        %v566 = vadd.f32 %v501, %v546
        %v567 = vadd.f32 %v502, %v547
        %v568 = vadd.f32 %v503, %v548
        %v569 = vadd.f32 %v504, %v549
        %v570 = vadd.f32 %v505, %v550
        %v571 = vadd.f32 %v506, %v551
        %v572 = vadd.f32 %v507, %v552
        %v573 = vadd.f32 %v508, %v553
        %v574 = vadd.f32 %v509, %v554
        %v575 = vadd.f32 %v510, %v555
        %s576 = scalar_lea.vmem [#allocation4], 640
        %v577 = vld [vmem:[%s576] sm:$0xff]
        %v578 = vld [vmem:[%s576 + $0x8] sm:$0xff]
        %v579 = vld [vmem:[%s576 + $0x10] sm:$0xff]
        %v580 = vld [vmem:[%s576 + $0x18] sm:$0xff]
        %v581 = vld [vmem:[%s576 + $0x20] sm:$0xff]
        %v582 = vld [vmem:[%s576 + $0x28] sm:$0xff]
        %v583 = vld [vmem:[%s576 + $0x30] sm:$0xff]
        %v584 = vld [vmem:[%s576 + $0x38] sm:$0xff]
        %v585 = vld [vmem:[%s576 + $0x40] sm:$0xff]
        %v586 = vld [vmem:[%s576 + $0x48] sm:$0xff]
        %v587 = vld [vmem:[%s576 + $0x50] sm:$0xff]
        %v588 = vld [vmem:[%s576 + $0x58] sm:$0xff]
        %v589 = vld [vmem:[%s576 + $0x60] sm:$0xff]
        %v590 = vld [vmem:[%s576 + $0x68] sm:$0xff]
        %v591 = vld [vmem:[%s576 + $0x70] sm:$0xff]
        %v592 = vld [vmem:[%s576 + $0x78] sm:$0xff]
        %v593 = vld [vmem:[%s576 + $0x80] sm:$0xff]
        %v594 = vld [vmem:[%s576 + $0x88] sm:$0xff]
        %v595 = vld [vmem:[%s576 + $0x90] sm:$0xff]
        %v596 = vld [vmem:[%s576 + $0x98] sm:$0xff]
        %v597 = vlaneseq
        %v598 = vshrl.u32 %v597, 7
        %v599 = vsub.s32 4, %v598
        %v600 = vrot.slane %v336, %v599
        %v601 = vmul.f32 %v600, %v577
        %v602 = vmul.f32 %v600, %v578
        %v603 = vmul.f32 %v600, %v579
        %v604 = vmul.f32 %v600, %v580
        %v605 = vmul.f32 %v600, %v581
        %v606 = vmul.f32 %v600, %v582
        %v607 = vmul.f32 %v600, %v583
        %v608 = vmul.f32 %v600, %v584
        %v609 = vmul.f32 %v600, %v585
        %v610 = vmul.f32 %v600, %v586
        %v611 = vmul.f32 %v600, %v587
        %v612 = vmul.f32 %v600, %v588
        %v613 = vmul.f32 %v600, %v589
        %v614 = vmul.f32 %v600, %v590
        %v615 = vmul.f32 %v600, %v591
        %v616 = vmul.f32 %v600, %v592
        %v617 = vmul.f32 %v600, %v593
        %v618 = vmul.f32 %v600, %v594
        %v619 = vmul.f32 %v600, %v595
        %v620 = vmul.f32 %v600, %v596
        %v621 = vadd.f32 %v556, %v601
        %v622 = vadd.f32 %v557, %v602
        %v623 = vadd.f32 %v558, %v603
        %v624 = vadd.f32 %v559, %v604
        %v625 = vadd.f32 %v560, %v605
        %v626 = vadd.f32 %v561, %v606
        %v627 = vadd.f32 %v562, %v607
        %v628 = vadd.f32 %v563, %v608
        %v629 = vadd.f32 %v564, %v609
        %v630 = vadd.f32 %v565, %v610
        %v631 = vadd.f32 %v566, %v611
        %v632 = vadd.f32 %v567, %v612
        %v633 = vadd.f32 %v568, %v613
        %v634 = vadd.f32 %v569, %v614
        %v635 = vadd.f32 %v570, %v615
        %v636 = vadd.f32 %v571, %v616
        %v637 = vadd.f32 %v572, %v617
        %v638 = vadd.f32 %v573, %v618
        %v639 = vadd.f32 %v574, %v619
        %v640 = vadd.f32 %v575, %v620
        %s641 = scalar_lea.vmem [#allocation4], 800
        %v642 = vld [vmem:[%s641] sm:$0xff]
        %v643 = vld [vmem:[%s641 + $0x8] sm:$0xff]
        %v644 = vld [vmem:[%s641 + $0x10] sm:$0xff]
        %v645 = vld [vmem:[%s641 + $0x18] sm:$0xff]
        %v646 = vld [vmem:[%s641 + $0x20] sm:$0xff]
        %v647 = vld [vmem:[%s641 + $0x28] sm:$0xff]
        %v648 = vld [vmem:[%s641 + $0x30] sm:$0xff]
        %v649 = vld [vmem:[%s641 + $0x38] sm:$0xff]
        %v650 = vld [vmem:[%s641 + $0x40] sm:$0xff]
        %v651 = vld [vmem:[%s641 + $0x48] sm:$0xff]
        %v652 = vld [vmem:[%s641 + $0x50] sm:$0xff]
        %v653 = vld [vmem:[%s641 + $0x58] sm:$0xff]
        %v654 = vld [vmem:[%s641 + $0x60] sm:$0xff]
        %v655 = vld [vmem:[%s641 + $0x68] sm:$0xff]
        %v656 = vld [vmem:[%s641 + $0x70] sm:$0xff]
        %v657 = vld [vmem:[%s641 + $0x78] sm:$0xff]
        %v658 = vld [vmem:[%s641 + $0x80] sm:$0xff]
        %v659 = vld [vmem:[%s641 + $0x88] sm:$0xff]
        %v660 = vld [vmem:[%s641 + $0x90] sm:$0xff]
        %v661 = vld [vmem:[%s641 + $0x98] sm:$0xff]
        %v662 = vlaneseq
        %v663 = vshrl.u32 %v662, 7
        %v664 = vsub.s32 5, %v663
        %v665 = vrot.slane %v336, %v664
        %v666 = vmul.f32 %v665, %v642
        %v667 = vmul.f32 %v665, %v643
        %v668 = vmul.f32 %v665, %v644
        %v669 = vmul.f32 %v665, %v645
        %v670 = vmul.f32 %v665, %v646
        %v671 = vmul.f32 %v665, %v647
        %v672 = vmul.f32 %v665, %v648
        %v673 = vmul.f32 %v665, %v649
        %v674 = vmul.f32 %v665, %v650
        %v675 = vmul.f32 %v665, %v651
        %v676 = vmul.f32 %v665, %v652
        %v677 = vmul.f32 %v665, %v653
        %v678 = vmul.f32 %v665, %v654
        %v679 = vmul.f32 %v665, %v655
        %v680 = vmul.f32 %v665, %v656
        %v681 = vmul.f32 %v665, %v657
        %v682 = vmul.f32 %v665, %v658
        %v683 = vmul.f32 %v665, %v659
        %v684 = vmul.f32 %v665, %v660
        %v685 = vmul.f32 %v665, %v661
        %v686 = vadd.f32 %v621, %v666
        %v687 = vadd.f32 %v622, %v667
        %v688 = vadd.f32 %v623, %v668
        %v689 = vadd.f32 %v624, %v669
        %v690 = vadd.f32 %v625, %v670
        %v691 = vadd.f32 %v626, %v671
        %v692 = vadd.f32 %v627, %v672
        %v693 = vadd.f32 %v628, %v673
        %v694 = vadd.f32 %v629, %v674
        %v695 = vadd.f32 %v630, %v675
        %v696 = vadd.f32 %v631, %v676
        %v697 = vadd.f32 %v632, %v677
        %v698 = vadd.f32 %v633, %v678
        %v699 = vadd.f32 %v634, %v679
        %v700 = vadd.f32 %v635, %v680
        %v701 = vadd.f32 %v636, %v681
        %v702 = vadd.f32 %v637, %v682
        %v703 = vadd.f32 %v638, %v683
        %v704 = vadd.f32 %v639, %v684
        %v705 = vadd.f32 %v640, %v685
        %s706 = scalar_lea.vmem [#allocation4], 960
        %v707 = vld [vmem:[%s706] sm:$0xff]
        %v708 = vld [vmem:[%s706 + $0x8] sm:$0xff]
        %v709 = vld [vmem:[%s706 + $0x10] sm:$0xff]
        %v710 = vld [vmem:[%s706 + $0x18] sm:$0xff]
        %v711 = vld [vmem:[%s706 + $0x20] sm:$0xff]
        %v712 = vld [vmem:[%s706 + $0x28] sm:$0xff]
        %v713 = vld [vmem:[%s706 + $0x30] sm:$0xff]
        %v714 = vld [vmem:[%s706 + $0x38] sm:$0xff]
        %v715 = vld [vmem:[%s706 + $0x40] sm:$0xff]
        %v716 = vld [vmem:[%s706 + $0x48] sm:$0xff]
        %v717 = vld [vmem:[%s706 + $0x50] sm:$0xff]
        %v718 = vld [vmem:[%s706 + $0x58] sm:$0xff]
        %v719 = vld [vmem:[%s706 + $0x60] sm:$0xff]
        %v720 = vld [vmem:[%s706 + $0x68] sm:$0xff]
        %v721 = vld [vmem:[%s706 + $0x70] sm:$0xff]
        %v722 = vld [vmem:[%s706 + $0x78] sm:$0xff]
        %v723 = vld [vmem:[%s706 + $0x80] sm:$0xff]
        %v724 = vld [vmem:[%s706 + $0x88] sm:$0xff]
        %v725 = vld [vmem:[%s706 + $0x90] sm:$0xff]
        %v726 = vld [vmem:[%s706 + $0x98] sm:$0xff]
        %v727 = vlaneseq
        %v728 = vshrl.u32 %v727, 7
        %v729 = vsub.s32 6, %v728
        %v730 = vrot.slane %v336, %v729
        %v731 = vmul.f32 %v730, %v707
        %v732 = vmul.f32 %v730, %v708
        %v733 = vmul.f32 %v730, %v709
        %v734 = vmul.f32 %v730, %v710
        %v735 = vmul.f32 %v730, %v711
        %v736 = vmul.f32 %v730, %v712
        %v737 = vmul.f32 %v730, %v713
        %v738 = vmul.f32 %v730, %v714
        %v739 = vmul.f32 %v730, %v715
        %v740 = vmul.f32 %v730, %v716
        %v741 = vmul.f32 %v730, %v717
        %v742 = vmul.f32 %v730, %v718
        %v743 = vmul.f32 %v730, %v719
        %v744 = vmul.f32 %v730, %v720
        %v745 = vmul.f32 %v730, %v721
        %v746 = vmul.f32 %v730, %v722
        %v747 = vmul.f32 %v730, %v723
        %v748 = vmul.f32 %v730, %v724
        %v749 = vmul.f32 %v730, %v725
        %v750 = vmul.f32 %v730, %v726
        %v751 = vadd.f32 %v686, %v731
        %v752 = vadd.f32 %v687, %v732
        %v753 = vadd.f32 %v688, %v733
        %v754 = vadd.f32 %v689, %v734
        %v755 = vadd.f32 %v690, %v735
        %v756 = vadd.f32 %v691, %v736
        %v757 = vadd.f32 %v692, %v737
        %v758 = vadd.f32 %v693, %v738
        %v759 = vadd.f32 %v694, %v739
        %v760 = vadd.f32 %v695, %v740
        %v761 = vadd.f32 %v696, %v741
        %v762 = vadd.f32 %v697, %v742
        %v763 = vadd.f32 %v698, %v743
        %v764 = vadd.f32 %v699, %v744
        %v765 = vadd.f32 %v700, %v745
        %v766 = vadd.f32 %v701, %v746
        %v767 = vadd.f32 %v702, %v747
        %v768 = vadd.f32 %v703, %v748
        %v769 = vadd.f32 %v704, %v749
        %v770 = vadd.f32 %v705, %v750
        %s771 = scalar_lea.vmem [#allocation4], 1120
        %v772 = vld [vmem:[%s771] sm:$0xff]
        %v773 = vld [vmem:[%s771 + $0x8] sm:$0xff]
        %v774 = vld [vmem:[%s771 + $0x10] sm:$0xff]
        %v775 = vld [vmem:[%s771 + $0x18] sm:$0xff]
        %v776 = vld [vmem:[%s771 + $0x20] sm:$0xff]
        %v777 = vld [vmem:[%s771 + $0x28] sm:$0xff]
        %v778 = vld [vmem:[%s771 + $0x30] sm:$0xff]
        %v779 = vld [vmem:[%s771 + $0x38] sm:$0xff]
        %v780 = vld [vmem:[%s771 + $0x40] sm:$0xff]
        %v781 = vld [vmem:[%s771 + $0x48] sm:$0xff]
        %v782 = vld [vmem:[%s771 + $0x50] sm:$0xff]
        %v783 = vld [vmem:[%s771 + $0x58] sm:$0xff]
        %v784 = vld [vmem:[%s771 + $0x60] sm:$0xff]
        %v785 = vld [vmem:[%s771 + $0x68] sm:$0xff]
        %v786 = vld [vmem:[%s771 + $0x70] sm:$0xff]
        %v787 = vld [vmem:[%s771 + $0x78] sm:$0xff]
        %v788 = vld [vmem:[%s771 + $0x80] sm:$0xff]
        %v789 = vld [vmem:[%s771 + $0x88] sm:$0xff]
        %v790 = vld [vmem:[%s771 + $0x90] sm:$0xff]
        %v791 = vld [vmem:[%s771 + $0x98] sm:$0xff]
        %v792 = vlaneseq
        %v793 = vshrl.u32 %v792, 7
        %v794 = vsub.s32 7, %v793
        %v795 = vrot.slane %v336, %v794
        %v796 = vmul.f32 %v795, %v772
        %v797 = vmul.f32 %v795, %v773
        %v798 = vmul.f32 %v795, %v774
        %v799 = vmul.f32 %v795, %v775
        %v800 = vmul.f32 %v795, %v776
        %v801 = vmul.f32 %v795, %v777
        %v802 = vmul.f32 %v795, %v778
        %v803 = vmul.f32 %v795, %v779
        %v804 = vmul.f32 %v795, %v780
        %v805 = vmul.f32 %v795, %v781
        %v806 = vmul.f32 %v795, %v782
        %v807 = vmul.f32 %v795, %v783
        %v808 = vmul.f32 %v795, %v784
        %v809 = vmul.f32 %v795, %v785
        %v810 = vmul.f32 %v795, %v786
        %v811 = vmul.f32 %v795, %v787
        %v812 = vmul.f32 %v795, %v788
        %v813 = vmul.f32 %v795, %v789
        %v814 = vmul.f32 %v795, %v790
        %v815 = vmul.f32 %v795, %v791
        %v816 = vadd.f32 %v751, %v796
        %v817 = vadd.f32 %v752, %v797
        %v818 = vadd.f32 %v753, %v798
        %v819 = vadd.f32 %v754, %v799
        %v820 = vadd.f32 %v755, %v800
        %v821 = vadd.f32 %v756, %v801
        %v822 = vadd.f32 %v757, %v802
        %v823 = vadd.f32 %v758, %v803
        %v824 = vadd.f32 %v759, %v804
        %v825 = vadd.f32 %v760, %v805
        %v826 = vadd.f32 %v761, %v806
        %v827 = vadd.f32 %v762, %v807
        %v828 = vadd.f32 %v763, %v808
        %v829 = vadd.f32 %v764, %v809
        %v830 = vadd.f32 %v765, %v810
        %v831 = vadd.f32 %v766, %v811
        %v832 = vadd.f32 %v767, %v812
        %v833 = vadd.f32 %v768, %v813
        %v834 = vadd.f32 %v769, %v814
        %v835 = vadd.f32 %v770, %v815
        %vm836 = vcmask 1041408
        %v837 = vsel %vm836, 1.0, 0.0
        %v838 = vadd.f32 %v837, 1.0
        %v839 = vrot.slane %v838, 4
        %v840 = vadd.f32 %v838, %v839
        %v841 = vrot.slane %v840, 2
        %v842 = vadd.f32 %v840, %v841
        %v843 = vrot.slane %v842, 1
        %v844 = vadd.f32 %v842, %v843
        %v845 = vrcp.pop %v844
        %v846 = vmul.f32 1.0, %v845
        %v847 = vmul.f32 %v846, %v816
        %v848 = vmul.f32 %v846, %v817
        %v849 = vmul.f32 %v846, %v818
        %v850 = vmul.f32 %v846, %v819
        %v851 = vmul.f32 %v846, %v820
        %v852 = vmul.f32 %v846, %v821
        %v853 = vmul.f32 %v846, %v822
        %v854 = vmul.f32 %v846, %v823
        %v855 = vmul.f32 %v846, %v824
        %v856 = vmul.f32 %v846, %v825
        %v857 = vmul.f32 %v846, %v826
        %v858 = vmul.f32 %v846, %v827
        %v859 = vmul.f32 %v846, %v828
        %v860 = vmul.f32 %v846, %v829
        %v861 = vmul.f32 %v846, %v830
        %v862 = vmul.f32 %v846, %v831
        %v863 = vmul.f32 %v846, %v832
        %v864 = vmul.f32 %v846, %v833
        %v865 = vmul.f32 %v846, %v834
        %v866 = vmul.f32 %v846, %v835
        %867 = vadd.xlane.f32.xlu0 %v847
        %v868 = vpop.xlane.xlu0 %867
        %869 = vadd.xlane.f32.xlu0 %v848
        %v870 = vpop.xlane.xlu0 %869
        %871 = vadd.xlane.f32.xlu0 %v849
        %v872 = vpop.xlane.xlu0 %871
        %873 = vadd.xlane.f32.xlu0 %v850
        %v874 = vpop.xlane.xlu0 %873
        %875 = vadd.xlane.f32.xlu0 %v851
        %v876 = vpop.xlane.xlu0 %875
        %877 = vadd.xlane.f32.xlu0 %v852
        %v878 = vpop.xlane.xlu0 %877
        %879 = vadd.xlane.f32.xlu0 %v853
        %v880 = vpop.xlane.xlu0 %879
        %881 = vadd.xlane.f32.xlu0 %v854
        %v882 = vpop.xlane.xlu0 %881
        %883 = vadd.xlane.f32.xlu0 %v855
        %v884 = vpop.xlane.xlu0 %883
        %885 = vadd.xlane.f32.xlu0 %v856
        %v886 = vpop.xlane.xlu0 %885
        %887 = vadd.xlane.f32.xlu0 %v857
        %v888 = vpop.xlane.xlu0 %887
        %889 = vadd.xlane.f32.xlu0 %v858
        %v890 = vpop.xlane.xlu0 %889
        %891 = vadd.xlane.f32.xlu0 %v859
        %v892 = vpop.xlane.xlu0 %891
        %893 = vadd.xlane.f32.xlu0 %v860
        %v894 = vpop.xlane.xlu0 %893
        %895 = vadd.xlane.f32.xlu0 %v861
        %v896 = vpop.xlane.xlu0 %895
        %897 = vadd.xlane.f32.xlu0 %v862
        %v898 = vpop.xlane.xlu0 %897
        %899 = vadd.xlane.f32.xlu0 %v863
        %v900 = vpop.xlane.xlu0 %899
        %901 = vadd.xlane.f32.xlu0 %v864
        %v902 = vpop.xlane.xlu0 %901
        %903 = vadd.xlane.f32.xlu0 %v865
        %v904 = vpop.xlane.xlu0 %903
        %905 = vadd.xlane.f32.xlu0 %v866
        %v906 = vpop.xlane.xlu0 %905
        %v907 = vadd.f32 %v868, %v232
        %v908 = vadd.f32 %v870, %v236
        %v909 = vadd.f32 %v872, %v243
        %v910 = vadd.f32 %v874, %v247
        %v911 = vadd.f32 %v876, %v254
        %v912 = vadd.f32 %v878, %v258
        %v913 = vadd.f32 %v880, %v265
        %v914 = vadd.f32 %v882, %v269
        %v915 = vadd.f32 %v884, %v276
        %v916 = vadd.f32 %v886, %v280
        %v917 = vadd.f32 %v888, %v287
        %v918 = vadd.f32 %v890, %v291
        %v919 = vadd.f32 %v892, %v298
        %v920 = vadd.f32 %v894, %v302
        %v921 = vadd.f32 %v896, %v309
        %v922 = vadd.f32 %v898, %v313
        %v923 = vadd.f32 %v900, %v320
        %v924 = vadd.f32 %v902, %v324
        %v925 = vadd.f32 %v904, %v331
        %v926 = vadd.f32 %v906, %v335
        %v927 = vmul.f32 %v907, %v907
        %v928 = vmul.f32 %v908, %v908
        %v929 = vmul.f32 %v909, %v909
        %v930 = vmul.f32 %v910, %v910
        %v931 = vmul.f32 %v911, %v911
        %v932 = vmul.f32 %v912, %v912
        %v933 = vmul.f32 %v913, %v913
        %v934 = vmul.f32 %v914, %v914
        %v935 = vmul.f32 %v915, %v915
        %v936 = vmul.f32 %v916, %v916
        %v937 = vmul.f32 %v917, %v917
        %v938 = vmul.f32 %v918, %v918
        %v939 = vmul.f32 %v919, %v919
        %v940 = vmul.f32 %v920, %v920
        %v941 = vmul.f32 %v921, %v921
        %v942 = vmul.f32 %v922, %v922
        %v943 = vmul.f32 %v923, %v923
        %v944 = vmul.f32 %v924, %v924
        %v945 = vmul.f32 %v925, %v925
        %v946 = vmul.f32 %v926, %v926
        %v947 = vadd.f32 %v927, %v928
        %v948 = vrot.slane %v947, 4
        %v949 = vadd.f32 %v947, %v948
        %v950 = vrot.slane %v949, 2
        %v951 = vadd.f32 %v949, %v950
        %v952 = vrot.slane %v951, 1
        %v953 = vadd.f32 %v951, %v952
        %v954 = vadd.f32 %v929, %v930
        %v955 = vrot.slane %v954, 4
        %v956 = vadd.f32 %v954, %v955
        %v957 = vrot.slane %v956, 2
        %v958 = vadd.f32 %v956, %v957
        %v959 = vrot.slane %v958, 1
        %v960 = vadd.f32 %v958, %v959
        %v961 = vadd.f32 %v931, %v932
        %v962 = vrot.slane %v961, 4
        %v963 = vadd.f32 %v961, %v962
        %v964 = vrot.slane %v963, 2
        %v965 = vadd.f32 %v963, %v964
        %v966 = vrot.slane %v965, 1
        %v967 = vadd.f32 %v965, %v966
        %v968 = vadd.f32 %v933, %v934
        %v969 = vrot.slane %v968, 4
        %v970 = vadd.f32 %v968, %v969
        %v971 = vrot.slane %v970, 2
        %v972 = vadd.f32 %v970, %v971
        %v973 = vrot.slane %v972, 1
        %v974 = vadd.f32 %v972, %v973
        %v975 = vadd.f32 %v935, %v936
        %v976 = vrot.slane %v975, 4
        %v977 = vadd.f32 %v975, %v976
        %v978 = vrot.slane %v977, 2
        %v979 = vadd.f32 %v977, %v978
        %v980 = vrot.slane %v979, 1
        %v981 = vadd.f32 %v979, %v980
        %v982 = vadd.f32 %v937, %v938
        %v983 = vrot.slane %v982, 4
        %v984 = vadd.f32 %v982, %v983
        %v985 = vrot.slane %v984, 2
        %v986 = vadd.f32 %v984, %v985
        %v987 = vrot.slane %v986, 1
        %v988 = vadd.f32 %v986, %v987
        %v989 = vadd.f32 %v939, %v940
        %v990 = vrot.slane %v989, 4
        %v991 = vadd.f32 %v989, %v990
        %v992 = vrot.slane %v991, 2
        %v993 = vadd.f32 %v991, %v992
        %v994 = vrot.slane %v993, 1
        %v995 = vadd.f32 %v993, %v994
        %v996 = vadd.f32 %v941, %v942
        %v997 = vrot.slane %v996, 4
        %v998 = vadd.f32 %v996, %v997
        %v999 = vrot.slane %v998, 2
        %v1000 = vadd.f32 %v998, %v999
        %v1001 = vrot.slane %v1000, 1
        %v1002 = vadd.f32 %v1000, %v1001
        %v1003 = vadd.f32 %v943, %v944
        %v1004 = vrot.slane %v1003, 4
        %v1005 = vadd.f32 %v1003, %v1004
        %v1006 = vrot.slane %v1005, 2
        %v1007 = vadd.f32 %v1005, %v1006
        %v1008 = vrot.slane %v1007, 1
        %v1009 = vadd.f32 %v1007, %v1008
        %v1010 = vadd.f32 %v945, %v946
        %v1011 = vrot.slane %v1010, 4
        %v1012 = vadd.f32 %v1010, %v1011
        %v1013 = vrot.slane %v1012, 2
        %v1014 = vadd.f32 %v1012, %v1013
        %v1015 = vrot.slane %v1014, 1
        %v1016 = vadd.f32 %v1014, %v1015
        %v1017 = vmul.f32 %v907, %v953
        %v1018 = vmul.f32 %v908, %v953
        %v1019 = vmul.f32 %v909, %v960
        %v1020 = vmul.f32 %v910, %v960
        %v1021 = vmul.f32 %v911, %v967
        %v1022 = vmul.f32 %v912, %v967
        %v1023 = vmul.f32 %v913, %v974
        %v1024 = vmul.f32 %v914, %v974
        %v1025 = vmul.f32 %v915, %v981
        %v1026 = vmul.f32 %v916, %v981
        %v1027 = vmul.f32 %v917, %v988
        %v1028 = vmul.f32 %v918, %v988
        %v1029 = vmul.f32 %v919, %v995
        %v1030 = vmul.f32 %v920, %v995
        %v1031 = vmul.f32 %v921, %v1002
        %v1032 = vmul.f32 %v922, %v1002
        %v1033 = vmul.f32 %v923, %v1009
        %v1034 = vmul.f32 %v924, %v1009
        %v1035 = vmul.f32 %v925, %v1016
        %v1036 = vmul.f32 %v926, %v1016
        %v1037 = vadd.f32 %v953, 1.0
        %v1038 = vadd.f32 %v960, 1.0
        %v1039 = vadd.f32 %v967, 1.0
        %v1040 = vadd.f32 %v974, 1.0
        %v1041 = vadd.f32 %v981, 1.0
        %v1042 = vadd.f32 %v988, 1.0
        %v1043 = vadd.f32 %v995, 1.0
        %v1044 = vadd.f32 %v1002, 1.0
        %v1045 = vadd.f32 %v1009, 1.0
        %v1046 = vadd.f32 %v1016, 1.0
        %v1047 = vrsqrt.pop %v953
        %v1048 = vmul.f32 %v953, %v1047
        %vm1049 = vcmp.eq.f32.partialorder %v953, inf
        %v1050 = vsel %vm1049, %v953, %v1048
        %vm1051 = vcmp.eq.f32.partialorder %v953, 0.0
        %v1052 = vand.u32 %v953, 2147483648
        %v1053 = vsel %vm1051, %v1052, %v1050
        %v1054 = vrsqrt.pop %v960
        %v1055 = vmul.f32 %v960, %v1054
        %vm1056 = vcmp.eq.f32.partialorder %v960, inf
        %v1057 = vsel %vm1056, %v960, %v1055
        %vm1058 = vcmp.eq.f32.partialorder %v960, 0.0
        %v1059 = vand.u32 %v960, 2147483648
        %v1060 = vsel %vm1058, %v1059, %v1057
        %v1061 = vrsqrt.pop %v967
        %v1062 = vmul.f32 %v967, %v1061
        %vm1063 = vcmp.eq.f32.partialorder %v967, inf
        %v1064 = vsel %vm1063, %v967, %v1062
        %vm1065 = vcmp.eq.f32.partialorder %v967, 0.0
        %v1066 = vand.u32 %v967, 2147483648
        %v1067 = vsel %vm1065, %v1066, %v1064
        %v1068 = vrsqrt.pop %v974
        %v1069 = vmul.f32 %v974, %v1068
        %vm1070 = vcmp.eq.f32.partialorder %v974, inf
        %v1071 = vsel %vm1070, %v974, %v1069
        %vm1072 = vcmp.eq.f32.partialorder %v974, 0.0
        %v1073 = vand.u32 %v974, 2147483648
        %v1074 = vsel %vm1072, %v1073, %v1071
        %v1075 = vrsqrt.pop %v981
        %v1076 = vmul.f32 %v981, %v1075
        %vm1077 = vcmp.eq.f32.partialorder %v981, inf
        %v1078 = vsel %vm1077, %v981, %v1076
        %vm1079 = vcmp.eq.f32.partialorder %v981, 0.0
        %v1080 = vand.u32 %v981, 2147483648
        %v1081 = vsel %vm1079, %v1080, %v1078
        %v1082 = vrsqrt.pop %v988
        %v1083 = vmul.f32 %v988, %v1082
        %vm1084 = vcmp.eq.f32.partialorder %v988, inf
        %v1085 = vsel %vm1084, %v988, %v1083
        %vm1086 = vcmp.eq.f32.partialorder %v988, 0.0
        %v1087 = vand.u32 %v988, 2147483648
        %v1088 = vsel %vm1086, %v1087, %v1085
        %v1089 = vrsqrt.pop %v995
        %v1090 = vmul.f32 %v995, %v1089
        %vm1091 = vcmp.eq.f32.partialorder %v995, inf
        %v1092 = vsel %vm1091, %v995, %v1090
        %vm1093 = vcmp.eq.f32.partialorder %v995, 0.0
        %v1094 = vand.u32 %v995, 2147483648
        %v1095 = vsel %vm1093, %v1094, %v1092
        %v1096 = vrsqrt.pop %v1002
        %v1097 = vmul.f32 %v1002, %v1096
        %vm1098 = vcmp.eq.f32.partialorder %v1002, inf
        %v1099 = vsel %vm1098, %v1002, %v1097
        %vm1100 = vcmp.eq.f32.partialorder %v1002, 0.0
        %v1101 = vand.u32 %v1002, 2147483648
        %v1102 = vsel %vm1100, %v1101, %v1099
        %v1103 = vrsqrt.pop %v1009
        %v1104 = vmul.f32 %v1009, %v1103
        %vm1105 = vcmp.eq.f32.partialorder %v1009, inf
        %v1106 = vsel %vm1105, %v1009, %v1104
        %vm1107 = vcmp.eq.f32.partialorder %v1009, 0.0
        %v1108 = vand.u32 %v1009, 2147483648
        %v1109 = vsel %vm1107, %v1108, %v1106
        %v1110 = vrsqrt.pop %v1016
        %v1111 = vmul.f32 %v1016, %v1110
        %vm1112 = vcmp.eq.f32.partialorder %v1016, inf
        %v1113 = vsel %vm1112, %v1016, %v1111
        %vm1114 = vcmp.eq.f32.partialorder %v1016, 0.0
        %v1115 = vand.u32 %v1016, 2147483648
        %v1116 = vsel %vm1114, %v1115, %v1113
        %v1117 = vmul.f32 %v1037, %v1053
        %v1118 = vmul.f32 %v1038, %v1060
        %v1119 = vmul.f32 %v1039, %v1067
        %v1120 = vmul.f32 %v1040, %v1074
        %v1121 = vmul.f32 %v1041, %v1081
        %v1122 = vmul.f32 %v1042, %v1088
        %v1123 = vmul.f32 %v1043, %v1095
        %v1124 = vmul.f32 %v1044, %v1102
        %v1125 = vmul.f32 %v1045, %v1109
        %v1126 = vmul.f32 %v1046, %v1116
        %v1127 = vrcp.pop %v1117
        %v1128 = vmul.f32 %v1017, %v1127
        %v1129 = vmul.f32 %v1018, %v1127
        %v1130 = vrcp.pop %v1118
        %v1131 = vmul.f32 %v1019, %v1130
        %v1132 = vmul.f32 %v1020, %v1130
        %v1133 = vrcp.pop %v1119
        %v1134 = vmul.f32 %v1021, %v1133
        %v1135 = vmul.f32 %v1022, %v1133
        %v1136 = vrcp.pop %v1120
        %v1137 = vmul.f32 %v1023, %v1136
        %v1138 = vmul.f32 %v1024, %v1136
        %v1139 = vrcp.pop %v1121
        %v1140 = vmul.f32 %v1025, %v1139
        %v1141 = vmul.f32 %v1026, %v1139
        %v1142 = vrcp.pop %v1122
        %v1143 = vmul.f32 %v1027, %v1142
        %v1144 = vmul.f32 %v1028, %v1142
        %v1145 = vrcp.pop %v1123
        %v1146 = vmul.f32 %v1029, %v1145
        %v1147 = vmul.f32 %v1030, %v1145
        %v1148 = vrcp.pop %v1124
        %v1149 = vmul.f32 %v1031, %v1148
        %v1150 = vmul.f32 %v1032, %v1148
        %v1151 = vrcp.pop %v1125
        %v1152 = vmul.f32 %v1033, %v1151
        %v1153 = vmul.f32 %v1034, %v1151
        %v1154 = vrcp.pop %v1126
        %v1155 = vmul.f32 %v1035, %v1154
        %v1156 = vmul.f32 %v1036, %v1154
        %v1157 = vmul.f32 %v816, %v1128
        %v1158 = vmul.f32 %v817, %v1129
        %v1159 = vmul.f32 %v818, %v1131
        %v1160 = vmul.f32 %v819, %v1132
        %v1161 = vmul.f32 %v820, %v1134
        %v1162 = vmul.f32 %v821, %v1135
        %v1163 = vmul.f32 %v822, %v1137
        %v1164 = vmul.f32 %v823, %v1138
        %v1165 = vmul.f32 %v824, %v1140
        %v1166 = vmul.f32 %v825, %v1141
        %v1167 = vmul.f32 %v826, %v1143
        %v1168 = vmul.f32 %v827, %v1144
        %v1169 = vmul.f32 %v828, %v1146
        %v1170 = vmul.f32 %v829, %v1147
        %v1171 = vmul.f32 %v830, %v1149
        %v1172 = vmul.f32 %v831, %v1150
        %v1173 = vmul.f32 %v832, %v1152
        %v1174 = vmul.f32 %v833, %v1153
        %v1175 = vmul.f32 %v834, %v1155
        %v1176 = vmul.f32 %v835, %v1156
        %v1177 = vadd.f32 %v1157, %v1158
        %v1178 = vrot.slane %v1177, 4
        %v1179 = vadd.f32 %v1177, %v1178
        %v1180 = vrot.slane %v1179, 2
        %v1181 = vadd.f32 %v1179, %v1180
        %v1182 = vrot.slane %v1181, 1
        %v1183 = vadd.f32 %v1181, %v1182
        %v1184 = vadd.f32 %v1159, %v1160
        %v1185 = vrot.slane %v1184, 4
        %v1186 = vadd.f32 %v1184, %v1185
        %v1187 = vrot.slane %v1186, 2
        %v1188 = vadd.f32 %v1186, %v1187
        %v1189 = vrot.slane %v1188, 1
        %v1190 = vadd.f32 %v1188, %v1189
        %v1191 = vadd.f32 %v1161, %v1162
        %v1192 = vrot.slane %v1191, 4
        %v1193 = vadd.f32 %v1191, %v1192
        %v1194 = vrot.slane %v1193, 2
        %v1195 = vadd.f32 %v1193, %v1194
        %v1196 = vrot.slane %v1195, 1
        %v1197 = vadd.f32 %v1195, %v1196
        %v1198 = vadd.f32 %v1163, %v1164
        %v1199 = vrot.slane %v1198, 4
        %v1200 = vadd.f32 %v1198, %v1199
        %v1201 = vrot.slane %v1200, 2
        %v1202 = vadd.f32 %v1200, %v1201
        %v1203 = vrot.slane %v1202, 1
        %v1204 = vadd.f32 %v1202, %v1203
        %v1205 = vadd.f32 %v1165, %v1166
        %v1206 = vrot.slane %v1205, 4
        %v1207 = vadd.f32 %v1205, %v1206
        %v1208 = vrot.slane %v1207, 2
        %v1209 = vadd.f32 %v1207, %v1208
        %v1210 = vrot.slane %v1209, 1
        %v1211 = vadd.f32 %v1209, %v1210
        %v1212 = vadd.f32 %v1167, %v1168
        %v1213 = vrot.slane %v1212, 4
        %v1214 = vadd.f32 %v1212, %v1213
        %v1215 = vrot.slane %v1214, 2
        %v1216 = vadd.f32 %v1214, %v1215
        %v1217 = vrot.slane %v1216, 1
        %v1218 = vadd.f32 %v1216, %v1217
        %v1219 = vadd.f32 %v1169, %v1170
        %v1220 = vrot.slane %v1219, 4
        %v1221 = vadd.f32 %v1219, %v1220
        %v1222 = vrot.slane %v1221, 2
        %v1223 = vadd.f32 %v1221, %v1222
        %v1224 = vrot.slane %v1223, 1
        %v1225 = vadd.f32 %v1223, %v1224
        %v1226 = vadd.f32 %v1171, %v1172
        %v1227 = vrot.slane %v1226, 4
        %v1228 = vadd.f32 %v1226, %v1227
        %v1229 = vrot.slane %v1228, 2
        %v1230 = vadd.f32 %v1228, %v1229
        %v1231 = vrot.slane %v1230, 1
        %v1232 = vadd.f32 %v1230, %v1231
        %v1233 = vadd.f32 %v1173, %v1174
        %v1234 = vrot.slane %v1233, 4
        %v1235 = vadd.f32 %v1233, %v1234
        %v1236 = vrot.slane %v1235, 2
        %v1237 = vadd.f32 %v1235, %v1236
        %v1238 = vrot.slane %v1237, 1
        %v1239 = vadd.f32 %v1237, %v1238
        %v1240 = vadd.f32 %v1175, %v1176
        %v1241 = vrot.slane %v1240, 4
        %v1242 = vadd.f32 %v1240, %v1241
        %v1243 = vrot.slane %v1242, 2
        %v1244 = vadd.f32 %v1242, %v1243
        %v1245 = vrot.slane %v1244, 1
        %v1246 = vadd.f32 %v1244, %v1245
        %v1247 = vadd.f32 %v1183, 0.0
        %v1248 = vadd.f32 %v1190, 0.0
        %v1249 = vadd.f32 %v1197, 0.0
        %v1250 = vadd.f32 %v1204, 0.0
        %v1251 = vadd.f32 %v1211, 0.0
        %v1252 = vadd.f32 %v1218, 0.0
        %v1253 = vadd.f32 %v1225, 0.0
        %v1254 = vadd.f32 %v1232, 0.0
        %v1255 = vadd.f32 %v1239, 0.0
        %v1256 = vadd.f32 %v1246, 0.0
        %v1257 = vmax.f32 %v1247, %v1251
        %v1258 = vmax.f32 %v1248, %v1252
        %v1259 = vmax.f32 %v1249, %v1253
        %v1260 = vmax.f32 %v1250, %v1254
        %v1261 = vmax.f32 %v1257, %v1255
        %v1262 = vmax.f32 %v1258, %v1256
        %v1263 = vmax.f32 %v1261, %v1262
        %v1264 = vmax.f32 %v1259, %v1260
        %v1265 = vmax.f32 %v1263, %v1264
        %v1266 = vsub.f32 %v1247, %v1265
        %v1267 = vsub.f32 %v1248, %v1265
        %v1268 = vsub.f32 %v1249, %v1265
        %v1269 = vsub.f32 %v1250, %v1265
        %v1270 = vsub.f32 %v1251, %v1265
        %v1271 = vsub.f32 %v1252, %v1265
        %v1272 = vsub.f32 %v1253, %v1265
        %v1273 = vsub.f32 %v1254, %v1265
        %v1274 = vsub.f32 %v1255, %v1265
        %v1275 = vsub.f32 %v1256, %v1265
        %v1276 = vmul.f32 %v1266, 1.442695
        %v1277 = vpow.pop %v1276
        %v1278 = vmul.f32 %v1267, 1.442695
        %v1279 = vpow.pop %v1278
        %v1280 = vmul.f32 %v1268, 1.442695
        %v1281 = vpow.pop %v1280
        %v1282 = vmul.f32 %v1269, 1.442695
        %v1283 = vpow.pop %v1282
        %v1284 = vmul.f32 %v1270, 1.442695
        %v1285 = vpow.pop %v1284
        %v1286 = vmul.f32 %v1271, 1.442695
        %v1287 = vpow.pop %v1286
        %v1288 = vmul.f32 %v1272, 1.442695
        %v1289 = vpow.pop %v1288
        %v1290 = vmul.f32 %v1273, 1.442695
        %v1291 = vpow.pop %v1290
        %v1292 = vmul.f32 %v1274, 1.442695
        %v1293 = vpow.pop %v1292
        %v1294 = vmul.f32 %v1275, 1.442695
        %v1295 = vpow.pop %v1294
        %v1306 = vrot.slane %v1279, 7
        %vm1307 = vcmask 1041409
        %v1308 = vsel %vm1307, %v1306, %v1277
        %v1309 = vrot.slane %v1281, 6
        %vm1310 = vcmask 1042434
        %v1311 = vsel %vm1310, %v1309, %v1308
        %v1312 = vrot.slane %v1283, 5
        %vm1313 = vcmask 1043459
        %v1314 = vsel %vm1313, %v1312, %v1311
        %v1315 = vrot.slane %v1285, 4
        %vm1316 = vcmask 1044484
        %v1317 = vsel %vm1316, %v1315, %v1314
        %v1318 = vrot.slane %v1287, 3
        %vm1319 = vcmask 1045509
        %v1320 = vsel %vm1319, %v1318, %v1317
        %v1321 = vrot.slane %v1289, 2
        %vm1322 = vcmask 1046534
        %v1323 = vsel %vm1322, %v1321, %v1320
        %v1324 = vrot.slane %v1291, 1
        %vm1325 = vcmask 1047559
        %v1326 = vsel %vm1325, %v1324, %v1323
        %v1327 = vrot.slane %v1295, 7
        %v1328 = vsel %vm1307, %v1327, %v1293
        %v1331 = vsel %vm836, %v1328, 0.0
        %v1332 = vadd.f32 %v1326, %v1331
        %v1333 = vrot.slane %v1332, 4
        %v1334 = vadd.f32 %v1332, %v1333
        %v1335 = vrot.slane %v1334, 2
        %v1336 = vadd.f32 %v1334, %v1335
        %v1337 = vrot.slane %v1336, 1
        %v1338 = vadd.f32 %v1336, %v1337
        %v1339 = vlaneseq
        %v1340 = vshrl.u32 %v1339, 7
        %v1341 = vsub.s32 0, %v1340
        %v1342 = vrot.slane %v1338, %v1341
        %v1343 = vrcp.pop %v1342
        %v1344 = vmul.f32 %v1277, %v1343
        %v1345 = vmul.f32 %v1279, %v1343
        %v1346 = vmul.f32 %v1281, %v1343
        %v1347 = vmul.f32 %v1283, %v1343
        %v1348 = vmul.f32 %v1285, %v1343
        %v1349 = vmul.f32 %v1287, %v1343
        %v1350 = vmul.f32 %v1289, %v1343
        %v1351 = vmul.f32 %v1291, %v1343
        %v1352 = vmul.f32 %v1293, %v1343
        %v1353 = vmul.f32 %v1295, %v1343
        %v1354 = vlaneseq
        %v1355 = vshrl.u32 %v1354, 7
        %v1356 = vsub.s32 0, %v1355
        %v1357 = vrot.slane %v1344, %v1356
        %v1358 = vlaneseq
        %v1359 = vshrl.u32 %v1358, 7
        %v1360 = vsub.s32 0, %v1359
        %v1361 = vrot.slane %v1345, %v1360
        %v1362 = vlaneseq
        %v1363 = vshrl.u32 %v1362, 7
        %v1364 = vsub.s32 0, %v1363
        %v1365 = vrot.slane %v1346, %v1364
        %v1366 = vlaneseq
        %v1367 = vshrl.u32 %v1366, 7
        %v1368 = vsub.s32 0, %v1367
        %v1369 = vrot.slane %v1347, %v1368
        %v1370 = vlaneseq
        %v1371 = vshrl.u32 %v1370, 7
        %v1372 = vsub.s32 0, %v1371
        %v1373 = vrot.slane %v1348, %v1372
        %v1374 = vlaneseq
        %v1375 = vshrl.u32 %v1374, 7
        %v1376 = vsub.s32 0, %v1375
        %v1377 = vrot.slane %v1349, %v1376
        %v1378 = vlaneseq
        %v1379 = vshrl.u32 %v1378, 7
        %v1380 = vsub.s32 0, %v1379
        %v1381 = vrot.slane %v1350, %v1380
        %v1382 = vlaneseq
        %v1383 = vshrl.u32 %v1382, 7
        %v1384 = vsub.s32 0, %v1383
        %v1385 = vrot.slane %v1351, %v1384
        %v1386 = vlaneseq
        %v1387 = vshrl.u32 %v1386, 7
        %v1388 = vsub.s32 0, %v1387
        %v1389 = vrot.slane %v1352, %v1388
        %v1390 = vlaneseq
        %v1391 = vshrl.u32 %v1390, 7
        %v1392 = vsub.s32 0, %v1391
        %v1393 = vrot.slane %v1353, %v1392
        %v1394 = vmul.f32 %v1357, %v816
        %v1395 = vmul.f32 %v1357, %v817
        %v1396 = vmul.f32 %v1361, %v818
        %v1397 = vmul.f32 %v1361, %v819
        %v1398 = vmul.f32 %v1365, %v820
        %v1399 = vmul.f32 %v1365, %v821
        %v1400 = vmul.f32 %v1369, %v822
        %v1401 = vmul.f32 %v1369, %v823
        %v1402 = vmul.f32 %v1373, %v824
        %v1403 = vmul.f32 %v1373, %v825
        %v1404 = vmul.f32 %v1377, %v826
        %v1405 = vmul.f32 %v1377, %v827
        %v1406 = vmul.f32 %v1381, %v828
        %v1407 = vmul.f32 %v1381, %v829
        %v1408 = vmul.f32 %v1385, %v830
        %v1409 = vmul.f32 %v1385, %v831
        %v1410 = vmul.f32 %v1389, %v832
        %v1411 = vmul.f32 %v1389, %v833
        %v1412 = vmul.f32 %v1393, %v834
        %v1413 = vmul.f32 %v1393, %v835
        %1414 = vadd.xlane.f32.xlu0 %v1394
        %v1415 = vpop.xlane.xlu0 %1414
        %1416 = vadd.xlane.f32.xlu0 %v1395
        %v1417 = vpop.xlane.xlu0 %1416
        %1418 = vadd.xlane.f32.xlu0 %v1396
        %v1419 = vpop.xlane.xlu0 %1418
        %1420 = vadd.xlane.f32.xlu0 %v1397
        %v1421 = vpop.xlane.xlu0 %1420
        %1422 = vadd.xlane.f32.xlu0 %v1398
        %v1423 = vpop.xlane.xlu0 %1422
        %1424 = vadd.xlane.f32.xlu0 %v1399
        %v1425 = vpop.xlane.xlu0 %1424
        %1426 = vadd.xlane.f32.xlu0 %v1400
        %v1427 = vpop.xlane.xlu0 %1426
        %1428 = vadd.xlane.f32.xlu0 %v1401
        %v1429 = vpop.xlane.xlu0 %1428
        %1430 = vadd.xlane.f32.xlu0 %v1402
        %v1431 = vpop.xlane.xlu0 %1430
        %1432 = vadd.xlane.f32.xlu0 %v1403
        %v1433 = vpop.xlane.xlu0 %1432
        %1434 = vadd.xlane.f32.xlu0 %v1404
        %v1435 = vpop.xlane.xlu0 %1434
        %1436 = vadd.xlane.f32.xlu0 %v1405
        %v1437 = vpop.xlane.xlu0 %1436
        %1438 = vadd.xlane.f32.xlu0 %v1406
        %v1439 = vpop.xlane.xlu0 %1438
        %1440 = vadd.xlane.f32.xlu0 %v1407
        %v1441 = vpop.xlane.xlu0 %1440
        %1442 = vadd.xlane.f32.xlu0 %v1408
        %v1443 = vpop.xlane.xlu0 %1442
        %1444 = vadd.xlane.f32.xlu0 %v1409
        %v1445 = vpop.xlane.xlu0 %1444
        %1446 = vadd.xlane.f32.xlu0 %v1410
        %v1447 = vpop.xlane.xlu0 %1446
        %1448 = vadd.xlane.f32.xlu0 %v1411
        %v1449 = vpop.xlane.xlu0 %1448
        %1450 = vadd.xlane.f32.xlu0 %v1412
        %v1451 = vpop.xlane.xlu0 %1450
        %1452 = vadd.xlane.f32.xlu0 %v1413
        %v1453 = vpop.xlane.xlu0 %1452
        %v1454 = vadd.f32 %v1415, %v232
        %v1455 = vadd.f32 %v1417, %v236
        %v1456 = vadd.f32 %v1419, %v243
        %v1457 = vadd.f32 %v1421, %v247
        %v1458 = vadd.f32 %v1423, %v254
        %v1459 = vadd.f32 %v1425, %v258
        %v1460 = vadd.f32 %v1427, %v265
        %v1461 = vadd.f32 %v1429, %v269
        %v1462 = vadd.f32 %v1431, %v276
        %v1463 = vadd.f32 %v1433, %v280
        %v1464 = vadd.f32 %v1435, %v287
        %v1465 = vadd.f32 %v1437, %v291
        %v1466 = vadd.f32 %v1439, %v298
        %v1467 = vadd.f32 %v1441, %v302
        %v1468 = vadd.f32 %v1443, %v309
        %v1469 = vadd.f32 %v1445, %v313
        %v1470 = vadd.f32 %v1447, %v320
        %v1471 = vadd.f32 %v1449, %v324
        %v1472 = vadd.f32 %v1451, %v331
        %v1473 = vadd.f32 %v1453, %v335
        %v1474 = vmul.f32 %v1454, %v1454
        %v1475 = vmul.f32 %v1455, %v1455
        %v1476 = vmul.f32 %v1456, %v1456
        %v1477 = vmul.f32 %v1457, %v1457
        %v1478 = vmul.f32 %v1458, %v1458
        %v1479 = vmul.f32 %v1459, %v1459
        %v1480 = vmul.f32 %v1460, %v1460
        %v1481 = vmul.f32 %v1461, %v1461
        %v1482 = vmul.f32 %v1462, %v1462
        %v1483 = vmul.f32 %v1463, %v1463
        %v1484 = vmul.f32 %v1464, %v1464
        %v1485 = vmul.f32 %v1465, %v1465
        %v1486 = vmul.f32 %v1466, %v1466
        %v1487 = vmul.f32 %v1467, %v1467
        %v1488 = vmul.f32 %v1468, %v1468
        %v1489 = vmul.f32 %v1469, %v1469
        %v1490 = vmul.f32 %v1470, %v1470
        %v1491 = vmul.f32 %v1471, %v1471
        %v1492 = vmul.f32 %v1472, %v1472
        %v1493 = vmul.f32 %v1473, %v1473
        %v1494 = vadd.f32 %v1474, %v1475
        %v1495 = vrot.slane %v1494, 4
        %v1496 = vadd.f32 %v1494, %v1495
        %v1497 = vrot.slane %v1496, 2
        %v1498 = vadd.f32 %v1496, %v1497
        %v1499 = vrot.slane %v1498, 1
        %v1500 = vadd.f32 %v1498, %v1499
        %v1501 = vadd.f32 %v1476, %v1477
        %v1502 = vrot.slane %v1501, 4
        %v1503 = vadd.f32 %v1501, %v1502
        %v1504 = vrot.slane %v1503, 2
        %v1505 = vadd.f32 %v1503, %v1504
        %v1506 = vrot.slane %v1505, 1
        %v1507 = vadd.f32 %v1505, %v1506
        %v1508 = vadd.f32 %v1478, %v1479
        %v1509 = vrot.slane %v1508, 4
        %v1510 = vadd.f32 %v1508, %v1509
        %v1511 = vrot.slane %v1510, 2
        %v1512 = vadd.f32 %v1510, %v1511
        %v1513 = vrot.slane %v1512, 1
        %v1514 = vadd.f32 %v1512, %v1513
        %v1515 = vadd.f32 %v1480, %v1481
        %v1516 = vrot.slane %v1515, 4
        %v1517 = vadd.f32 %v1515, %v1516
        %v1518 = vrot.slane %v1517, 2
        %v1519 = vadd.f32 %v1517, %v1518
        %v1520 = vrot.slane %v1519, 1
        %v1521 = vadd.f32 %v1519, %v1520
        %v1522 = vadd.f32 %v1482, %v1483
        %v1523 = vrot.slane %v1522, 4
        %v1524 = vadd.f32 %v1522, %v1523
        %v1525 = vrot.slane %v1524, 2
        %v1526 = vadd.f32 %v1524, %v1525
        %v1527 = vrot.slane %v1526, 1
        %v1528 = vadd.f32 %v1526, %v1527
        %v1529 = vadd.f32 %v1484, %v1485
        %v1530 = vrot.slane %v1529, 4
        %v1531 = vadd.f32 %v1529, %v1530
        %v1532 = vrot.slane %v1531, 2
        %v1533 = vadd.f32 %v1531, %v1532
        %v1534 = vrot.slane %v1533, 1
        %v1535 = vadd.f32 %v1533, %v1534
        %v1536 = vadd.f32 %v1486, %v1487
        %v1537 = vrot.slane %v1536, 4
        %v1538 = vadd.f32 %v1536, %v1537
        %v1539 = vrot.slane %v1538, 2
        %v1540 = vadd.f32 %v1538, %v1539
        %v1541 = vrot.slane %v1540, 1
        %v1542 = vadd.f32 %v1540, %v1541
        %v1543 = vadd.f32 %v1488, %v1489
        %v1544 = vrot.slane %v1543, 4
        %v1545 = vadd.f32 %v1543, %v1544
        %v1546 = vrot.slane %v1545, 2
        %v1547 = vadd.f32 %v1545, %v1546
        %v1548 = vrot.slane %v1547, 1
        %v1549 = vadd.f32 %v1547, %v1548
        %v1550 = vadd.f32 %v1490, %v1491
        %v1551 = vrot.slane %v1550, 4
        %v1552 = vadd.f32 %v1550, %v1551
        %v1553 = vrot.slane %v1552, 2
        %v1554 = vadd.f32 %v1552, %v1553
        %v1555 = vrot.slane %v1554, 1
        %v1556 = vadd.f32 %v1554, %v1555
        %v1557 = vadd.f32 %v1492, %v1493
        %v1558 = vrot.slane %v1557, 4
        %v1559 = vadd.f32 %v1557, %v1558
        %v1560 = vrot.slane %v1559, 2
        %v1561 = vadd.f32 %v1559, %v1560
        %v1562 = vrot.slane %v1561, 1
        %v1563 = vadd.f32 %v1561, %v1562
        %v1564 = vmul.f32 %v1454, %v1500
        %v1565 = vmul.f32 %v1455, %v1500
        %v1566 = vmul.f32 %v1456, %v1507
        %v1567 = vmul.f32 %v1457, %v1507
        %v1568 = vmul.f32 %v1458, %v1514
        %v1569 = vmul.f32 %v1459, %v1514
        %v1570 = vmul.f32 %v1460, %v1521
        %v1571 = vmul.f32 %v1461, %v1521
        %v1572 = vmul.f32 %v1462, %v1528
        %v1573 = vmul.f32 %v1463, %v1528
        %v1574 = vmul.f32 %v1464, %v1535
        %v1575 = vmul.f32 %v1465, %v1535
        %v1576 = vmul.f32 %v1466, %v1542
        %v1577 = vmul.f32 %v1467, %v1542
        %v1578 = vmul.f32 %v1468, %v1549
        %v1579 = vmul.f32 %v1469, %v1549
        %v1580 = vmul.f32 %v1470, %v1556
        %v1581 = vmul.f32 %v1471, %v1556
        %v1582 = vmul.f32 %v1472, %v1563
        %v1583 = vmul.f32 %v1473, %v1563
        %v1584 = vadd.f32 %v1500, 1.0
        %v1585 = vadd.f32 %v1507, 1.0
        %v1586 = vadd.f32 %v1514, 1.0
        %v1587 = vadd.f32 %v1521, 1.0
        %v1588 = vadd.f32 %v1528, 1.0
        %v1589 = vadd.f32 %v1535, 1.0
        %v1590 = vadd.f32 %v1542, 1.0
        %v1591 = vadd.f32 %v1549, 1.0
        %v1592 = vadd.f32 %v1556, 1.0
        %v1593 = vadd.f32 %v1563, 1.0
        %v1594 = vrsqrt.pop %v1500
        %v1595 = vmul.f32 %v1500, %v1594
        %vm1596 = vcmp.eq.f32.partialorder %v1500, inf
        %v1597 = vsel %vm1596, %v1500, %v1595
        %vm1598 = vcmp.eq.f32.partialorder %v1500, 0.0
        %v1599 = vand.u32 %v1500, 2147483648
        %v1600 = vsel %vm1598, %v1599, %v1597
        %v1601 = vrsqrt.pop %v1507
        %v1602 = vmul.f32 %v1507, %v1601
        %vm1603 = vcmp.eq.f32.partialorder %v1507, inf
        %v1604 = vsel %vm1603, %v1507, %v1602
        %vm1605 = vcmp.eq.f32.partialorder %v1507, 0.0
        %v1606 = vand.u32 %v1507, 2147483648
        %v1607 = vsel %vm1605, %v1606, %v1604
        %v1608 = vrsqrt.pop %v1514
        %v1609 = vmul.f32 %v1514, %v1608
        %vm1610 = vcmp.eq.f32.partialorder %v1514, inf
        %v1611 = vsel %vm1610, %v1514, %v1609
        %vm1612 = vcmp.eq.f32.partialorder %v1514, 0.0
        %v1613 = vand.u32 %v1514, 2147483648
        %v1614 = vsel %vm1612, %v1613, %v1611
        %v1615 = vrsqrt.pop %v1521
        %v1616 = vmul.f32 %v1521, %v1615
        %vm1617 = vcmp.eq.f32.partialorder %v1521, inf
        %v1618 = vsel %vm1617, %v1521, %v1616
        %vm1619 = vcmp.eq.f32.partialorder %v1521, 0.0
        %v1620 = vand.u32 %v1521, 2147483648
        %v1621 = vsel %vm1619, %v1620, %v1618
        %v1622 = vrsqrt.pop %v1528
        %v1623 = vmul.f32 %v1528, %v1622
        %vm1624 = vcmp.eq.f32.partialorder %v1528, inf
        %v1625 = vsel %vm1624, %v1528, %v1623
        %vm1626 = vcmp.eq.f32.partialorder %v1528, 0.0
        %v1627 = vand.u32 %v1528, 2147483648
        %v1628 = vsel %vm1626, %v1627, %v1625
        %v1629 = vrsqrt.pop %v1535
        %v1630 = vmul.f32 %v1535, %v1629
        %vm1631 = vcmp.eq.f32.partialorder %v1535, inf
        %v1632 = vsel %vm1631, %v1535, %v1630
        %vm1633 = vcmp.eq.f32.partialorder %v1535, 0.0
        %v1634 = vand.u32 %v1535, 2147483648
        %v1635 = vsel %vm1633, %v1634, %v1632
        %v1636 = vrsqrt.pop %v1542
        %v1637 = vmul.f32 %v1542, %v1636
        %vm1638 = vcmp.eq.f32.partialorder %v1542, inf
        %v1639 = vsel %vm1638, %v1542, %v1637
        %vm1640 = vcmp.eq.f32.partialorder %v1542, 0.0
        %v1641 = vand.u32 %v1542, 2147483648
        %v1642 = vsel %vm1640, %v1641, %v1639
        %v1643 = vrsqrt.pop %v1549
        %v1644 = vmul.f32 %v1549, %v1643
        %vm1645 = vcmp.eq.f32.partialorder %v1549, inf
        %v1646 = vsel %vm1645, %v1549, %v1644
        %vm1647 = vcmp.eq.f32.partialorder %v1549, 0.0
        %v1648 = vand.u32 %v1549, 2147483648
        %v1649 = vsel %vm1647, %v1648, %v1646
        %v1650 = vrsqrt.pop %v1556
        %v1651 = vmul.f32 %v1556, %v1650
        %vm1652 = vcmp.eq.f32.partialorder %v1556, inf
        %v1653 = vsel %vm1652, %v1556, %v1651
        %vm1654 = vcmp.eq.f32.partialorder %v1556, 0.0
        %v1655 = vand.u32 %v1556, 2147483648
        %v1656 = vsel %vm1654, %v1655, %v1653
        %v1657 = vrsqrt.pop %v1563
        %v1658 = vmul.f32 %v1563, %v1657
        %vm1659 = vcmp.eq.f32.partialorder %v1563, inf
        %v1660 = vsel %vm1659, %v1563, %v1658
        %vm1661 = vcmp.eq.f32.partialorder %v1563, 0.0
        %v1662 = vand.u32 %v1563, 2147483648
        %v1663 = vsel %vm1661, %v1662, %v1660
        %v1664 = vmul.f32 %v1584, %v1600
        %v1665 = vmul.f32 %v1585, %v1607
        %v1666 = vmul.f32 %v1586, %v1614
        %v1667 = vmul.f32 %v1587, %v1621
        %v1668 = vmul.f32 %v1588, %v1628
        %v1669 = vmul.f32 %v1589, %v1635
        %v1670 = vmul.f32 %v1590, %v1642
        %v1671 = vmul.f32 %v1591, %v1649
        %v1672 = vmul.f32 %v1592, %v1656
        %v1673 = vmul.f32 %v1593, %v1663
        %v1674 = vrcp.pop %v1664
        %v1675 = vmul.f32 %v1564, %v1674
        %v1676 = vmul.f32 %v1565, %v1674
        %v1677 = vrcp.pop %v1665
        %v1678 = vmul.f32 %v1566, %v1677
        %v1679 = vmul.f32 %v1567, %v1677
        %v1680 = vrcp.pop %v1666
        %v1681 = vmul.f32 %v1568, %v1680
        %v1682 = vmul.f32 %v1569, %v1680
        %v1683 = vrcp.pop %v1667
        %v1684 = vmul.f32 %v1570, %v1683
        %v1685 = vmul.f32 %v1571, %v1683
        %v1686 = vrcp.pop %v1668
        %v1687 = vmul.f32 %v1572, %v1686
        %v1688 = vmul.f32 %v1573, %v1686
        %v1689 = vrcp.pop %v1669
        %v1690 = vmul.f32 %v1574, %v1689
        %v1691 = vmul.f32 %v1575, %v1689
        %v1692 = vrcp.pop %v1670
        %v1693 = vmul.f32 %v1576, %v1692
        %v1694 = vmul.f32 %v1577, %v1692
        %v1695 = vrcp.pop %v1671
        %v1696 = vmul.f32 %v1578, %v1695
        %v1697 = vmul.f32 %v1579, %v1695
        %v1698 = vrcp.pop %v1672
        %v1699 = vmul.f32 %v1580, %v1698
        %v1700 = vmul.f32 %v1581, %v1698
        %v1701 = vrcp.pop %v1673
        %v1702 = vmul.f32 %v1582, %v1701
        %v1703 = vmul.f32 %v1583, %v1701
        %v1704 = vmul.f32 %v816, %v1675
        %v1705 = vmul.f32 %v817, %v1676
        %v1706 = vmul.f32 %v818, %v1678
        %v1707 = vmul.f32 %v819, %v1679
        %v1708 = vmul.f32 %v820, %v1681
        %v1709 = vmul.f32 %v821, %v1682
        %v1710 = vmul.f32 %v822, %v1684
        %v1711 = vmul.f32 %v823, %v1685
        %v1712 = vmul.f32 %v824, %v1687
        %v1713 = vmul.f32 %v825, %v1688
        %v1714 = vmul.f32 %v826, %v1690
        %v1715 = vmul.f32 %v827, %v1691
        %v1716 = vmul.f32 %v828, %v1693
        %v1717 = vmul.f32 %v829, %v1694
        %v1718 = vmul.f32 %v830, %v1696
        %v1719 = vmul.f32 %v831, %v1697
        %v1720 = vmul.f32 %v832, %v1699
        %v1721 = vmul.f32 %v833, %v1700
        %v1722 = vmul.f32 %v834, %v1702
        %v1723 = vmul.f32 %v835, %v1703
        %v1724 = vadd.f32 %v1704, %v1705
        %v1725 = vrot.slane %v1724, 4
        %v1726 = vadd.f32 %v1724, %v1725
        %v1727 = vrot.slane %v1726, 2
        %v1728 = vadd.f32 %v1726, %v1727
        %v1729 = vrot.slane %v1728, 1
        %v1730 = vadd.f32 %v1728, %v1729
        %v1731 = vadd.f32 %v1706, %v1707
        %v1732 = vrot.slane %v1731, 4
        %v1733 = vadd.f32 %v1731, %v1732
        %v1734 = vrot.slane %v1733, 2
        %v1735 = vadd.f32 %v1733, %v1734
        %v1736 = vrot.slane %v1735, 1
        %v1737 = vadd.f32 %v1735, %v1736
        %v1738 = vadd.f32 %v1708, %v1709
        %v1739 = vrot.slane %v1738, 4
        %v1740 = vadd.f32 %v1738, %v1739
        %v1741 = vrot.slane %v1740, 2
        %v1742 = vadd.f32 %v1740, %v1741
        %v1743 = vrot.slane %v1742, 1
        %v1744 = vadd.f32 %v1742, %v1743
        %v1745 = vadd.f32 %v1710, %v1711
        %v1746 = vrot.slane %v1745, 4
        %v1747 = vadd.f32 %v1745, %v1746
        %v1748 = vrot.slane %v1747, 2
        %v1749 = vadd.f32 %v1747, %v1748
        %v1750 = vrot.slane %v1749, 1
        %v1751 = vadd.f32 %v1749, %v1750
        %v1752 = vadd.f32 %v1712, %v1713
        %v1753 = vrot.slane %v1752, 4
        %v1754 = vadd.f32 %v1752, %v1753
        %v1755 = vrot.slane %v1754, 2
        %v1756 = vadd.f32 %v1754, %v1755
        %v1757 = vrot.slane %v1756, 1
        %v1758 = vadd.f32 %v1756, %v1757
        %v1759 = vadd.f32 %v1714, %v1715
        %v1760 = vrot.slane %v1759, 4
        %v1761 = vadd.f32 %v1759, %v1760
        %v1762 = vrot.slane %v1761, 2
        %v1763 = vadd.f32 %v1761, %v1762
        %v1764 = vrot.slane %v1763, 1
        %v1765 = vadd.f32 %v1763, %v1764
        %v1766 = vadd.f32 %v1716, %v1717
        %v1767 = vrot.slane %v1766, 4
        %v1768 = vadd.f32 %v1766, %v1767
        %v1769 = vrot.slane %v1768, 2
        %v1770 = vadd.f32 %v1768, %v1769
        %v1771 = vrot.slane %v1770, 1
        %v1772 = vadd.f32 %v1770, %v1771
        %v1773 = vadd.f32 %v1718, %v1719
        %v1774 = vrot.slane %v1773, 4
        %v1775 = vadd.f32 %v1773, %v1774
        %v1776 = vrot.slane %v1775, 2
        %v1777 = vadd.f32 %v1775, %v1776
        %v1778 = vrot.slane %v1777, 1
        %v1779 = vadd.f32 %v1777, %v1778
        %v1780 = vadd.f32 %v1720, %v1721
        %v1781 = vrot.slane %v1780, 4
        %v1782 = vadd.f32 %v1780, %v1781
        %v1783 = vrot.slane %v1782, 2
        %v1784 = vadd.f32 %v1782, %v1783
        %v1785 = vrot.slane %v1784, 1
        %v1786 = vadd.f32 %v1784, %v1785
        %v1787 = vadd.f32 %v1722, %v1723
        %v1788 = vrot.slane %v1787, 4
        %v1789 = vadd.f32 %v1787, %v1788
        %v1790 = vrot.slane %v1789, 2
        %v1791 = vadd.f32 %v1789, %v1790
        %v1792 = vrot.slane %v1791, 1
        %v1793 = vadd.f32 %v1791, %v1792
        %v1794 = vadd.f32 %v1247, %v1730
        %v1795 = vadd.f32 %v1248, %v1737
        %v1796 = vadd.f32 %v1249, %v1744
        %v1797 = vadd.f32 %v1250, %v1751
        %v1798 = vadd.f32 %v1251, %v1758
        %v1799 = vadd.f32 %v1252, %v1765
        %v1800 = vadd.f32 %v1253, %v1772
        %v1801 = vadd.f32 %v1254, %v1779
        %v1802 = vadd.f32 %v1255, %v1786
        %v1803 = vadd.f32 %v1256, %v1793
        %v1804 = vmax.f32 %v1794, %v1798
        %v1805 = vmax.f32 %v1795, %v1799
        %v1806 = vmax.f32 %v1796, %v1800
        %v1807 = vmax.f32 %v1797, %v1801
        %v1808 = vmax.f32 %v1804, %v1802
        %v1809 = vmax.f32 %v1805, %v1803
        %v1810 = vmax.f32 %v1808, %v1809
        %v1811 = vmax.f32 %v1806, %v1807
        %v1812 = vmax.f32 %v1810, %v1811
        %v1813 = vsub.f32 %v1794, %v1812
        %v1814 = vsub.f32 %v1795, %v1812
        %v1815 = vsub.f32 %v1796, %v1812
        %v1816 = vsub.f32 %v1797, %v1812
        %v1817 = vsub.f32 %v1798, %v1812
        %v1818 = vsub.f32 %v1799, %v1812
        %v1819 = vsub.f32 %v1800, %v1812
        %v1820 = vsub.f32 %v1801, %v1812
        %v1821 = vsub.f32 %v1802, %v1812
        %v1822 = vsub.f32 %v1803, %v1812
        %v1823 = vmul.f32 %v1813, 1.442695
        %v1824 = vpow.pop %v1823
        %v1825 = vmul.f32 %v1814, 1.442695
        %v1826 = vpow.pop %v1825
        %v1827 = vmul.f32 %v1815, 1.442695
        %v1828 = vpow.pop %v1827
        %v1829 = vmul.f32 %v1816, 1.442695
        %v1830 = vpow.pop %v1829
        %v1831 = vmul.f32 %v1817, 1.442695
        %v1832 = vpow.pop %v1831
        %v1833 = vmul.f32 %v1818, 1.442695
        %v1834 = vpow.pop %v1833
        %v1835 = vmul.f32 %v1819, 1.442695
        %v1836 = vpow.pop %v1835
        %v1837 = vmul.f32 %v1820, 1.442695
        %v1838 = vpow.pop %v1837
        %v1839 = vmul.f32 %v1821, 1.442695
        %v1840 = vpow.pop %v1839
        %v1841 = vmul.f32 %v1822, 1.442695
        %v1842 = vpow.pop %v1841
        %v1853 = vrot.slane %v1826, 7
        %v1854 = vsel %vm1307, %v1853, %v1824
        %v1855 = vrot.slane %v1828, 6
        %v1856 = vsel %vm1310, %v1855, %v1854
        %v1857 = vrot.slane %v1830, 5
        %v1858 = vsel %vm1313, %v1857, %v1856
        %v1859 = vrot.slane %v1832, 4
        %v1860 = vsel %vm1316, %v1859, %v1858
        %v1861 = vrot.slane %v1834, 3
        %v1862 = vsel %vm1319, %v1861, %v1860
        %v1863 = vrot.slane %v1836, 2
        %v1864 = vsel %vm1322, %v1863, %v1862
        %v1865 = vrot.slane %v1838, 1
        %v1866 = vsel %vm1325, %v1865, %v1864
        %v1867 = vrot.slane %v1842, 7
        %v1868 = vsel %vm1307, %v1867, %v1840
        %v1871 = vsel %vm836, %v1868, 0.0
        %v1872 = vadd.f32 %v1866, %v1871
        %v1873 = vrot.slane %v1872, 4
        %v1874 = vadd.f32 %v1872, %v1873
        %v1875 = vrot.slane %v1874, 2
        %v1876 = vadd.f32 %v1874, %v1875
        %v1877 = vrot.slane %v1876, 1
        %v1878 = vadd.f32 %v1876, %v1877
        %v1879 = vlaneseq
        %v1880 = vshrl.u32 %v1879, 7
        %v1881 = vsub.s32 0, %v1880
        %v1882 = vrot.slane %v1878, %v1881
        %v1883 = vrcp.pop %v1882
        %v1884 = vmul.f32 %v1824, %v1883
        %v1885 = vmul.f32 %v1826, %v1883
        %v1886 = vmul.f32 %v1828, %v1883
        %v1887 = vmul.f32 %v1830, %v1883
        %v1888 = vmul.f32 %v1832, %v1883
        %v1889 = vmul.f32 %v1834, %v1883
        %v1890 = vmul.f32 %v1836, %v1883
        %v1891 = vmul.f32 %v1838, %v1883
        %v1892 = vmul.f32 %v1840, %v1883
        %v1893 = vmul.f32 %v1842, %v1883
        %v1894 = vlaneseq
        %v1895 = vshrl.u32 %v1894, 7
        %v1896 = vsub.s32 0, %v1895
        %v1897 = vrot.slane %v1884, %v1896
        %v1898 = vlaneseq
        %v1899 = vshrl.u32 %v1898, 7
        %v1900 = vsub.s32 0, %v1899
        %v1901 = vrot.slane %v1885, %v1900
        %v1902 = vlaneseq
        %v1903 = vshrl.u32 %v1902, 7
        %v1904 = vsub.s32 0, %v1903
        %v1905 = vrot.slane %v1886, %v1904
        %v1906 = vlaneseq
        %v1907 = vshrl.u32 %v1906, 7
        %v1908 = vsub.s32 0, %v1907
        %v1909 = vrot.slane %v1887, %v1908
        %v1910 = vlaneseq
        %v1911 = vshrl.u32 %v1910, 7
        %v1912 = vsub.s32 0, %v1911
        %v1913 = vrot.slane %v1888, %v1912
        %v1914 = vlaneseq
        %v1915 = vshrl.u32 %v1914, 7
        %v1916 = vsub.s32 0, %v1915
        %v1917 = vrot.slane %v1889, %v1916
        %v1918 = vlaneseq
        %v1919 = vshrl.u32 %v1918, 7
        %v1920 = vsub.s32 0, %v1919
        %v1921 = vrot.slane %v1890, %v1920
        %v1922 = vlaneseq
        %v1923 = vshrl.u32 %v1922, 7
        %v1924 = vsub.s32 0, %v1923
        %v1925 = vrot.slane %v1891, %v1924
        %v1926 = vlaneseq
        %v1927 = vshrl.u32 %v1926, 7
        %v1928 = vsub.s32 0, %v1927
        %v1929 = vrot.slane %v1892, %v1928
        %v1930 = vlaneseq
        %v1931 = vshrl.u32 %v1930, 7
        %v1932 = vsub.s32 0, %v1931
        %v1933 = vrot.slane %v1893, %v1932
        %v1934 = vmul.f32 %v1897, %v816
        %v1935 = vmul.f32 %v1897, %v817
        %v1936 = vmul.f32 %v1901, %v818
        %v1937 = vmul.f32 %v1901, %v819
        %v1938 = vmul.f32 %v1905, %v820
        %v1939 = vmul.f32 %v1905, %v821
        %v1940 = vmul.f32 %v1909, %v822
        %v1941 = vmul.f32 %v1909, %v823
        %v1942 = vmul.f32 %v1913, %v824
        %v1943 = vmul.f32 %v1913, %v825
        %v1944 = vmul.f32 %v1917, %v826
        %v1945 = vmul.f32 %v1917, %v827
        %v1946 = vmul.f32 %v1921, %v828
        %v1947 = vmul.f32 %v1921, %v829
        %v1948 = vmul.f32 %v1925, %v830
        %v1949 = vmul.f32 %v1925, %v831
        %v1950 = vmul.f32 %v1929, %v832
        %v1951 = vmul.f32 %v1929, %v833
        %v1952 = vmul.f32 %v1933, %v834
        %v1953 = vmul.f32 %v1933, %v835
        %1954 = vadd.xlane.f32.xlu0 %v1934
        %v1955 = vpop.xlane.xlu0 %1954
        %1956 = vadd.xlane.f32.xlu0 %v1935
        %v1957 = vpop.xlane.xlu0 %1956
        %1958 = vadd.xlane.f32.xlu0 %v1936
        %v1959 = vpop.xlane.xlu0 %1958
        %1960 = vadd.xlane.f32.xlu0 %v1937
        %v1961 = vpop.xlane.xlu0 %1960
        %1962 = vadd.xlane.f32.xlu0 %v1938
        %v1963 = vpop.xlane.xlu0 %1962
        %1964 = vadd.xlane.f32.xlu0 %v1939
        %v1965 = vpop.xlane.xlu0 %1964
        %1966 = vadd.xlane.f32.xlu0 %v1940
        %v1967 = vpop.xlane.xlu0 %1966
        %1968 = vadd.xlane.f32.xlu0 %v1941
        %v1969 = vpop.xlane.xlu0 %1968
        %1970 = vadd.xlane.f32.xlu0 %v1942
        %v1971 = vpop.xlane.xlu0 %1970
        %1972 = vadd.xlane.f32.xlu0 %v1943
        %v1973 = vpop.xlane.xlu0 %1972
        %1974 = vadd.xlane.f32.xlu0 %v1944
        %v1975 = vpop.xlane.xlu0 %1974
        %1976 = vadd.xlane.f32.xlu0 %v1945
        %v1977 = vpop.xlane.xlu0 %1976
        %1978 = vadd.xlane.f32.xlu0 %v1946
        %v1979 = vpop.xlane.xlu0 %1978
        %1980 = vadd.xlane.f32.xlu0 %v1947
        %v1981 = vpop.xlane.xlu0 %1980
        %1982 = vadd.xlane.f32.xlu0 %v1948
        %v1983 = vpop.xlane.xlu0 %1982
        %1984 = vadd.xlane.f32.xlu0 %v1949
        %v1985 = vpop.xlane.xlu0 %1984
        %1986 = vadd.xlane.f32.xlu0 %v1950
        %v1987 = vpop.xlane.xlu0 %1986
        %1988 = vadd.xlane.f32.xlu0 %v1951
        %v1989 = vpop.xlane.xlu0 %1988
        %1990 = vadd.xlane.f32.xlu0 %v1952
        %v1991 = vpop.xlane.xlu0 %1990
        %1992 = vadd.xlane.f32.xlu0 %v1953
        %v1993 = vpop.xlane.xlu0 %1992
        %v1996 = vlaneseq
        %v1997 = vshrl.u32 %v1996, 7
        %v1998 = vsub.s32 0, %v1997
        %v1999 = vrot.slane %v224, %v1998
        %2001 = vbcast.lane.b32.xlu0 %v1999, 256
        %v2002 = vpop.permute.xlu0 %2001
        %s2004 = sor.u32 256, 8
        %2005 = vbcast.lane.b32.xlu0 %v1999, %s2004
        %v2006 = vpop.permute.xlu0 %2005
        %v2007 = vlaneseq
        %v2008 = vshrl.u32 %v2007, 7
        %v2009 = vsub.s32 1, %v2008
        %v2010 = vrot.slane %v224, %v2009
        %2012 = vbcast.lane.b32.xlu0 %v2010, 256
        %v2013 = vpop.permute.xlu0 %2012
        %s2015 = sor.u32 256, 8
        %2016 = vbcast.lane.b32.xlu0 %v2010, %s2015
        %v2017 = vpop.permute.xlu0 %2016
        %v2018 = vlaneseq
        %v2019 = vshrl.u32 %v2018, 7
        %v2020 = vsub.s32 2, %v2019
        %v2021 = vrot.slane %v224, %v2020
        %2023 = vbcast.lane.b32.xlu0 %v2021, 256
        %v2024 = vpop.permute.xlu0 %2023
        %s2026 = sor.u32 256, 8
        %2027 = vbcast.lane.b32.xlu0 %v2021, %s2026
        %v2028 = vpop.permute.xlu0 %2027
        %v2029 = vlaneseq
        %v2030 = vshrl.u32 %v2029, 7
        %v2031 = vsub.s32 3, %v2030
        %v2032 = vrot.slane %v224, %v2031
        %2034 = vbcast.lane.b32.xlu0 %v2032, 256
        %v2035 = vpop.permute.xlu0 %2034
        %s2037 = sor.u32 256, 8
        %2038 = vbcast.lane.b32.xlu0 %v2032, %s2037
        %v2039 = vpop.permute.xlu0 %2038
        %v2040 = vlaneseq
        %v2041 = vshrl.u32 %v2040, 7
        %v2042 = vsub.s32 4, %v2041
        %v2043 = vrot.slane %v224, %v2042
        %2045 = vbcast.lane.b32.xlu0 %v2043, 256
        %v2046 = vpop.permute.xlu0 %2045
        %s2048 = sor.u32 256, 8
        %2049 = vbcast.lane.b32.xlu0 %v2043, %s2048
        %v2050 = vpop.permute.xlu0 %2049
        %v2051 = vlaneseq
        %v2052 = vshrl.u32 %v2051, 7
        %v2053 = vsub.s32 5, %v2052
        %v2054 = vrot.slane %v224, %v2053
        %2056 = vbcast.lane.b32.xlu0 %v2054, 256
        %v2057 = vpop.permute.xlu0 %2056
        %s2059 = sor.u32 256, 8
        %2060 = vbcast.lane.b32.xlu0 %v2054, %s2059
        %v2061 = vpop.permute.xlu0 %2060
        %v2062 = vlaneseq
        %v2063 = vshrl.u32 %v2062, 7
        %v2064 = vsub.s32 6, %v2063
        %v2065 = vrot.slane %v224, %v2064
        %2067 = vbcast.lane.b32.xlu0 %v2065, 256
        %v2068 = vpop.permute.xlu0 %2067
        %s2070 = sor.u32 256, 8
        %2071 = vbcast.lane.b32.xlu0 %v2065, %s2070
        %v2072 = vpop.permute.xlu0 %2071
        %v2073 = vlaneseq
        %v2074 = vshrl.u32 %v2073, 7
        %v2075 = vsub.s32 7, %v2074
        %v2076 = vrot.slane %v224, %v2075
        %2078 = vbcast.lane.b32.xlu0 %v2076, 256
        %v2079 = vpop.permute.xlu0 %2078
        %s2081 = sor.u32 256, 8
        %2082 = vbcast.lane.b32.xlu0 %v2076, %s2081
        %v2083 = vpop.permute.xlu0 %2082
        %v2084 = vlaneseq
        %v2085 = vshrl.u32 %v2084, 7
        %v2086 = vsub.s32 0, %v2085
        %v2087 = vrot.slane %v225, %v2086
        %2089 = vbcast.lane.b32.xlu0 %v2087, 256
        %v2090 = vpop.permute.xlu0 %2089
        %s2092 = sor.u32 256, 8
        %2093 = vbcast.lane.b32.xlu0 %v2087, %s2092
        %v2094 = vpop.permute.xlu0 %2093
        %v2095 = vlaneseq
        %v2096 = vshrl.u32 %v2095, 7
        %v2097 = vsub.s32 1, %v2096
        %v2098 = vrot.slane %v225, %v2097
        %2100 = vbcast.lane.b32.xlu0 %v2098, 256
        %v2101 = vpop.permute.xlu0 %2100
        %s2103 = sor.u32 256, 8
        %2104 = vbcast.lane.b32.xlu0 %v2098, %s2103
        %v2105 = vpop.permute.xlu0 %2104
        %v2126 = vadd.f32 %v1955, %v2002
        %v2127 = vadd.f32 %v1957, %v2006
        %v2128 = vadd.f32 %v1959, %v2013
        %v2129 = vadd.f32 %v1961, %v2017
        %v2130 = vadd.f32 %v1963, %v2024
        %v2131 = vadd.f32 %v1965, %v2028
        %v2132 = vadd.f32 %v1967, %v2035
        %v2133 = vadd.f32 %v1969, %v2039
        %v2134 = vadd.f32 %v1971, %v2046
        %v2135 = vadd.f32 %v1973, %v2050
        %v2136 = vadd.f32 %v1975, %v2057
        %v2137 = vadd.f32 %v1977, %v2061
        %v2138 = vadd.f32 %v1979, %v2068
        %v2139 = vadd.f32 %v1981, %v2072
        %v2140 = vadd.f32 %v1983, %v2079
        %v2141 = vadd.f32 %v1985, %v2083
        %v2142 = vadd.f32 %v1987, %v2090
        %v2143 = vadd.f32 %v1989, %v2094
        %v2144 = vadd.f32 %v1991, %v2101
        %v2145 = vadd.f32 %v1993, %v2105
        %v2146 = vmul.f32 %v2126, %v2126
        %v2147 = vmul.f32 %v2127, %v2127
        %v2148 = vmul.f32 %v2128, %v2128
        %v2149 = vmul.f32 %v2129, %v2129
        %v2150 = vmul.f32 %v2130, %v2130
        %v2151 = vmul.f32 %v2131, %v2131
        %v2152 = vmul.f32 %v2132, %v2132
        %v2153 = vmul.f32 %v2133, %v2133
        %v2154 = vmul.f32 %v2134, %v2134
        %v2155 = vmul.f32 %v2135, %v2135
        %v2156 = vmul.f32 %v2136, %v2136
        %v2157 = vmul.f32 %v2137, %v2137
        %v2158 = vmul.f32 %v2138, %v2138
        %v2159 = vmul.f32 %v2139, %v2139
        %v2160 = vmul.f32 %v2140, %v2140
        %v2161 = vmul.f32 %v2141, %v2141
        %v2162 = vmul.f32 %v2142, %v2142
        %v2163 = vmul.f32 %v2143, %v2143
        %v2164 = vmul.f32 %v2144, %v2144
        %v2165 = vmul.f32 %v2145, %v2145
        %2186 = vset.pattern.permute.xlu0 0
        %2187 = vperm.xlu0 %2186, %v2146
        %v2188 = vpop.permute.xlu0 %2187
        %2189 = vset.pattern.permute.xlu0 0
        %2190 = vperm.xlu0 %2189, %v2147
        %v2191 = vpop.permute.xlu0 %2190
        %2192 = vset.pattern.permute.xlu0 0
        %2193 = vperm.xlu0 %2192, %v2148
        %v2194 = vpop.permute.xlu0 %2193
        %2195 = vset.pattern.permute.xlu0 0
        %2196 = vperm.xlu0 %2195, %v2149
        %v2197 = vpop.permute.xlu0 %2196
        %2198 = vset.pattern.permute.xlu0 0
        %2199 = vperm.xlu0 %2198, %v2150
        %v2200 = vpop.permute.xlu0 %2199
        %2201 = vset.pattern.permute.xlu0 0
        %2202 = vperm.xlu0 %2201, %v2151
        %v2203 = vpop.permute.xlu0 %2202
        %2204 = vset.pattern.permute.xlu0 0
        %2205 = vperm.xlu0 %2204, %v2152
        %v2206 = vpop.permute.xlu0 %2205
        %2207 = vset.pattern.permute.xlu0 0
        %2208 = vperm.xlu0 %2207, %v2153
        %v2209 = vpop.permute.xlu0 %2208
        %2210 = vset.pattern.permute.xlu0 0
        %2211 = vperm.xlu0 %2210, %v2154
        %v2212 = vpop.permute.xlu0 %2211
        %2213 = vset.pattern.permute.xlu0 0
        %2214 = vperm.xlu0 %2213, %v2155
        %v2215 = vpop.permute.xlu0 %2214
        %2216 = vset.pattern.permute.xlu0 0
        %2217 = vperm.xlu0 %2216, %v2156
        %v2218 = vpop.permute.xlu0 %2217
        %2219 = vset.pattern.permute.xlu0 0
        %2220 = vperm.xlu0 %2219, %v2157
        %v2221 = vpop.permute.xlu0 %2220
        %2222 = vset.pattern.permute.xlu0 0
        %2223 = vperm.xlu0 %2222, %v2158
        %v2224 = vpop.permute.xlu0 %2223
        %2225 = vset.pattern.permute.xlu0 0
        %2226 = vperm.xlu0 %2225, %v2159
        %v2227 = vpop.permute.xlu0 %2226
        %2228 = vset.pattern.permute.xlu0 0
        %2229 = vperm.xlu0 %2228, %v2160
        %v2230 = vpop.permute.xlu0 %2229
        %2231 = vset.pattern.permute.xlu0 0
        %2232 = vperm.xlu0 %2231, %v2161
        %v2233 = vpop.permute.xlu0 %2232
        %2234 = vset.pattern.permute.xlu0 0
        %2235 = vperm.xlu0 %2234, %v2162
        %v2236 = vpop.permute.xlu0 %2235
        %2237 = vset.pattern.permute.xlu0 0
        %2238 = vperm.xlu0 %2237, %v2163
        %v2239 = vpop.permute.xlu0 %2238
        %2240 = vset.pattern.permute.xlu0 0
        %2241 = vperm.xlu0 %2240, %v2164
        %v2242 = vpop.permute.xlu0 %2241
        %2243 = vset.pattern.permute.xlu0 0
        %2244 = vperm.xlu0 %2243, %v2165
        %v2245 = vpop.permute.xlu0 %2244
        %v2246 = vlaneseq
        %v2247 = vand.u32 %v2246, 127
        %v2248 = vlaneseq
        %v2249 = vshrl.u32 %v2248, 7
        %v2250 = vsub.s32 %v2247, %v2249
        %v2251 = vrot.slane %v2188, %v2250
        %v2252 = vadd.s32 %v2247, 4294967288
        %v2253 = vlaneseq
        %v2254 = vshrl.u32 %v2253, 7
        %v2255 = vsub.s32 %v2252, %v2254
        %v2256 = vrot.slane %v2191, %v2255
        %vm2257 = vcmask 130112
        %v2258 = vsel %vm2257, %v2256, %v2251
        %v2259 = vlaneseq
        %v2260 = vshrl.u32 %v2259, 7
        %v2261 = vsub.s32 %v2247, %v2260
        %v2262 = vrot.slane %v2194, %v2261
        %v2263 = vlaneseq
        %v2264 = vshrl.u32 %v2263, 7
        %v2265 = vsub.s32 %v2252, %v2264
        %v2266 = vrot.slane %v2197, %v2265
        %v2267 = vsel %vm2257, %v2266, %v2262
        %v2268 = vlaneseq
        %v2269 = vshrl.u32 %v2268, 7
        %v2270 = vsub.s32 %v2247, %v2269
        %v2271 = vrot.slane %v2200, %v2270
        %v2272 = vlaneseq
        %v2273 = vshrl.u32 %v2272, 7
        %v2274 = vsub.s32 %v2252, %v2273
        %v2275 = vrot.slane %v2203, %v2274
        %v2276 = vsel %vm2257, %v2275, %v2271
        %v2277 = vlaneseq
        %v2278 = vshrl.u32 %v2277, 7
        %v2279 = vsub.s32 %v2247, %v2278
        %v2280 = vrot.slane %v2206, %v2279
        %v2281 = vlaneseq
        %v2282 = vshrl.u32 %v2281, 7
        %v2283 = vsub.s32 %v2252, %v2282
        %v2284 = vrot.slane %v2209, %v2283
        %v2285 = vsel %vm2257, %v2284, %v2280
        %v2286 = vlaneseq
        %v2287 = vshrl.u32 %v2286, 7
        %v2288 = vsub.s32 %v2247, %v2287
        %v2289 = vrot.slane %v2212, %v2288
        %v2290 = vlaneseq
        %v2291 = vshrl.u32 %v2290, 7
        %v2292 = vsub.s32 %v2252, %v2291
        %v2293 = vrot.slane %v2215, %v2292
        %v2294 = vsel %vm2257, %v2293, %v2289
        %v2295 = vlaneseq
        %v2296 = vshrl.u32 %v2295, 7
        %v2297 = vsub.s32 %v2247, %v2296
        %v2298 = vrot.slane %v2218, %v2297
        %v2299 = vlaneseq
        %v2300 = vshrl.u32 %v2299, 7
        %v2301 = vsub.s32 %v2252, %v2300
        %v2302 = vrot.slane %v2221, %v2301
        %v2303 = vsel %vm2257, %v2302, %v2298
        %v2304 = vlaneseq
        %v2305 = vshrl.u32 %v2304, 7
        %v2306 = vsub.s32 %v2247, %v2305
        %v2307 = vrot.slane %v2224, %v2306
        %v2308 = vlaneseq
        %v2309 = vshrl.u32 %v2308, 7
        %v2310 = vsub.s32 %v2252, %v2309
        %v2311 = vrot.slane %v2227, %v2310
        %v2312 = vsel %vm2257, %v2311, %v2307
        %v2313 = vlaneseq
        %v2314 = vshrl.u32 %v2313, 7
        %v2315 = vsub.s32 %v2247, %v2314
        %v2316 = vrot.slane %v2230, %v2315
        %v2317 = vlaneseq
        %v2318 = vshrl.u32 %v2317, 7
        %v2319 = vsub.s32 %v2252, %v2318
        %v2320 = vrot.slane %v2233, %v2319
        %v2321 = vsel %vm2257, %v2320, %v2316
        %v2322 = vlaneseq
        %v2323 = vshrl.u32 %v2322, 7
        %v2324 = vsub.s32 %v2247, %v2323
        %v2325 = vrot.slane %v2236, %v2324
        %v2326 = vlaneseq
        %v2327 = vshrl.u32 %v2326, 7
        %v2328 = vsub.s32 %v2252, %v2327
        %v2329 = vrot.slane %v2239, %v2328
        %v2330 = vsel %vm2257, %v2329, %v2325
        %v2331 = vlaneseq
        %v2332 = vshrl.u32 %v2331, 7
        %v2333 = vsub.s32 %v2247, %v2332
        %v2334 = vrot.slane %v2242, %v2333
        %v2335 = vlaneseq
        %v2336 = vshrl.u32 %v2335, 7
        %v2337 = vsub.s32 %v2252, %v2336
        %v2338 = vrot.slane %v2245, %v2337
        %v2339 = vsel %vm2257, %v2338, %v2334
        %v2340 = vsel %vm1307, %v2267, %v2258
        %v2341 = vsel %vm1310, %v2276, %v2340
        %v2342 = vsel %vm1313, %v2285, %v2341
        %v2343 = vsel %vm1316, %v2294, %v2342
        %v2344 = vsel %vm1319, %v2303, %v2343
        %v2345 = vsel %vm1322, %v2312, %v2344
        %v2346 = vsel %vm1325, %v2321, %v2345
        %v2347 = vsel %vm1307, %v2339, %v2330
        %vm2350 = vcmask 130048
        %v2351 = vsel %vm2350, %v2346, 0.0
        %2352 = vadd.xlane.f32.xlu0 %v2351
        %v2353 = vpop.xlane.xlu0 %2352
        %vm2354 = vcmask 123904
        %v2355 = vsel %vm2354, %v2347, 0.0
        %2356 = vadd.xlane.f32.xlu0 %v2355
        %v2357 = vpop.xlane.xlu0 %2356
        %v2360 = vlaneseq
        %v2361 = vshrl.u32 %v2360, 7
        %v2362 = vsub.s32 0, %v2361
        %v2363 = vrot.slane %v2353, %v2362
        %v2364 = vlaneseq
        %v2365 = vshrl.u32 %v2364, 7
        %v2366 = vsub.s32 1, %v2365
        %v2367 = vrot.slane %v2353, %v2366
        %v2368 = vlaneseq
        %v2369 = vshrl.u32 %v2368, 7
        %v2370 = vsub.s32 2, %v2369
        %v2371 = vrot.slane %v2353, %v2370
        %v2372 = vlaneseq
        %v2373 = vshrl.u32 %v2372, 7
        %v2374 = vsub.s32 3, %v2373
        %v2375 = vrot.slane %v2353, %v2374
        %v2376 = vlaneseq
        %v2377 = vshrl.u32 %v2376, 7
        %v2378 = vsub.s32 4, %v2377
        %v2379 = vrot.slane %v2353, %v2378
        %v2380 = vlaneseq
        %v2381 = vshrl.u32 %v2380, 7
        %v2382 = vsub.s32 5, %v2381
        %v2383 = vrot.slane %v2353, %v2382
        %v2384 = vlaneseq
        %v2385 = vshrl.u32 %v2384, 7
        %v2386 = vsub.s32 6, %v2385
        %v2387 = vrot.slane %v2353, %v2386
        %v2388 = vlaneseq
        %v2389 = vshrl.u32 %v2388, 7
        %v2390 = vsub.s32 7, %v2389
        %v2391 = vrot.slane %v2353, %v2390
        %v2392 = vlaneseq
        %v2393 = vshrl.u32 %v2392, 7
        %v2394 = vsub.s32 0, %v2393
        %v2395 = vrot.slane %v2357, %v2394
        %v2396 = vlaneseq
        %v2397 = vshrl.u32 %v2396, 7
        %v2398 = vsub.s32 1, %v2397
        %v2399 = vrot.slane %v2357, %v2398
        %v2410 = vmul.f32 %v2126, %v2363
        %v2411 = vmul.f32 %v2127, %v2363
        %v2412 = vmul.f32 %v2128, %v2367
        %v2413 = vmul.f32 %v2129, %v2367
        %v2414 = vmul.f32 %v2130, %v2371
        %v2415 = vmul.f32 %v2131, %v2371
        %v2416 = vmul.f32 %v2132, %v2375
        %v2417 = vmul.f32 %v2133, %v2375
        %v2418 = vmul.f32 %v2134, %v2379
        %v2419 = vmul.f32 %v2135, %v2379
        %v2420 = vmul.f32 %v2136, %v2383
        %v2421 = vmul.f32 %v2137, %v2383
        %v2422 = vmul.f32 %v2138, %v2387
        %v2423 = vmul.f32 %v2139, %v2387
        %v2424 = vmul.f32 %v2140, %v2391
        %v2425 = vmul.f32 %v2141, %v2391
        %v2426 = vmul.f32 %v2142, %v2395
        %v2427 = vmul.f32 %v2143, %v2395
        %v2428 = vmul.f32 %v2144, %v2399
        %v2429 = vmul.f32 %v2145, %v2399
        %v2430 = vadd.f32 %v2353, 1.0
        %v2431 = vadd.f32 %v2357, 1.0
        %v2432 = vrsqrt.pop %v2353
        %v2433 = vmul.f32 %v2353, %v2432
        %vm2434 = vcmp.eq.f32.partialorder %v2353, inf
        %v2435 = vsel %vm2434, %v2353, %v2433
        %vm2436 = vcmp.eq.f32.partialorder %v2353, 0.0
        %v2437 = vand.u32 %v2353, 2147483648
        %v2438 = vsel %vm2436, %v2437, %v2435
        %v2439 = vrsqrt.pop %v2357
        %v2440 = vmul.f32 %v2357, %v2439
        %vm2441 = vcmp.eq.f32.partialorder %v2357, inf
        %v2442 = vsel %vm2441, %v2357, %v2440
        %vm2443 = vcmp.eq.f32.partialorder %v2357, 0.0
        %v2444 = vand.u32 %v2357, 2147483648
        %v2445 = vsel %vm2443, %v2444, %v2442
        %v2446 = vmul.f32 %v2430, %v2438
        %v2447 = vmul.f32 %v2431, %v2445
        %v2450 = vlaneseq
        %v2451 = vshrl.u32 %v2450, 7
        %v2452 = vsub.s32 0, %v2451
        %v2453 = vrot.slane %v2446, %v2452
        %v2454 = vlaneseq
        %v2455 = vshrl.u32 %v2454, 7
        %v2456 = vsub.s32 1, %v2455
        %v2457 = vrot.slane %v2446, %v2456
        %v2458 = vlaneseq
        %v2459 = vshrl.u32 %v2458, 7
        %v2460 = vsub.s32 2, %v2459
        %v2461 = vrot.slane %v2446, %v2460
        %v2462 = vlaneseq
        %v2463 = vshrl.u32 %v2462, 7
        %v2464 = vsub.s32 3, %v2463
        %v2465 = vrot.slane %v2446, %v2464
        %v2466 = vlaneseq
        %v2467 = vshrl.u32 %v2466, 7
        %v2468 = vsub.s32 4, %v2467
        %v2469 = vrot.slane %v2446, %v2468
        %v2470 = vlaneseq
        %v2471 = vshrl.u32 %v2470, 7
        %v2472 = vsub.s32 5, %v2471
        %v2473 = vrot.slane %v2446, %v2472
        %v2474 = vlaneseq
        %v2475 = vshrl.u32 %v2474, 7
        %v2476 = vsub.s32 6, %v2475
        %v2477 = vrot.slane %v2446, %v2476
        %v2478 = vlaneseq
        %v2479 = vshrl.u32 %v2478, 7
        %v2480 = vsub.s32 7, %v2479
        %v2481 = vrot.slane %v2446, %v2480
        %v2482 = vlaneseq
        %v2483 = vshrl.u32 %v2482, 7
        %v2484 = vsub.s32 0, %v2483
        %v2485 = vrot.slane %v2447, %v2484
        %v2486 = vlaneseq
        %v2487 = vshrl.u32 %v2486, 7
        %v2488 = vsub.s32 1, %v2487
        %v2489 = vrot.slane %v2447, %v2488
        %v2500 = vrcp.pop %v2453
        %v2501 = vmul.f32 %v2410, %v2500
        %v2502 = vmul.f32 %v2411, %v2500
        %v2503 = vrcp.pop %v2457
        %v2504 = vmul.f32 %v2412, %v2503
        %v2505 = vmul.f32 %v2413, %v2503
        %v2506 = vrcp.pop %v2461
        %v2507 = vmul.f32 %v2414, %v2506
        %v2508 = vmul.f32 %v2415, %v2506
        %v2509 = vrcp.pop %v2465
        %v2510 = vmul.f32 %v2416, %v2509
        %v2511 = vmul.f32 %v2417, %v2509
        %v2512 = vrcp.pop %v2469
        %v2513 = vmul.f32 %v2418, %v2512
        %v2514 = vmul.f32 %v2419, %v2512
        %v2515 = vrcp.pop %v2473
        %v2516 = vmul.f32 %v2420, %v2515
        %v2517 = vmul.f32 %v2421, %v2515
        %v2518 = vrcp.pop %v2477
        %v2519 = vmul.f32 %v2422, %v2518
        %v2520 = vmul.f32 %v2423, %v2518
        %v2521 = vrcp.pop %v2481
        %v2522 = vmul.f32 %v2424, %v2521
        %v2523 = vmul.f32 %v2425, %v2521
        %v2524 = vrcp.pop %v2485
        %v2525 = vmul.f32 %v2426, %v2524
        %v2526 = vmul.f32 %v2427, %v2524
        %v2527 = vrcp.pop %v2489
        %v2528 = vmul.f32 %v2428, %v2527
        %v2529 = vmul.f32 %v2429, %v2527
        %2550 = vset.pattern.permute.xlu0 0
        %2551 = vperm.xlu0 %2550, %v2501
        %v2552 = vpop.permute.xlu0 %2551
        %2553 = vset.pattern.permute.xlu0 0
        %2554 = vperm.xlu0 %2553, %v2502
        %v2555 = vpop.permute.xlu0 %2554
        %2556 = vset.pattern.permute.xlu0 0
        %2557 = vperm.xlu0 %2556, %v2504
        %v2558 = vpop.permute.xlu0 %2557
        %2559 = vset.pattern.permute.xlu0 0
        %2560 = vperm.xlu0 %2559, %v2505
        %v2561 = vpop.permute.xlu0 %2560
        %2562 = vset.pattern.permute.xlu0 0
        %2563 = vperm.xlu0 %2562, %v2507
        %v2564 = vpop.permute.xlu0 %2563
        %2565 = vset.pattern.permute.xlu0 0
        %2566 = vperm.xlu0 %2565, %v2508
        %v2567 = vpop.permute.xlu0 %2566
        %2568 = vset.pattern.permute.xlu0 0
        %2569 = vperm.xlu0 %2568, %v2510
        %v2570 = vpop.permute.xlu0 %2569
        %2571 = vset.pattern.permute.xlu0 0
        %2572 = vperm.xlu0 %2571, %v2511
        %v2573 = vpop.permute.xlu0 %2572
        %2574 = vset.pattern.permute.xlu0 0
        %2575 = vperm.xlu0 %2574, %v2513
        %v2576 = vpop.permute.xlu0 %2575
        %2577 = vset.pattern.permute.xlu0 0
        %2578 = vperm.xlu0 %2577, %v2514
        %v2579 = vpop.permute.xlu0 %2578
        %2580 = vset.pattern.permute.xlu0 0
        %2581 = vperm.xlu0 %2580, %v2516
        %v2582 = vpop.permute.xlu0 %2581
        %2583 = vset.pattern.permute.xlu0 0
        %2584 = vperm.xlu0 %2583, %v2517
        %v2585 = vpop.permute.xlu0 %2584
        %2586 = vset.pattern.permute.xlu0 0
        %2587 = vperm.xlu0 %2586, %v2519
        %v2588 = vpop.permute.xlu0 %2587
        %2589 = vset.pattern.permute.xlu0 0
        %2590 = vperm.xlu0 %2589, %v2520
        %v2591 = vpop.permute.xlu0 %2590
        %2592 = vset.pattern.permute.xlu0 0
        %2593 = vperm.xlu0 %2592, %v2522
        %v2594 = vpop.permute.xlu0 %2593
        %2595 = vset.pattern.permute.xlu0 0
        %2596 = vperm.xlu0 %2595, %v2523
        %v2597 = vpop.permute.xlu0 %2596
        %2598 = vset.pattern.permute.xlu0 0
        %2599 = vperm.xlu0 %2598, %v2525
        %v2600 = vpop.permute.xlu0 %2599
        %2601 = vset.pattern.permute.xlu0 0
        %2602 = vperm.xlu0 %2601, %v2526
        %v2603 = vpop.permute.xlu0 %2602
        %2604 = vset.pattern.permute.xlu0 0
        %2605 = vperm.xlu0 %2604, %v2528
        %v2606 = vpop.permute.xlu0 %2605
        %2607 = vset.pattern.permute.xlu0 0
        %2608 = vperm.xlu0 %2607, %v2529
        %v2609 = vpop.permute.xlu0 %2608
        %v2610 = vlaneseq
        %v2611 = vshrl.u32 %v2610, 7
        %v2612 = vsub.s32 %v2247, %v2611
        %v2613 = vrot.slane %v2552, %v2612
        %v2614 = vlaneseq
        %v2615 = vshrl.u32 %v2614, 7
        %v2616 = vsub.s32 %v2252, %v2615
        %v2617 = vrot.slane %v2555, %v2616
        %v2618 = vsel %vm2257, %v2617, %v2613
        %v2619 = vlaneseq
        %v2620 = vshrl.u32 %v2619, 7
        %v2621 = vsub.s32 %v2247, %v2620
        %v2622 = vrot.slane %v2558, %v2621
        %v2623 = vlaneseq
        %v2624 = vshrl.u32 %v2623, 7
        %v2625 = vsub.s32 %v2252, %v2624
        %v2626 = vrot.slane %v2561, %v2625
        %v2627 = vsel %vm2257, %v2626, %v2622
        %v2628 = vlaneseq
        %v2629 = vshrl.u32 %v2628, 7
        %v2630 = vsub.s32 %v2247, %v2629
        %v2631 = vrot.slane %v2564, %v2630
        %v2632 = vlaneseq
        %v2633 = vshrl.u32 %v2632, 7
        %v2634 = vsub.s32 %v2252, %v2633
        %v2635 = vrot.slane %v2567, %v2634
        %v2636 = vsel %vm2257, %v2635, %v2631
        %v2637 = vlaneseq
        %v2638 = vshrl.u32 %v2637, 7
        %v2639 = vsub.s32 %v2247, %v2638
        %v2640 = vrot.slane %v2570, %v2639
        %v2641 = vlaneseq
        %v2642 = vshrl.u32 %v2641, 7
        %v2643 = vsub.s32 %v2252, %v2642
        %v2644 = vrot.slane %v2573, %v2643
        %v2645 = vsel %vm2257, %v2644, %v2640
        %v2646 = vlaneseq
        %v2647 = vshrl.u32 %v2646, 7
        %v2648 = vsub.s32 %v2247, %v2647
        %v2649 = vrot.slane %v2576, %v2648
        %v2650 = vlaneseq
        %v2651 = vshrl.u32 %v2650, 7
        %v2652 = vsub.s32 %v2252, %v2651
        %v2653 = vrot.slane %v2579, %v2652
        %v2654 = vsel %vm2257, %v2653, %v2649
        %v2655 = vlaneseq
        %v2656 = vshrl.u32 %v2655, 7
        %v2657 = vsub.s32 %v2247, %v2656
        %v2658 = vrot.slane %v2582, %v2657
        %v2659 = vlaneseq
        %v2660 = vshrl.u32 %v2659, 7
        %v2661 = vsub.s32 %v2252, %v2660
        %v2662 = vrot.slane %v2585, %v2661
        %v2663 = vsel %vm2257, %v2662, %v2658
        %v2664 = vlaneseq
        %v2665 = vshrl.u32 %v2664, 7
        %v2666 = vsub.s32 %v2247, %v2665
        %v2667 = vrot.slane %v2588, %v2666
        %v2668 = vlaneseq
        %v2669 = vshrl.u32 %v2668, 7
        %v2670 = vsub.s32 %v2252, %v2669
        %v2671 = vrot.slane %v2591, %v2670
        %v2672 = vsel %vm2257, %v2671, %v2667
        %v2673 = vlaneseq
        %v2674 = vshrl.u32 %v2673, 7
        %v2675 = vsub.s32 %v2247, %v2674
        %v2676 = vrot.slane %v2594, %v2675
        %v2677 = vlaneseq
        %v2678 = vshrl.u32 %v2677, 7
        %v2679 = vsub.s32 %v2252, %v2678
        %v2680 = vrot.slane %v2597, %v2679
        %v2681 = vsel %vm2257, %v2680, %v2676
        %v2682 = vlaneseq
        %v2683 = vshrl.u32 %v2682, 7
        %v2684 = vsub.s32 %v2247, %v2683
        %v2685 = vrot.slane %v2600, %v2684
        %v2686 = vlaneseq
        %v2687 = vshrl.u32 %v2686, 7
        %v2688 = vsub.s32 %v2252, %v2687
        %v2689 = vrot.slane %v2603, %v2688
        %v2690 = vsel %vm2257, %v2689, %v2685
        %v2691 = vlaneseq
        %v2692 = vshrl.u32 %v2691, 7
        %v2693 = vsub.s32 %v2247, %v2692
        %v2694 = vrot.slane %v2606, %v2693
        %v2695 = vlaneseq
        %v2696 = vshrl.u32 %v2695, 7
        %v2697 = vsub.s32 %v2252, %v2696
        %v2698 = vrot.slane %v2609, %v2697
        %v2699 = vsel %vm2257, %v2698, %v2694
        %v2700 = vsel %vm1307, %v2627, %v2618
        %v2701 = vsel %vm1310, %v2636, %v2700
        %v2702 = vsel %vm1313, %v2645, %v2701
        %v2703 = vsel %vm1316, %v2654, %v2702
        %v2704 = vsel %vm1319, %v2663, %v2703
        %v2705 = vsel %vm1322, %v2672, %v2704
        %v2706 = vsel %vm1325, %v2681, %v2705
        %v2707 = vsel %vm1307, %v2699, %v2690
        %2710 = vst.msk [vmem:[%s222] sm:$0xff] %vm2350, %v2706
        %2711 = vst.msk [vmem:[%s222 + $0x8] sm:$0x3] %vm2354, %v2707
        %s2712 = scalar_lea.vmem %s184, 8 [#allocation2]
        %v2713 = vld [vmem:[%s2712] sm:$0xff]
        %v2714 = vld [vmem:[#allocation4] sm:$0xff]
        %v2715 = vld [vmem:[#allocation4 + $0x8] sm:$0xff]
        %v2716 = vld [vmem:[#allocation4 + $0x10] sm:$0xff]
        %v2717 = vld [vmem:[#allocation4 + $0x18] sm:$0xff]
        %v2718 = vld [vmem:[#allocation4 + $0x20] sm:$0xff]
        %v2719 = vld [vmem:[#allocation4 + $0x28] sm:$0xff]
        %v2720 = vld [vmem:[#allocation4 + $0x30] sm:$0xff]
        %v2721 = vld [vmem:[#allocation4 + $0x38] sm:$0xff]
        %v2722 = vld [vmem:[#allocation4 + $0x40] sm:$0xff]
        %v2723 = vld [vmem:[#allocation4 + $0x48] sm:$0xff]
        %v2724 = vld [vmem:[#allocation4 + $0x50] sm:$0xff]
        %v2725 = vld [vmem:[#allocation4 + $0x58] sm:$0xff]
        %v2726 = vld [vmem:[#allocation4 + $0x60] sm:$0xff]
        %v2727 = vld [vmem:[#allocation4 + $0x68] sm:$0xff]
        %v2728 = vld [vmem:[#allocation4 + $0x70] sm:$0xff]
        %v2729 = vld [vmem:[#allocation4 + $0x78] sm:$0xff]
        %v2730 = vld [vmem:[#allocation4 + $0x80] sm:$0xff]
        %v2731 = vld [vmem:[#allocation4 + $0x88] sm:$0xff]
        %v2732 = vld [vmem:[#allocation4 + $0x90] sm:$0xff]
        %v2733 = vld [vmem:[#allocation4 + $0x98] sm:$0xff]
        %v2734 = vlaneseq
        %v2735 = vshrl.u32 %v2734, 7
        %v2736 = vsub.s32 0, %v2735
        %v2737 = vrot.slane %v2713, %v2736
        %v2738 = vmul.f32 %v2737, %v2714
        %v2739 = vmul.f32 %v2737, %v2715
        %v2740 = vmul.f32 %v2737, %v2716
        %v2741 = vmul.f32 %v2737, %v2717
        %v2742 = vmul.f32 %v2737, %v2718
        %v2743 = vmul.f32 %v2737, %v2719
        %v2744 = vmul.f32 %v2737, %v2720
        %v2745 = vmul.f32 %v2737, %v2721
        %v2746 = vmul.f32 %v2737, %v2722
        %v2747 = vmul.f32 %v2737, %v2723
        %v2748 = vmul.f32 %v2737, %v2724
        %v2749 = vmul.f32 %v2737, %v2725
        %v2750 = vmul.f32 %v2737, %v2726
        %v2751 = vmul.f32 %v2737, %v2727
        %v2752 = vmul.f32 %v2737, %v2728
        %v2753 = vmul.f32 %v2737, %v2729
        %v2754 = vmul.f32 %v2737, %v2730
        %v2755 = vmul.f32 %v2737, %v2731
        %v2756 = vmul.f32 %v2737, %v2732
        %v2757 = vmul.f32 %v2737, %v2733
        %v2758 = vld [vmem:[%s381] sm:$0xff]
        %v2759 = vld [vmem:[%s381 + $0x8] sm:$0xff]
        %v2760 = vld [vmem:[%s381 + $0x10] sm:$0xff]
        %v2761 = vld [vmem:[%s381 + $0x18] sm:$0xff]
        %v2762 = vld [vmem:[%s381 + $0x20] sm:$0xff]
        %v2763 = vld [vmem:[%s381 + $0x28] sm:$0xff]
        %v2764 = vld [vmem:[%s381 + $0x30] sm:$0xff]
        %v2765 = vld [vmem:[%s381 + $0x38] sm:$0xff]
        %v2766 = vld [vmem:[%s381 + $0x40] sm:$0xff]
        %v2767 = vld [vmem:[%s381 + $0x48] sm:$0xff]
        %v2768 = vld [vmem:[%s381 + $0x50] sm:$0xff]
        %v2769 = vld [vmem:[%s381 + $0x58] sm:$0xff]
        %v2770 = vld [vmem:[%s381 + $0x60] sm:$0xff]
        %v2771 = vld [vmem:[%s381 + $0x68] sm:$0xff]
        %v2772 = vld [vmem:[%s381 + $0x70] sm:$0xff]
        %v2773 = vld [vmem:[%s381 + $0x78] sm:$0xff]
        %v2774 = vld [vmem:[%s381 + $0x80] sm:$0xff]
        %v2775 = vld [vmem:[%s381 + $0x88] sm:$0xff]
        %v2776 = vld [vmem:[%s381 + $0x90] sm:$0xff]
        %v2777 = vld [vmem:[%s381 + $0x98] sm:$0xff]
        %v2778 = vlaneseq
        %v2779 = vshrl.u32 %v2778, 7
        %v2780 = vsub.s32 1, %v2779
        %v2781 = vrot.slane %v2713, %v2780
        %v2782 = vmul.f32 %v2781, %v2758
        %v2783 = vmul.f32 %v2781, %v2759
        %v2784 = vmul.f32 %v2781, %v2760
        %v2785 = vmul.f32 %v2781, %v2761
        %v2786 = vmul.f32 %v2781, %v2762
        %v2787 = vmul.f32 %v2781, %v2763
        %v2788 = vmul.f32 %v2781, %v2764
        %v2789 = vmul.f32 %v2781, %v2765
        %v2790 = vmul.f32 %v2781, %v2766
        %v2791 = vmul.f32 %v2781, %v2767
        %v2792 = vmul.f32 %v2781, %v2768
        %v2793 = vmul.f32 %v2781, %v2769
        %v2794 = vmul.f32 %v2781, %v2770
        %v2795 = vmul.f32 %v2781, %v2771
        %v2796 = vmul.f32 %v2781, %v2772
        %v2797 = vmul.f32 %v2781, %v2773
        %v2798 = vmul.f32 %v2781, %v2774
        %v2799 = vmul.f32 %v2781, %v2775
        %v2800 = vmul.f32 %v2781, %v2776
        %v2801 = vmul.f32 %v2781, %v2777
        %v2802 = vadd.f32 %v2738, %v2782
        %v2803 = vadd.f32 %v2739, %v2783
        %v2804 = vadd.f32 %v2740, %v2784
        %v2805 = vadd.f32 %v2741, %v2785
        %v2806 = vadd.f32 %v2742, %v2786
        %v2807 = vadd.f32 %v2743, %v2787
        %v2808 = vadd.f32 %v2744, %v2788
        %v2809 = vadd.f32 %v2745, %v2789
        %v2810 = vadd.f32 %v2746, %v2790
        %v2811 = vadd.f32 %v2747, %v2791
        %v2812 = vadd.f32 %v2748, %v2792
        %v2813 = vadd.f32 %v2749, %v2793
        %v2814 = vadd.f32 %v2750, %v2794
        %v2815 = vadd.f32 %v2751, %v2795
        %v2816 = vadd.f32 %v2752, %v2796
        %v2817 = vadd.f32 %v2753, %v2797
        %v2818 = vadd.f32 %v2754, %v2798
        %v2819 = vadd.f32 %v2755, %v2799
        %v2820 = vadd.f32 %v2756, %v2800
        %v2821 = vadd.f32 %v2757, %v2801
        %v2822 = vld [vmem:[%s446] sm:$0xff]
        %v2823 = vld [vmem:[%s446 + $0x8] sm:$0xff]
        %v2824 = vld [vmem:[%s446 + $0x10] sm:$0xff]
        %v2825 = vld [vmem:[%s446 + $0x18] sm:$0xff]
        %v2826 = vld [vmem:[%s446 + $0x20] sm:$0xff]
        %v2827 = vld [vmem:[%s446 + $0x28] sm:$0xff]
        %v2828 = vld [vmem:[%s446 + $0x30] sm:$0xff]
        %v2829 = vld [vmem:[%s446 + $0x38] sm:$0xff]
        %v2830 = vld [vmem:[%s446 + $0x40] sm:$0xff]
        %v2831 = vld [vmem:[%s446 + $0x48] sm:$0xff]
        %v2832 = vld [vmem:[%s446 + $0x50] sm:$0xff]
        %v2833 = vld [vmem:[%s446 + $0x58] sm:$0xff]
        %v2834 = vld [vmem:[%s446 + $0x60] sm:$0xff]
        %v2835 = vld [vmem:[%s446 + $0x68] sm:$0xff]
        %v2836 = vld [vmem:[%s446 + $0x70] sm:$0xff]
        %v2837 = vld [vmem:[%s446 + $0x78] sm:$0xff]
        %v2838 = vld [vmem:[%s446 + $0x80] sm:$0xff]
        %v2839 = vld [vmem:[%s446 + $0x88] sm:$0xff]
        %v2840 = vld [vmem:[%s446 + $0x90] sm:$0xff]
        %v2841 = vld [vmem:[%s446 + $0x98] sm:$0xff]
        %v2842 = vlaneseq
        %v2843 = vshrl.u32 %v2842, 7
        %v2844 = vsub.s32 2, %v2843
        %v2845 = vrot.slane %v2713, %v2844
        %v2846 = vmul.f32 %v2845, %v2822
        %v2847 = vmul.f32 %v2845, %v2823
        %v2848 = vmul.f32 %v2845, %v2824
        %v2849 = vmul.f32 %v2845, %v2825
        %v2850 = vmul.f32 %v2845, %v2826
        %v2851 = vmul.f32 %v2845, %v2827
        %v2852 = vmul.f32 %v2845, %v2828
        %v2853 = vmul.f32 %v2845, %v2829
        %v2854 = vmul.f32 %v2845, %v2830
        %v2855 = vmul.f32 %v2845, %v2831
        %v2856 = vmul.f32 %v2845, %v2832
        %v2857 = vmul.f32 %v2845, %v2833
        %v2858 = vmul.f32 %v2845, %v2834
        %v2859 = vmul.f32 %v2845, %v2835
        %v2860 = vmul.f32 %v2845, %v2836
        %v2861 = vmul.f32 %v2845, %v2837
        %v2862 = vmul.f32 %v2845, %v2838
        %v2863 = vmul.f32 %v2845, %v2839
        %v2864 = vmul.f32 %v2845, %v2840
        %v2865 = vmul.f32 %v2845, %v2841
        %v2866 = vadd.f32 %v2802, %v2846
        %v2867 = vadd.f32 %v2803, %v2847
        %v2868 = vadd.f32 %v2804, %v2848
        %v2869 = vadd.f32 %v2805, %v2849
        %v2870 = vadd.f32 %v2806, %v2850
        %v2871 = vadd.f32 %v2807, %v2851
        %v2872 = vadd.f32 %v2808, %v2852
        %v2873 = vadd.f32 %v2809, %v2853
        %v2874 = vadd.f32 %v2810, %v2854
        %v2875 = vadd.f32 %v2811, %v2855
        %v2876 = vadd.f32 %v2812, %v2856
        %v2877 = vadd.f32 %v2813, %v2857
        %v2878 = vadd.f32 %v2814, %v2858
        %v2879 = vadd.f32 %v2815, %v2859
        %v2880 = vadd.f32 %v2816, %v2860
        %v2881 = vadd.f32 %v2817, %v2861
        %v2882 = vadd.f32 %v2818, %v2862
        %v2883 = vadd.f32 %v2819, %v2863
        %v2884 = vadd.f32 %v2820, %v2864
        %v2885 = vadd.f32 %v2821, %v2865
        %v2886 = vld [vmem:[%s511] sm:$0xff]
        %v2887 = vld [vmem:[%s511 + $0x8] sm:$0xff]
        %v2888 = vld [vmem:[%s511 + $0x10] sm:$0xff]
        %v2889 = vld [vmem:[%s511 + $0x18] sm:$0xff]
        %v2890 = vld [vmem:[%s511 + $0x20] sm:$0xff]
        %v2891 = vld [vmem:[%s511 + $0x28] sm:$0xff]
        %v2892 = vld [vmem:[%s511 + $0x30] sm:$0xff]
        %v2893 = vld [vmem:[%s511 + $0x38] sm:$0xff]
        %v2894 = vld [vmem:[%s511 + $0x40] sm:$0xff]
        %v2895 = vld [vmem:[%s511 + $0x48] sm:$0xff]
        %v2896 = vld [vmem:[%s511 + $0x50] sm:$0xff]
        %v2897 = vld [vmem:[%s511 + $0x58] sm:$0xff]
        %v2898 = vld [vmem:[%s511 + $0x60] sm:$0xff]
        %v2899 = vld [vmem:[%s511 + $0x68] sm:$0xff]
        %v2900 = vld [vmem:[%s511 + $0x70] sm:$0xff]
        %v2901 = vld [vmem:[%s511 + $0x78] sm:$0xff]
        %v2902 = vld [vmem:[%s511 + $0x80] sm:$0xff]
        %v2903 = vld [vmem:[%s511 + $0x88] sm:$0xff]
        %v2904 = vld [vmem:[%s511 + $0x90] sm:$0xff]
        %v2905 = vld [vmem:[%s511 + $0x98] sm:$0xff]
        %v2906 = vlaneseq
        %v2907 = vshrl.u32 %v2906, 7
        %v2908 = vsub.s32 3, %v2907
        %v2909 = vrot.slane %v2713, %v2908
        %v2910 = vmul.f32 %v2909, %v2886
        %v2911 = vmul.f32 %v2909, %v2887
        %v2912 = vmul.f32 %v2909, %v2888
        %v2913 = vmul.f32 %v2909, %v2889
        %v2914 = vmul.f32 %v2909, %v2890
        %v2915 = vmul.f32 %v2909, %v2891
        %v2916 = vmul.f32 %v2909, %v2892
        %v2917 = vmul.f32 %v2909, %v2893
        %v2918 = vmul.f32 %v2909, %v2894
        %v2919 = vmul.f32 %v2909, %v2895
        %v2920 = vmul.f32 %v2909, %v2896
        %v2921 = vmul.f32 %v2909, %v2897
        %v2922 = vmul.f32 %v2909, %v2898
        %v2923 = vmul.f32 %v2909, %v2899
        %v2924 = vmul.f32 %v2909, %v2900
        %v2925 = vmul.f32 %v2909, %v2901
        %v2926 = vmul.f32 %v2909, %v2902
        %v2927 = vmul.f32 %v2909, %v2903
        %v2928 = vmul.f32 %v2909, %v2904
        %v2929 = vmul.f32 %v2909, %v2905
        %v2930 = vadd.f32 %v2866, %v2910
        %v2931 = vadd.f32 %v2867, %v2911
        %v2932 = vadd.f32 %v2868, %v2912
        %v2933 = vadd.f32 %v2869, %v2913
        %v2934 = vadd.f32 %v2870, %v2914
        %v2935 = vadd.f32 %v2871, %v2915
        %v2936 = vadd.f32 %v2872, %v2916
        %v2937 = vadd.f32 %v2873, %v2917
        %v2938 = vadd.f32 %v2874, %v2918
        %v2939 = vadd.f32 %v2875, %v2919
        %v2940 = vadd.f32 %v2876, %v2920
        %v2941 = vadd.f32 %v2877, %v2921
        %v2942 = vadd.f32 %v2878, %v2922
        %v2943 = vadd.f32 %v2879, %v2923
        %v2944 = vadd.f32 %v2880, %v2924
        %v2945 = vadd.f32 %v2881, %v2925
        %v2946 = vadd.f32 %v2882, %v2926
        %v2947 = vadd.f32 %v2883, %v2927
        %v2948 = vadd.f32 %v2884, %v2928
        %v2949 = vadd.f32 %v2885, %v2929
        %v2950 = vld [vmem:[%s576] sm:$0xff]
        %v2951 = vld [vmem:[%s576 + $0x8] sm:$0xff]
        %v2952 = vld [vmem:[%s576 + $0x10] sm:$0xff]
        %v2953 = vld [vmem:[%s576 + $0x18] sm:$0xff]
        %v2954 = vld [vmem:[%s576 + $0x20] sm:$0xff]
        %v2955 = vld [vmem:[%s576 + $0x28] sm:$0xff]
        %v2956 = vld [vmem:[%s576 + $0x30] sm:$0xff]
        %v2957 = vld [vmem:[%s576 + $0x38] sm:$0xff]
        %v2958 = vld [vmem:[%s576 + $0x40] sm:$0xff]
        %v2959 = vld [vmem:[%s576 + $0x48] sm:$0xff]
        %v2960 = vld [vmem:[%s576 + $0x50] sm:$0xff]
        %v2961 = vld [vmem:[%s576 + $0x58] sm:$0xff]
        %v2962 = vld [vmem:[%s576 + $0x60] sm:$0xff]
        %v2963 = vld [vmem:[%s576 + $0x68] sm:$0xff]
        %v2964 = vld [vmem:[%s576 + $0x70] sm:$0xff]
        %v2965 = vld [vmem:[%s576 + $0x78] sm:$0xff]
        %v2966 = vld [vmem:[%s576 + $0x80] sm:$0xff]
        %v2967 = vld [vmem:[%s576 + $0x88] sm:$0xff]
        %v2968 = vld [vmem:[%s576 + $0x90] sm:$0xff]
        %v2969 = vld [vmem:[%s576 + $0x98] sm:$0xff]
        %v2970 = vlaneseq
        %v2971 = vshrl.u32 %v2970, 7
        %v2972 = vsub.s32 4, %v2971
        %v2973 = vrot.slane %v2713, %v2972
        %v2974 = vmul.f32 %v2973, %v2950
        %v2975 = vmul.f32 %v2973, %v2951
        %v2976 = vmul.f32 %v2973, %v2952
        %v2977 = vmul.f32 %v2973, %v2953
        %v2978 = vmul.f32 %v2973, %v2954
        %v2979 = vmul.f32 %v2973, %v2955
        %v2980 = vmul.f32 %v2973, %v2956
        %v2981 = vmul.f32 %v2973, %v2957
        %v2982 = vmul.f32 %v2973, %v2958
        %v2983 = vmul.f32 %v2973, %v2959
        %v2984 = vmul.f32 %v2973, %v2960
        %v2985 = vmul.f32 %v2973, %v2961
        %v2986 = vmul.f32 %v2973, %v2962
        %v2987 = vmul.f32 %v2973, %v2963
        %v2988 = vmul.f32 %v2973, %v2964
        %v2989 = vmul.f32 %v2973, %v2965
        %v2990 = vmul.f32 %v2973, %v2966
        %v2991 = vmul.f32 %v2973, %v2967
        %v2992 = vmul.f32 %v2973, %v2968
        %v2993 = vmul.f32 %v2973, %v2969
        %v2994 = vadd.f32 %v2930, %v2974
        %v2995 = vadd.f32 %v2931, %v2975
        %v2996 = vadd.f32 %v2932, %v2976
        %v2997 = vadd.f32 %v2933, %v2977
        %v2998 = vadd.f32 %v2934, %v2978
        %v2999 = vadd.f32 %v2935, %v2979
        %v3000 = vadd.f32 %v2936, %v2980
        %v3001 = vadd.f32 %v2937, %v2981
        %v3002 = vadd.f32 %v2938, %v2982
        %v3003 = vadd.f32 %v2939, %v2983
        %v3004 = vadd.f32 %v2940, %v2984
        %v3005 = vadd.f32 %v2941, %v2985
        %v3006 = vadd.f32 %v2942, %v2986
        %v3007 = vadd.f32 %v2943, %v2987
        %v3008 = vadd.f32 %v2944, %v2988
        %v3009 = vadd.f32 %v2945, %v2989
        %v3010 = vadd.f32 %v2946, %v2990
        %v3011 = vadd.f32 %v2947, %v2991
        %v3012 = vadd.f32 %v2948, %v2992
        %v3013 = vadd.f32 %v2949, %v2993
        %v3014 = vld [vmem:[%s641] sm:$0xff]
        %v3015 = vld [vmem:[%s641 + $0x8] sm:$0xff]
        %v3016 = vld [vmem:[%s641 + $0x10] sm:$0xff]
        %v3017 = vld [vmem:[%s641 + $0x18] sm:$0xff]
        %v3018 = vld [vmem:[%s641 + $0x20] sm:$0xff]
        %v3019 = vld [vmem:[%s641 + $0x28] sm:$0xff]
        %v3020 = vld [vmem:[%s641 + $0x30] sm:$0xff]
        %v3021 = vld [vmem:[%s641 + $0x38] sm:$0xff]
        %v3022 = vld [vmem:[%s641 + $0x40] sm:$0xff]
        %v3023 = vld [vmem:[%s641 + $0x48] sm:$0xff]
        %v3024 = vld [vmem:[%s641 + $0x50] sm:$0xff]
        %v3025 = vld [vmem:[%s641 + $0x58] sm:$0xff]
        %v3026 = vld [vmem:[%s641 + $0x60] sm:$0xff]
        %v3027 = vld [vmem:[%s641 + $0x68] sm:$0xff]
        %v3028 = vld [vmem:[%s641 + $0x70] sm:$0xff]
        %v3029 = vld [vmem:[%s641 + $0x78] sm:$0xff]
        %v3030 = vld [vmem:[%s641 + $0x80] sm:$0xff]
        %v3031 = vld [vmem:[%s641 + $0x88] sm:$0xff]
        %v3032 = vld [vmem:[%s641 + $0x90] sm:$0xff]
        %v3033 = vld [vmem:[%s641 + $0x98] sm:$0xff]
        %v3034 = vlaneseq
        %v3035 = vshrl.u32 %v3034, 7
        %v3036 = vsub.s32 5, %v3035
        %v3037 = vrot.slane %v2713, %v3036
        %v3038 = vmul.f32 %v3037, %v3014
        %v3039 = vmul.f32 %v3037, %v3015
        %v3040 = vmul.f32 %v3037, %v3016
        %v3041 = vmul.f32 %v3037, %v3017
        %v3042 = vmul.f32 %v3037, %v3018
        %v3043 = vmul.f32 %v3037, %v3019
        %v3044 = vmul.f32 %v3037, %v3020
        %v3045 = vmul.f32 %v3037, %v3021
        %v3046 = vmul.f32 %v3037, %v3022
        %v3047 = vmul.f32 %v3037, %v3023
        %v3048 = vmul.f32 %v3037, %v3024
        %v3049 = vmul.f32 %v3037, %v3025
        %v3050 = vmul.f32 %v3037, %v3026
        %v3051 = vmul.f32 %v3037, %v3027
        %v3052 = vmul.f32 %v3037, %v3028
        %v3053 = vmul.f32 %v3037, %v3029
        %v3054 = vmul.f32 %v3037, %v3030
        %v3055 = vmul.f32 %v3037, %v3031
        %v3056 = vmul.f32 %v3037, %v3032
        %v3057 = vmul.f32 %v3037, %v3033
        %v3058 = vadd.f32 %v2994, %v3038
        %v3059 = vadd.f32 %v2995, %v3039
        %v3060 = vadd.f32 %v2996, %v3040
        %v3061 = vadd.f32 %v2997, %v3041
        %v3062 = vadd.f32 %v2998, %v3042
        %v3063 = vadd.f32 %v2999, %v3043
        %v3064 = vadd.f32 %v3000, %v3044
        %v3065 = vadd.f32 %v3001, %v3045
        %v3066 = vadd.f32 %v3002, %v3046
        %v3067 = vadd.f32 %v3003, %v3047
        %v3068 = vadd.f32 %v3004, %v3048
        %v3069 = vadd.f32 %v3005, %v3049
        %v3070 = vadd.f32 %v3006, %v3050
        %v3071 = vadd.f32 %v3007, %v3051
        %v3072 = vadd.f32 %v3008, %v3052
        %v3073 = vadd.f32 %v3009, %v3053
        %v3074 = vadd.f32 %v3010, %v3054
        %v3075 = vadd.f32 %v3011, %v3055
        %v3076 = vadd.f32 %v3012, %v3056
        %v3077 = vadd.f32 %v3013, %v3057
        %v3078 = vld [vmem:[%s706] sm:$0xff]
        %v3079 = vld [vmem:[%s706 + $0x8] sm:$0xff]
        %v3080 = vld [vmem:[%s706 + $0x10] sm:$0xff]
        %v3081 = vld [vmem:[%s706 + $0x18] sm:$0xff]
        %v3082 = vld [vmem:[%s706 + $0x20] sm:$0xff]
        %v3083 = vld [vmem:[%s706 + $0x28] sm:$0xff]
        %v3084 = vld [vmem:[%s706 + $0x30] sm:$0xff]
        %v3085 = vld [vmem:[%s706 + $0x38] sm:$0xff]
        %v3086 = vld [vmem:[%s706 + $0x40] sm:$0xff]
        %v3087 = vld [vmem:[%s706 + $0x48] sm:$0xff]
        %v3088 = vld [vmem:[%s706 + $0x50] sm:$0xff]
        %v3089 = vld [vmem:[%s706 + $0x58] sm:$0xff]
        %v3090 = vld [vmem:[%s706 + $0x60] sm:$0xff]
        %v3091 = vld [vmem:[%s706 + $0x68] sm:$0xff]
        %v3092 = vld [vmem:[%s706 + $0x70] sm:$0xff]
        %v3093 = vld [vmem:[%s706 + $0x78] sm:$0xff]
        %v3094 = vld [vmem:[%s706 + $0x80] sm:$0xff]
        %v3095 = vld [vmem:[%s706 + $0x88] sm:$0xff]
        %v3096 = vld [vmem:[%s706 + $0x90] sm:$0xff]
        %v3097 = vld [vmem:[%s706 + $0x98] sm:$0xff]
        %v3098 = vlaneseq
        %v3099 = vshrl.u32 %v3098, 7
        %v3100 = vsub.s32 6, %v3099
        %v3101 = vrot.slane %v2713, %v3100
        %v3102 = vmul.f32 %v3101, %v3078
        %v3103 = vmul.f32 %v3101, %v3079
        %v3104 = vmul.f32 %v3101, %v3080
        %v3105 = vmul.f32 %v3101, %v3081
        %v3106 = vmul.f32 %v3101, %v3082
        %v3107 = vmul.f32 %v3101, %v3083
        %v3108 = vmul.f32 %v3101, %v3084
        %v3109 = vmul.f32 %v3101, %v3085
        %v3110 = vmul.f32 %v3101, %v3086
        %v3111 = vmul.f32 %v3101, %v3087
        %v3112 = vmul.f32 %v3101, %v3088
        %v3113 = vmul.f32 %v3101, %v3089
        %v3114 = vmul.f32 %v3101, %v3090
        %v3115 = vmul.f32 %v3101, %v3091
        %v3116 = vmul.f32 %v3101, %v3092
        %v3117 = vmul.f32 %v3101, %v3093
        %v3118 = vmul.f32 %v3101, %v3094
        %v3119 = vmul.f32 %v3101, %v3095
        %v3120 = vmul.f32 %v3101, %v3096
        %v3121 = vmul.f32 %v3101, %v3097
        %v3122 = vadd.f32 %v3058, %v3102
        %v3123 = vadd.f32 %v3059, %v3103
        %v3124 = vadd.f32 %v3060, %v3104
        %v3125 = vadd.f32 %v3061, %v3105
        %v3126 = vadd.f32 %v3062, %v3106
        %v3127 = vadd.f32 %v3063, %v3107
        %v3128 = vadd.f32 %v3064, %v3108
        %v3129 = vadd.f32 %v3065, %v3109
        %v3130 = vadd.f32 %v3066, %v3110
        %v3131 = vadd.f32 %v3067, %v3111
        %v3132 = vadd.f32 %v3068, %v3112
        %v3133 = vadd.f32 %v3069, %v3113
        %v3134 = vadd.f32 %v3070, %v3114
        %v3135 = vadd.f32 %v3071, %v3115
        %v3136 = vadd.f32 %v3072, %v3116
        %v3137 = vadd.f32 %v3073, %v3117
        %v3138 = vadd.f32 %v3074, %v3118
        %v3139 = vadd.f32 %v3075, %v3119
        %v3140 = vadd.f32 %v3076, %v3120
        %v3141 = vadd.f32 %v3077, %v3121
        %v3142 = vld [vmem:[%s771] sm:$0xff]
        %v3143 = vld [vmem:[%s771 + $0x8] sm:$0xff]
        %v3144 = vld [vmem:[%s771 + $0x10] sm:$0xff]
        %v3145 = vld [vmem:[%s771 + $0x18] sm:$0xff]
        %v3146 = vld [vmem:[%s771 + $0x20] sm:$0xff]
        %v3147 = vld [vmem:[%s771 + $0x28] sm:$0xff]
        %v3148 = vld [vmem:[%s771 + $0x30] sm:$0xff]
        %v3149 = vld [vmem:[%s771 + $0x38] sm:$0xff]
        %v3150 = vld [vmem:[%s771 + $0x40] sm:$0xff]
        %v3151 = vld [vmem:[%s771 + $0x48] sm:$0xff]
        %v3152 = vld [vmem:[%s771 + $0x50] sm:$0xff]
        %v3153 = vld [vmem:[%s771 + $0x58] sm:$0xff]
        %v3154 = vld [vmem:[%s771 + $0x60] sm:$0xff]
        %v3155 = vld [vmem:[%s771 + $0x68] sm:$0xff]
        %v3156 = vld [vmem:[%s771 + $0x70] sm:$0xff]
        %v3157 = vld [vmem:[%s771 + $0x78] sm:$0xff]
        %v3158 = vld [vmem:[%s771 + $0x80] sm:$0xff]
        %v3159 = vld [vmem:[%s771 + $0x88] sm:$0xff]
        %v3160 = vld [vmem:[%s771 + $0x90] sm:$0xff]
        %v3161 = vld [vmem:[%s771 + $0x98] sm:$0xff]
        %v3162 = vlaneseq
        %v3163 = vshrl.u32 %v3162, 7
        %v3164 = vsub.s32 7, %v3163
        %v3165 = vrot.slane %v2713, %v3164
        %v3166 = vmul.f32 %v3165, %v3142
        %v3167 = vmul.f32 %v3165, %v3143
        %v3168 = vmul.f32 %v3165, %v3144
        %v3169 = vmul.f32 %v3165, %v3145
        %v3170 = vmul.f32 %v3165, %v3146
        %v3171 = vmul.f32 %v3165, %v3147
        %v3172 = vmul.f32 %v3165, %v3148
        %v3173 = vmul.f32 %v3165, %v3149
        %v3174 = vmul.f32 %v3165, %v3150
        %v3175 = vmul.f32 %v3165, %v3151
        %v3176 = vmul.f32 %v3165, %v3152
        %v3177 = vmul.f32 %v3165, %v3153
        %v3178 = vmul.f32 %v3165, %v3154
        %v3179 = vmul.f32 %v3165, %v3155
        %v3180 = vmul.f32 %v3165, %v3156
        %v3181 = vmul.f32 %v3165, %v3157
        %v3182 = vmul.f32 %v3165, %v3158
        %v3183 = vmul.f32 %v3165, %v3159
        %v3184 = vmul.f32 %v3165, %v3160
        %v3185 = vmul.f32 %v3165, %v3161
        %v3186 = vadd.f32 %v3122, %v3166
        %v3187 = vadd.f32 %v3123, %v3167
        %v3188 = vadd.f32 %v3124, %v3168
        %v3189 = vadd.f32 %v3125, %v3169
        %v3190 = vadd.f32 %v3126, %v3170
        %v3191 = vadd.f32 %v3127, %v3171
        %v3192 = vadd.f32 %v3128, %v3172
        %v3193 = vadd.f32 %v3129, %v3173
        %v3194 = vadd.f32 %v3130, %v3174
        %v3195 = vadd.f32 %v3131, %v3175
        %v3196 = vadd.f32 %v3132, %v3176
        %v3197 = vadd.f32 %v3133, %v3177
        %v3198 = vadd.f32 %v3134, %v3178
        %v3199 = vadd.f32 %v3135, %v3179
        %v3200 = vadd.f32 %v3136, %v3180
        %v3201 = vadd.f32 %v3137, %v3181
        %v3202 = vadd.f32 %v3138, %v3182
        %v3203 = vadd.f32 %v3139, %v3183
        %v3204 = vadd.f32 %v3140, %v3184
        %v3205 = vadd.f32 %v3141, %v3185
        %v3206 = vmul.f32 %v846, %v3186
        %v3207 = vmul.f32 %v846, %v3187
        %v3208 = vmul.f32 %v846, %v3188
        %v3209 = vmul.f32 %v846, %v3189
        %v3210 = vmul.f32 %v846, %v3190
        %v3211 = vmul.f32 %v846, %v3191
        %v3212 = vmul.f32 %v846, %v3192
        %v3213 = vmul.f32 %v846, %v3193
        %v3214 = vmul.f32 %v846, %v3194
        %v3215 = vmul.f32 %v846, %v3195
        %v3216 = vmul.f32 %v846, %v3196
        %v3217 = vmul.f32 %v846, %v3197
        %v3218 = vmul.f32 %v846, %v3198
        %v3219 = vmul.f32 %v846, %v3199
        %v3220 = vmul.f32 %v846, %v3200
        %v3221 = vmul.f32 %v846, %v3201
        %v3222 = vmul.f32 %v846, %v3202
        %v3223 = vmul.f32 %v846, %v3203
        %v3224 = vmul.f32 %v846, %v3204
        %v3225 = vmul.f32 %v846, %v3205
        %3226 = vadd.xlane.f32.xlu0 %v3206
        %v3227 = vpop.xlane.xlu0 %3226
        %3228 = vadd.xlane.f32.xlu0 %v3207
        %v3229 = vpop.xlane.xlu0 %3228
        %3230 = vadd.xlane.f32.xlu0 %v3208
        %v3231 = vpop.xlane.xlu0 %3230
        %3232 = vadd.xlane.f32.xlu0 %v3209
        %v3233 = vpop.xlane.xlu0 %3232
        %3234 = vadd.xlane.f32.xlu0 %v3210
        %v3235 = vpop.xlane.xlu0 %3234
        %3236 = vadd.xlane.f32.xlu0 %v3211
        %v3237 = vpop.xlane.xlu0 %3236
        %3238 = vadd.xlane.f32.xlu0 %v3212
        %v3239 = vpop.xlane.xlu0 %3238
        %3240 = vadd.xlane.f32.xlu0 %v3213
        %v3241 = vpop.xlane.xlu0 %3240
        %3242 = vadd.xlane.f32.xlu0 %v3214
        %v3243 = vpop.xlane.xlu0 %3242
        %3244 = vadd.xlane.f32.xlu0 %v3215
        %v3245 = vpop.xlane.xlu0 %3244
        %3246 = vadd.xlane.f32.xlu0 %v3216
        %v3247 = vpop.xlane.xlu0 %3246
        %3248 = vadd.xlane.f32.xlu0 %v3217
        %v3249 = vpop.xlane.xlu0 %3248
        %3250 = vadd.xlane.f32.xlu0 %v3218
        %v3251 = vpop.xlane.xlu0 %3250
        %3252 = vadd.xlane.f32.xlu0 %v3219
        %v3253 = vpop.xlane.xlu0 %3252
        %3254 = vadd.xlane.f32.xlu0 %v3220
        %v3255 = vpop.xlane.xlu0 %3254
        %3256 = vadd.xlane.f32.xlu0 %v3221
        %v3257 = vpop.xlane.xlu0 %3256
        %3258 = vadd.xlane.f32.xlu0 %v3222
        %v3259 = vpop.xlane.xlu0 %3258
        %3260 = vadd.xlane.f32.xlu0 %v3223
        %v3261 = vpop.xlane.xlu0 %3260
        %3262 = vadd.xlane.f32.xlu0 %v3224
        %v3263 = vpop.xlane.xlu0 %3262
        %3264 = vadd.xlane.f32.xlu0 %v3225
        %v3265 = vpop.xlane.xlu0 %3264
        %v3266 = vadd.f32 %v3227, %v232
        %v3267 = vadd.f32 %v3229, %v236
        %v3268 = vadd.f32 %v3231, %v243
        %v3269 = vadd.f32 %v3233, %v247
        %v3270 = vadd.f32 %v3235, %v254
        %v3271 = vadd.f32 %v3237, %v258
        %v3272 = vadd.f32 %v3239, %v265
        %v3273 = vadd.f32 %v3241, %v269
        %v3274 = vadd.f32 %v3243, %v276
        %v3275 = vadd.f32 %v3245, %v280
        %v3276 = vadd.f32 %v3247, %v287
        %v3277 = vadd.f32 %v3249, %v291
        %v3278 = vadd.f32 %v3251, %v298
        %v3279 = vadd.f32 %v3253, %v302
        %v3280 = vadd.f32 %v3255, %v309
        %v3281 = vadd.f32 %v3257, %v313
        %v3282 = vadd.f32 %v3259, %v320
        %v3283 = vadd.f32 %v3261, %v324
        %v3284 = vadd.f32 %v3263, %v331
        %v3285 = vadd.f32 %v3265, %v335
        %v3286 = vmul.f32 %v3266, %v3266
        %v3287 = vmul.f32 %v3267, %v3267
        %v3288 = vmul.f32 %v3268, %v3268
        %v3289 = vmul.f32 %v3269, %v3269
        %v3290 = vmul.f32 %v3270, %v3270
        %v3291 = vmul.f32 %v3271, %v3271
        %v3292 = vmul.f32 %v3272, %v3272
        %v3293 = vmul.f32 %v3273, %v3273
        %v3294 = vmul.f32 %v3274, %v3274
        %v3295 = vmul.f32 %v3275, %v3275
        %v3296 = vmul.f32 %v3276, %v3276
        %v3297 = vmul.f32 %v3277, %v3277
        %v3298 = vmul.f32 %v3278, %v3278
        %v3299 = vmul.f32 %v3279, %v3279
        %v3300 = vmul.f32 %v3280, %v3280
        %v3301 = vmul.f32 %v3281, %v3281
        %v3302 = vmul.f32 %v3282, %v3282
        %v3303 = vmul.f32 %v3283, %v3283
        %v3304 = vmul.f32 %v3284, %v3284
        %v3305 = vmul.f32 %v3285, %v3285
        %v3306 = vadd.f32 %v3286, %v3287
        %v3307 = vrot.slane %v3306, 4
        %v3308 = vadd.f32 %v3306, %v3307
        %v3309 = vrot.slane %v3308, 2
        %v3310 = vadd.f32 %v3308, %v3309
        %v3311 = vrot.slane %v3310, 1
        %v3312 = vadd.f32 %v3310, %v3311
        %v3313 = vadd.f32 %v3288, %v3289
        %v3314 = vrot.slane %v3313, 4
        %v3315 = vadd.f32 %v3313, %v3314
        %v3316 = vrot.slane %v3315, 2
        %v3317 = vadd.f32 %v3315, %v3316
        %v3318 = vrot.slane %v3317, 1
        %v3319 = vadd.f32 %v3317, %v3318
        %v3320 = vadd.f32 %v3290, %v3291
        %v3321 = vrot.slane %v3320, 4
        %v3322 = vadd.f32 %v3320, %v3321
        %v3323 = vrot.slane %v3322, 2
        %v3324 = vadd.f32 %v3322, %v3323
        %v3325 = vrot.slane %v3324, 1
        %v3326 = vadd.f32 %v3324, %v3325
        %v3327 = vadd.f32 %v3292, %v3293
        %v3328 = vrot.slane %v3327, 4
        %v3329 = vadd.f32 %v3327, %v3328
        %v3330 = vrot.slane %v3329, 2
        %v3331 = vadd.f32 %v3329, %v3330
        %v3332 = vrot.slane %v3331, 1
        %v3333 = vadd.f32 %v3331, %v3332
        %v3334 = vadd.f32 %v3294, %v3295
        %v3335 = vrot.slane %v3334, 4
        %v3336 = vadd.f32 %v3334, %v3335
        %v3337 = vrot.slane %v3336, 2
        %v3338 = vadd.f32 %v3336, %v3337
        %v3339 = vrot.slane %v3338, 1
        %v3340 = vadd.f32 %v3338, %v3339
        %v3341 = vadd.f32 %v3296, %v3297
        %v3342 = vrot.slane %v3341, 4
        %v3343 = vadd.f32 %v3341, %v3342
        %v3344 = vrot.slane %v3343, 2
        %v3345 = vadd.f32 %v3343, %v3344
        %v3346 = vrot.slane %v3345, 1
        %v3347 = vadd.f32 %v3345, %v3346
        %v3348 = vadd.f32 %v3298, %v3299
        %v3349 = vrot.slane %v3348, 4
        %v3350 = vadd.f32 %v3348, %v3349
        %v3351 = vrot.slane %v3350, 2
        %v3352 = vadd.f32 %v3350, %v3351
        %v3353 = vrot.slane %v3352, 1
        %v3354 = vadd.f32 %v3352, %v3353
        %v3355 = vadd.f32 %v3300, %v3301
        %v3356 = vrot.slane %v3355, 4
        %v3357 = vadd.f32 %v3355, %v3356
        %v3358 = vrot.slane %v3357, 2
        %v3359 = vadd.f32 %v3357, %v3358
        %v3360 = vrot.slane %v3359, 1
        %v3361 = vadd.f32 %v3359, %v3360
        %v3362 = vadd.f32 %v3302, %v3303
        %v3363 = vrot.slane %v3362, 4
        %v3364 = vadd.f32 %v3362, %v3363
        %v3365 = vrot.slane %v3364, 2
        %v3366 = vadd.f32 %v3364, %v3365
        %v3367 = vrot.slane %v3366, 1
        %v3368 = vadd.f32 %v3366, %v3367
        %v3369 = vadd.f32 %v3304, %v3305
        %v3370 = vrot.slane %v3369, 4
        %v3371 = vadd.f32 %v3369, %v3370
        %v3372 = vrot.slane %v3371, 2
        %v3373 = vadd.f32 %v3371, %v3372
        %v3374 = vrot.slane %v3373, 1
        %v3375 = vadd.f32 %v3373, %v3374
        %v3376 = vmul.f32 %v3266, %v3312
        %v3377 = vmul.f32 %v3267, %v3312
        %v3378 = vmul.f32 %v3268, %v3319
        %v3379 = vmul.f32 %v3269, %v3319
        %v3380 = vmul.f32 %v3270, %v3326
        %v3381 = vmul.f32 %v3271, %v3326
        %v3382 = vmul.f32 %v3272, %v3333
        %v3383 = vmul.f32 %v3273, %v3333
        %v3384 = vmul.f32 %v3274, %v3340
        %v3385 = vmul.f32 %v3275, %v3340
        %v3386 = vmul.f32 %v3276, %v3347
        %v3387 = vmul.f32 %v3277, %v3347
        %v3388 = vmul.f32 %v3278, %v3354
        %v3389 = vmul.f32 %v3279, %v3354
        %v3390 = vmul.f32 %v3280, %v3361
        %v3391 = vmul.f32 %v3281, %v3361
        %v3392 = vmul.f32 %v3282, %v3368
        %v3393 = vmul.f32 %v3283, %v3368
        %v3394 = vmul.f32 %v3284, %v3375
        %v3395 = vmul.f32 %v3285, %v3375
        %v3396 = vadd.f32 %v3312, 1.0
        %v3397 = vadd.f32 %v3319, 1.0
        %v3398 = vadd.f32 %v3326, 1.0
        %v3399 = vadd.f32 %v3333, 1.0
        %v3400 = vadd.f32 %v3340, 1.0
        %v3401 = vadd.f32 %v3347, 1.0
        %v3402 = vadd.f32 %v3354, 1.0
        %v3403 = vadd.f32 %v3361, 1.0
        %v3404 = vadd.f32 %v3368, 1.0
        %v3405 = vadd.f32 %v3375, 1.0
        %v3406 = vrsqrt.pop %v3312
        %v3407 = vmul.f32 %v3312, %v3406
        %vm3408 = vcmp.eq.f32.partialorder %v3312, inf
        %v3409 = vsel %vm3408, %v3312, %v3407
        %vm3410 = vcmp.eq.f32.partialorder %v3312, 0.0
        %v3411 = vand.u32 %v3312, 2147483648
        %v3412 = vsel %vm3410, %v3411, %v3409
        %v3413 = vrsqrt.pop %v3319
        %v3414 = vmul.f32 %v3319, %v3413
        %vm3415 = vcmp.eq.f32.partialorder %v3319, inf
        %v3416 = vsel %vm3415, %v3319, %v3414
        %vm3417 = vcmp.eq.f32.partialorder %v3319, 0.0
        %v3418 = vand.u32 %v3319, 2147483648
        %v3419 = vsel %vm3417, %v3418, %v3416
        %v3420 = vrsqrt.pop %v3326
        %v3421 = vmul.f32 %v3326, %v3420
        %vm3422 = vcmp.eq.f32.partialorder %v3326, inf
        %v3423 = vsel %vm3422, %v3326, %v3421
        %vm3424 = vcmp.eq.f32.partialorder %v3326, 0.0
        %v3425 = vand.u32 %v3326, 2147483648
        %v3426 = vsel %vm3424, %v3425, %v3423
        %v3427 = vrsqrt.pop %v3333
        %v3428 = vmul.f32 %v3333, %v3427
        %vm3429 = vcmp.eq.f32.partialorder %v3333, inf
        %v3430 = vsel %vm3429, %v3333, %v3428
        %vm3431 = vcmp.eq.f32.partialorder %v3333, 0.0
        %v3432 = vand.u32 %v3333, 2147483648
        %v3433 = vsel %vm3431, %v3432, %v3430
        %v3434 = vrsqrt.pop %v3340
        %v3435 = vmul.f32 %v3340, %v3434
        %vm3436 = vcmp.eq.f32.partialorder %v3340, inf
        %v3437 = vsel %vm3436, %v3340, %v3435
        %vm3438 = vcmp.eq.f32.partialorder %v3340, 0.0
        %v3439 = vand.u32 %v3340, 2147483648
        %v3440 = vsel %vm3438, %v3439, %v3437
        %v3441 = vrsqrt.pop %v3347
        %v3442 = vmul.f32 %v3347, %v3441
        %vm3443 = vcmp.eq.f32.partialorder %v3347, inf
        %v3444 = vsel %vm3443, %v3347, %v3442
        %vm3445 = vcmp.eq.f32.partialorder %v3347, 0.0
        %v3446 = vand.u32 %v3347, 2147483648
        %v3447 = vsel %vm3445, %v3446, %v3444
        %v3448 = vrsqrt.pop %v3354
        %v3449 = vmul.f32 %v3354, %v3448
        %vm3450 = vcmp.eq.f32.partialorder %v3354, inf
        %v3451 = vsel %vm3450, %v3354, %v3449
        %vm3452 = vcmp.eq.f32.partialorder %v3354, 0.0
        %v3453 = vand.u32 %v3354, 2147483648
        %v3454 = vsel %vm3452, %v3453, %v3451
        %v3455 = vrsqrt.pop %v3361
        %v3456 = vmul.f32 %v3361, %v3455
        %vm3457 = vcmp.eq.f32.partialorder %v3361, inf
        %v3458 = vsel %vm3457, %v3361, %v3456
        %vm3459 = vcmp.eq.f32.partialorder %v3361, 0.0
        %v3460 = vand.u32 %v3361, 2147483648
        %v3461 = vsel %vm3459, %v3460, %v3458
        %v3462 = vrsqrt.pop %v3368
        %v3463 = vmul.f32 %v3368, %v3462
        %vm3464 = vcmp.eq.f32.partialorder %v3368, inf
        %v3465 = vsel %vm3464, %v3368, %v3463
        %vm3466 = vcmp.eq.f32.partialorder %v3368, 0.0
        %v3467 = vand.u32 %v3368, 2147483648
        %v3468 = vsel %vm3466, %v3467, %v3465
        %v3469 = vrsqrt.pop %v3375
        %v3470 = vmul.f32 %v3375, %v3469
        %vm3471 = vcmp.eq.f32.partialorder %v3375, inf
        %v3472 = vsel %vm3471, %v3375, %v3470
        %vm3473 = vcmp.eq.f32.partialorder %v3375, 0.0
        %v3474 = vand.u32 %v3375, 2147483648
        %v3475 = vsel %vm3473, %v3474, %v3472
        %v3476 = vmul.f32 %v3396, %v3412
        %v3477 = vmul.f32 %v3397, %v3419
        %v3478 = vmul.f32 %v3398, %v3426
        %v3479 = vmul.f32 %v3399, %v3433
        %v3480 = vmul.f32 %v3400, %v3440
        %v3481 = vmul.f32 %v3401, %v3447
        %v3482 = vmul.f32 %v3402, %v3454
        %v3483 = vmul.f32 %v3403, %v3461
        %v3484 = vmul.f32 %v3404, %v3468
        %v3485 = vmul.f32 %v3405, %v3475
        %v3486 = vrcp.pop %v3476
        %v3487 = vmul.f32 %v3376, %v3486
        %v3488 = vmul.f32 %v3377, %v3486
        %v3489 = vrcp.pop %v3477
        %v3490 = vmul.f32 %v3378, %v3489
        %v3491 = vmul.f32 %v3379, %v3489
        %v3492 = vrcp.pop %v3478
        %v3493 = vmul.f32 %v3380, %v3492
        %v3494 = vmul.f32 %v3381, %v3492
        %v3495 = vrcp.pop %v3479
        %v3496 = vmul.f32 %v3382, %v3495
        %v3497 = vmul.f32 %v3383, %v3495
        %v3498 = vrcp.pop %v3480
        %v3499 = vmul.f32 %v3384, %v3498
        %v3500 = vmul.f32 %v3385, %v3498
        %v3501 = vrcp.pop %v3481
        %v3502 = vmul.f32 %v3386, %v3501
        %v3503 = vmul.f32 %v3387, %v3501
        %v3504 = vrcp.pop %v3482
        %v3505 = vmul.f32 %v3388, %v3504
        %v3506 = vmul.f32 %v3389, %v3504
        %v3507 = vrcp.pop %v3483
        %v3508 = vmul.f32 %v3390, %v3507
        %v3509 = vmul.f32 %v3391, %v3507
        %v3510 = vrcp.pop %v3484
        %v3511 = vmul.f32 %v3392, %v3510
        %v3512 = vmul.f32 %v3393, %v3510
        %v3513 = vrcp.pop %v3485
        %v3514 = vmul.f32 %v3394, %v3513
        %v3515 = vmul.f32 %v3395, %v3513
        %v3516 = vmul.f32 %v3186, %v3487
        %v3517 = vmul.f32 %v3187, %v3488
        %v3518 = vmul.f32 %v3188, %v3490
        %v3519 = vmul.f32 %v3189, %v3491
        %v3520 = vmul.f32 %v3190, %v3493
        %v3521 = vmul.f32 %v3191, %v3494
        %v3522 = vmul.f32 %v3192, %v3496
        %v3523 = vmul.f32 %v3193, %v3497
        %v3524 = vmul.f32 %v3194, %v3499
        %v3525 = vmul.f32 %v3195, %v3500
        %v3526 = vmul.f32 %v3196, %v3502
        %v3527 = vmul.f32 %v3197, %v3503
        %v3528 = vmul.f32 %v3198, %v3505
        %v3529 = vmul.f32 %v3199, %v3506
        %v3530 = vmul.f32 %v3200, %v3508
        %v3531 = vmul.f32 %v3201, %v3509
        %v3532 = vmul.f32 %v3202, %v3511
        %v3533 = vmul.f32 %v3203, %v3512
        %v3534 = vmul.f32 %v3204, %v3514
        %v3535 = vmul.f32 %v3205, %v3515
        %v3536 = vadd.f32 %v3516, %v3517
        %v3537 = vrot.slane %v3536, 4
        %v3538 = vadd.f32 %v3536, %v3537
        %v3539 = vrot.slane %v3538, 2
        %v3540 = vadd.f32 %v3538, %v3539
        %v3541 = vrot.slane %v3540, 1
        %v3542 = vadd.f32 %v3540, %v3541
        %v3543 = vadd.f32 %v3518, %v3519
        %v3544 = vrot.slane %v3543, 4
        %v3545 = vadd.f32 %v3543, %v3544
        %v3546 = vrot.slane %v3545, 2
        %v3547 = vadd.f32 %v3545, %v3546
        %v3548 = vrot.slane %v3547, 1
        %v3549 = vadd.f32 %v3547, %v3548
        %v3550 = vadd.f32 %v3520, %v3521
        %v3551 = vrot.slane %v3550, 4
        %v3552 = vadd.f32 %v3550, %v3551
        %v3553 = vrot.slane %v3552, 2
        %v3554 = vadd.f32 %v3552, %v3553
        %v3555 = vrot.slane %v3554, 1
        %v3556 = vadd.f32 %v3554, %v3555
        %v3557 = vadd.f32 %v3522, %v3523
        %v3558 = vrot.slane %v3557, 4
        %v3559 = vadd.f32 %v3557, %v3558
        %v3560 = vrot.slane %v3559, 2
        %v3561 = vadd.f32 %v3559, %v3560
        %v3562 = vrot.slane %v3561, 1
        %v3563 = vadd.f32 %v3561, %v3562
        %v3564 = vadd.f32 %v3524, %v3525
        %v3565 = vrot.slane %v3564, 4
        %v3566 = vadd.f32 %v3564, %v3565
        %v3567 = vrot.slane %v3566, 2
        %v3568 = vadd.f32 %v3566, %v3567
        %v3569 = vrot.slane %v3568, 1
        %v3570 = vadd.f32 %v3568, %v3569
        %v3571 = vadd.f32 %v3526, %v3527
        %v3572 = vrot.slane %v3571, 4
        %v3573 = vadd.f32 %v3571, %v3572
        %v3574 = vrot.slane %v3573, 2
        %v3575 = vadd.f32 %v3573, %v3574
        %v3576 = vrot.slane %v3575, 1
        %v3577 = vadd.f32 %v3575, %v3576
        %v3578 = vadd.f32 %v3528, %v3529
        %v3579 = vrot.slane %v3578, 4
        %v3580 = vadd.f32 %v3578, %v3579
        %v3581 = vrot.slane %v3580, 2
        %v3582 = vadd.f32 %v3580, %v3581
        %v3583 = vrot.slane %v3582, 1
        %v3584 = vadd.f32 %v3582, %v3583
        %v3585 = vadd.f32 %v3530, %v3531
        %v3586 = vrot.slane %v3585, 4
        %v3587 = vadd.f32 %v3585, %v3586
        %v3588 = vrot.slane %v3587, 2
        %v3589 = vadd.f32 %v3587, %v3588
        %v3590 = vrot.slane %v3589, 1
        %v3591 = vadd.f32 %v3589, %v3590
        %v3592 = vadd.f32 %v3532, %v3533
        %v3593 = vrot.slane %v3592, 4
        %v3594 = vadd.f32 %v3592, %v3593
        %v3595 = vrot.slane %v3594, 2
        %v3596 = vadd.f32 %v3594, %v3595
        %v3597 = vrot.slane %v3596, 1
        %v3598 = vadd.f32 %v3596, %v3597
        %v3599 = vadd.f32 %v3534, %v3535
        %v3600 = vrot.slane %v3599, 4
        %v3601 = vadd.f32 %v3599, %v3600
        %v3602 = vrot.slane %v3601, 2
        %v3603 = vadd.f32 %v3601, %v3602
        %v3604 = vrot.slane %v3603, 1
        %v3605 = vadd.f32 %v3603, %v3604
        %v3606 = vadd.f32 %v3542, 0.0
        %v3607 = vadd.f32 %v3549, 0.0
        %v3608 = vadd.f32 %v3556, 0.0
        %v3609 = vadd.f32 %v3563, 0.0
        %v3610 = vadd.f32 %v3570, 0.0
        %v3611 = vadd.f32 %v3577, 0.0
        %v3612 = vadd.f32 %v3584, 0.0
        %v3613 = vadd.f32 %v3591, 0.0
        %v3614 = vadd.f32 %v3598, 0.0
        %v3615 = vadd.f32 %v3605, 0.0
        %v3616 = vmax.f32 %v3606, %v3610
        %v3617 = vmax.f32 %v3607, %v3611
        %v3618 = vmax.f32 %v3608, %v3612
        %v3619 = vmax.f32 %v3609, %v3613
        %v3620 = vmax.f32 %v3616, %v3614
        %v3621 = vmax.f32 %v3617, %v3615
        %v3622 = vmax.f32 %v3620, %v3621
        %v3623 = vmax.f32 %v3618, %v3619
        %v3624 = vmax.f32 %v3622, %v3623
        %v3625 = vsub.f32 %v3606, %v3624
        %v3626 = vsub.f32 %v3607, %v3624
        %v3627 = vsub.f32 %v3608, %v3624
        %v3628 = vsub.f32 %v3609, %v3624
        %v3629 = vsub.f32 %v3610, %v3624
        %v3630 = vsub.f32 %v3611, %v3624
        %v3631 = vsub.f32 %v3612, %v3624
        %v3632 = vsub.f32 %v3613, %v3624
        %v3633 = vsub.f32 %v3614, %v3624
        %v3634 = vsub.f32 %v3615, %v3624
        %v3635 = vmul.f32 %v3625, 1.442695
        %v3636 = vpow.pop %v3635
        %v3637 = vmul.f32 %v3626, 1.442695
        %v3638 = vpow.pop %v3637
        %v3639 = vmul.f32 %v3627, 1.442695
        %v3640 = vpow.pop %v3639
        %v3641 = vmul.f32 %v3628, 1.442695
        %v3642 = vpow.pop %v3641
        %v3643 = vmul.f32 %v3629, 1.442695
        %v3644 = vpow.pop %v3643
        %v3645 = vmul.f32 %v3630, 1.442695
        %v3646 = vpow.pop %v3645
        %v3647 = vmul.f32 %v3631, 1.442695
        %v3648 = vpow.pop %v3647
        %v3649 = vmul.f32 %v3632, 1.442695
        %v3650 = vpow.pop %v3649
        %v3651 = vmul.f32 %v3633, 1.442695
        %v3652 = vpow.pop %v3651
        %v3653 = vmul.f32 %v3634, 1.442695
        %v3654 = vpow.pop %v3653
        %v3665 = vrot.slane %v3638, 7
        %v3666 = vsel %vm1307, %v3665, %v3636
        %v3667 = vrot.slane %v3640, 6
        %v3668 = vsel %vm1310, %v3667, %v3666
        %v3669 = vrot.slane %v3642, 5
        %v3670 = vsel %vm1313, %v3669, %v3668
        %v3671 = vrot.slane %v3644, 4
        %v3672 = vsel %vm1316, %v3671, %v3670
        %v3673 = vrot.slane %v3646, 3
        %v3674 = vsel %vm1319, %v3673, %v3672
        %v3675 = vrot.slane %v3648, 2
        %v3676 = vsel %vm1322, %v3675, %v3674
        %v3677 = vrot.slane %v3650, 1
        %v3678 = vsel %vm1325, %v3677, %v3676
        %v3679 = vrot.slane %v3654, 7
        %v3680 = vsel %vm1307, %v3679, %v3652
        %v3683 = vsel %vm836, %v3680, 0.0
        %v3684 = vadd.f32 %v3678, %v3683
        %v3685 = vrot.slane %v3684, 4
        %v3686 = vadd.f32 %v3684, %v3685
        %v3687 = vrot.slane %v3686, 2
        %v3688 = vadd.f32 %v3686, %v3687
        %v3689 = vrot.slane %v3688, 1
        %v3690 = vadd.f32 %v3688, %v3689
        %v3691 = vlaneseq
        %v3692 = vshrl.u32 %v3691, 7
        %v3693 = vsub.s32 0, %v3692
        %v3694 = vrot.slane %v3690, %v3693
        %v3695 = vrcp.pop %v3694
        %v3696 = vmul.f32 %v3636, %v3695
        %v3697 = vmul.f32 %v3638, %v3695
        %v3698 = vmul.f32 %v3640, %v3695
        %v3699 = vmul.f32 %v3642, %v3695
        %v3700 = vmul.f32 %v3644, %v3695
        %v3701 = vmul.f32 %v3646, %v3695
        %v3702 = vmul.f32 %v3648, %v3695
        %v3703 = vmul.f32 %v3650, %v3695
        %v3704 = vmul.f32 %v3652, %v3695
        %v3705 = vmul.f32 %v3654, %v3695
        %v3706 = vlaneseq
        %v3707 = vshrl.u32 %v3706, 7
        %v3708 = vsub.s32 0, %v3707
        %v3709 = vrot.slane %v3696, %v3708
        %v3710 = vlaneseq
        %v3711 = vshrl.u32 %v3710, 7
        %v3712 = vsub.s32 0, %v3711
        %v3713 = vrot.slane %v3697, %v3712
        %v3714 = vlaneseq
        %v3715 = vshrl.u32 %v3714, 7
        %v3716 = vsub.s32 0, %v3715
        %v3717 = vrot.slane %v3698, %v3716
        %v3718 = vlaneseq
        %v3719 = vshrl.u32 %v3718, 7
        %v3720 = vsub.s32 0, %v3719
        %v3721 = vrot.slane %v3699, %v3720
        %v3722 = vlaneseq
        %v3723 = vshrl.u32 %v3722, 7
        %v3724 = vsub.s32 0, %v3723
        %v3725 = vrot.slane %v3700, %v3724
        %v3726 = vlaneseq
        %v3727 = vshrl.u32 %v3726, 7
        %v3728 = vsub.s32 0, %v3727
        %v3729 = vrot.slane %v3701, %v3728
        %v3730 = vlaneseq
        %v3731 = vshrl.u32 %v3730, 7
        %v3732 = vsub.s32 0, %v3731
        %v3733 = vrot.slane %v3702, %v3732
        %v3734 = vlaneseq
        %v3735 = vshrl.u32 %v3734, 7
        %v3736 = vsub.s32 0, %v3735
        %v3737 = vrot.slane %v3703, %v3736
        %v3738 = vlaneseq
        %v3739 = vshrl.u32 %v3738, 7
        %v3740 = vsub.s32 0, %v3739
        %v3741 = vrot.slane %v3704, %v3740
        %v3742 = vlaneseq
        %v3743 = vshrl.u32 %v3742, 7
        %v3744 = vsub.s32 0, %v3743
        %v3745 = vrot.slane %v3705, %v3744
        %v3746 = vmul.f32 %v3709, %v3186
        %v3747 = vmul.f32 %v3709, %v3187
        %v3748 = vmul.f32 %v3713, %v3188
        %v3749 = vmul.f32 %v3713, %v3189
        %v3750 = vmul.f32 %v3717, %v3190
        %v3751 = vmul.f32 %v3717, %v3191
        %v3752 = vmul.f32 %v3721, %v3192
        %v3753 = vmul.f32 %v3721, %v3193
        %v3754 = vmul.f32 %v3725, %v3194
        %v3755 = vmul.f32 %v3725, %v3195
        %v3756 = vmul.f32 %v3729, %v3196
        %v3757 = vmul.f32 %v3729, %v3197
        %v3758 = vmul.f32 %v3733, %v3198
        %v3759 = vmul.f32 %v3733, %v3199
        %v3760 = vmul.f32 %v3737, %v3200
        %v3761 = vmul.f32 %v3737, %v3201
        %v3762 = vmul.f32 %v3741, %v3202
        %v3763 = vmul.f32 %v3741, %v3203
        %v3764 = vmul.f32 %v3745, %v3204
        %v3765 = vmul.f32 %v3745, %v3205
        %3766 = vadd.xlane.f32.xlu0 %v3746
        %v3767 = vpop.xlane.xlu0 %3766
        %3768 = vadd.xlane.f32.xlu0 %v3747
        %v3769 = vpop.xlane.xlu0 %3768
        %3770 = vadd.xlane.f32.xlu0 %v3748
        %v3771 = vpop.xlane.xlu0 %3770
        %3772 = vadd.xlane.f32.xlu0 %v3749
        %v3773 = vpop.xlane.xlu0 %3772
        %3774 = vadd.xlane.f32.xlu0 %v3750
        %v3775 = vpop.xlane.xlu0 %3774
        %3776 = vadd.xlane.f32.xlu0 %v3751
        %v3777 = vpop.xlane.xlu0 %3776
        %3778 = vadd.xlane.f32.xlu0 %v3752
        %v3779 = vpop.xlane.xlu0 %3778
        %3780 = vadd.xlane.f32.xlu0 %v3753
        %v3781 = vpop.xlane.xlu0 %3780
        %3782 = vadd.xlane.f32.xlu0 %v3754
        %v3783 = vpop.xlane.xlu0 %3782
        %3784 = vadd.xlane.f32.xlu0 %v3755
        %v3785 = vpop.xlane.xlu0 %3784
        %3786 = vadd.xlane.f32.xlu0 %v3756
        %v3787 = vpop.xlane.xlu0 %3786
        %3788 = vadd.xlane.f32.xlu0 %v3757
        %v3789 = vpop.xlane.xlu0 %3788
        %3790 = vadd.xlane.f32.xlu0 %v3758
        %v3791 = vpop.xlane.xlu0 %3790
        %3792 = vadd.xlane.f32.xlu0 %v3759
        %v3793 = vpop.xlane.xlu0 %3792
        %3794 = vadd.xlane.f32.xlu0 %v3760
        %v3795 = vpop.xlane.xlu0 %3794
        %3796 = vadd.xlane.f32.xlu0 %v3761
        %v3797 = vpop.xlane.xlu0 %3796
        %3798 = vadd.xlane.f32.xlu0 %v3762
        %v3799 = vpop.xlane.xlu0 %3798
        %3800 = vadd.xlane.f32.xlu0 %v3763
        %v3801 = vpop.xlane.xlu0 %3800
        %3802 = vadd.xlane.f32.xlu0 %v3764
        %v3803 = vpop.xlane.xlu0 %3802
        %3804 = vadd.xlane.f32.xlu0 %v3765
        %v3805 = vpop.xlane.xlu0 %3804
        %v3806 = vadd.f32 %v3767, %v232
        %v3807 = vadd.f32 %v3769, %v236
        %v3808 = vadd.f32 %v3771, %v243
        %v3809 = vadd.f32 %v3773, %v247
        %v3810 = vadd.f32 %v3775, %v254
        %v3811 = vadd.f32 %v3777, %v258
        %v3812 = vadd.f32 %v3779, %v265
        %v3813 = vadd.f32 %v3781, %v269
        %v3814 = vadd.f32 %v3783, %v276
        %v3815 = vadd.f32 %v3785, %v280
        %v3816 = vadd.f32 %v3787, %v287
        %v3817 = vadd.f32 %v3789, %v291
        %v3818 = vadd.f32 %v3791, %v298
        %v3819 = vadd.f32 %v3793, %v302
        %v3820 = vadd.f32 %v3795, %v309
        %v3821 = vadd.f32 %v3797, %v313
        %v3822 = vadd.f32 %v3799, %v320
        %v3823 = vadd.f32 %v3801, %v324
        %v3824 = vadd.f32 %v3803, %v331
        %v3825 = vadd.f32 %v3805, %v335
        %v3826 = vmul.f32 %v3806, %v3806
        %v3827 = vmul.f32 %v3807, %v3807
        %v3828 = vmul.f32 %v3808, %v3808
        %v3829 = vmul.f32 %v3809, %v3809
        %v3830 = vmul.f32 %v3810, %v3810
        %v3831 = vmul.f32 %v3811, %v3811
        %v3832 = vmul.f32 %v3812, %v3812
        %v3833 = vmul.f32 %v3813, %v3813
        %v3834 = vmul.f32 %v3814, %v3814
        %v3835 = vmul.f32 %v3815, %v3815
        %v3836 = vmul.f32 %v3816, %v3816
        %v3837 = vmul.f32 %v3817, %v3817
        %v3838 = vmul.f32 %v3818, %v3818
        %v3839 = vmul.f32 %v3819, %v3819
        %v3840 = vmul.f32 %v3820, %v3820
        %v3841 = vmul.f32 %v3821, %v3821
        %v3842 = vmul.f32 %v3822, %v3822
        %v3843 = vmul.f32 %v3823, %v3823
        %v3844 = vmul.f32 %v3824, %v3824
        %v3845 = vmul.f32 %v3825, %v3825
        %v3846 = vadd.f32 %v3826, %v3827
        %v3847 = vrot.slane %v3846, 4
        %v3848 = vadd.f32 %v3846, %v3847
        %v3849 = vrot.slane %v3848, 2
        %v3850 = vadd.f32 %v3848, %v3849
        %v3851 = vrot.slane %v3850, 1
        %v3852 = vadd.f32 %v3850, %v3851
        %v3853 = vadd.f32 %v3828, %v3829
        %v3854 = vrot.slane %v3853, 4
        %v3855 = vadd.f32 %v3853, %v3854
        %v3856 = vrot.slane %v3855, 2
        %v3857 = vadd.f32 %v3855, %v3856
        %v3858 = vrot.slane %v3857, 1
        %v3859 = vadd.f32 %v3857, %v3858
        %v3860 = vadd.f32 %v3830, %v3831
        %v3861 = vrot.slane %v3860, 4
        %v3862 = vadd.f32 %v3860, %v3861
        %v3863 = vrot.slane %v3862, 2
        %v3864 = vadd.f32 %v3862, %v3863
        %v3865 = vrot.slane %v3864, 1
        %v3866 = vadd.f32 %v3864, %v3865
        %v3867 = vadd.f32 %v3832, %v3833
        %v3868 = vrot.slane %v3867, 4
        %v3869 = vadd.f32 %v3867, %v3868
        %v3870 = vrot.slane %v3869, 2
        %v3871 = vadd.f32 %v3869, %v3870
        %v3872 = vrot.slane %v3871, 1
        %v3873 = vadd.f32 %v3871, %v3872
        %v3874 = vadd.f32 %v3834, %v3835
        %v3875 = vrot.slane %v3874, 4
        %v3876 = vadd.f32 %v3874, %v3875
        %v3877 = vrot.slane %v3876, 2
        %v3878 = vadd.f32 %v3876, %v3877
        %v3879 = vrot.slane %v3878, 1
        %v3880 = vadd.f32 %v3878, %v3879
        %v3881 = vadd.f32 %v3836, %v3837
        %v3882 = vrot.slane %v3881, 4
        %v3883 = vadd.f32 %v3881, %v3882
        %v3884 = vrot.slane %v3883, 2
        %v3885 = vadd.f32 %v3883, %v3884
        %v3886 = vrot.slane %v3885, 1
        %v3887 = vadd.f32 %v3885, %v3886
        %v3888 = vadd.f32 %v3838, %v3839
        %v3889 = vrot.slane %v3888, 4
        %v3890 = vadd.f32 %v3888, %v3889
        %v3891 = vrot.slane %v3890, 2
        %v3892 = vadd.f32 %v3890, %v3891
        %v3893 = vrot.slane %v3892, 1
        %v3894 = vadd.f32 %v3892, %v3893
        %v3895 = vadd.f32 %v3840, %v3841
        %v3896 = vrot.slane %v3895, 4
        %v3897 = vadd.f32 %v3895, %v3896
        %v3898 = vrot.slane %v3897, 2
        %v3899 = vadd.f32 %v3897, %v3898
        %v3900 = vrot.slane %v3899, 1
        %v3901 = vadd.f32 %v3899, %v3900
        %v3902 = vadd.f32 %v3842, %v3843
        %v3903 = vrot.slane %v3902, 4
        %v3904 = vadd.f32 %v3902, %v3903
        %v3905 = vrot.slane %v3904, 2
        %v3906 = vadd.f32 %v3904, %v3905
        %v3907 = vrot.slane %v3906, 1
        %v3908 = vadd.f32 %v3906, %v3907
        %v3909 = vadd.f32 %v3844, %v3845
        %v3910 = vrot.slane %v3909, 4
        %v3911 = vadd.f32 %v3909, %v3910
        %v3912 = vrot.slane %v3911, 2
        %v3913 = vadd.f32 %v3911, %v3912
        %v3914 = vrot.slane %v3913, 1
        %v3915 = vadd.f32 %v3913, %v3914
        %v3916 = vmul.f32 %v3806, %v3852
        %v3917 = vmul.f32 %v3807, %v3852
        %v3918 = vmul.f32 %v3808, %v3859
        %v3919 = vmul.f32 %v3809, %v3859
        %v3920 = vmul.f32 %v3810, %v3866
        %v3921 = vmul.f32 %v3811, %v3866
        %v3922 = vmul.f32 %v3812, %v3873
        %v3923 = vmul.f32 %v3813, %v3873
        %v3924 = vmul.f32 %v3814, %v3880
        %v3925 = vmul.f32 %v3815, %v3880
        %v3926 = vmul.f32 %v3816, %v3887
        %v3927 = vmul.f32 %v3817, %v3887
        %v3928 = vmul.f32 %v3818, %v3894
        %v3929 = vmul.f32 %v3819, %v3894
        %v3930 = vmul.f32 %v3820, %v3901
        %v3931 = vmul.f32 %v3821, %v3901
        %v3932 = vmul.f32 %v3822, %v3908
        %v3933 = vmul.f32 %v3823, %v3908
        %v3934 = vmul.f32 %v3824, %v3915
        %v3935 = vmul.f32 %v3825, %v3915
        %v3936 = vadd.f32 %v3852, 1.0
        %v3937 = vadd.f32 %v3859, 1.0
        %v3938 = vadd.f32 %v3866, 1.0
        %v3939 = vadd.f32 %v3873, 1.0
        %v3940 = vadd.f32 %v3880, 1.0
        %v3941 = vadd.f32 %v3887, 1.0
        %v3942 = vadd.f32 %v3894, 1.0
        %v3943 = vadd.f32 %v3901, 1.0
        %v3944 = vadd.f32 %v3908, 1.0
        %v3945 = vadd.f32 %v3915, 1.0
        %v3946 = vrsqrt.pop %v3852
        %v3947 = vmul.f32 %v3852, %v3946
        %vm3948 = vcmp.eq.f32.partialorder %v3852, inf
        %v3949 = vsel %vm3948, %v3852, %v3947
        %vm3950 = vcmp.eq.f32.partialorder %v3852, 0.0
        %v3951 = vand.u32 %v3852, 2147483648
        %v3952 = vsel %vm3950, %v3951, %v3949
        %v3953 = vrsqrt.pop %v3859
        %v3954 = vmul.f32 %v3859, %v3953
        %vm3955 = vcmp.eq.f32.partialorder %v3859, inf
        %v3956 = vsel %vm3955, %v3859, %v3954
        %vm3957 = vcmp.eq.f32.partialorder %v3859, 0.0
        %v3958 = vand.u32 %v3859, 2147483648
        %v3959 = vsel %vm3957, %v3958, %v3956
        %v3960 = vrsqrt.pop %v3866
        %v3961 = vmul.f32 %v3866, %v3960
        %vm3962 = vcmp.eq.f32.partialorder %v3866, inf
        %v3963 = vsel %vm3962, %v3866, %v3961
        %vm3964 = vcmp.eq.f32.partialorder %v3866, 0.0
        %v3965 = vand.u32 %v3866, 2147483648
        %v3966 = vsel %vm3964, %v3965, %v3963
        %v3967 = vrsqrt.pop %v3873
        %v3968 = vmul.f32 %v3873, %v3967
        %vm3969 = vcmp.eq.f32.partialorder %v3873, inf
        %v3970 = vsel %vm3969, %v3873, %v3968
        %vm3971 = vcmp.eq.f32.partialorder %v3873, 0.0
        %v3972 = vand.u32 %v3873, 2147483648
        %v3973 = vsel %vm3971, %v3972, %v3970
        %v3974 = vrsqrt.pop %v3880
        %v3975 = vmul.f32 %v3880, %v3974
        %vm3976 = vcmp.eq.f32.partialorder %v3880, inf
        %v3977 = vsel %vm3976, %v3880, %v3975
        %vm3978 = vcmp.eq.f32.partialorder %v3880, 0.0
        %v3979 = vand.u32 %v3880, 2147483648
        %v3980 = vsel %vm3978, %v3979, %v3977
        %v3981 = vrsqrt.pop %v3887
        %v3982 = vmul.f32 %v3887, %v3981
        %vm3983 = vcmp.eq.f32.partialorder %v3887, inf
        %v3984 = vsel %vm3983, %v3887, %v3982
        %vm3985 = vcmp.eq.f32.partialorder %v3887, 0.0
        %v3986 = vand.u32 %v3887, 2147483648
        %v3987 = vsel %vm3985, %v3986, %v3984
        %v3988 = vrsqrt.pop %v3894
        %v3989 = vmul.f32 %v3894, %v3988
        %vm3990 = vcmp.eq.f32.partialorder %v3894, inf
        %v3991 = vsel %vm3990, %v3894, %v3989
        %vm3992 = vcmp.eq.f32.partialorder %v3894, 0.0
        %v3993 = vand.u32 %v3894, 2147483648
        %v3994 = vsel %vm3992, %v3993, %v3991
        %v3995 = vrsqrt.pop %v3901
        %v3996 = vmul.f32 %v3901, %v3995
        %vm3997 = vcmp.eq.f32.partialorder %v3901, inf
        %v3998 = vsel %vm3997, %v3901, %v3996
        %vm3999 = vcmp.eq.f32.partialorder %v3901, 0.0
        %v4000 = vand.u32 %v3901, 2147483648
        %v4001 = vsel %vm3999, %v4000, %v3998
        %v4002 = vrsqrt.pop %v3908
        %v4003 = vmul.f32 %v3908, %v4002
        %vm4004 = vcmp.eq.f32.partialorder %v3908, inf
        %v4005 = vsel %vm4004, %v3908, %v4003
        %vm4006 = vcmp.eq.f32.partialorder %v3908, 0.0
        %v4007 = vand.u32 %v3908, 2147483648
        %v4008 = vsel %vm4006, %v4007, %v4005
        %v4009 = vrsqrt.pop %v3915
        %v4010 = vmul.f32 %v3915, %v4009
        %vm4011 = vcmp.eq.f32.partialorder %v3915, inf
        %v4012 = vsel %vm4011, %v3915, %v4010
        %vm4013 = vcmp.eq.f32.partialorder %v3915, 0.0
        %v4014 = vand.u32 %v3915, 2147483648
        %v4015 = vsel %vm4013, %v4014, %v4012
        %v4016 = vmul.f32 %v3936, %v3952
        %v4017 = vmul.f32 %v3937, %v3959
        %v4018 = vmul.f32 %v3938, %v3966
        %v4019 = vmul.f32 %v3939, %v3973
        %v4020 = vmul.f32 %v3940, %v3980
        %v4021 = vmul.f32 %v3941, %v3987
        %v4022 = vmul.f32 %v3942, %v3994
        %v4023 = vmul.f32 %v3943, %v4001
        %v4024 = vmul.f32 %v3944, %v4008
        %v4025 = vmul.f32 %v3945, %v4015
        %v4026 = vrcp.pop %v4016
        %v4027 = vmul.f32 %v3916, %v4026
        %v4028 = vmul.f32 %v3917, %v4026
        %v4029 = vrcp.pop %v4017
        %v4030 = vmul.f32 %v3918, %v4029
        %v4031 = vmul.f32 %v3919, %v4029
        %v4032 = vrcp.pop %v4018
        %v4033 = vmul.f32 %v3920, %v4032
        %v4034 = vmul.f32 %v3921, %v4032
        %v4035 = vrcp.pop %v4019
        %v4036 = vmul.f32 %v3922, %v4035
        %v4037 = vmul.f32 %v3923, %v4035
        %v4038 = vrcp.pop %v4020
        %v4039 = vmul.f32 %v3924, %v4038
        %v4040 = vmul.f32 %v3925, %v4038
        %v4041 = vrcp.pop %v4021
        %v4042 = vmul.f32 %v3926, %v4041
        %v4043 = vmul.f32 %v3927, %v4041
        %v4044 = vrcp.pop %v4022
        %v4045 = vmul.f32 %v3928, %v4044
        %v4046 = vmul.f32 %v3929, %v4044
        %v4047 = vrcp.pop %v4023
        %v4048 = vmul.f32 %v3930, %v4047
        %v4049 = vmul.f32 %v3931, %v4047
        %v4050 = vrcp.pop %v4024
        %v4051 = vmul.f32 %v3932, %v4050
        %v4052 = vmul.f32 %v3933, %v4050
        %v4053 = vrcp.pop %v4025
        %v4054 = vmul.f32 %v3934, %v4053
        %v4055 = vmul.f32 %v3935, %v4053
        %v4056 = vmul.f32 %v3186, %v4027
        %v4057 = vmul.f32 %v3187, %v4028
        %v4058 = vmul.f32 %v3188, %v4030
        %v4059 = vmul.f32 %v3189, %v4031
        %v4060 = vmul.f32 %v3190, %v4033
        %v4061 = vmul.f32 %v3191, %v4034
        %v4062 = vmul.f32 %v3192, %v4036
        %v4063 = vmul.f32 %v3193, %v4037
        %v4064 = vmul.f32 %v3194, %v4039
        %v4065 = vmul.f32 %v3195, %v4040
        %v4066 = vmul.f32 %v3196, %v4042
        %v4067 = vmul.f32 %v3197, %v4043
        %v4068 = vmul.f32 %v3198, %v4045
        %v4069 = vmul.f32 %v3199, %v4046
        %v4070 = vmul.f32 %v3200, %v4048
        %v4071 = vmul.f32 %v3201, %v4049
        %v4072 = vmul.f32 %v3202, %v4051
        %v4073 = vmul.f32 %v3203, %v4052
        %v4074 = vmul.f32 %v3204, %v4054
        %v4075 = vmul.f32 %v3205, %v4055
        %v4076 = vadd.f32 %v4056, %v4057
        %v4077 = vrot.slane %v4076, 4
        %v4078 = vadd.f32 %v4076, %v4077
        %v4079 = vrot.slane %v4078, 2
        %v4080 = vadd.f32 %v4078, %v4079
        %v4081 = vrot.slane %v4080, 1
        %v4082 = vadd.f32 %v4080, %v4081
        %v4083 = vadd.f32 %v4058, %v4059
        %v4084 = vrot.slane %v4083, 4
        %v4085 = vadd.f32 %v4083, %v4084
        %v4086 = vrot.slane %v4085, 2
        %v4087 = vadd.f32 %v4085, %v4086
        %v4088 = vrot.slane %v4087, 1
        %v4089 = vadd.f32 %v4087, %v4088
        %v4090 = vadd.f32 %v4060, %v4061
        %v4091 = vrot.slane %v4090, 4
        %v4092 = vadd.f32 %v4090, %v4091
        %v4093 = vrot.slane %v4092, 2
        %v4094 = vadd.f32 %v4092, %v4093
        %v4095 = vrot.slane %v4094, 1
        %v4096 = vadd.f32 %v4094, %v4095
        %v4097 = vadd.f32 %v4062, %v4063
        %v4098 = vrot.slane %v4097, 4
        %v4099 = vadd.f32 %v4097, %v4098
        %v4100 = vrot.slane %v4099, 2
        %v4101 = vadd.f32 %v4099, %v4100
        %v4102 = vrot.slane %v4101, 1
        %v4103 = vadd.f32 %v4101, %v4102
        %v4104 = vadd.f32 %v4064, %v4065
        %v4105 = vrot.slane %v4104, 4
        %v4106 = vadd.f32 %v4104, %v4105
        %v4107 = vrot.slane %v4106, 2
        %v4108 = vadd.f32 %v4106, %v4107
        %v4109 = vrot.slane %v4108, 1
        %v4110 = vadd.f32 %v4108, %v4109
        %v4111 = vadd.f32 %v4066, %v4067
        %v4112 = vrot.slane %v4111, 4
        %v4113 = vadd.f32 %v4111, %v4112
        %v4114 = vrot.slane %v4113, 2
        %v4115 = vadd.f32 %v4113, %v4114
        %v4116 = vrot.slane %v4115, 1
        %v4117 = vadd.f32 %v4115, %v4116
        %v4118 = vadd.f32 %v4068, %v4069
        %v4119 = vrot.slane %v4118, 4
        %v4120 = vadd.f32 %v4118, %v4119
        %v4121 = vrot.slane %v4120, 2
        %v4122 = vadd.f32 %v4120, %v4121
        %v4123 = vrot.slane %v4122, 1
        %v4124 = vadd.f32 %v4122, %v4123
        %v4125 = vadd.f32 %v4070, %v4071
        %v4126 = vrot.slane %v4125, 4
        %v4127 = vadd.f32 %v4125, %v4126
        %v4128 = vrot.slane %v4127, 2
        %v4129 = vadd.f32 %v4127, %v4128
        %v4130 = vrot.slane %v4129, 1
        %v4131 = vadd.f32 %v4129, %v4130
        %v4132 = vadd.f32 %v4072, %v4073
        %v4133 = vrot.slane %v4132, 4
        %v4134 = vadd.f32 %v4132, %v4133
        %v4135 = vrot.slane %v4134, 2
        %v4136 = vadd.f32 %v4134, %v4135
        %v4137 = vrot.slane %v4136, 1
        %v4138 = vadd.f32 %v4136, %v4137
        %v4139 = vadd.f32 %v4074, %v4075
        %v4140 = vrot.slane %v4139, 4
        %v4141 = vadd.f32 %v4139, %v4140
        %v4142 = vrot.slane %v4141, 2
        %v4143 = vadd.f32 %v4141, %v4142
        %v4144 = vrot.slane %v4143, 1
        %v4145 = vadd.f32 %v4143, %v4144
        %v4146 = vadd.f32 %v3606, %v4082
        %v4147 = vadd.f32 %v3607, %v4089
        %v4148 = vadd.f32 %v3608, %v4096
        %v4149 = vadd.f32 %v3609, %v4103
        %v4150 = vadd.f32 %v3610, %v4110
        %v4151 = vadd.f32 %v3611, %v4117
        %v4152 = vadd.f32 %v3612, %v4124
        %v4153 = vadd.f32 %v3613, %v4131
        %v4154 = vadd.f32 %v3614, %v4138
        %v4155 = vadd.f32 %v3615, %v4145
        %v4156 = vmax.f32 %v4146, %v4150
        %v4157 = vmax.f32 %v4147, %v4151
        %v4158 = vmax.f32 %v4148, %v4152
        %v4159 = vmax.f32 %v4149, %v4153
        %v4160 = vmax.f32 %v4156, %v4154
        %v4161 = vmax.f32 %v4157, %v4155
        %v4162 = vmax.f32 %v4160, %v4161
        %v4163 = vmax.f32 %v4158, %v4159
        %v4164 = vmax.f32 %v4162, %v4163
        %v4165 = vsub.f32 %v4146, %v4164
        %v4166 = vsub.f32 %v4147, %v4164
        %v4167 = vsub.f32 %v4148, %v4164
        %v4168 = vsub.f32 %v4149, %v4164
        %v4169 = vsub.f32 %v4150, %v4164
        %v4170 = vsub.f32 %v4151, %v4164
        %v4171 = vsub.f32 %v4152, %v4164
        %v4172 = vsub.f32 %v4153, %v4164
        %v4173 = vsub.f32 %v4154, %v4164
        %v4174 = vsub.f32 %v4155, %v4164
        %v4175 = vmul.f32 %v4165, 1.442695
        %v4176 = vpow.pop %v4175
        %v4177 = vmul.f32 %v4166, 1.442695
        %v4178 = vpow.pop %v4177
        %v4179 = vmul.f32 %v4167, 1.442695
        %v4180 = vpow.pop %v4179
        %v4181 = vmul.f32 %v4168, 1.442695
        %v4182 = vpow.pop %v4181
        %v4183 = vmul.f32 %v4169, 1.442695
        %v4184 = vpow.pop %v4183
        %v4185 = vmul.f32 %v4170, 1.442695
        %v4186 = vpow.pop %v4185
        %v4187 = vmul.f32 %v4171, 1.442695
        %v4188 = vpow.pop %v4187
        %v4189 = vmul.f32 %v4172, 1.442695
        %v4190 = vpow.pop %v4189
        %v4191 = vmul.f32 %v4173, 1.442695
        %v4192 = vpow.pop %v4191
        %v4193 = vmul.f32 %v4174, 1.442695
        %v4194 = vpow.pop %v4193
        %v4205 = vrot.slane %v4178, 7
        %v4206 = vsel %vm1307, %v4205, %v4176
        %v4207 = vrot.slane %v4180, 6
        %v4208 = vsel %vm1310, %v4207, %v4206
        %v4209 = vrot.slane %v4182, 5
        %v4210 = vsel %vm1313, %v4209, %v4208
        %v4211 = vrot.slane %v4184, 4
        %v4212 = vsel %vm1316, %v4211, %v4210
        %v4213 = vrot.slane %v4186, 3
        %v4214 = vsel %vm1319, %v4213, %v4212
        %v4215 = vrot.slane %v4188, 2
        %v4216 = vsel %vm1322, %v4215, %v4214
        %v4217 = vrot.slane %v4190, 1
        %v4218 = vsel %vm1325, %v4217, %v4216
        %v4219 = vrot.slane %v4194, 7
        %v4220 = vsel %vm1307, %v4219, %v4192
        %v4223 = vsel %vm836, %v4220, 0.0
        %v4224 = vadd.f32 %v4218, %v4223
        %v4225 = vrot.slane %v4224, 4
        %v4226 = vadd.f32 %v4224, %v4225
        %v4227 = vrot.slane %v4226, 2
        %v4228 = vadd.f32 %v4226, %v4227
        %v4229 = vrot.slane %v4228, 1
        %v4230 = vadd.f32 %v4228, %v4229
        %v4231 = vlaneseq
        %v4232 = vshrl.u32 %v4231, 7
        %v4233 = vsub.s32 0, %v4232
        %v4234 = vrot.slane %v4230, %v4233
        %v4235 = vrcp.pop %v4234
        %v4236 = vmul.f32 %v4176, %v4235
        %v4237 = vmul.f32 %v4178, %v4235
        %v4238 = vmul.f32 %v4180, %v4235
        %v4239 = vmul.f32 %v4182, %v4235
        %v4240 = vmul.f32 %v4184, %v4235
        %v4241 = vmul.f32 %v4186, %v4235
        %v4242 = vmul.f32 %v4188, %v4235
        %v4243 = vmul.f32 %v4190, %v4235
        %v4244 = vmul.f32 %v4192, %v4235
        %v4245 = vmul.f32 %v4194, %v4235
        %v4246 = vlaneseq
        %v4247 = vshrl.u32 %v4246, 7
        %v4248 = vsub.s32 0, %v4247
        %v4249 = vrot.slane %v4236, %v4248
        %v4250 = vlaneseq
        %v4251 = vshrl.u32 %v4250, 7
        %v4252 = vsub.s32 0, %v4251
        %v4253 = vrot.slane %v4237, %v4252
        %v4254 = vlaneseq
        %v4255 = vshrl.u32 %v4254, 7
        %v4256 = vsub.s32 0, %v4255
        %v4257 = vrot.slane %v4238, %v4256
        %v4258 = vlaneseq
        %v4259 = vshrl.u32 %v4258, 7
        %v4260 = vsub.s32 0, %v4259
        %v4261 = vrot.slane %v4239, %v4260
        %v4262 = vlaneseq
        %v4263 = vshrl.u32 %v4262, 7
        %v4264 = vsub.s32 0, %v4263
        %v4265 = vrot.slane %v4240, %v4264
        %v4266 = vlaneseq
        %v4267 = vshrl.u32 %v4266, 7
        %v4268 = vsub.s32 0, %v4267
        %v4269 = vrot.slane %v4241, %v4268
        %v4270 = vlaneseq
        %v4271 = vshrl.u32 %v4270, 7
        %v4272 = vsub.s32 0, %v4271
        %v4273 = vrot.slane %v4242, %v4272
        %v4274 = vlaneseq
        %v4275 = vshrl.u32 %v4274, 7
        %v4276 = vsub.s32 0, %v4275
        %v4277 = vrot.slane %v4243, %v4276
        %v4278 = vlaneseq
        %v4279 = vshrl.u32 %v4278, 7
        %v4280 = vsub.s32 0, %v4279
        %v4281 = vrot.slane %v4244, %v4280
        %v4282 = vlaneseq
        %v4283 = vshrl.u32 %v4282, 7
        %v4284 = vsub.s32 0, %v4283
        %v4285 = vrot.slane %v4245, %v4284
        %v4286 = vmul.f32 %v4249, %v3186
        %v4287 = vmul.f32 %v4249, %v3187
        %v4288 = vmul.f32 %v4253, %v3188
        %v4289 = vmul.f32 %v4253, %v3189
        %v4290 = vmul.f32 %v4257, %v3190
        %v4291 = vmul.f32 %v4257, %v3191
        %v4292 = vmul.f32 %v4261, %v3192
        %v4293 = vmul.f32 %v4261, %v3193
        %v4294 = vmul.f32 %v4265, %v3194
        %v4295 = vmul.f32 %v4265, %v3195
        %v4296 = vmul.f32 %v4269, %v3196
        %v4297 = vmul.f32 %v4269, %v3197
        %v4298 = vmul.f32 %v4273, %v3198
        %v4299 = vmul.f32 %v4273, %v3199
        %v4300 = vmul.f32 %v4277, %v3200
        %v4301 = vmul.f32 %v4277, %v3201
        %v4302 = vmul.f32 %v4281, %v3202
        %v4303 = vmul.f32 %v4281, %v3203
        %v4304 = vmul.f32 %v4285, %v3204
        %v4305 = vmul.f32 %v4285, %v3205
        %4306 = vadd.xlane.f32.xlu0 %v4286
        %v4307 = vpop.xlane.xlu0 %4306
        %4308 = vadd.xlane.f32.xlu0 %v4287
        %v4309 = vpop.xlane.xlu0 %4308
        %4310 = vadd.xlane.f32.xlu0 %v4288
        %v4311 = vpop.xlane.xlu0 %4310
        %4312 = vadd.xlane.f32.xlu0 %v4289
        %v4313 = vpop.xlane.xlu0 %4312
        %4314 = vadd.xlane.f32.xlu0 %v4290
        %v4315 = vpop.xlane.xlu0 %4314
        %4316 = vadd.xlane.f32.xlu0 %v4291
        %v4317 = vpop.xlane.xlu0 %4316
        %4318 = vadd.xlane.f32.xlu0 %v4292
        %v4319 = vpop.xlane.xlu0 %4318
        %4320 = vadd.xlane.f32.xlu0 %v4293
        %v4321 = vpop.xlane.xlu0 %4320
        %4322 = vadd.xlane.f32.xlu0 %v4294
        %v4323 = vpop.xlane.xlu0 %4322
        %4324 = vadd.xlane.f32.xlu0 %v4295
        %v4325 = vpop.xlane.xlu0 %4324
        %4326 = vadd.xlane.f32.xlu0 %v4296
        %v4327 = vpop.xlane.xlu0 %4326
        %4328 = vadd.xlane.f32.xlu0 %v4297
        %v4329 = vpop.xlane.xlu0 %4328
        %4330 = vadd.xlane.f32.xlu0 %v4298
        %v4331 = vpop.xlane.xlu0 %4330
        %4332 = vadd.xlane.f32.xlu0 %v4299
        %v4333 = vpop.xlane.xlu0 %4332
        %4334 = vadd.xlane.f32.xlu0 %v4300
        %v4335 = vpop.xlane.xlu0 %4334
        %4336 = vadd.xlane.f32.xlu0 %v4301
        %v4337 = vpop.xlane.xlu0 %4336
        %4338 = vadd.xlane.f32.xlu0 %v4302
        %v4339 = vpop.xlane.xlu0 %4338
        %4340 = vadd.xlane.f32.xlu0 %v4303
        %v4341 = vpop.xlane.xlu0 %4340
        %4342 = vadd.xlane.f32.xlu0 %v4304
        %v4343 = vpop.xlane.xlu0 %4342
        %4344 = vadd.xlane.f32.xlu0 %v4305
        %v4345 = vpop.xlane.xlu0 %4344
        %v4346 = vadd.f32 %v4307, %v2002
        %v4347 = vadd.f32 %v4309, %v2006
        %v4348 = vadd.f32 %v4311, %v2013
        %v4349 = vadd.f32 %v4313, %v2017
        %v4350 = vadd.f32 %v4315, %v2024
        %v4351 = vadd.f32 %v4317, %v2028
        %v4352 = vadd.f32 %v4319, %v2035
        %v4353 = vadd.f32 %v4321, %v2039
        %v4354 = vadd.f32 %v4323, %v2046
        %v4355 = vadd.f32 %v4325, %v2050
        %v4356 = vadd.f32 %v4327, %v2057
        %v4357 = vadd.f32 %v4329, %v2061
        %v4358 = vadd.f32 %v4331, %v2068
        %v4359 = vadd.f32 %v4333, %v2072
        %v4360 = vadd.f32 %v4335, %v2079
        %v4361 = vadd.f32 %v4337, %v2083
        %v4362 = vadd.f32 %v4339, %v2090
        %v4363 = vadd.f32 %v4341, %v2094
        %v4364 = vadd.f32 %v4343, %v2101
        %v4365 = vadd.f32 %v4345, %v2105
        %v4366 = vmul.f32 %v4346, %v4346
        %v4367 = vmul.f32 %v4347, %v4347
        %v4368 = vmul.f32 %v4348, %v4348
        %v4369 = vmul.f32 %v4349, %v4349
        %v4370 = vmul.f32 %v4350, %v4350
        %v4371 = vmul.f32 %v4351, %v4351
        %v4372 = vmul.f32 %v4352, %v4352
        %v4373 = vmul.f32 %v4353, %v4353
        %v4374 = vmul.f32 %v4354, %v4354
        %v4375 = vmul.f32 %v4355, %v4355
        %v4376 = vmul.f32 %v4356, %v4356
        %v4377 = vmul.f32 %v4357, %v4357
        %v4378 = vmul.f32 %v4358, %v4358
        %v4379 = vmul.f32 %v4359, %v4359
        %v4380 = vmul.f32 %v4360, %v4360
        %v4381 = vmul.f32 %v4361, %v4361
        %v4382 = vmul.f32 %v4362, %v4362
        %v4383 = vmul.f32 %v4363, %v4363
        %v4384 = vmul.f32 %v4364, %v4364
        %v4385 = vmul.f32 %v4365, %v4365
        %4406 = vset.pattern.permute.xlu0 0
        %4407 = vperm.xlu0 %4406, %v4366
        %v4408 = vpop.permute.xlu0 %4407
        %4409 = vset.pattern.permute.xlu0 0
        %4410 = vperm.xlu0 %4409, %v4367
        %v4411 = vpop.permute.xlu0 %4410
        %4412 = vset.pattern.permute.xlu0 0
        %4413 = vperm.xlu0 %4412, %v4368
        %v4414 = vpop.permute.xlu0 %4413
        %4415 = vset.pattern.permute.xlu0 0
        %4416 = vperm.xlu0 %4415, %v4369
        %v4417 = vpop.permute.xlu0 %4416
        %4418 = vset.pattern.permute.xlu0 0
        %4419 = vperm.xlu0 %4418, %v4370
        %v4420 = vpop.permute.xlu0 %4419
        %4421 = vset.pattern.permute.xlu0 0
        %4422 = vperm.xlu0 %4421, %v4371
        %v4423 = vpop.permute.xlu0 %4422
        %4424 = vset.pattern.permute.xlu0 0
        %4425 = vperm.xlu0 %4424, %v4372
        %v4426 = vpop.permute.xlu0 %4425
        %4427 = vset.pattern.permute.xlu0 0
        %4428 = vperm.xlu0 %4427, %v4373
        %v4429 = vpop.permute.xlu0 %4428
        %4430 = vset.pattern.permute.xlu0 0
        %4431 = vperm.xlu0 %4430, %v4374
        %v4432 = vpop.permute.xlu0 %4431
        %4433 = vset.pattern.permute.xlu0 0
        %4434 = vperm.xlu0 %4433, %v4375
        %v4435 = vpop.permute.xlu0 %4434
        %4436 = vset.pattern.permute.xlu0 0
        %4437 = vperm.xlu0 %4436, %v4376
        %v4438 = vpop.permute.xlu0 %4437
        %4439 = vset.pattern.permute.xlu0 0
        %4440 = vperm.xlu0 %4439, %v4377
        %v4441 = vpop.permute.xlu0 %4440
        %4442 = vset.pattern.permute.xlu0 0
        %4443 = vperm.xlu0 %4442, %v4378
        %v4444 = vpop.permute.xlu0 %4443
        %4445 = vset.pattern.permute.xlu0 0
        %4446 = vperm.xlu0 %4445, %v4379
        %v4447 = vpop.permute.xlu0 %4446
        %4448 = vset.pattern.permute.xlu0 0
        %4449 = vperm.xlu0 %4448, %v4380
        %v4450 = vpop.permute.xlu0 %4449
        %4451 = vset.pattern.permute.xlu0 0
        %4452 = vperm.xlu0 %4451, %v4381
        %v4453 = vpop.permute.xlu0 %4452
        %4454 = vset.pattern.permute.xlu0 0
        %4455 = vperm.xlu0 %4454, %v4382
        %v4456 = vpop.permute.xlu0 %4455
        %4457 = vset.pattern.permute.xlu0 0
        %4458 = vperm.xlu0 %4457, %v4383
        %v4459 = vpop.permute.xlu0 %4458
        %4460 = vset.pattern.permute.xlu0 0
        %4461 = vperm.xlu0 %4460, %v4384
        %v4462 = vpop.permute.xlu0 %4461
        %4463 = vset.pattern.permute.xlu0 0
        %4464 = vperm.xlu0 %4463, %v4385
        %v4465 = vpop.permute.xlu0 %4464
        %v4466 = vlaneseq
        %v4467 = vshrl.u32 %v4466, 7
        %v4468 = vsub.s32 %v2247, %v4467
        %v4469 = vrot.slane %v4408, %v4468
        %v4470 = vlaneseq
        %v4471 = vshrl.u32 %v4470, 7
        %v4472 = vsub.s32 %v2252, %v4471
        %v4473 = vrot.slane %v4411, %v4472
        %v4474 = vsel %vm2257, %v4473, %v4469
        %v4475 = vlaneseq
        %v4476 = vshrl.u32 %v4475, 7
        %v4477 = vsub.s32 %v2247, %v4476
        %v4478 = vrot.slane %v4414, %v4477
        %v4479 = vlaneseq
        %v4480 = vshrl.u32 %v4479, 7
        %v4481 = vsub.s32 %v2252, %v4480
        %v4482 = vrot.slane %v4417, %v4481
        %v4483 = vsel %vm2257, %v4482, %v4478
        %v4484 = vlaneseq
        %v4485 = vshrl.u32 %v4484, 7
        %v4486 = vsub.s32 %v2247, %v4485
        %v4487 = vrot.slane %v4420, %v4486
        %v4488 = vlaneseq
        %v4489 = vshrl.u32 %v4488, 7
        %v4490 = vsub.s32 %v2252, %v4489
        %v4491 = vrot.slane %v4423, %v4490
        %v4492 = vsel %vm2257, %v4491, %v4487
        %v4493 = vlaneseq
        %v4494 = vshrl.u32 %v4493, 7
        %v4495 = vsub.s32 %v2247, %v4494
        %v4496 = vrot.slane %v4426, %v4495
        %v4497 = vlaneseq
        %v4498 = vshrl.u32 %v4497, 7
        %v4499 = vsub.s32 %v2252, %v4498
        %v4500 = vrot.slane %v4429, %v4499
        %v4501 = vsel %vm2257, %v4500, %v4496
        %v4502 = vlaneseq
        %v4503 = vshrl.u32 %v4502, 7
        %v4504 = vsub.s32 %v2247, %v4503
        %v4505 = vrot.slane %v4432, %v4504
        %v4506 = vlaneseq
        %v4507 = vshrl.u32 %v4506, 7
        %v4508 = vsub.s32 %v2252, %v4507
        %v4509 = vrot.slane %v4435, %v4508
        %v4510 = vsel %vm2257, %v4509, %v4505
        %v4511 = vlaneseq
        %v4512 = vshrl.u32 %v4511, 7
        %v4513 = vsub.s32 %v2247, %v4512
        %v4514 = vrot.slane %v4438, %v4513
        %v4515 = vlaneseq
        %v4516 = vshrl.u32 %v4515, 7
        %v4517 = vsub.s32 %v2252, %v4516
        %v4518 = vrot.slane %v4441, %v4517
        %v4519 = vsel %vm2257, %v4518, %v4514
        %v4520 = vlaneseq
        %v4521 = vshrl.u32 %v4520, 7
        %v4522 = vsub.s32 %v2247, %v4521
        %v4523 = vrot.slane %v4444, %v4522
        %v4524 = vlaneseq
        %v4525 = vshrl.u32 %v4524, 7
        %v4526 = vsub.s32 %v2252, %v4525
        %v4527 = vrot.slane %v4447, %v4526
        %v4528 = vsel %vm2257, %v4527, %v4523
        %v4529 = vlaneseq
        %v4530 = vshrl.u32 %v4529, 7
        %v4531 = vsub.s32 %v2247, %v4530
        %v4532 = vrot.slane %v4450, %v4531
        %v4533 = vlaneseq
        %v4534 = vshrl.u32 %v4533, 7
        %v4535 = vsub.s32 %v2252, %v4534
        %v4536 = vrot.slane %v4453, %v4535
        %v4537 = vsel %vm2257, %v4536, %v4532
        %v4538 = vlaneseq
        %v4539 = vshrl.u32 %v4538, 7
        %v4540 = vsub.s32 %v2247, %v4539
        %v4541 = vrot.slane %v4456, %v4540
        %v4542 = vlaneseq
        %v4543 = vshrl.u32 %v4542, 7
        %v4544 = vsub.s32 %v2252, %v4543
        %v4545 = vrot.slane %v4459, %v4544
        %v4546 = vsel %vm2257, %v4545, %v4541
        %v4547 = vlaneseq
        %v4548 = vshrl.u32 %v4547, 7
        %v4549 = vsub.s32 %v2247, %v4548
        %v4550 = vrot.slane %v4462, %v4549
        %v4551 = vlaneseq
        %v4552 = vshrl.u32 %v4551, 7
        %v4553 = vsub.s32 %v2252, %v4552
        %v4554 = vrot.slane %v4465, %v4553
        %v4555 = vsel %vm2257, %v4554, %v4550
        %v4556 = vsel %vm1307, %v4483, %v4474
        %v4557 = vsel %vm1310, %v4492, %v4556
        %v4558 = vsel %vm1313, %v4501, %v4557
        %v4559 = vsel %vm1316, %v4510, %v4558
        %v4560 = vsel %vm1319, %v4519, %v4559
        %v4561 = vsel %vm1322, %v4528, %v4560
        %v4562 = vsel %vm1325, %v4537, %v4561
        %v4563 = vsel %vm1307, %v4555, %v4546
        %v4566 = vsel %vm2350, %v4562, 0.0
        %4567 = vadd.xlane.f32.xlu0 %v4566
        %v4568 = vpop.xlane.xlu0 %4567
        %v4569 = vsel %vm2354, %v4563, 0.0
        %4570 = vadd.xlane.f32.xlu0 %v4569
        %v4571 = vpop.xlane.xlu0 %4570
        %v4574 = vlaneseq
        %v4575 = vshrl.u32 %v4574, 7
        %v4576 = vsub.s32 0, %v4575
        %v4577 = vrot.slane %v4568, %v4576
        %v4578 = vlaneseq
        %v4579 = vshrl.u32 %v4578, 7
        %v4580 = vsub.s32 1, %v4579
        %v4581 = vrot.slane %v4568, %v4580
        %v4582 = vlaneseq
        %v4583 = vshrl.u32 %v4582, 7
        %v4584 = vsub.s32 2, %v4583
        %v4585 = vrot.slane %v4568, %v4584
        %v4586 = vlaneseq
        %v4587 = vshrl.u32 %v4586, 7
        %v4588 = vsub.s32 3, %v4587
        %v4589 = vrot.slane %v4568, %v4588
        %v4590 = vlaneseq
        %v4591 = vshrl.u32 %v4590, 7
        %v4592 = vsub.s32 4, %v4591
        %v4593 = vrot.slane %v4568, %v4592
        %v4594 = vlaneseq
        %v4595 = vshrl.u32 %v4594, 7
        %v4596 = vsub.s32 5, %v4595
        %v4597 = vrot.slane %v4568, %v4596
        %v4598 = vlaneseq
        %v4599 = vshrl.u32 %v4598, 7
        %v4600 = vsub.s32 6, %v4599
        %v4601 = vrot.slane %v4568, %v4600
        %v4602 = vlaneseq
        %v4603 = vshrl.u32 %v4602, 7
        %v4604 = vsub.s32 7, %v4603
        %v4605 = vrot.slane %v4568, %v4604
        %v4606 = vlaneseq
        %v4607 = vshrl.u32 %v4606, 7
        %v4608 = vsub.s32 0, %v4607
        %v4609 = vrot.slane %v4571, %v4608
        %v4610 = vlaneseq
        %v4611 = vshrl.u32 %v4610, 7
        %v4612 = vsub.s32 1, %v4611
        %v4613 = vrot.slane %v4571, %v4612
        %v4624 = vmul.f32 %v4346, %v4577
        %v4625 = vmul.f32 %v4347, %v4577
        %v4626 = vmul.f32 %v4348, %v4581
        %v4627 = vmul.f32 %v4349, %v4581
        %v4628 = vmul.f32 %v4350, %v4585
        %v4629 = vmul.f32 %v4351, %v4585
        %v4630 = vmul.f32 %v4352, %v4589
        %v4631 = vmul.f32 %v4353, %v4589
        %v4632 = vmul.f32 %v4354, %v4593
        %v4633 = vmul.f32 %v4355, %v4593
        %v4634 = vmul.f32 %v4356, %v4597
        %v4635 = vmul.f32 %v4357, %v4597
        %v4636 = vmul.f32 %v4358, %v4601
        %v4637 = vmul.f32 %v4359, %v4601
        %v4638 = vmul.f32 %v4360, %v4605
        %v4639 = vmul.f32 %v4361, %v4605
        %v4640 = vmul.f32 %v4362, %v4609
        %v4641 = vmul.f32 %v4363, %v4609
        %v4642 = vmul.f32 %v4364, %v4613
        %v4643 = vmul.f32 %v4365, %v4613
        %v4644 = vadd.f32 %v4568, 1.0
        %v4645 = vadd.f32 %v4571, 1.0
        %v4646 = vrsqrt.pop %v4568
        %v4647 = vmul.f32 %v4568, %v4646
        %vm4648 = vcmp.eq.f32.partialorder %v4568, inf
        %v4649 = vsel %vm4648, %v4568, %v4647
        %vm4650 = vcmp.eq.f32.partialorder %v4568, 0.0
        %v4651 = vand.u32 %v4568, 2147483648
        %v4652 = vsel %vm4650, %v4651, %v4649
        %v4653 = vrsqrt.pop %v4571
        %v4654 = vmul.f32 %v4571, %v4653
        %vm4655 = vcmp.eq.f32.partialorder %v4571, inf
        %v4656 = vsel %vm4655, %v4571, %v4654
        %vm4657 = vcmp.eq.f32.partialorder %v4571, 0.0
        %v4658 = vand.u32 %v4571, 2147483648
        %v4659 = vsel %vm4657, %v4658, %v4656
        %v4660 = vmul.f32 %v4644, %v4652
        %v4661 = vmul.f32 %v4645, %v4659
        %v4664 = vlaneseq
        %v4665 = vshrl.u32 %v4664, 7
        %v4666 = vsub.s32 0, %v4665
        %v4667 = vrot.slane %v4660, %v4666
        %v4668 = vlaneseq
        %v4669 = vshrl.u32 %v4668, 7
        %v4670 = vsub.s32 1, %v4669
        %v4671 = vrot.slane %v4660, %v4670
        %v4672 = vlaneseq
        %v4673 = vshrl.u32 %v4672, 7
        %v4674 = vsub.s32 2, %v4673
        %v4675 = vrot.slane %v4660, %v4674
        %v4676 = vlaneseq
        %v4677 = vshrl.u32 %v4676, 7
        %v4678 = vsub.s32 3, %v4677
        %v4679 = vrot.slane %v4660, %v4678
        %v4680 = vlaneseq
        %v4681 = vshrl.u32 %v4680, 7
        %v4682 = vsub.s32 4, %v4681
        %v4683 = vrot.slane %v4660, %v4682
        %v4684 = vlaneseq
        %v4685 = vshrl.u32 %v4684, 7
        %v4686 = vsub.s32 5, %v4685
        %v4687 = vrot.slane %v4660, %v4686
        %v4688 = vlaneseq
        %v4689 = vshrl.u32 %v4688, 7
        %v4690 = vsub.s32 6, %v4689
        %v4691 = vrot.slane %v4660, %v4690
        %v4692 = vlaneseq
        %v4693 = vshrl.u32 %v4692, 7
        %v4694 = vsub.s32 7, %v4693
        %v4695 = vrot.slane %v4660, %v4694
        %v4696 = vlaneseq
        %v4697 = vshrl.u32 %v4696, 7
        %v4698 = vsub.s32 0, %v4697
        %v4699 = vrot.slane %v4661, %v4698
        %v4700 = vlaneseq
        %v4701 = vshrl.u32 %v4700, 7
        %v4702 = vsub.s32 1, %v4701
        %v4703 = vrot.slane %v4661, %v4702
        %v4714 = vrcp.pop %v4667
        %v4715 = vmul.f32 %v4624, %v4714
        %v4716 = vmul.f32 %v4625, %v4714
        %v4717 = vrcp.pop %v4671
        %v4718 = vmul.f32 %v4626, %v4717
        %v4719 = vmul.f32 %v4627, %v4717
        %v4720 = vrcp.pop %v4675
        %v4721 = vmul.f32 %v4628, %v4720
        %v4722 = vmul.f32 %v4629, %v4720
        %v4723 = vrcp.pop %v4679
        %v4724 = vmul.f32 %v4630, %v4723
        %v4725 = vmul.f32 %v4631, %v4723
        %v4726 = vrcp.pop %v4683
        %v4727 = vmul.f32 %v4632, %v4726
        %v4728 = vmul.f32 %v4633, %v4726
        %v4729 = vrcp.pop %v4687
        %v4730 = vmul.f32 %v4634, %v4729
        %v4731 = vmul.f32 %v4635, %v4729
        %v4732 = vrcp.pop %v4691
        %v4733 = vmul.f32 %v4636, %v4732
        %v4734 = vmul.f32 %v4637, %v4732
        %v4735 = vrcp.pop %v4695
        %v4736 = vmul.f32 %v4638, %v4735
        %v4737 = vmul.f32 %v4639, %v4735
        %v4738 = vrcp.pop %v4699
        %v4739 = vmul.f32 %v4640, %v4738
        %v4740 = vmul.f32 %v4641, %v4738
        %v4741 = vrcp.pop %v4703
        %v4742 = vmul.f32 %v4642, %v4741
        %v4743 = vmul.f32 %v4643, %v4741
        %4764 = vset.pattern.permute.xlu0 0
        %4765 = vperm.xlu0 %4764, %v4715
        %v4766 = vpop.permute.xlu0 %4765
        %4767 = vset.pattern.permute.xlu0 0
        %4768 = vperm.xlu0 %4767, %v4716
        %v4769 = vpop.permute.xlu0 %4768
        %4770 = vset.pattern.permute.xlu0 0
        %4771 = vperm.xlu0 %4770, %v4718
        %v4772 = vpop.permute.xlu0 %4771
        %4773 = vset.pattern.permute.xlu0 0
        %4774 = vperm.xlu0 %4773, %v4719
        %v4775 = vpop.permute.xlu0 %4774
        %4776 = vset.pattern.permute.xlu0 0
        %4777 = vperm.xlu0 %4776, %v4721
        %v4778 = vpop.permute.xlu0 %4777
        %4779 = vset.pattern.permute.xlu0 0
        %4780 = vperm.xlu0 %4779, %v4722
        %v4781 = vpop.permute.xlu0 %4780
        %4782 = vset.pattern.permute.xlu0 0
        %4783 = vperm.xlu0 %4782, %v4724
        %v4784 = vpop.permute.xlu0 %4783
        %4785 = vset.pattern.permute.xlu0 0
        %4786 = vperm.xlu0 %4785, %v4725
        %v4787 = vpop.permute.xlu0 %4786
        %4788 = vset.pattern.permute.xlu0 0
        %4789 = vperm.xlu0 %4788, %v4727
        %v4790 = vpop.permute.xlu0 %4789
        %4791 = vset.pattern.permute.xlu0 0
        %4792 = vperm.xlu0 %4791, %v4728
        %v4793 = vpop.permute.xlu0 %4792
        %4794 = vset.pattern.permute.xlu0 0
        %4795 = vperm.xlu0 %4794, %v4730
        %v4796 = vpop.permute.xlu0 %4795
        %4797 = vset.pattern.permute.xlu0 0
        %4798 = vperm.xlu0 %4797, %v4731
        %v4799 = vpop.permute.xlu0 %4798
        %4800 = vset.pattern.permute.xlu0 0
        %4801 = vperm.xlu0 %4800, %v4733
        %v4802 = vpop.permute.xlu0 %4801
        %4803 = vset.pattern.permute.xlu0 0
        %4804 = vperm.xlu0 %4803, %v4734
        %v4805 = vpop.permute.xlu0 %4804
        %4806 = vset.pattern.permute.xlu0 0
        %4807 = vperm.xlu0 %4806, %v4736
        %v4808 = vpop.permute.xlu0 %4807
        %4809 = vset.pattern.permute.xlu0 0
        %4810 = vperm.xlu0 %4809, %v4737
        %v4811 = vpop.permute.xlu0 %4810
        %4812 = vset.pattern.permute.xlu0 0
        %4813 = vperm.xlu0 %4812, %v4739
        %v4814 = vpop.permute.xlu0 %4813
        %4815 = vset.pattern.permute.xlu0 0
        %4816 = vperm.xlu0 %4815, %v4740
        %v4817 = vpop.permute.xlu0 %4816
        %4818 = vset.pattern.permute.xlu0 0
        %4819 = vperm.xlu0 %4818, %v4742
        %v4820 = vpop.permute.xlu0 %4819
        %4821 = vset.pattern.permute.xlu0 0
        %4822 = vperm.xlu0 %4821, %v4743
        %v4823 = vpop.permute.xlu0 %4822
        %v4824 = vlaneseq
        %v4825 = vshrl.u32 %v4824, 7
        %v4826 = vsub.s32 %v2247, %v4825
        %v4827 = vrot.slane %v4766, %v4826
        %v4828 = vlaneseq
        %v4829 = vshrl.u32 %v4828, 7
        %v4830 = vsub.s32 %v2252, %v4829
        %v4831 = vrot.slane %v4769, %v4830
        %v4832 = vsel %vm2257, %v4831, %v4827
        %v4833 = vlaneseq
        %v4834 = vshrl.u32 %v4833, 7
        %v4835 = vsub.s32 %v2247, %v4834
        %v4836 = vrot.slane %v4772, %v4835
        %v4837 = vlaneseq
        %v4838 = vshrl.u32 %v4837, 7
        %v4839 = vsub.s32 %v2252, %v4838
        %v4840 = vrot.slane %v4775, %v4839
        %v4841 = vsel %vm2257, %v4840, %v4836
        %v4842 = vlaneseq
        %v4843 = vshrl.u32 %v4842, 7
        %v4844 = vsub.s32 %v2247, %v4843
        %v4845 = vrot.slane %v4778, %v4844
        %v4846 = vlaneseq
        %v4847 = vshrl.u32 %v4846, 7
        %v4848 = vsub.s32 %v2252, %v4847
        %v4849 = vrot.slane %v4781, %v4848
        %v4850 = vsel %vm2257, %v4849, %v4845
        %v4851 = vlaneseq
        %v4852 = vshrl.u32 %v4851, 7
        %v4853 = vsub.s32 %v2247, %v4852
        %v4854 = vrot.slane %v4784, %v4853
        %v4855 = vlaneseq
        %v4856 = vshrl.u32 %v4855, 7
        %v4857 = vsub.s32 %v2252, %v4856
        %v4858 = vrot.slane %v4787, %v4857
        %v4859 = vsel %vm2257, %v4858, %v4854
        %v4860 = vlaneseq
        %v4861 = vshrl.u32 %v4860, 7
        %v4862 = vsub.s32 %v2247, %v4861
        %v4863 = vrot.slane %v4790, %v4862
        %v4864 = vlaneseq
        %v4865 = vshrl.u32 %v4864, 7
        %v4866 = vsub.s32 %v2252, %v4865
        %v4867 = vrot.slane %v4793, %v4866
        %v4868 = vsel %vm2257, %v4867, %v4863
        %v4869 = vlaneseq
        %v4870 = vshrl.u32 %v4869, 7
        %v4871 = vsub.s32 %v2247, %v4870
        %v4872 = vrot.slane %v4796, %v4871
        %v4873 = vlaneseq
        %v4874 = vshrl.u32 %v4873, 7
        %v4875 = vsub.s32 %v2252, %v4874
        %v4876 = vrot.slane %v4799, %v4875
        %v4877 = vsel %vm2257, %v4876, %v4872
        %v4878 = vlaneseq
        %v4879 = vshrl.u32 %v4878, 7
        %v4880 = vsub.s32 %v2247, %v4879
        %v4881 = vrot.slane %v4802, %v4880
        %v4882 = vlaneseq
        %v4883 = vshrl.u32 %v4882, 7
        %v4884 = vsub.s32 %v2252, %v4883
        %v4885 = vrot.slane %v4805, %v4884
        %v4886 = vsel %vm2257, %v4885, %v4881
        %v4887 = vlaneseq
        %v4888 = vshrl.u32 %v4887, 7
        %v4889 = vsub.s32 %v2247, %v4888
        %v4890 = vrot.slane %v4808, %v4889
        %v4891 = vlaneseq
        %v4892 = vshrl.u32 %v4891, 7
        %v4893 = vsub.s32 %v2252, %v4892
        %v4894 = vrot.slane %v4811, %v4893
        %v4895 = vsel %vm2257, %v4894, %v4890
        %v4896 = vlaneseq
        %v4897 = vshrl.u32 %v4896, 7
        %v4898 = vsub.s32 %v2247, %v4897
        %v4899 = vrot.slane %v4814, %v4898
        %v4900 = vlaneseq
        %v4901 = vshrl.u32 %v4900, 7
        %v4902 = vsub.s32 %v2252, %v4901
        %v4903 = vrot.slane %v4817, %v4902
        %v4904 = vsel %vm2257, %v4903, %v4899
        %v4905 = vlaneseq
        %v4906 = vshrl.u32 %v4905, 7
        %v4907 = vsub.s32 %v2247, %v4906
        %v4908 = vrot.slane %v4820, %v4907
        %v4909 = vlaneseq
        %v4910 = vshrl.u32 %v4909, 7
        %v4911 = vsub.s32 %v2252, %v4910
        %v4912 = vrot.slane %v4823, %v4911
        %v4913 = vsel %vm2257, %v4912, %v4908
        %v4914 = vsel %vm1307, %v4841, %v4832
        %v4915 = vsel %vm1310, %v4850, %v4914
        %v4916 = vsel %vm1313, %v4859, %v4915
        %v4917 = vsel %vm1316, %v4868, %v4916
        %v4918 = vsel %vm1319, %v4877, %v4917
        %v4919 = vsel %vm1322, %v4886, %v4918
        %v4920 = vsel %vm1325, %v4895, %v4919
        %v4921 = vsel %vm1307, %v4913, %v4904
        %s4924 = scalar_lea.vmem %s222, 16
        %4925 = vst.msk [vmem:[%s4924] sm:$0xff] %vm2350, %v4920
        %4926 = vst.msk [vmem:[%s4924 + $0x8] sm:$0x3] %vm2354, %v4921
        %s4927 = smul.u32 2, %s18
        %p4928 = scmp.lt.s32.totalorder %s4927, 3
        %s4929 = scalar_select %p4928, %s4927, 3
        %s4930 = smul.addr %s4929, 2
        %s4931 = smul.addr %s4930, 8
        %s4932 = scalar_lea.vmem %s3, %s4931
        // Predicated region
        $region45: #{tpu_custom_call.1} parent=31 // pred_check
          %p4933 = pneg %p104
        $region46: #{tpu_custom_call.1} parent=31 // pred_check_branch
          %4935 = sbr.rel (%p4933) target = $region48
        $region47: #{tpu_custom_call.1} parent=31 // pred_region
          %s4936 = smul.u32 2, %s18
        $region48: #{tpu_custom_call.1} parent=31 // pred_fallthru
          _
      $region32: #{tpu_custom_call.1} parent=5 // pred_fallthru
        _
      %p4937 = scmp.le.s32.totalorder 2, %s13
      // Predicated region
      $region49: #{tpu_custom_call.1} parent=5 // pred_check
        %p4938 = pneg %p4937
      $region50: #{tpu_custom_call.1} parent=5 // pred_check_branch
        %4940 = sbr.rel (%p4938) target = $region52
      $region51: #{tpu_custom_call.1} parent=5 // pred_region
        %s4941 = ssub.s32 %s13, 2
        // Predicated region
        $region53: #{tpu_custom_call.1} parent=51 // pred_check
          %p4942 = pneg %p110
        $region54: #{tpu_custom_call.1} parent=51 // pred_check_branch
          %4944 = sbr.rel (%p4942) target = $region56
        $region55: #{tpu_custom_call.1} parent=51 // pred_region
          %s4945 = smul.u32 2, %s19
          %p4946 = scmp.lt.s32.totalorder %s4945, 3
          %s4947 = scalar_select %p4946, %s4945, 3
          %s4948 = smul.addr %s4947, 2
          %s4949 = smul.addr %s4948, 8
          %s4950 = scalar_lea.vmem %s3, %s4949
        $region56: #{tpu_custom_call.1} parent=51 // pred_fallthru
          _
      $region52: #{tpu_custom_call.1} parent=5 // pred_fallthru
        _
    $region6: #{tpu_custom_call.1} parent=1 // loop_footer
      %s17 = sadd.s32 1, %s13
    $region7: #{tpu_custom_call.1} parent=1 // loop_footer_branch
      %12 = sbr.rel target = $region3
    $region8: #{tpu_custom_call.1} parent=1 // loop_exit
      _
    %4951 = vsyncpa [#allocation3], 1
    %s4952 = scalar_lea.sflag [#allocation3], 1
    %4953 = vsyncpa %s4952, 1
    %4954 = vsyncpa [#allocation5], 1

// kernel: tpu_custom_call.1
$region0: #{tpu_custom_call.1}
  #allocation0 [shape = 'u32[]', space=smem, size = 0x4, offset = 0x4, fixed_abs, tag = 'smem constant byte address 0x4 - core index']
  #allocation1 [shape = 'u32[144,128]{1,0:T(1,128)}', space=vmem, size = 0x12000, scoped, tag = 'internal scratch']
  %s0 = inlined_call_operand.hbm [shape: f32[4,8,128], index: 0, kind: input, shape index: {}]
  %s1 = inlined_call_operand.hbm [shape: f32[8,10,16,128], index: 1, kind: input, shape index: {}]
  %s2 = inlined_call_operand.hbm [shape: f32[10,16], index: 2, kind: input, shape index: {}]
  %s3 = inlined_call_operand.vmem [shape: f32[4,10,16], index: 3, kind: output, shape index: {}]
  %s4 = sld [smem:[#allocation0]]
  $region57: #{tpu_custom_call.1} parent=0
    _
  %s6 = ssub.s32 1, %s4
  %s7 = scalar_select 0, %s6, %s4
  $region1: #{tpu_custom_call.1} parent=0
    #allocation2 [shape = 'u8[16384]{0}', space=vmem, size = 0x4000, scoped, tag = 'input window, operand 0']
    #allocation3 [shape = 's32[2]{0}', space=sflag, size = 0x8, scoped, tag = 'scoped memory for tpu_custom_call.1']
    #allocation4 [shape = 'u8[655360]{0}', space=vmem, size = 0xa0000, scoped, tag = 'input window, operand 1, single buffered']
    #allocation5 [shape = 's32[1]{0}', space=sflag, size = 0x4, scoped, tag = 'scoped memory for tpu_custom_call.1']
    #allocation6 [shape = 'u8[8192]{0}', space=vmem, size = 0x2000, scoped, tag = 'input window, operand 2, single buffered']
    %8 = vsyncpa [#allocation3], 0
    %s9 = scalar_lea.sflag [#allocation3], 1
    %10 = vsyncpa %s9, 0
    %11 = vsyncpa [#allocation5], 0
    loop: start=0, step=1, limit=4
    $region2: #{tpu_custom_call.1} parent=1 // loop_pre_header
      _
    $region3: #{tpu_custom_call.1} parent=1 // loop_header
      %s13 = sphi 0, %s17
      %p14 = scmp.ge.s32.totalorder %s13, 4
      %s23 = sphi 0, %s25
      %s26 = sphi 0, %s23
      %s27 = sphi 0, %s26
      %s43 = sphi 0, %s27
      %s47 = sphi 0, %s47
      %s49 = sphi 0, %s47
      %s50 = sphi 0, %s49
      %s64 = sphi 0, %s50
      %s68 = sphi 0, %s68
      %s70 = sphi 0, %s68
      %s71 = sphi 0, %s70
      %s85 = sphi 0, %s71
      %s91 = sphi 0, %s93
      %s94 = sphi 0, %s91
      %s95 = sphi 0, %s94
      %s111 = sphi 0, %s95
    $region4: #{tpu_custom_call.1} parent=1 // loop_header_branch
      %16 = sbr.rel (%p14) target = $region8
    $region5: #{tpu_custom_call.1} parent=1 // loop_body
      %s18 = ssub.s32 %s13, 1
      %s19 = ssub.s32 %s13, 2
      %s20 = sadd.s32 %s13, 1
      %s21 = ssub.s32 %s13, %s20
      %p22 = scmp.eq.s32.totalorder %s21, 0
      %s24 = sadd.s32 %s23, 1
      %s25 = scalar_select %p22, %s23, %s24
      %p28 = pneg %p22
      %p29 = scmp.eq.s32.totalorder %s13, 1
      %p30 = por %p28, %p29
      %p31 = scmp.ne.s32.totalorder %s23, %s26
      %p32 = scmp.eq.s32.totalorder %s13, 0
      %p33 = por %p31, %p32
      %p34 = scmp.ne.s32.totalorder %s23, %s26
      %p35 = scmp.eq.s32.totalorder %s18, 1
      %p36 = por %p34, %p35
      %p37 = scmp.ne.s32.totalorder %s26, %s27
      %p38 = scmp.eq.s32.totalorder %s18, 0
      %p39 = por %p37, %p38
      %p40 = scmp.ne.s32.totalorder %s26, %s27
      %p41 = scmp.eq.s32.totalorder %s19, 1
      %p42 = por %p40, %p41
      %p44 = scmp.ne.s32.totalorder %s27, %s43
      %p45 = scmp.eq.s32.totalorder %s19, 0
      %p46 = por %p44, %p45
      %s48 = sadd.s32 %s47, 1
      %p51 = scmp.eq.s32.totalorder %s13, 1
      %p52 = scmp.ne.s32.totalorder %s47, %s49
      %p53 = scmp.eq.s32.totalorder %s13, 0
      %p54 = por %p52, %p53
      %p55 = scmp.ne.s32.totalorder %s47, %s49
      %p56 = scmp.eq.s32.totalorder %s18, 1
      %p57 = por %p55, %p56
      %p58 = scmp.ne.s32.totalorder %s49, %s50
      %p59 = scmp.eq.s32.totalorder %s18, 0
      %p60 = por %p58, %p59
      %p61 = scmp.ne.s32.totalorder %s49, %s50
      %p62 = scmp.eq.s32.totalorder %s19, 1
      %p63 = por %p61, %p62
      %p65 = scmp.ne.s32.totalorder %s50, %s64
      %p66 = scmp.eq.s32.totalorder %s19, 0
      %p67 = por %p65, %p66
      %s69 = sadd.s32 %s68, 1
      %p72 = scmp.eq.s32.totalorder %s13, 1
      %p73 = scmp.ne.s32.totalorder %s68, %s70
      %p74 = scmp.eq.s32.totalorder %s13, 0
      %p75 = por %p73, %p74
      %p76 = scmp.ne.s32.totalorder %s68, %s70
      %p77 = scmp.eq.s32.totalorder %s18, 1
      %p78 = por %p76, %p77
      %p79 = scmp.ne.s32.totalorder %s70, %s71
      %p80 = scmp.eq.s32.totalorder %s18, 0
      %p81 = por %p79, %p80
      %p82 = scmp.ne.s32.totalorder %s70, %s71
      %p83 = scmp.eq.s32.totalorder %s19, 1
      %p84 = por %p82, %p83
      %p86 = scmp.ne.s32.totalorder %s71, %s85
      %p87 = scmp.eq.s32.totalorder %s19, 0
      %p88 = por %p86, %p87
      %s89 = ssub.s32 %s13, %s20
      %p90 = scmp.eq.s32.totalorder %s89, 0
      %s92 = sadd.s32 %s91, 1
      %s93 = scalar_select %p90, %s91, %s92
      %p96 = pneg %p90
      %p97 = scmp.eq.s32.totalorder %s13, 1
      %p98 = por %p96, %p97
      %p99 = scmp.ne.s32.totalorder %s91, %s94
      %p100 = scmp.eq.s32.totalorder %s13, 0
      %p101 = por %p99, %p100
      %p102 = scmp.ne.s32.totalorder %s91, %s94
      %p103 = scmp.eq.s32.totalorder %s18, 1
      %p104 = por %p102, %p103
      %p105 = scmp.ne.s32.totalorder %s94, %s95
      %p106 = scmp.eq.s32.totalorder %s18, 0
      %p107 = por %p105, %p106
      %p108 = scmp.ne.s32.totalorder %s94, %s95
      %p109 = scmp.eq.s32.totalorder %s19, 1
      %p110 = por %p108, %p109
      %p112 = scmp.ne.s32.totalorder %s95, %s111
      %p113 = scmp.eq.s32.totalorder %s19, 0
      %p114 = por %p112, %p113
      %p115 = scmp.le.s32.totalorder 1, %s13
      %p116 = scmp.lt.s32.totalorder %s13, 3
      %p117 = pnand %p115, %p116
      %p118 = pneg %p117
      // Predicated region
      $region9: #{tpu_custom_call.1} parent=5 // pred_check
        _
      $region10: #{tpu_custom_call.1} parent=5 // pred_check_branch
        %120 = sbr.rel (%p117) target = $region12
      $region11: #{tpu_custom_call.1} parent=5 // pred_region
        %s121 = ssub.s32 %s13, 1
        // Predicated region
        $region13: #{tpu_custom_call.1} parent=11 // pred_check
          %p122 = pneg %p60
        $region14: #{tpu_custom_call.1} parent=11 // pred_check_branch
          %124 = sbr.rel (%p122) target = $region16
        $region15: #{tpu_custom_call.1} parent=11 // pred_region
          %s126 = ssub.s32 20480, 20480
          %127 = vsyncadd [#allocation5], %s126
          %s128 = sshll.u32 [#allocation4], 4
          %s129 = int_to_ptr.vmem [resolvable:$true] %s128
          %134 = dma.hbm_to_vmem [thread:$0]  %s1, 20480, %s129, [#allocation5], 128, 128, 8
        $region16: #{tpu_custom_call.1} parent=11 // pred_fallthru
          _
        // Predicated region
        $region17: #{tpu_custom_call.1} parent=11 // pred_check
          %p135 = pneg %p81
        $region18: #{tpu_custom_call.1} parent=11 // pred_check_branch
          %137 = sbr.rel (%p135) target = $region20
        $region19: #{tpu_custom_call.1} parent=11 // pred_region
          %s139 = ssub.s32 256, 256
          %140 = vsyncadd [#allocation5], %s139
          %s141 = sshll.u32 [#allocation6], 4
          %s142 = int_to_ptr.vmem [resolvable:$true] %s141
          %147 = dma.hbm_to_vmem [thread:$0]  %s2, 256, %s142, [#allocation5], 128, 128, 8
        $region20: #{tpu_custom_call.1} parent=11 // pred_fallthru
          _
      $region12: #{tpu_custom_call.1} parent=5 // pred_fallthru
        _
      %p148 = scmp.lt.s32.totalorder %s13, 2
      // Predicated region
      $region21: #{tpu_custom_call.1} parent=5 // pred_check
        %p149 = pneg %p148
      $region22: #{tpu_custom_call.1} parent=5 // pred_check_branch
        %151 = sbr.rel (%p149) target = $region24
      $region23: #{tpu_custom_call.1} parent=5 // pred_region
        // Predicated region
        $region25: #{tpu_custom_call.1} parent=23 // pred_check
          %p152 = pneg %p33
        $region26: #{tpu_custom_call.1} parent=23 // pred_check_branch
          %154 = sbr.rel (%p152) target = $region28
        $region27: #{tpu_custom_call.1} parent=23 // pred_region
          %s155 = sand.u32 %s23, 1
          %s156 = scalar_lea.sflag [#allocation3], %s155
          %s157 = sand.u32 %s23, 1
          %s158 = smul.addr %s157, 16
          %s159 = scalar_lea.vmem [#allocation2], %s158
          %s160 = smul.u32 2, %s13
          %s162 = ssub.s32 256, 256
          %163 = vsyncadd %s156, %s162
          %s164 = smul.addr %s160, 128
          %s165 = scalar_lea.hbm %s0, %s164
          %s166 = sshll.u32 %s159, 4
          %s167 = int_to_ptr.vmem [resolvable:$true] %s166
          %172 = dma.hbm_to_vmem [thread:$0]  %s165, 256, %s167, %s156, 128, 128, 8
        $region28: #{tpu_custom_call.1} parent=23 // pred_fallthru
          _
      $region24: #{tpu_custom_call.1} parent=5 // pred_fallthru
        _
      %p173 = scmp.le.s32.totalorder 1, %s13
      %p174 = scmp.lt.s32.totalorder %s13, 3
      %p175 = pnand %p173, %p174
      %p176 = pneg %p175
      // Predicated region
      $region29: #{tpu_custom_call.1} parent=5 // pred_check
        _
      $region30: #{tpu_custom_call.1} parent=5 // pred_check_branch
        %178 = sbr.rel (%p175) target = $region32
      $region31: #{tpu_custom_call.1} parent=5 // pred_region
        %s179 = ssub.s32 %s13, 1
        %s180 = sand.u32 %s26, 1
        %s181 = scalar_lea.sflag [#allocation3], %s180
        %s182 = sand.u32 %s26, 1
        %s183 = smul.addr %s182, 16
        %s184 = scalar_lea.vmem [#allocation2], %s183
        // Predicated region
        $region33: #{tpu_custom_call.1} parent=31 // pred_check
          %p185 = pneg %p39
        $region34: #{tpu_custom_call.1} parent=31 // pred_check_branch
          %187 = sbr.rel (%p185) target = $region36
        $region35: #{tpu_custom_call.1} parent=31 // pred_region
          %188 = dma.done %s181, 256
        $region36: #{tpu_custom_call.1} parent=31 // pred_fallthru
          _
        // Predicated region
        $region37: #{tpu_custom_call.1} parent=31 // pred_check
          %p189 = pneg %p60
        $region38: #{tpu_custom_call.1} parent=31 // pred_check_branch
          %191 = sbr.rel (%p189) target = $region40
        $region39: #{tpu_custom_call.1} parent=31 // pred_region
          %192 = dma.done [#allocation5], 20480
        $region40: #{tpu_custom_call.1} parent=31 // pred_fallthru
          _
        // Predicated region
        $region41: #{tpu_custom_call.1} parent=31 // pred_check
          %p193 = pneg %p81
        $region42: #{tpu_custom_call.1} parent=31 // pred_check_branch
          %195 = sbr.rel (%p193) target = $region44
        $region43: #{tpu_custom_call.1} parent=31 // pred_region
          %196 = dma.done [#allocation5], 256
        $region44: #{tpu_custom_call.1} parent=31 // pred_fallthru
          _
        %s197 = sand.u32 %s26, 1
        %s198 = scalar_lea.sflag [#allocation3], %s197
        %s199 = sand.u32 %s26, 1
        %s200 = smul.addr %s199, 16
        %s201 = scalar_lea.vmem [#allocation2], %s200
        %p202 = pneg %p39
        %p203 = pneg %p36
        %p204 = pneg %p60
        %p205 = pneg %p57
        %p206 = pneg %p81
        %p207 = pneg %p78
        %p208 = pneg %p107
        %p209 = pneg %p104
        %s210 = smul.u32 2, %s18
        %p211 = scmp.lt.s32.totalorder %s210, 3
        %s212 = scalar_select %p211, %s210, 3
        %s213 = smul.addr %s212, 2
        %s214 = smul.addr %s213, 8
        %s215 = scalar_lea.vmem %s3, %s214
        %s216 = smul.u32 2, %s18
        %s217 = smul.u32 2, %s18
        %p218 = scmp.lt.s32.totalorder %s217, 3
        %s219 = scalar_select %p218, %s217, 3
        %s220 = smul.addr %s219, 2
        %s221 = smul.addr %s220, 8
        %s222 = scalar_lea.vmem %s3, %s221
        %s223 = smul.u32 2, %s18
        %v224 = vld [vmem:[#allocation6] sm:$0xff]
        %v225 = vld [vmem:[#allocation6 + $0x8] sm:$0x3]
        %v226 = vlaneseq
        %v227 = vshrl.u32 %v226, 7
        %v228 = vsub.s32 0, %v227
        %v229 = vrot.slane %v224, %v228
        %231 = vbcast.lane.b32.xlu0 %v229, 256
        %v232 = vpop.permute.xlu0 %231
        %s234 = sor.u32 256, 8
        %235 = vbcast.lane.b32.xlu0 %v229, %s234
        %v236 = vpop.permute.xlu0 %235
        %v237 = vlaneseq
        %v238 = vshrl.u32 %v237, 7
        %v239 = vsub.s32 1, %v238
        %v240 = vrot.slane %v224, %v239
        %242 = vbcast.lane.b32.xlu0 %v240, 256
        %v243 = vpop.permute.xlu0 %242
        %s245 = sor.u32 256, 8
        %246 = vbcast.lane.b32.xlu0 %v240, %s245
        %v247 = vpop.permute.xlu0 %246
        %v248 = vlaneseq
        %v249 = vshrl.u32 %v248, 7
        %v250 = vsub.s32 2, %v249
        %v251 = vrot.slane %v224, %v250
        %253 = vbcast.lane.b32.xlu0 %v251, 256
        %v254 = vpop.permute.xlu0 %253
        %s256 = sor.u32 256, 8
        %257 = vbcast.lane.b32.xlu0 %v251, %s256
        %v258 = vpop.permute.xlu0 %257
        %v259 = vlaneseq
        %v260 = vshrl.u32 %v259, 7
        %v261 = vsub.s32 3, %v260
        %v262 = vrot.slane %v224, %v261
        %264 = vbcast.lane.b32.xlu0 %v262, 256
        %v265 = vpop.permute.xlu0 %264
        %s267 = sor.u32 256, 8
        %268 = vbcast.lane.b32.xlu0 %v262, %s267
        %v269 = vpop.permute.xlu0 %268
        %v270 = vlaneseq
        %v271 = vshrl.u32 %v270, 7
        %v272 = vsub.s32 4, %v271
        %v273 = vrot.slane %v224, %v272
        %275 = vbcast.lane.b32.xlu0 %v273, 256
        %v276 = vpop.permute.xlu0 %275
        %s278 = sor.u32 256, 8
        %279 = vbcast.lane.b32.xlu0 %v273, %s278
        %v280 = vpop.permute.xlu0 %279
        %v281 = vlaneseq
        %v282 = vshrl.u32 %v281, 7
        %v283 = vsub.s32 5, %v282
        %v284 = vrot.slane %v224, %v283
        %286 = vbcast.lane.b32.xlu0 %v284, 256
        %v287 = vpop.permute.xlu0 %286
        %s289 = sor.u32 256, 8
        %290 = vbcast.lane.b32.xlu0 %v284, %s289
        %v291 = vpop.permute.xlu0 %290
        %v292 = vlaneseq
        %v293 = vshrl.u32 %v292, 7
        %v294 = vsub.s32 6, %v293
        %v295 = vrot.slane %v224, %v294
        %297 = vbcast.lane.b32.xlu0 %v295, 256
        %v298 = vpop.permute.xlu0 %297
        %s300 = sor.u32 256, 8
        %301 = vbcast.lane.b32.xlu0 %v295, %s300
        %v302 = vpop.permute.xlu0 %301
        %v303 = vlaneseq
        %v304 = vshrl.u32 %v303, 7
        %v305 = vsub.s32 7, %v304
        %v306 = vrot.slane %v224, %v305
        %308 = vbcast.lane.b32.xlu0 %v306, 256
        %v309 = vpop.permute.xlu0 %308
        %s311 = sor.u32 256, 8
        %312 = vbcast.lane.b32.xlu0 %v306, %s311
        %v313 = vpop.permute.xlu0 %312
        %v314 = vlaneseq
        %v315 = vshrl.u32 %v314, 7
        %v316 = vsub.s32 0, %v315
        %v317 = vrot.slane %v225, %v316
        %319 = vbcast.lane.b32.xlu0 %v317, 256
        %v320 = vpop.permute.xlu0 %319
        %s322 = sor.u32 256, 8
        %323 = vbcast.lane.b32.xlu0 %v317, %s322
        %v324 = vpop.permute.xlu0 %323
        %v325 = vlaneseq
        %v326 = vshrl.u32 %v325, 7
        %v327 = vsub.s32 1, %v326
        %v328 = vrot.slane %v225, %v327
        %330 = vbcast.lane.b32.xlu0 %v328, 256
        %v331 = vpop.permute.xlu0 %330
        %s333 = sor.u32 256, 8
        %334 = vbcast.lane.b32.xlu0 %v328, %s333
        %v335 = vpop.permute.xlu0 %334
        %v336 = vld [vmem:[%s184] sm:$0xff]
        %v337 = vld [vmem:[#allocation4] sm:$0xff]
        %v338 = vld [vmem:[#allocation4 + $0x8] sm:$0xff]
        %v339 = vld [vmem:[#allocation4 + $0x10] sm:$0xff]
        %v340 = vld [vmem:[#allocation4 + $0x18] sm:$0xff]
        %v341 = vld [vmem:[#allocation4 + $0x20] sm:$0xff]
        %v342 = vld [vmem:[#allocation4 + $0x28] sm:$0xff]
        %v343 = vld [vmem:[#allocation4 + $0x30] sm:$0xff]
        %v344 = vld [vmem:[#allocation4 + $0x38] sm:$0xff]
        %v345 = vld [vmem:[#allocation4 + $0x40] sm:$0xff]
        %v346 = vld [vmem:[#allocation4 + $0x48] sm:$0xff]
        %v347 = vld [vmem:[#allocation4 + $0x50] sm:$0xff]
        %v348 = vld [vmem:[#allocation4 + $0x58] sm:$0xff]
        %v349 = vld [vmem:[#allocation4 + $0x60] sm:$0xff]
        %v350 = vld [vmem:[#allocation4 + $0x68] sm:$0xff]
        %v351 = vld [vmem:[#allocation4 + $0x70] sm:$0xff]
        %v352 = vld [vmem:[#allocation4 + $0x78] sm:$0xff]
        %v353 = vld [vmem:[#allocation4 + $0x80] sm:$0xff]
        %v354 = vld [vmem:[#allocation4 + $0x88] sm:$0xff]
        %v355 = vld [vmem:[#allocation4 + $0x90] sm:$0xff]
        %v356 = vld [vmem:[#allocation4 + $0x98] sm:$0xff]
        %v357 = vlaneseq
        %v358 = vshrl.u32 %v357, 7
        %v359 = vsub.s32 0, %v358
        %v360 = vrot.slane %v336, %v359
        %v361 = vmul.f32 %v360, %v337
        %v362 = vmul.f32 %v360, %v338
        %v363 = vmul.f32 %v360, %v339
        %v364 = vmul.f32 %v360, %v340
        %v365 = vmul.f32 %v360, %v341
        %v366 = vmul.f32 %v360, %v342
        %v367 = vmul.f32 %v360, %v343
        %v368 = vmul.f32 %v360, %v344
        %v369 = vmul.f32 %v360, %v345
        %v370 = vmul.f32 %v360, %v346
        %v371 = vmul.f32 %v360, %v347
        %v372 = vmul.f32 %v360, %v348
        %v373 = vmul.f32 %v360, %v349
        %v374 = vmul.f32 %v360, %v350
        %v375 = vmul.f32 %v360, %v351
        %v376 = vmul.f32 %v360, %v352
        %v377 = vmul.f32 %v360, %v353
        %v378 = vmul.f32 %v360, %v354
        %v379 = vmul.f32 %v360, %v355
        %v380 = vmul.f32 %v360, %v356
        %s381 = scalar_lea.vmem [#allocation4], 160
        %v382 = vld [vmem:[%s381] sm:$0xff]
        %v383 = vld [vmem:[%s381 + $0x8] sm:$0xff]
        %v384 = vld [vmem:[%s381 + $0x10] sm:$0xff]
        %v385 = vld [vmem:[%s381 + $0x18] sm:$0xff]
        %v386 = vld [vmem:[%s381 + $0x20] sm:$0xff]
        %v387 = vld [vmem:[%s381 + $0x28] sm:$0xff]
        %v388 = vld [vmem:[%s381 + $0x30] sm:$0xff]
        %v389 = vld [vmem:[%s381 + $0x38] sm:$0xff]
        %v390 = vld [vmem:[%s381 + $0x40] sm:$0xff]
        %v391 = vld [vmem:[%s381 + $0x48] sm:$0xff]
        %v392 = vld [vmem:[%s381 + $0x50] sm:$0xff]
        %v393 = vld [vmem:[%s381 + $0x58] sm:$0xff]
        %v394 = vld [vmem:[%s381 + $0x60] sm:$0xff]
        %v395 = vld [vmem:[%s381 + $0x68] sm:$0xff]
        %v396 = vld [vmem:[%s381 + $0x70] sm:$0xff]
        %v397 = vld [vmem:[%s381 + $0x78] sm:$0xff]
        %v398 = vld [vmem:[%s381 + $0x80] sm:$0xff]
        %v399 = vld [vmem:[%s381 + $0x88] sm:$0xff]
        %v400 = vld [vmem:[%s381 + $0x90] sm:$0xff]
        %v401 = vld [vmem:[%s381 + $0x98] sm:$0xff]
        %v402 = vlaneseq
        %v403 = vshrl.u32 %v402, 7
        %v404 = vsub.s32 1, %v403
        %v405 = vrot.slane %v336, %v404
        %v406 = vmul.f32 %v405, %v382
        %v407 = vmul.f32 %v405, %v383
        %v408 = vmul.f32 %v405, %v384
        %v409 = vmul.f32 %v405, %v385
        %v410 = vmul.f32 %v405, %v386
        %v411 = vmul.f32 %v405, %v387
        %v412 = vmul.f32 %v405, %v388
        %v413 = vmul.f32 %v405, %v389
        %v414 = vmul.f32 %v405, %v390
        %v415 = vmul.f32 %v405, %v391
        %v416 = vmul.f32 %v405, %v392
        %v417 = vmul.f32 %v405, %v393
        %v418 = vmul.f32 %v405, %v394
        %v419 = vmul.f32 %v405, %v395
        %v420 = vmul.f32 %v405, %v396
        %v421 = vmul.f32 %v405, %v397
        %v422 = vmul.f32 %v405, %v398
        %v423 = vmul.f32 %v405, %v399
        %v424 = vmul.f32 %v405, %v400
        %v425 = vmul.f32 %v405, %v401
        %v426 = vadd.f32 %v361, %v406
        %v427 = vadd.f32 %v362, %v407
        %v428 = vadd.f32 %v363, %v408
        %v429 = vadd.f32 %v364, %v409
        %v430 = vadd.f32 %v365, %v410
        %v431 = vadd.f32 %v366, %v411
        %v432 = vadd.f32 %v367, %v412
        %v433 = vadd.f32 %v368, %v413
        %v434 = vadd.f32 %v369, %v414
        %v435 = vadd.f32 %v370, %v415
        %v436 = vadd.f32 %v371, %v416
        %v437 = vadd.f32 %v372, %v417
        %v438 = vadd.f32 %v373, %v418
        %v439 = vadd.f32 %v374, %v419
        %v440 = vadd.f32 %v375, %v420
        %v441 = vadd.f32 %v376, %v421
        %v442 = vadd.f32 %v377, %v422
        %v443 = vadd.f32 %v378, %v423
        %v444 = vadd.f32 %v379, %v424
        %v445 = vadd.f32 %v380, %v425
        %s446 = scalar_lea.vmem [#allocation4], 320
        %v447 = vld [vmem:[%s446] sm:$0xff]
        %v448 = vld [vmem:[%s446 + $0x8] sm:$0xff]
        %v449 = vld [vmem:[%s446 + $0x10] sm:$0xff]
        %v450 = vld [vmem:[%s446 + $0x18] sm:$0xff]
        %v451 = vld [vmem:[%s446 + $0x20] sm:$0xff]
        %v452 = vld [vmem:[%s446 + $0x28] sm:$0xff]
        %v453 = vld [vmem:[%s446 + $0x30] sm:$0xff]
        %v454 = vld [vmem:[%s446 + $0x38] sm:$0xff]
        %v455 = vld [vmem:[%s446 + $0x40] sm:$0xff]
        %v456 = vld [vmem:[%s446 + $0x48] sm:$0xff]
        %v457 = vld [vmem:[%s446 + $0x50] sm:$0xff]
        %v458 = vld [vmem:[%s446 + $0x58] sm:$0xff]
        %v459 = vld [vmem:[%s446 + $0x60] sm:$0xff]
        %v460 = vld [vmem:[%s446 + $0x68] sm:$0xff]
        %v461 = vld [vmem:[%s446 + $0x70] sm:$0xff]
        %v462 = vld [vmem:[%s446 + $0x78] sm:$0xff]
        %v463 = vld [vmem:[%s446 + $0x80] sm:$0xff]
        %v464 = vld [vmem:[%s446 + $0x88] sm:$0xff]
        %v465 = vld [vmem:[%s446 + $0x90] sm:$0xff]
        %v466 = vld [vmem:[%s446 + $0x98] sm:$0xff]
        %v467 = vlaneseq
        %v468 = vshrl.u32 %v467, 7
        %v469 = vsub.s32 2, %v468
        %v470 = vrot.slane %v336, %v469
        %v471 = vmul.f32 %v470, %v447
        %v472 = vmul.f32 %v470, %v448
        %v473 = vmul.f32 %v470, %v449
        %v474 = vmul.f32 %v470, %v450
        %v475 = vmul.f32 %v470, %v451
        %v476 = vmul.f32 %v470, %v452
        %v477 = vmul.f32 %v470, %v453
        %v478 = vmul.f32 %v470, %v454
        %v479 = vmul.f32 %v470, %v455
        %v480 = vmul.f32 %v470, %v456
        %v481 = vmul.f32 %v470, %v457
        %v482 = vmul.f32 %v470, %v458
        %v483 = vmul.f32 %v470, %v459
        %v484 = vmul.f32 %v470, %v460
        %v485 = vmul.f32 %v470, %v461
        %v486 = vmul.f32 %v470, %v462
        %v487 = vmul.f32 %v470, %v463
        %v488 = vmul.f32 %v470, %v464
        %v489 = vmul.f32 %v470, %v465
        %v490 = vmul.f32 %v470, %v466
        %v491 = vadd.f32 %v426, %v471
        %v492 = vadd.f32 %v427, %v472
        %v493 = vadd.f32 %v428, %v473
        %v494 = vadd.f32 %v429, %v474
        %v495 = vadd.f32 %v430, %v475
        %v496 = vadd.f32 %v431, %v476
        %v497 = vadd.f32 %v432, %v477
        %v498 = vadd.f32 %v433, %v478
        %v499 = vadd.f32 %v434, %v479
        %v500 = vadd.f32 %v435, %v480
        %v501 = vadd.f32 %v436, %v481
        %v502 = vadd.f32 %v437, %v482
        %v503 = vadd.f32 %v438, %v483
        %v504 = vadd.f32 %v439, %v484
        %v505 = vadd.f32 %v440, %v485
        %v506 = vadd.f32 %v441, %v486
        %v507 = vadd.f32 %v442, %v487
        %v508 = vadd.f32 %v443, %v488
        %v509 = vadd.f32 %v444, %v489
        %v510 = vadd.f32 %v445, %v490
        %s511 = scalar_lea.vmem [#allocation4], 480
        %v512 = vld [vmem:[%s511] sm:$0xff]
        %v513 = vld [vmem:[%s511 + $0x8] sm:$0xff]
        %v514 = vld [vmem:[%s511 + $0x10] sm:$0xff]
        %v515 = vld [vmem:[%s511 + $0x18] sm:$0xff]
        %v516 = vld [vmem:[%s511 + $0x20] sm:$0xff]
        %v517 = vld [vmem:[%s511 + $0x28] sm:$0xff]
        %v518 = vld [vmem:[%s511 + $0x30] sm:$0xff]
        %v519 = vld [vmem:[%s511 + $0x38] sm:$0xff]
        %v520 = vld [vmem:[%s511 + $0x40] sm:$0xff]
        %v521 = vld [vmem:[%s511 + $0x48] sm:$0xff]
        %v522 = vld [vmem:[%s511 + $0x50] sm:$0xff]
        %v523 = vld [vmem:[%s511 + $0x58] sm:$0xff]
        %v524 = vld [vmem:[%s511 + $0x60] sm:$0xff]
        %v525 = vld [vmem:[%s511 + $0x68] sm:$0xff]
        %v526 = vld [vmem:[%s511 + $0x70] sm:$0xff]
        %v527 = vld [vmem:[%s511 + $0x78] sm:$0xff]
        %v528 = vld [vmem:[%s511 + $0x80] sm:$0xff]
        %v529 = vld [vmem:[%s511 + $0x88] sm:$0xff]
        %v530 = vld [vmem:[%s511 + $0x90] sm:$0xff]
        %v531 = vld [vmem:[%s511 + $0x98] sm:$0xff]
        %v532 = vlaneseq
        %v533 = vshrl.u32 %v532, 7
        %v534 = vsub.s32 3, %v533
        %v535 = vrot.slane %v336, %v534
        %v536 = vmul.f32 %v535, %v512
        %v537 = vmul.f32 %v535, %v513
        %v538 = vmul.f32 %v535, %v514
        %v539 = vmul.f32 %v535, %v515
        %v540 = vmul.f32 %v535, %v516
        %v541 = vmul.f32 %v535, %v517
        %v542 = vmul.f32 %v535, %v518
        %v543 = vmul.f32 %v535, %v519
        %v544 = vmul.f32 %v535, %v520
        %v545 = vmul.f32 %v535, %v521
        %v546 = vmul.f32 %v535, %v522
        %v547 = vmul.f32 %v535, %v523
        %v548 = vmul.f32 %v535, %v524
        %v549 = vmul.f32 %v535, %v525
        %v550 = vmul.f32 %v535, %v526
        %v551 = vmul.f32 %v535, %v527
        %v552 = vmul.f32 %v535, %v528
        %v553 = vmul.f32 %v535, %v529
        %v554 = vmul.f32 %v535, %v530
        %v555 = vmul.f32 %v535, %v531
        %v556 = vadd.f32 %v491, %v536
        %v557 = vadd.f32 %v492, %v537
        %v558 = vadd.f32 %v493, %v538
        %v559 = vadd.f32 %v494, %v539
        %v560 = vadd.f32 %v495, %v540
        %v561 = vadd.f32 %v496, %v541
        %v562 = vadd.f32 %v497, %v542
        %v563 = vadd.f32 %v498, %v543
        %v564 = vadd.f32 %v499, %v544
        %v565 = vadd.f32 %v500, %v545
        %v566 = vadd.f32 %v501, %v546
        %v567 = vadd.f32 %v502, %v547
        %v568 = vadd.f32 %v503, %v548
        %v569 = vadd.f32 %v504, %v549
        %v570 = vadd.f32 %v505, %v550
        %v571 = vadd.f32 %v506, %v551
        %v572 = vadd.f32 %v507, %v552
        %v573 = vadd.f32 %v508, %v553
        %v574 = vadd.f32 %v509, %v554
        %v575 = vadd.f32 %v510, %v555
        %s576 = scalar_lea.vmem [#allocation4], 640
        %v577 = vld [vmem:[%s576] sm:$0xff]
        %v578 = vld [vmem:[%s576 + $0x8] sm:$0xff]
        %v579 = vld [vmem:[%s576 + $0x10] sm:$0xff]
        %v580 = vld [vmem:[%s576 + $0x18] sm:$0xff]
        %v581 = vld [vmem:[%s576 + $0x20] sm:$0xff]
        %v582 = vld [vmem:[%s576 + $0x28] sm:$0xff]
        %v583 = vld [vmem:[%s576 + $0x30] sm:$0xff]
        %v584 = vld [vmem:[%s576 + $0x38] sm:$0xff]
        %v585 = vld [vmem:[%s576 + $0x40] sm:$0xff]
        %v586 = vld [vmem:[%s576 + $0x48] sm:$0xff]
        %v587 = vld [vmem:[%s576 + $0x50] sm:$0xff]
        %v588 = vld [vmem:[%s576 + $0x58] sm:$0xff]
        %v589 = vld [vmem:[%s576 + $0x60] sm:$0xff]
        %v590 = vld [vmem:[%s576 + $0x68] sm:$0xff]
        %v591 = vld [vmem:[%s576 + $0x70] sm:$0xff]
        %v592 = vld [vmem:[%s576 + $0x78] sm:$0xff]
        %v593 = vld [vmem:[%s576 + $0x80] sm:$0xff]
        %v594 = vld [vmem:[%s576 + $0x88] sm:$0xff]
        %v595 = vld [vmem:[%s576 + $0x90] sm:$0xff]
        %v596 = vld [vmem:[%s576 + $0x98] sm:$0xff]
        %v597 = vlaneseq
        %v598 = vshrl.u32 %v597, 7
        %v599 = vsub.s32 4, %v598
        %v600 = vrot.slane %v336, %v599
        %v601 = vmul.f32 %v600, %v577
        %v602 = vmul.f32 %v600, %v578
        %v603 = vmul.f32 %v600, %v579
        %v604 = vmul.f32 %v600, %v580
        %v605 = vmul.f32 %v600, %v581
        %v606 = vmul.f32 %v600, %v582
        %v607 = vmul.f32 %v600, %v583
        %v608 = vmul.f32 %v600, %v584
        %v609 = vmul.f32 %v600, %v585
        %v610 = vmul.f32 %v600, %v586
        %v611 = vmul.f32 %v600, %v587
        %v612 = vmul.f32 %v600, %v588
        %v613 = vmul.f32 %v600, %v589
        %v614 = vmul.f32 %v600, %v590
        %v615 = vmul.f32 %v600, %v591
        %v616 = vmul.f32 %v600, %v592
        %v617 = vmul.f32 %v600, %v593
        %v618 = vmul.f32 %v600, %v594
        %v619 = vmul.f32 %v600, %v595
        %v620 = vmul.f32 %v600, %v596
        %v621 = vadd.f32 %v556, %v601
        %v622 = vadd.f32 %v557, %v602
        %v623 = vadd.f32 %v558, %v603
        %v624 = vadd.f32 %v559, %v604
        %v625 = vadd.f32 %v560, %v605
        %v626 = vadd.f32 %v561, %v606
        %v627 = vadd.f32 %v562, %v607
        %v628 = vadd.f32 %v563, %v608
        %v629 = vadd.f32 %v564, %v609
        %v630 = vadd.f32 %v565, %v610
        %v631 = vadd.f32 %v566, %v611
        %v632 = vadd.f32 %v567, %v612
        %v633 = vadd.f32 %v568, %v613
        %v634 = vadd.f32 %v569, %v614
        %v635 = vadd.f32 %v570, %v615
        %v636 = vadd.f32 %v571, %v616
        %v637 = vadd.f32 %v572, %v617
        %v638 = vadd.f32 %v573, %v618
        %v639 = vadd.f32 %v574, %v619
        %v640 = vadd.f32 %v575, %v620
        %s641 = scalar_lea.vmem [#allocation4], 800
        %v642 = vld [vmem:[%s641] sm:$0xff]
        %v643 = vld [vmem:[%s641 + $0x8] sm:$0xff]
        %v644 = vld [vmem:[%s641 + $0x10] sm:$0xff]
        %v645 = vld [vmem:[%s641 + $0x18] sm:$0xff]
        %v646 = vld [vmem:[%s641 + $0x20] sm:$0xff]
        %v647 = vld [vmem:[%s641 + $0x28] sm:$0xff]
        %v648 = vld [vmem:[%s641 + $0x30] sm:$0xff]
        %v649 = vld [vmem:[%s641 + $0x38] sm:$0xff]
        %v650 = vld [vmem:[%s641 + $0x40] sm:$0xff]
        %v651 = vld [vmem:[%s641 + $0x48] sm:$0xff]
        %v652 = vld [vmem:[%s641 + $0x50] sm:$0xff]
        %v653 = vld [vmem:[%s641 + $0x58] sm:$0xff]
        %v654 = vld [vmem:[%s641 + $0x60] sm:$0xff]
        %v655 = vld [vmem:[%s641 + $0x68] sm:$0xff]
        %v656 = vld [vmem:[%s641 + $0x70] sm:$0xff]
        %v657 = vld [vmem:[%s641 + $0x78] sm:$0xff]
        %v658 = vld [vmem:[%s641 + $0x80] sm:$0xff]
        %v659 = vld [vmem:[%s641 + $0x88] sm:$0xff]
        %v660 = vld [vmem:[%s641 + $0x90] sm:$0xff]
        %v661 = vld [vmem:[%s641 + $0x98] sm:$0xff]
        %v662 = vlaneseq
        %v663 = vshrl.u32 %v662, 7
        %v664 = vsub.s32 5, %v663
        %v665 = vrot.slane %v336, %v664
        %v666 = vmul.f32 %v665, %v642
        %v667 = vmul.f32 %v665, %v643
        %v668 = vmul.f32 %v665, %v644
        %v669 = vmul.f32 %v665, %v645
        %v670 = vmul.f32 %v665, %v646
        %v671 = vmul.f32 %v665, %v647
        %v672 = vmul.f32 %v665, %v648
        %v673 = vmul.f32 %v665, %v649
        %v674 = vmul.f32 %v665, %v650
        %v675 = vmul.f32 %v665, %v651
        %v676 = vmul.f32 %v665, %v652
        %v677 = vmul.f32 %v665, %v653
        %v678 = vmul.f32 %v665, %v654
        %v679 = vmul.f32 %v665, %v655
        %v680 = vmul.f32 %v665, %v656
        %v681 = vmul.f32 %v665, %v657
        %v682 = vmul.f32 %v665, %v658
        %v683 = vmul.f32 %v665, %v659
        %v684 = vmul.f32 %v665, %v660
        %v685 = vmul.f32 %v665, %v661
        %v686 = vadd.f32 %v621, %v666
        %v687 = vadd.f32 %v622, %v667
        %v688 = vadd.f32 %v623, %v668
        %v689 = vadd.f32 %v624, %v669
        %v690 = vadd.f32 %v625, %v670
        %v691 = vadd.f32 %v626, %v671
        %v692 = vadd.f32 %v627, %v672
        %v693 = vadd.f32 %v628, %v673
        %v694 = vadd.f32 %v629, %v674
        %v695 = vadd.f32 %v630, %v675
        %v696 = vadd.f32 %v631, %v676
        %v697 = vadd.f32 %v632, %v677
        %v698 = vadd.f32 %v633, %v678
        %v699 = vadd.f32 %v634, %v679
        %v700 = vadd.f32 %v635, %v680
        %v701 = vadd.f32 %v636, %v681
        %v702 = vadd.f32 %v637, %v682
        %v703 = vadd.f32 %v638, %v683
        %v704 = vadd.f32 %v639, %v684
        %v705 = vadd.f32 %v640, %v685
        %s706 = scalar_lea.vmem [#allocation4], 960
        %v707 = vld [vmem:[%s706] sm:$0xff]
        %v708 = vld [vmem:[%s706 + $0x8] sm:$0xff]
        %v709 = vld [vmem:[%s706 + $0x10] sm:$0xff]
        %v710 = vld [vmem:[%s706 + $0x18] sm:$0xff]
        %v711 = vld [vmem:[%s706 + $0x20] sm:$0xff]
        %v712 = vld [vmem:[%s706 + $0x28] sm:$0xff]
        %v713 = vld [vmem:[%s706 + $0x30] sm:$0xff]
        %v714 = vld [vmem:[%s706 + $0x38] sm:$0xff]
        %v715 = vld [vmem:[%s706 + $0x40] sm:$0xff]
        %v716 = vld [vmem:[%s706 + $0x48] sm:$0xff]
        %v717 = vld [vmem:[%s706 + $0x50] sm:$0xff]
        %v718 = vld [vmem:[%s706 + $0x58] sm:$0xff]
        %v719 = vld [vmem:[%s706 + $0x60] sm:$0xff]
        %v720 = vld [vmem:[%s706 + $0x68] sm:$0xff]
        %v721 = vld [vmem:[%s706 + $0x70] sm:$0xff]
        %v722 = vld [vmem:[%s706 + $0x78] sm:$0xff]
        %v723 = vld [vmem:[%s706 + $0x80] sm:$0xff]
        %v724 = vld [vmem:[%s706 + $0x88] sm:$0xff]
        %v725 = vld [vmem:[%s706 + $0x90] sm:$0xff]
        %v726 = vld [vmem:[%s706 + $0x98] sm:$0xff]
        %v727 = vlaneseq
        %v728 = vshrl.u32 %v727, 7
        %v729 = vsub.s32 6, %v728
        %v730 = vrot.slane %v336, %v729
        %v731 = vmul.f32 %v730, %v707
        %v732 = vmul.f32 %v730, %v708
        %v733 = vmul.f32 %v730, %v709
        %v734 = vmul.f32 %v730, %v710
        %v735 = vmul.f32 %v730, %v711
        %v736 = vmul.f32 %v730, %v712
        %v737 = vmul.f32 %v730, %v713
        %v738 = vmul.f32 %v730, %v714
        %v739 = vmul.f32 %v730, %v715
        %v740 = vmul.f32 %v730, %v716
        %v741 = vmul.f32 %v730, %v717
        %v742 = vmul.f32 %v730, %v718
        %v743 = vmul.f32 %v730, %v719
        %v744 = vmul.f32 %v730, %v720
        %v745 = vmul.f32 %v730, %v721
        %v746 = vmul.f32 %v730, %v722
        %v747 = vmul.f32 %v730, %v723
        %v748 = vmul.f32 %v730, %v724
        %v749 = vmul.f32 %v730, %v725
        %v750 = vmul.f32 %v730, %v726
        %v751 = vadd.f32 %v686, %v731
        %v752 = vadd.f32 %v687, %v732
        %v753 = vadd.f32 %v688, %v733
        %v754 = vadd.f32 %v689, %v734
        %v755 = vadd.f32 %v690, %v735
        %v756 = vadd.f32 %v691, %v736
        %v757 = vadd.f32 %v692, %v737
        %v758 = vadd.f32 %v693, %v738
        %v759 = vadd.f32 %v694, %v739
        %v760 = vadd.f32 %v695, %v740
        %v761 = vadd.f32 %v696, %v741
        %v762 = vadd.f32 %v697, %v742
        %v763 = vadd.f32 %v698, %v743
        %v764 = vadd.f32 %v699, %v744
        %v765 = vadd.f32 %v700, %v745
        %v766 = vadd.f32 %v701, %v746
        %v767 = vadd.f32 %v702, %v747
        %v768 = vadd.f32 %v703, %v748
        %v769 = vadd.f32 %v704, %v749
        %v770 = vadd.f32 %v705, %v750
        %s771 = scalar_lea.vmem [#allocation4], 1120
        %v772 = vld [vmem:[%s771] sm:$0xff]
        %v773 = vld [vmem:[%s771 + $0x8] sm:$0xff]
        %v774 = vld [vmem:[%s771 + $0x10] sm:$0xff]
        %v775 = vld [vmem:[%s771 + $0x18] sm:$0xff]
        %v776 = vld [vmem:[%s771 + $0x20] sm:$0xff]
        %v777 = vld [vmem:[%s771 + $0x28] sm:$0xff]
        %v778 = vld [vmem:[%s771 + $0x30] sm:$0xff]
        %v779 = vld [vmem:[%s771 + $0x38] sm:$0xff]
        %v780 = vld [vmem:[%s771 + $0x40] sm:$0xff]
        %v781 = vld [vmem:[%s771 + $0x48] sm:$0xff]
        %v782 = vld [vmem:[%s771 + $0x50] sm:$0xff]
        %v783 = vld [vmem:[%s771 + $0x58] sm:$0xff]
        %v784 = vld [vmem:[%s771 + $0x60] sm:$0xff]
        %v785 = vld [vmem:[%s771 + $0x68] sm:$0xff]
        %v786 = vld [vmem:[%s771 + $0x70] sm:$0xff]
        %v787 = vld [vmem:[%s771 + $0x78] sm:$0xff]
        %v788 = vld [vmem:[%s771 + $0x80] sm:$0xff]
        %v789 = vld [vmem:[%s771 + $0x88] sm:$0xff]
        %v790 = vld [vmem:[%s771 + $0x90] sm:$0xff]
        %v791 = vld [vmem:[%s771 + $0x98] sm:$0xff]
        %v792 = vlaneseq
        %v793 = vshrl.u32 %v792, 7
        %v794 = vsub.s32 7, %v793
        %v795 = vrot.slane %v336, %v794
        %v796 = vmul.f32 %v795, %v772
        %v797 = vmul.f32 %v795, %v773
        %v798 = vmul.f32 %v795, %v774
        %v799 = vmul.f32 %v795, %v775
        %v800 = vmul.f32 %v795, %v776
        %v801 = vmul.f32 %v795, %v777
        %v802 = vmul.f32 %v795, %v778
        %v803 = vmul.f32 %v795, %v779
        %v804 = vmul.f32 %v795, %v780
        %v805 = vmul.f32 %v795, %v781
        %v806 = vmul.f32 %v795, %v782
        %v807 = vmul.f32 %v795, %v783
        %v808 = vmul.f32 %v795, %v784
        %v809 = vmul.f32 %v795, %v785
        %v810 = vmul.f32 %v795, %v786
        %v811 = vmul.f32 %v795, %v787
        %v812 = vmul.f32 %v795, %v788
        %v813 = vmul.f32 %v795, %v789
        %v814 = vmul.f32 %v795, %v790
        %v815 = vmul.f32 %v795, %v791
        %v816 = vadd.f32 %v751, %v796
        %v817 = vadd.f32 %v752, %v797
        %v818 = vadd.f32 %v753, %v798
        %v819 = vadd.f32 %v754, %v799
        %v820 = vadd.f32 %v755, %v800
        %v821 = vadd.f32 %v756, %v801
        %v822 = vadd.f32 %v757, %v802
        %v823 = vadd.f32 %v758, %v803
        %v824 = vadd.f32 %v759, %v804
        %v825 = vadd.f32 %v760, %v805
        %v826 = vadd.f32 %v761, %v806
        %v827 = vadd.f32 %v762, %v807
        %v828 = vadd.f32 %v763, %v808
        %v829 = vadd.f32 %v764, %v809
        %v830 = vadd.f32 %v765, %v810
        %v831 = vadd.f32 %v766, %v811
        %v832 = vadd.f32 %v767, %v812
        %v833 = vadd.f32 %v768, %v813
        %v834 = vadd.f32 %v769, %v814
        %v835 = vadd.f32 %v770, %v815
        %vm836 = vcmask 1041408
        %v837 = vsel %vm836, 1.0, 0.0
        %v838 = vadd.f32 %v837, 1.0
        %v839 = vrot.slane %v838, 4
        %v840 = vadd.f32 %v838, %v839
        %v841 = vrot.slane %v840, 2
        %v842 = vadd.f32 %v840, %v841
        %v843 = vrot.slane %v842, 1
        %v844 = vadd.f32 %v842, %v843
        %v845 = vrcp.pop %v844
        %v846 = vmul.f32 1.0, %v845
        %v847 = vmul.f32 %v846, %v816
        %v848 = vmul.f32 %v846, %v817
        %v849 = vmul.f32 %v846, %v818
        %v850 = vmul.f32 %v846, %v819
        %v851 = vmul.f32 %v846, %v820
        %v852 = vmul.f32 %v846, %v821
        %v853 = vmul.f32 %v846, %v822
        %v854 = vmul.f32 %v846, %v823
        %v855 = vmul.f32 %v846, %v824
        %v856 = vmul.f32 %v846, %v825
        %v857 = vmul.f32 %v846, %v826
        %v858 = vmul.f32 %v846, %v827
        %v859 = vmul.f32 %v846, %v828
        %v860 = vmul.f32 %v846, %v829
        %v861 = vmul.f32 %v846, %v830
        %v862 = vmul.f32 %v846, %v831
        %v863 = vmul.f32 %v846, %v832
        %v864 = vmul.f32 %v846, %v833
        %v865 = vmul.f32 %v846, %v834
        %v866 = vmul.f32 %v846, %v835
        %867 = vadd.xlane.f32.xlu0 %v847
        %v868 = vpop.xlane.xlu0 %867
        %869 = vadd.xlane.f32.xlu0 %v848
        %v870 = vpop.xlane.xlu0 %869
        %871 = vadd.xlane.f32.xlu0 %v849
        %v872 = vpop.xlane.xlu0 %871
        %873 = vadd.xlane.f32.xlu0 %v850
        %v874 = vpop.xlane.xlu0 %873
        %875 = vadd.xlane.f32.xlu0 %v851
        %v876 = vpop.xlane.xlu0 %875
        %877 = vadd.xlane.f32.xlu0 %v852
        %v878 = vpop.xlane.xlu0 %877
        %879 = vadd.xlane.f32.xlu0 %v853
        %v880 = vpop.xlane.xlu0 %879
        %881 = vadd.xlane.f32.xlu0 %v854
        %v882 = vpop.xlane.xlu0 %881
        %883 = vadd.xlane.f32.xlu0 %v855
        %v884 = vpop.xlane.xlu0 %883
        %885 = vadd.xlane.f32.xlu0 %v856
        %v886 = vpop.xlane.xlu0 %885
        %887 = vadd.xlane.f32.xlu0 %v857
        %v888 = vpop.xlane.xlu0 %887
        %889 = vadd.xlane.f32.xlu0 %v858
        %v890 = vpop.xlane.xlu0 %889
        %891 = vadd.xlane.f32.xlu0 %v859
        %v892 = vpop.xlane.xlu0 %891
        %893 = vadd.xlane.f32.xlu0 %v860
        %v894 = vpop.xlane.xlu0 %893
        %895 = vadd.xlane.f32.xlu0 %v861
        %v896 = vpop.xlane.xlu0 %895
        %897 = vadd.xlane.f32.xlu0 %v862
        %v898 = vpop.xlane.xlu0 %897
        %899 = vadd.xlane.f32.xlu0 %v863
        %v900 = vpop.xlane.xlu0 %899
        %901 = vadd.xlane.f32.xlu0 %v864
        %v902 = vpop.xlane.xlu0 %901
        %903 = vadd.xlane.f32.xlu0 %v865
        %v904 = vpop.xlane.xlu0 %903
        %905 = vadd.xlane.f32.xlu0 %v866
        %v906 = vpop.xlane.xlu0 %905
        %v907 = vadd.f32 %v868, %v232
        %v908 = vadd.f32 %v870, %v236
        %v909 = vadd.f32 %v872, %v243
        %v910 = vadd.f32 %v874, %v247
        %v911 = vadd.f32 %v876, %v254
        %v912 = vadd.f32 %v878, %v258
        %v913 = vadd.f32 %v880, %v265
        %v914 = vadd.f32 %v882, %v269
        %v915 = vadd.f32 %v884, %v276
        %v916 = vadd.f32 %v886, %v280
        %v917 = vadd.f32 %v888, %v287
        %v918 = vadd.f32 %v890, %v291
        %v919 = vadd.f32 %v892, %v298
        %v920 = vadd.f32 %v894, %v302
        %v921 = vadd.f32 %v896, %v309
        %v922 = vadd.f32 %v898, %v313
        %v923 = vadd.f32 %v900, %v320
        %v924 = vadd.f32 %v902, %v324
        %v925 = vadd.f32 %v904, %v331
        %v926 = vadd.f32 %v906, %v335
        %v927 = vmul.f32 %v907, %v907
        %v928 = vmul.f32 %v908, %v908
        %v929 = vmul.f32 %v909, %v909
        %v930 = vmul.f32 %v910, %v910
        %v931 = vmul.f32 %v911, %v911
        %v932 = vmul.f32 %v912, %v912
        %v933 = vmul.f32 %v913, %v913
        %v934 = vmul.f32 %v914, %v914
        %v935 = vmul.f32 %v915, %v915
        %v936 = vmul.f32 %v916, %v916
        %v937 = vmul.f32 %v917, %v917
        %v938 = vmul.f32 %v918, %v918
        %v939 = vmul.f32 %v919, %v919
        %v940 = vmul.f32 %v920, %v920
        %v941 = vmul.f32 %v921, %v921
        %v942 = vmul.f32 %v922, %v922
        %v943 = vmul.f32 %v923, %v923
        %v944 = vmul.f32 %v924, %v924
        %v945 = vmul.f32 %v925, %v925
        %v946 = vmul.f32 %v926, %v926
        %v947 = vadd.f32 %v927, %v928
        %v948 = vrot.slane %v947, 4
        %v949 = vadd.f32 %v947, %v948
        %v950 = vrot.slane %v949, 2
        %v951 = vadd.f32 %v949, %v950
        %v952 = vrot.slane %v951, 1
        %v953 = vadd.f32 %v951, %v952
        %v954 = vadd.f32 %v929, %v930
        %v955 = vrot.slane %v954, 4
        %v956 = vadd.f32 %v954, %v955
        %v957 = vrot.slane %v956, 2
        %v958 = vadd.f32 %v956, %v957
        %v959 = vrot.slane %v958, 1
        %v960 = vadd.f32 %v958, %v959
        %v961 = vadd.f32 %v931, %v932
        %v962 = vrot.slane %v961, 4
        %v963 = vadd.f32 %v961, %v962
        %v964 = vrot.slane %v963, 2
        %v965 = vadd.f32 %v963, %v964
        %v966 = vrot.slane %v965, 1
        %v967 = vadd.f32 %v965, %v966
        %v968 = vadd.f32 %v933, %v934
        %v969 = vrot.slane %v968, 4
        %v970 = vadd.f32 %v968, %v969
        %v971 = vrot.slane %v970, 2
        %v972 = vadd.f32 %v970, %v971
        %v973 = vrot.slane %v972, 1
        %v974 = vadd.f32 %v972, %v973
        %v975 = vadd.f32 %v935, %v936
        %v976 = vrot.slane %v975, 4
        %v977 = vadd.f32 %v975, %v976
        %v978 = vrot.slane %v977, 2
        %v979 = vadd.f32 %v977, %v978
        %v980 = vrot.slane %v979, 1
        %v981 = vadd.f32 %v979, %v980
        %v982 = vadd.f32 %v937, %v938
        %v983 = vrot.slane %v982, 4
        %v984 = vadd.f32 %v982, %v983
        %v985 = vrot.slane %v984, 2
        %v986 = vadd.f32 %v984, %v985
        %v987 = vrot.slane %v986, 1
        %v988 = vadd.f32 %v986, %v987
        %v989 = vadd.f32 %v939, %v940
        %v990 = vrot.slane %v989, 4
        %v991 = vadd.f32 %v989, %v990
        %v992 = vrot.slane %v991, 2
        %v993 = vadd.f32 %v991, %v992
        %v994 = vrot.slane %v993, 1
        %v995 = vadd.f32 %v993, %v994
        %v996 = vadd.f32 %v941, %v942
        %v997 = vrot.slane %v996, 4
        %v998 = vadd.f32 %v996, %v997
        %v999 = vrot.slane %v998, 2
        %v1000 = vadd.f32 %v998, %v999
        %v1001 = vrot.slane %v1000, 1
        %v1002 = vadd.f32 %v1000, %v1001
        %v1003 = vadd.f32 %v943, %v944
        %v1004 = vrot.slane %v1003, 4
        %v1005 = vadd.f32 %v1003, %v1004
        %v1006 = vrot.slane %v1005, 2
        %v1007 = vadd.f32 %v1005, %v1006
        %v1008 = vrot.slane %v1007, 1
        %v1009 = vadd.f32 %v1007, %v1008
        %v1010 = vadd.f32 %v945, %v946
        %v1011 = vrot.slane %v1010, 4
        %v1012 = vadd.f32 %v1010, %v1011
        %v1013 = vrot.slane %v1012, 2
        %v1014 = vadd.f32 %v1012, %v1013
        %v1015 = vrot.slane %v1014, 1
        %v1016 = vadd.f32 %v1014, %v1015
        %v1017 = vmul.f32 %v907, %v953
        %v1018 = vmul.f32 %v908, %v953
        %v1019 = vmul.f32 %v909, %v960
        %v1020 = vmul.f32 %v910, %v960
        %v1021 = vmul.f32 %v911, %v967
        %v1022 = vmul.f32 %v912, %v967
        %v1023 = vmul.f32 %v913, %v974
        %v1024 = vmul.f32 %v914, %v974
        %v1025 = vmul.f32 %v915, %v981
        %v1026 = vmul.f32 %v916, %v981
        %v1027 = vmul.f32 %v917, %v988
        %v1028 = vmul.f32 %v918, %v988
        %v1029 = vmul.f32 %v919, %v995
        %v1030 = vmul.f32 %v920, %v995
        %v1031 = vmul.f32 %v921, %v1002
        %v1032 = vmul.f32 %v922, %v1002
        %v1033 = vmul.f32 %v923, %v1009
        %v1034 = vmul.f32 %v924, %v1009
        %v1035 = vmul.f32 %v925, %v1016
        %v1036 = vmul.f32 %v926, %v1016
        %v1037 = vadd.f32 %v953, 1.0
        %v1038 = vadd.f32 %v960, 1.0
        %v1039 = vadd.f32 %v967, 1.0
        %v1040 = vadd.f32 %v974, 1.0
        %v1041 = vadd.f32 %v981, 1.0
        %v1042 = vadd.f32 %v988, 1.0
        %v1043 = vadd.f32 %v995, 1.0
        %v1044 = vadd.f32 %v1002, 1.0
        %v1045 = vadd.f32 %v1009, 1.0
        %v1046 = vadd.f32 %v1016, 1.0
        %v1047 = vrsqrt.pop %v953
        %v1048 = vmul.f32 %v953, %v1047
        %vm1049 = vcmp.eq.f32.partialorder %v953, inf
        %v1050 = vsel %vm1049, %v953, %v1048
        %vm1051 = vcmp.eq.f32.partialorder %v953, 0.0
        %v1052 = vand.u32 %v953, 2147483648
        %v1053 = vsel %vm1051, %v1052, %v1050
        %v1054 = vrsqrt.pop %v960
        %v1055 = vmul.f32 %v960, %v1054
        %vm1056 = vcmp.eq.f32.partialorder %v960, inf
        %v1057 = vsel %vm1056, %v960, %v1055
        %vm1058 = vcmp.eq.f32.partialorder %v960, 0.0
        %v1059 = vand.u32 %v960, 2147483648
        %v1060 = vsel %vm1058, %v1059, %v1057
        %v1061 = vrsqrt.pop %v967
        %v1062 = vmul.f32 %v967, %v1061
        %vm1063 = vcmp.eq.f32.partialorder %v967, inf
        %v1064 = vsel %vm1063, %v967, %v1062
        %vm1065 = vcmp.eq.f32.partialorder %v967, 0.0
        %v1066 = vand.u32 %v967, 2147483648
        %v1067 = vsel %vm1065, %v1066, %v1064
        %v1068 = vrsqrt.pop %v974
        %v1069 = vmul.f32 %v974, %v1068
        %vm1070 = vcmp.eq.f32.partialorder %v974, inf
        %v1071 = vsel %vm1070, %v974, %v1069
        %vm1072 = vcmp.eq.f32.partialorder %v974, 0.0
        %v1073 = vand.u32 %v974, 2147483648
        %v1074 = vsel %vm1072, %v1073, %v1071
        %v1075 = vrsqrt.pop %v981
        %v1076 = vmul.f32 %v981, %v1075
        %vm1077 = vcmp.eq.f32.partialorder %v981, inf
        %v1078 = vsel %vm1077, %v981, %v1076
        %vm1079 = vcmp.eq.f32.partialorder %v981, 0.0
        %v1080 = vand.u32 %v981, 2147483648
        %v1081 = vsel %vm1079, %v1080, %v1078
        %v1082 = vrsqrt.pop %v988
        %v1083 = vmul.f32 %v988, %v1082
        %vm1084 = vcmp.eq.f32.partialorder %v988, inf
        %v1085 = vsel %vm1084, %v988, %v1083
        %vm1086 = vcmp.eq.f32.partialorder %v988, 0.0
        %v1087 = vand.u32 %v988, 2147483648
        %v1088 = vsel %vm1086, %v1087, %v1085
        %v1089 = vrsqrt.pop %v995
        %v1090 = vmul.f32 %v995, %v1089
        %vm1091 = vcmp.eq.f32.partialorder %v995, inf
        %v1092 = vsel %vm1091, %v995, %v1090
        %vm1093 = vcmp.eq.f32.partialorder %v995, 0.0
        %v1094 = vand.u32 %v995, 2147483648
        %v1095 = vsel %vm1093, %v1094, %v1092
        %v1096 = vrsqrt.pop %v1002
        %v1097 = vmul.f32 %v1002, %v1096
        %vm1098 = vcmp.eq.f32.partialorder %v1002, inf
        %v1099 = vsel %vm1098, %v1002, %v1097
        %vm1100 = vcmp.eq.f32.partialorder %v1002, 0.0
        %v1101 = vand.u32 %v1002, 2147483648
        %v1102 = vsel %vm1100, %v1101, %v1099
        %v1103 = vrsqrt.pop %v1009
        %v1104 = vmul.f32 %v1009, %v1103
        %vm1105 = vcmp.eq.f32.partialorder %v1009, inf
        %v1106 = vsel %vm1105, %v1009, %v1104
        %vm1107 = vcmp.eq.f32.partialorder %v1009, 0.0
        %v1108 = vand.u32 %v1009, 2147483648
        %v1109 = vsel %vm1107, %v1108, %v1106
        %v1110 = vrsqrt.pop %v1016
        %v1111 = vmul.f32 %v1016, %v1110
        %vm1112 = vcmp.eq.f32.partialorder %v1016, inf
        %v1113 = vsel %vm1112, %v1016, %v1111
        %vm1114 = vcmp.eq.f32.partialorder %v1016, 0.0
        %v1115 = vand.u32 %v1016, 2147483648
        %v1116 = vsel %vm1114, %v1115, %v1113
        %v1117 = vmul.f32 %v1037, %v1053
        %v1118 = vmul.f32 %v1038, %v1060
        %v1119 = vmul.f32 %v1039, %v1067
        %v1120 = vmul.f32 %v1040, %v1074
        %v1121 = vmul.f32 %v1041, %v1081
        %v1122 = vmul.f32 %v1042, %v1088
        %v1123 = vmul.f32 %v1043, %v1095
        %v1124 = vmul.f32 %v1044, %v1102
        %v1125 = vmul.f32 %v1045, %v1109
        %v1126 = vmul.f32 %v1046, %v1116
        %v1127 = vrcp.pop %v1117
        %v1128 = vmul.f32 %v1017, %v1127
        %v1129 = vmul.f32 %v1018, %v1127
        %v1130 = vrcp.pop %v1118
        %v1131 = vmul.f32 %v1019, %v1130
        %v1132 = vmul.f32 %v1020, %v1130
        %v1133 = vrcp.pop %v1119
        %v1134 = vmul.f32 %v1021, %v1133
        %v1135 = vmul.f32 %v1022, %v1133
        %v1136 = vrcp.pop %v1120
        %v1137 = vmul.f32 %v1023, %v1136
        %v1138 = vmul.f32 %v1024, %v1136
        %v1139 = vrcp.pop %v1121
        %v1140 = vmul.f32 %v1025, %v1139
        %v1141 = vmul.f32 %v1026, %v1139
        %v1142 = vrcp.pop %v1122
        %v1143 = vmul.f32 %v1027, %v1142
        %v1144 = vmul.f32 %v1028, %v1142
        %v1145 = vrcp.pop %v1123
        %v1146 = vmul.f32 %v1029, %v1145
        %v1147 = vmul.f32 %v1030, %v1145
        %v1148 = vrcp.pop %v1124
        %v1149 = vmul.f32 %v1031, %v1148
        %v1150 = vmul.f32 %v1032, %v1148
        %v1151 = vrcp.pop %v1125
        %v1152 = vmul.f32 %v1033, %v1151
        %v1153 = vmul.f32 %v1034, %v1151
        %v1154 = vrcp.pop %v1126
        %v1155 = vmul.f32 %v1035, %v1154
        %v1156 = vmul.f32 %v1036, %v1154
        %v1157 = vmul.f32 %v816, %v1128
        %v1158 = vmul.f32 %v817, %v1129
        %v1159 = vmul.f32 %v818, %v1131
        %v1160 = vmul.f32 %v819, %v1132
        %v1161 = vmul.f32 %v820, %v1134
        %v1162 = vmul.f32 %v821, %v1135
        %v1163 = vmul.f32 %v822, %v1137
        %v1164 = vmul.f32 %v823, %v1138
        %v1165 = vmul.f32 %v824, %v1140
        %v1166 = vmul.f32 %v825, %v1141
        %v1167 = vmul.f32 %v826, %v1143
        %v1168 = vmul.f32 %v827, %v1144
        %v1169 = vmul.f32 %v828, %v1146
        %v1170 = vmul.f32 %v829, %v1147
        %v1171 = vmul.f32 %v830, %v1149
        %v1172 = vmul.f32 %v831, %v1150
        %v1173 = vmul.f32 %v832, %v1152
        %v1174 = vmul.f32 %v833, %v1153
        %v1175 = vmul.f32 %v834, %v1155
        %v1176 = vmul.f32 %v835, %v1156
        %v1177 = vadd.f32 %v1157, %v1158
        %v1178 = vrot.slane %v1177, 4
        %v1179 = vadd.f32 %v1177, %v1178
        %v1180 = vrot.slane %v1179, 2
        %v1181 = vadd.f32 %v1179, %v1180
        %v1182 = vrot.slane %v1181, 1
        %v1183 = vadd.f32 %v1181, %v1182
        %v1184 = vadd.f32 %v1159, %v1160
        %v1185 = vrot.slane %v1184, 4
        %v1186 = vadd.f32 %v1184, %v1185
        %v1187 = vrot.slane %v1186, 2
        %v1188 = vadd.f32 %v1186, %v1187
        %v1189 = vrot.slane %v1188, 1
        %v1190 = vadd.f32 %v1188, %v1189
        %v1191 = vadd.f32 %v1161, %v1162
        %v1192 = vrot.slane %v1191, 4
        %v1193 = vadd.f32 %v1191, %v1192
        %v1194 = vrot.slane %v1193, 2
        %v1195 = vadd.f32 %v1193, %v1194
        %v1196 = vrot.slane %v1195, 1
        %v1197 = vadd.f32 %v1195, %v1196
        %v1198 = vadd.f32 %v1163, %v1164
        %v1199 = vrot.slane %v1198, 4
        %v1200 = vadd.f32 %v1198, %v1199
        %v1201 = vrot.slane %v1200, 2
        %v1202 = vadd.f32 %v1200, %v1201
        %v1203 = vrot.slane %v1202, 1
        %v1204 = vadd.f32 %v1202, %v1203
        %v1205 = vadd.f32 %v1165, %v1166
        %v1206 = vrot.slane %v1205, 4
        %v1207 = vadd.f32 %v1205, %v1206
        %v1208 = vrot.slane %v1207, 2
        %v1209 = vadd.f32 %v1207, %v1208
        %v1210 = vrot.slane %v1209, 1
        %v1211 = vadd.f32 %v1209, %v1210
        %v1212 = vadd.f32 %v1167, %v1168
        %v1213 = vrot.slane %v1212, 4
        %v1214 = vadd.f32 %v1212, %v1213
        %v1215 = vrot.slane %v1214, 2
        %v1216 = vadd.f32 %v1214, %v1215
        %v1217 = vrot.slane %v1216, 1
        %v1218 = vadd.f32 %v1216, %v1217
        %v1219 = vadd.f32 %v1169, %v1170
        %v1220 = vrot.slane %v1219, 4
        %v1221 = vadd.f32 %v1219, %v1220
        %v1222 = vrot.slane %v1221, 2
        %v1223 = vadd.f32 %v1221, %v1222
        %v1224 = vrot.slane %v1223, 1
        %v1225 = vadd.f32 %v1223, %v1224
        %v1226 = vadd.f32 %v1171, %v1172
        %v1227 = vrot.slane %v1226, 4
        %v1228 = vadd.f32 %v1226, %v1227
        %v1229 = vrot.slane %v1228, 2
        %v1230 = vadd.f32 %v1228, %v1229
        %v1231 = vrot.slane %v1230, 1
        %v1232 = vadd.f32 %v1230, %v1231
        %v1233 = vadd.f32 %v1173, %v1174
        %v1234 = vrot.slane %v1233, 4
        %v1235 = vadd.f32 %v1233, %v1234
        %v1236 = vrot.slane %v1235, 2
        %v1237 = vadd.f32 %v1235, %v1236
        %v1238 = vrot.slane %v1237, 1
        %v1239 = vadd.f32 %v1237, %v1238
        %v1240 = vadd.f32 %v1175, %v1176
        %v1241 = vrot.slane %v1240, 4
        %v1242 = vadd.f32 %v1240, %v1241
        %v1243 = vrot.slane %v1242, 2
        %v1244 = vadd.f32 %v1242, %v1243
        %v1245 = vrot.slane %v1244, 1
        %v1246 = vadd.f32 %v1244, %v1245
        %v1247 = vadd.f32 %v1183, 0.0
        %v1248 = vadd.f32 %v1190, 0.0
        %v1249 = vadd.f32 %v1197, 0.0
        %v1250 = vadd.f32 %v1204, 0.0
        %v1251 = vadd.f32 %v1211, 0.0
        %v1252 = vadd.f32 %v1218, 0.0
        %v1253 = vadd.f32 %v1225, 0.0
        %v1254 = vadd.f32 %v1232, 0.0
        %v1255 = vadd.f32 %v1239, 0.0
        %v1256 = vadd.f32 %v1246, 0.0
        %v1257 = vmax.f32 %v1247, %v1251
        %v1258 = vmax.f32 %v1248, %v1252
        %v1259 = vmax.f32 %v1249, %v1253
        %v1260 = vmax.f32 %v1250, %v1254
        %v1261 = vmax.f32 %v1257, %v1255
        %v1262 = vmax.f32 %v1258, %v1256
        %v1263 = vmax.f32 %v1261, %v1262
        %v1264 = vmax.f32 %v1259, %v1260
        %v1265 = vmax.f32 %v1263, %v1264
        %v1266 = vsub.f32 %v1247, %v1265
        %v1267 = vsub.f32 %v1248, %v1265
        %v1268 = vsub.f32 %v1249, %v1265
        %v1269 = vsub.f32 %v1250, %v1265
        %v1270 = vsub.f32 %v1251, %v1265
        %v1271 = vsub.f32 %v1252, %v1265
        %v1272 = vsub.f32 %v1253, %v1265
        %v1273 = vsub.f32 %v1254, %v1265
        %v1274 = vsub.f32 %v1255, %v1265
        %v1275 = vsub.f32 %v1256, %v1265
        %v1276 = vmul.f32 %v1266, 1.442695
        %v1277 = vpow.pop %v1276
        %v1278 = vmul.f32 %v1267, 1.442695
        %v1279 = vpow.pop %v1278
        %v1280 = vmul.f32 %v1268, 1.442695
        %v1281 = vpow.pop %v1280
        %v1282 = vmul.f32 %v1269, 1.442695
        %v1283 = vpow.pop %v1282
        %v1284 = vmul.f32 %v1270, 1.442695
        %v1285 = vpow.pop %v1284
        %v1286 = vmul.f32 %v1271, 1.442695
        %v1287 = vpow.pop %v1286
        %v1288 = vmul.f32 %v1272, 1.442695
        %v1289 = vpow.pop %v1288
        %v1290 = vmul.f32 %v1273, 1.442695
        %v1291 = vpow.pop %v1290
        %v1292 = vmul.f32 %v1274, 1.442695
        %v1293 = vpow.pop %v1292
        %v1294 = vmul.f32 %v1275, 1.442695
        %v1295 = vpow.pop %v1294
        %v1306 = vrot.slane %v1279, 7
        %vm1307 = vcmask 1041409
        %v1308 = vsel %vm1307, %v1306, %v1277
        %v1309 = vrot.slane %v1281, 6
        %vm1310 = vcmask 1042434
        %v1311 = vsel %vm1310, %v1309, %v1308
        %v1312 = vrot.slane %v1283, 5
        %vm1313 = vcmask 1043459
        %v1314 = vsel %vm1313, %v1312, %v1311
        %v1315 = vrot.slane %v1285, 4
        %vm1316 = vcmask 1044484
        %v1317 = vsel %vm1316, %v1315, %v1314
        %v1318 = vrot.slane %v1287, 3
        %vm1319 = vcmask 1045509
        %v1320 = vsel %vm1319, %v1318, %v1317
        %v1321 = vrot.slane %v1289, 2
        %vm1322 = vcmask 1046534
        %v1323 = vsel %vm1322, %v1321, %v1320
        %v1324 = vrot.slane %v1291, 1
        %vm1325 = vcmask 1047559
        %v1326 = vsel %vm1325, %v1324, %v1323
        %v1327 = vrot.slane %v1295, 7
        %v1328 = vsel %vm1307, %v1327, %v1293
        %v1331 = vsel %vm836, %v1328, 0.0
        %v1332 = vadd.f32 %v1326, %v1331
        %v1333 = vrot.slane %v1332, 4
        %v1334 = vadd.f32 %v1332, %v1333
        %v1335 = vrot.slane %v1334, 2
        %v1336 = vadd.f32 %v1334, %v1335
        %v1337 = vrot.slane %v1336, 1
        %v1338 = vadd.f32 %v1336, %v1337
        %v1339 = vlaneseq
        %v1340 = vshrl.u32 %v1339, 7
        %v1341 = vsub.s32 0, %v1340
        %v1342 = vrot.slane %v1338, %v1341
        %v1343 = vrcp.pop %v1342
        %v1344 = vmul.f32 %v1277, %v1343
        %v1345 = vmul.f32 %v1279, %v1343
        %v1346 = vmul.f32 %v1281, %v1343
        %v1347 = vmul.f32 %v1283, %v1343
        %v1348 = vmul.f32 %v1285, %v1343
        %v1349 = vmul.f32 %v1287, %v1343
        %v1350 = vmul.f32 %v1289, %v1343
        %v1351 = vmul.f32 %v1291, %v1343
        %v1352 = vmul.f32 %v1293, %v1343
        %v1353 = vmul.f32 %v1295, %v1343
        %v1354 = vlaneseq
        %v1355 = vshrl.u32 %v1354, 7
        %v1356 = vsub.s32 0, %v1355
        %v1357 = vrot.slane %v1344, %v1356
        %v1358 = vlaneseq
        %v1359 = vshrl.u32 %v1358, 7
        %v1360 = vsub.s32 0, %v1359
        %v1361 = vrot.slane %v1345, %v1360
        %v1362 = vlaneseq
        %v1363 = vshrl.u32 %v1362, 7
        %v1364 = vsub.s32 0, %v1363
        %v1365 = vrot.slane %v1346, %v1364
        %v1366 = vlaneseq
        %v1367 = vshrl.u32 %v1366, 7
        %v1368 = vsub.s32 0, %v1367
        %v1369 = vrot.slane %v1347, %v1368
        %v1370 = vlaneseq
        %v1371 = vshrl.u32 %v1370, 7
        %v1372 = vsub.s32 0, %v1371
        %v1373 = vrot.slane %v1348, %v1372
        %v1374 = vlaneseq
        %v1375 = vshrl.u32 %v1374, 7
        %v1376 = vsub.s32 0, %v1375
        %v1377 = vrot.slane %v1349, %v1376
        %v1378 = vlaneseq
        %v1379 = vshrl.u32 %v1378, 7
        %v1380 = vsub.s32 0, %v1379
        %v1381 = vrot.slane %v1350, %v1380
        %v1382 = vlaneseq
        %v1383 = vshrl.u32 %v1382, 7
        %v1384 = vsub.s32 0, %v1383
        %v1385 = vrot.slane %v1351, %v1384
        %v1386 = vlaneseq
        %v1387 = vshrl.u32 %v1386, 7
        %v1388 = vsub.s32 0, %v1387
        %v1389 = vrot.slane %v1352, %v1388
        %v1390 = vlaneseq
        %v1391 = vshrl.u32 %v1390, 7
        %v1392 = vsub.s32 0, %v1391
        %v1393 = vrot.slane %v1353, %v1392
        %v1394 = vmul.f32 %v1357, %v816
        %v1395 = vmul.f32 %v1357, %v817
        %v1396 = vmul.f32 %v1361, %v818
        %v1397 = vmul.f32 %v1361, %v819
        %v1398 = vmul.f32 %v1365, %v820
        %v1399 = vmul.f32 %v1365, %v821
        %v1400 = vmul.f32 %v1369, %v822
        %v1401 = vmul.f32 %v1369, %v823
        %v1402 = vmul.f32 %v1373, %v824
        %v1403 = vmul.f32 %v1373, %v825
        %v1404 = vmul.f32 %v1377, %v826
        %v1405 = vmul.f32 %v1377, %v827
        %v1406 = vmul.f32 %v1381, %v828
        %v1407 = vmul.f32 %v1381, %v829
        %v1408 = vmul.f32 %v1385, %v830
        %v1409 = vmul.f32 %v1385, %v831
        %v1410 = vmul.f32 %v1389, %v832
        %v1411 = vmul.f32 %v1389, %v833
        %v1412 = vmul.f32 %v1393, %v834
        %v1413 = vmul.f32 %v1393, %v835
        %1414 = vadd.xlane.f32.xlu0 %v1394
        %v1415 = vpop.xlane.xlu0 %1414
        %1416 = vadd.xlane.f32.xlu0 %v1395
        %v1417 = vpop.xlane.xlu0 %1416
        %1418 = vadd.xlane.f32.xlu0 %v1396
        %v1419 = vpop.xlane.xlu0 %1418
        %1420 = vadd.xlane.f32.xlu0 %v1397
        %v1421 = vpop.xlane.xlu0 %1420
        %1422 = vadd.xlane.f32.xlu0 %v1398
        %v1423 = vpop.xlane.xlu0 %1422
        %1424 = vadd.xlane.f32.xlu0 %v1399
        %v1425 = vpop.xlane.xlu0 %1424
        %1426 = vadd.xlane.f32.xlu0 %v1400
        %v1427 = vpop.xlane.xlu0 %1426
        %1428 = vadd.xlane.f32.xlu0 %v1401
        %v1429 = vpop.xlane.xlu0 %1428
        %1430 = vadd.xlane.f32.xlu0 %v1402
        %v1431 = vpop.xlane.xlu0 %1430
        %1432 = vadd.xlane.f32.xlu0 %v1403
        %v1433 = vpop.xlane.xlu0 %1432
        %1434 = vadd.xlane.f32.xlu0 %v1404
        %v1435 = vpop.xlane.xlu0 %1434
        %1436 = vadd.xlane.f32.xlu0 %v1405
        %v1437 = vpop.xlane.xlu0 %1436
        %1438 = vadd.xlane.f32.xlu0 %v1406
        %v1439 = vpop.xlane.xlu0 %1438
        %1440 = vadd.xlane.f32.xlu0 %v1407
        %v1441 = vpop.xlane.xlu0 %1440
        %1442 = vadd.xlane.f32.xlu0 %v1408
        %v1443 = vpop.xlane.xlu0 %1442
        %1444 = vadd.xlane.f32.xlu0 %v1409
        %v1445 = vpop.xlane.xlu0 %1444
        %1446 = vadd.xlane.f32.xlu0 %v1410
        %v1447 = vpop.xlane.xlu0 %1446
        %1448 = vadd.xlane.f32.xlu0 %v1411
        %v1449 = vpop.xlane.xlu0 %1448
        %1450 = vadd.xlane.f32.xlu0 %v1412
        %v1451 = vpop.xlane.xlu0 %1450
        %1452 = vadd.xlane.f32.xlu0 %v1413
        %v1453 = vpop.xlane.xlu0 %1452
        %v1454 = vadd.f32 %v1415, %v232
        %v1455 = vadd.f32 %v1417, %v236
        %v1456 = vadd.f32 %v1419, %v243
        %v1457 = vadd.f32 %v1421, %v247
        %v1458 = vadd.f32 %v1423, %v254
        %v1459 = vadd.f32 %v1425, %v258
        %v1460 = vadd.f32 %v1427, %v265
        %v1461 = vadd.f32 %v1429, %v269
        %v1462 = vadd.f32 %v1431, %v276
        %v1463 = vadd.f32 %v1433, %v280
        %v1464 = vadd.f32 %v1435, %v287
        %v1465 = vadd.f32 %v1437, %v291
        %v1466 = vadd.f32 %v1439, %v298
        %v1467 = vadd.f32 %v1441, %v302
        %v1468 = vadd.f32 %v1443, %v309
        %v1469 = vadd.f32 %v1445, %v313
        %v1470 = vadd.f32 %v1447, %v320
        %v1471 = vadd.f32 %v1449, %v324
        %v1472 = vadd.f32 %v1451, %v331
        %v1473 = vadd.f32 %v1453, %v335
        %v1474 = vmul.f32 %v1454, %v1454
        %v1475 = vmul.f32 %v1455, %v1455
        %v1476 = vmul.f32 %v1456, %v1456
        %v1477 = vmul.f32 %v1457, %v1457
        %v1478 = vmul.f32 %v1458, %v1458
        %v1479 = vmul.f32 %v1459, %v1459
        %v1480 = vmul.f32 %v1460, %v1460
        %v1481 = vmul.f32 %v1461, %v1461
        %v1482 = vmul.f32 %v1462, %v1462
        %v1483 = vmul.f32 %v1463, %v1463
        %v1484 = vmul.f32 %v1464, %v1464
        %v1485 = vmul.f32 %v1465, %v1465
        %v1486 = vmul.f32 %v1466, %v1466
        %v1487 = vmul.f32 %v1467, %v1467
        %v1488 = vmul.f32 %v1468, %v1468
        %v1489 = vmul.f32 %v1469, %v1469
        %v1490 = vmul.f32 %v1470, %v1470
        %v1491 = vmul.f32 %v1471, %v1471
        %v1492 = vmul.f32 %v1472, %v1472
        %v1493 = vmul.f32 %v1473, %v1473
        %v1494 = vadd.f32 %v1474, %v1475
        %v1495 = vrot.slane %v1494, 4
        %v1496 = vadd.f32 %v1494, %v1495
        %v1497 = vrot.slane %v1496, 2
        %v1498 = vadd.f32 %v1496, %v1497
        %v1499 = vrot.slane %v1498, 1
        %v1500 = vadd.f32 %v1498, %v1499
        %v1501 = vadd.f32 %v1476, %v1477
        %v1502 = vrot.slane %v1501, 4
        %v1503 = vadd.f32 %v1501, %v1502
        %v1504 = vrot.slane %v1503, 2
        %v1505 = vadd.f32 %v1503, %v1504
        %v1506 = vrot.slane %v1505, 1
        %v1507 = vadd.f32 %v1505, %v1506
        %v1508 = vadd.f32 %v1478, %v1479
        %v1509 = vrot.slane %v1508, 4
        %v1510 = vadd.f32 %v1508, %v1509
        %v1511 = vrot.slane %v1510, 2
        %v1512 = vadd.f32 %v1510, %v1511
        %v1513 = vrot.slane %v1512, 1
        %v1514 = vadd.f32 %v1512, %v1513
        %v1515 = vadd.f32 %v1480, %v1481
        %v1516 = vrot.slane %v1515, 4
        %v1517 = vadd.f32 %v1515, %v1516
        %v1518 = vrot.slane %v1517, 2
        %v1519 = vadd.f32 %v1517, %v1518
        %v1520 = vrot.slane %v1519, 1
        %v1521 = vadd.f32 %v1519, %v1520
        %v1522 = vadd.f32 %v1482, %v1483
        %v1523 = vrot.slane %v1522, 4
        %v1524 = vadd.f32 %v1522, %v1523
        %v1525 = vrot.slane %v1524, 2
        %v1526 = vadd.f32 %v1524, %v1525
        %v1527 = vrot.slane %v1526, 1
        %v1528 = vadd.f32 %v1526, %v1527
        %v1529 = vadd.f32 %v1484, %v1485
        %v1530 = vrot.slane %v1529, 4
        %v1531 = vadd.f32 %v1529, %v1530
        %v1532 = vrot.slane %v1531, 2
        %v1533 = vadd.f32 %v1531, %v1532
        %v1534 = vrot.slane %v1533, 1
        %v1535 = vadd.f32 %v1533, %v1534
        %v1536 = vadd.f32 %v1486, %v1487
        %v1537 = vrot.slane %v1536, 4
        %v1538 = vadd.f32 %v1536, %v1537
        %v1539 = vrot.slane %v1538, 2
        %v1540 = vadd.f32 %v1538, %v1539
        %v1541 = vrot.slane %v1540, 1
        %v1542 = vadd.f32 %v1540, %v1541
        %v1543 = vadd.f32 %v1488, %v1489
        %v1544 = vrot.slane %v1543, 4
        %v1545 = vadd.f32 %v1543, %v1544
        %v1546 = vrot.slane %v1545, 2
        %v1547 = vadd.f32 %v1545, %v1546
        %v1548 = vrot.slane %v1547, 1
        %v1549 = vadd.f32 %v1547, %v1548
        %v1550 = vadd.f32 %v1490, %v1491
        %v1551 = vrot.slane %v1550, 4
        %v1552 = vadd.f32 %v1550, %v1551
        %v1553 = vrot.slane %v1552, 2
        %v1554 = vadd.f32 %v1552, %v1553
        %v1555 = vrot.slane %v1554, 1
        %v1556 = vadd.f32 %v1554, %v1555
        %v1557 = vadd.f32 %v1492, %v1493
        %v1558 = vrot.slane %v1557, 4
        %v1559 = vadd.f32 %v1557, %v1558
        %v1560 = vrot.slane %v1559, 2
        %v1561 = vadd.f32 %v1559, %v1560
        %v1562 = vrot.slane %v1561, 1
        %v1563 = vadd.f32 %v1561, %v1562
        %v1564 = vmul.f32 %v1454, %v1500
        %v1565 = vmul.f32 %v1455, %v1500
        %v1566 = vmul.f32 %v1456, %v1507
        %v1567 = vmul.f32 %v1457, %v1507
        %v1568 = vmul.f32 %v1458, %v1514
        %v1569 = vmul.f32 %v1459, %v1514
        %v1570 = vmul.f32 %v1460, %v1521
        %v1571 = vmul.f32 %v1461, %v1521
        %v1572 = vmul.f32 %v1462, %v1528
        %v1573 = vmul.f32 %v1463, %v1528
        %v1574 = vmul.f32 %v1464, %v1535
        %v1575 = vmul.f32 %v1465, %v1535
        %v1576 = vmul.f32 %v1466, %v1542
        %v1577 = vmul.f32 %v1467, %v1542
        %v1578 = vmul.f32 %v1468, %v1549
        %v1579 = vmul.f32 %v1469, %v1549
        %v1580 = vmul.f32 %v1470, %v1556
        %v1581 = vmul.f32 %v1471, %v1556
        %v1582 = vmul.f32 %v1472, %v1563
        %v1583 = vmul.f32 %v1473, %v1563
        %v1584 = vadd.f32 %v1500, 1.0
        %v1585 = vadd.f32 %v1507, 1.0
        %v1586 = vadd.f32 %v1514, 1.0
        %v1587 = vadd.f32 %v1521, 1.0
        %v1588 = vadd.f32 %v1528, 1.0
        %v1589 = vadd.f32 %v1535, 1.0
        %v1590 = vadd.f32 %v1542, 1.0
        %v1591 = vadd.f32 %v1549, 1.0
        %v1592 = vadd.f32 %v1556, 1.0
        %v1593 = vadd.f32 %v1563, 1.0
        %v1594 = vrsqrt.pop %v1500
        %v1595 = vmul.f32 %v1500, %v1594
        %vm1596 = vcmp.eq.f32.partialorder %v1500, inf
        %v1597 = vsel %vm1596, %v1500, %v1595
        %vm1598 = vcmp.eq.f32.partialorder %v1500, 0.0
        %v1599 = vand.u32 %v1500, 2147483648
        %v1600 = vsel %vm1598, %v1599, %v1597
        %v1601 = vrsqrt.pop %v1507
        %v1602 = vmul.f32 %v1507, %v1601
        %vm1603 = vcmp.eq.f32.partialorder %v1507, inf
        %v1604 = vsel %vm1603, %v1507, %v1602
        %vm1605 = vcmp.eq.f32.partialorder %v1507, 0.0
        %v1606 = vand.u32 %v1507, 2147483648
        %v1607 = vsel %vm1605, %v1606, %v1604
        %v1608 = vrsqrt.pop %v1514
        %v1609 = vmul.f32 %v1514, %v1608
        %vm1610 = vcmp.eq.f32.partialorder %v1514, inf
        %v1611 = vsel %vm1610, %v1514, %v1609
        %vm1612 = vcmp.eq.f32.partialorder %v1514, 0.0
        %v1613 = vand.u32 %v1514, 2147483648
        %v1614 = vsel %vm1612, %v1613, %v1611
        %v1615 = vrsqrt.pop %v1521
        %v1616 = vmul.f32 %v1521, %v1615
        %vm1617 = vcmp.eq.f32.partialorder %v1521, inf
        %v1618 = vsel %vm1617, %v1521, %v1616
        %vm1619 = vcmp.eq.f32.partialorder %v1521, 0.0
        %v1620 = vand.u32 %v1521, 2147483648
        %v1621 = vsel %vm1619, %v1620, %v1618
        %v1622 = vrsqrt.pop %v1528
        %v1623 = vmul.f32 %v1528, %v1622
        %vm1624 = vcmp.eq.f32.partialorder %v1528, inf
        %v1625 = vsel %vm1624, %v1528, %v1623
        %vm1626 = vcmp.eq.f32.partialorder %v1528, 0.0
        %v1627 = vand.u32 %v1528, 2147483648
        %v1628 = vsel %vm1626, %v1627, %v1625
        %v1629 = vrsqrt.pop %v1535
        %v1630 = vmul.f32 %v1535, %v1629
        %vm1631 = vcmp.eq.f32.partialorder %v1535, inf
        %v1632 = vsel %vm1631, %v1535, %v1630
        %vm1633 = vcmp.eq.f32.partialorder %v1535, 0.0
        %v1634 = vand.u32 %v1535, 2147483648
        %v1635 = vsel %vm1633, %v1634, %v1632
        %v1636 = vrsqrt.pop %v1542
        %v1637 = vmul.f32 %v1542, %v1636
        %vm1638 = vcmp.eq.f32.partialorder %v1542, inf
        %v1639 = vsel %vm1638, %v1542, %v1637
        %vm1640 = vcmp.eq.f32.partialorder %v1542, 0.0
        %v1641 = vand.u32 %v1542, 2147483648
        %v1642 = vsel %vm1640, %v1641, %v1639
        %v1643 = vrsqrt.pop %v1549
        %v1644 = vmul.f32 %v1549, %v1643
        %vm1645 = vcmp.eq.f32.partialorder %v1549, inf
        %v1646 = vsel %vm1645, %v1549, %v1644
        %vm1647 = vcmp.eq.f32.partialorder %v1549, 0.0
        %v1648 = vand.u32 %v1549, 2147483648
        %v1649 = vsel %vm1647, %v1648, %v1646
        %v1650 = vrsqrt.pop %v1556
        %v1651 = vmul.f32 %v1556, %v1650
        %vm1652 = vcmp.eq.f32.partialorder %v1556, inf
        %v1653 = vsel %vm1652, %v1556, %v1651
        %vm1654 = vcmp.eq.f32.partialorder %v1556, 0.0
        %v1655 = vand.u32 %v1556, 2147483648
        %v1656 = vsel %vm1654, %v1655, %v1653
        %v1657 = vrsqrt.pop %v1563
        %v1658 = vmul.f32 %v1563, %v1657
        %vm1659 = vcmp.eq.f32.partialorder %v1563, inf
        %v1660 = vsel %vm1659, %v1563, %v1658
        %vm1661 = vcmp.eq.f32.partialorder %v1563, 0.0
        %v1662 = vand.u32 %v1563, 2147483648
        %v1663 = vsel %vm1661, %v1662, %v1660
        %v1664 = vmul.f32 %v1584, %v1600
        %v1665 = vmul.f32 %v1585, %v1607
        %v1666 = vmul.f32 %v1586, %v1614
        %v1667 = vmul.f32 %v1587, %v1621
        %v1668 = vmul.f32 %v1588, %v1628
        %v1669 = vmul.f32 %v1589, %v1635
        %v1670 = vmul.f32 %v1590, %v1642
        %v1671 = vmul.f32 %v1591, %v1649
        %v1672 = vmul.f32 %v1592, %v1656
        %v1673 = vmul.f32 %v1593, %v1663
        %v1674 = vrcp.pop %v1664
        %v1675 = vmul.f32 %v1564, %v1674
        %v1676 = vmul.f32 %v1565, %v1674
        %v1677 = vrcp.pop %v1665
        %v1678 = vmul.f32 %v1566, %v1677
        %v1679 = vmul.f32 %v1567, %v1677
        %v1680 = vrcp.pop %v1666
        %v1681 = vmul.f32 %v1568, %v1680
        %v1682 = vmul.f32 %v1569, %v1680
        %v1683 = vrcp.pop %v1667
        %v1684 = vmul.f32 %v1570, %v1683
        %v1685 = vmul.f32 %v1571, %v1683
        %v1686 = vrcp.pop %v1668
        %v1687 = vmul.f32 %v1572, %v1686
        %v1688 = vmul.f32 %v1573, %v1686
        %v1689 = vrcp.pop %v1669
        %v1690 = vmul.f32 %v1574, %v1689
        %v1691 = vmul.f32 %v1575, %v1689
        %v1692 = vrcp.pop %v1670
        %v1693 = vmul.f32 %v1576, %v1692
        %v1694 = vmul.f32 %v1577, %v1692
        %v1695 = vrcp.pop %v1671
        %v1696 = vmul.f32 %v1578, %v1695
        %v1697 = vmul.f32 %v1579, %v1695
        %v1698 = vrcp.pop %v1672
        %v1699 = vmul.f32 %v1580, %v1698
        %v1700 = vmul.f32 %v1581, %v1698
        %v1701 = vrcp.pop %v1673
        %v1702 = vmul.f32 %v1582, %v1701
        %v1703 = vmul.f32 %v1583, %v1701
        %v1704 = vmul.f32 %v816, %v1675
        %v1705 = vmul.f32 %v817, %v1676
        %v1706 = vmul.f32 %v818, %v1678
        %v1707 = vmul.f32 %v819, %v1679
        %v1708 = vmul.f32 %v820, %v1681
        %v1709 = vmul.f32 %v821, %v1682
        %v1710 = vmul.f32 %v822, %v1684
        %v1711 = vmul.f32 %v823, %v1685
        %v1712 = vmul.f32 %v824, %v1687
        %v1713 = vmul.f32 %v825, %v1688
        %v1714 = vmul.f32 %v826, %v1690
        %v1715 = vmul.f32 %v827, %v1691
        %v1716 = vmul.f32 %v828, %v1693
        %v1717 = vmul.f32 %v829, %v1694
        %v1718 = vmul.f32 %v830, %v1696
        %v1719 = vmul.f32 %v831, %v1697
        %v1720 = vmul.f32 %v832, %v1699
        %v1721 = vmul.f32 %v833, %v1700
        %v1722 = vmul.f32 %v834, %v1702
        %v1723 = vmul.f32 %v835, %v1703
        %v1724 = vadd.f32 %v1704, %v1705
        %v1725 = vrot.slane %v1724, 4
        %v1726 = vadd.f32 %v1724, %v1725
        %v1727 = vrot.slane %v1726, 2
        %v1728 = vadd.f32 %v1726, %v1727
        %v1729 = vrot.slane %v1728, 1
        %v1730 = vadd.f32 %v1728, %v1729
        %v1731 = vadd.f32 %v1706, %v1707
        %v1732 = vrot.slane %v1731, 4
        %v1733 = vadd.f32 %v1731, %v1732
        %v1734 = vrot.slane %v1733, 2
        %v1735 = vadd.f32 %v1733, %v1734
        %v1736 = vrot.slane %v1735, 1
        %v1737 = vadd.f32 %v1735, %v1736
        %v1738 = vadd.f32 %v1708, %v1709
        %v1739 = vrot.slane %v1738, 4
        %v1740 = vadd.f32 %v1738, %v1739
        %v1741 = vrot.slane %v1740, 2
        %v1742 = vadd.f32 %v1740, %v1741
        %v1743 = vrot.slane %v1742, 1
        %v1744 = vadd.f32 %v1742, %v1743
        %v1745 = vadd.f32 %v1710, %v1711
        %v1746 = vrot.slane %v1745, 4
        %v1747 = vadd.f32 %v1745, %v1746
        %v1748 = vrot.slane %v1747, 2
        %v1749 = vadd.f32 %v1747, %v1748
        %v1750 = vrot.slane %v1749, 1
        %v1751 = vadd.f32 %v1749, %v1750
        %v1752 = vadd.f32 %v1712, %v1713
        %v1753 = vrot.slane %v1752, 4
        %v1754 = vadd.f32 %v1752, %v1753
        %v1755 = vrot.slane %v1754, 2
        %v1756 = vadd.f32 %v1754, %v1755
        %v1757 = vrot.slane %v1756, 1
        %v1758 = vadd.f32 %v1756, %v1757
        %v1759 = vadd.f32 %v1714, %v1715
        %v1760 = vrot.slane %v1759, 4
        %v1761 = vadd.f32 %v1759, %v1760
        %v1762 = vrot.slane %v1761, 2
        %v1763 = vadd.f32 %v1761, %v1762
        %v1764 = vrot.slane %v1763, 1
        %v1765 = vadd.f32 %v1763, %v1764
        %v1766 = vadd.f32 %v1716, %v1717
        %v1767 = vrot.slane %v1766, 4
        %v1768 = vadd.f32 %v1766, %v1767
        %v1769 = vrot.slane %v1768, 2
        %v1770 = vadd.f32 %v1768, %v1769
        %v1771 = vrot.slane %v1770, 1
        %v1772 = vadd.f32 %v1770, %v1771
        %v1773 = vadd.f32 %v1718, %v1719
        %v1774 = vrot.slane %v1773, 4
        %v1775 = vadd.f32 %v1773, %v1774
        %v1776 = vrot.slane %v1775, 2
        %v1777 = vadd.f32 %v1775, %v1776
        %v1778 = vrot.slane %v1777, 1
        %v1779 = vadd.f32 %v1777, %v1778
        %v1780 = vadd.f32 %v1720, %v1721
        %v1781 = vrot.slane %v1780, 4
        %v1782 = vadd.f32 %v1780, %v1781
        %v1783 = vrot.slane %v1782, 2
        %v1784 = vadd.f32 %v1782, %v1783
        %v1785 = vrot.slane %v1784, 1
        %v1786 = vadd.f32 %v1784, %v1785
        %v1787 = vadd.f32 %v1722, %v1723
        %v1788 = vrot.slane %v1787, 4
        %v1789 = vadd.f32 %v1787, %v1788
        %v1790 = vrot.slane %v1789, 2
        %v1791 = vadd.f32 %v1789, %v1790
        %v1792 = vrot.slane %v1791, 1
        %v1793 = vadd.f32 %v1791, %v1792
        %v1794 = vadd.f32 %v1247, %v1730
        %v1795 = vadd.f32 %v1248, %v1737
        %v1796 = vadd.f32 %v1249, %v1744
        %v1797 = vadd.f32 %v1250, %v1751
        %v1798 = vadd.f32 %v1251, %v1758
        %v1799 = vadd.f32 %v1252, %v1765
        %v1800 = vadd.f32 %v1253, %v1772
        %v1801 = vadd.f32 %v1254, %v1779
        %v1802 = vadd.f32 %v1255, %v1786
        %v1803 = vadd.f32 %v1256, %v1793
        %v1804 = vmax.f32 %v1794, %v1798
        %v1805 = vmax.f32 %v1795, %v1799
        %v1806 = vmax.f32 %v1796, %v1800
        %v1807 = vmax.f32 %v1797, %v1801
        %v1808 = vmax.f32 %v1804, %v1802
        %v1809 = vmax.f32 %v1805, %v1803
        %v1810 = vmax.f32 %v1808, %v1809
        %v1811 = vmax.f32 %v1806, %v1807
        %v1812 = vmax.f32 %v1810, %v1811
        %v1813 = vsub.f32 %v1794, %v1812
        %v1814 = vsub.f32 %v1795, %v1812
        %v1815 = vsub.f32 %v1796, %v1812
        %v1816 = vsub.f32 %v1797, %v1812
        %v1817 = vsub.f32 %v1798, %v1812
        %v1818 = vsub.f32 %v1799, %v1812
        %v1819 = vsub.f32 %v1800, %v1812
        %v1820 = vsub.f32 %v1801, %v1812
        %v1821 = vsub.f32 %v1802, %v1812
        %v1822 = vsub.f32 %v1803, %v1812
        %v1823 = vmul.f32 %v1813, 1.442695
        %v1824 = vpow.pop %v1823
        %v1825 = vmul.f32 %v1814, 1.442695
        %v1826 = vpow.pop %v1825
        %v1827 = vmul.f32 %v1815, 1.442695
        %v1828 = vpow.pop %v1827
        %v1829 = vmul.f32 %v1816, 1.442695
        %v1830 = vpow.pop %v1829
        %v1831 = vmul.f32 %v1817, 1.442695
        %v1832 = vpow.pop %v1831
        %v1833 = vmul.f32 %v1818, 1.442695
        %v1834 = vpow.pop %v1833
        %v1835 = vmul.f32 %v1819, 1.442695
        %v1836 = vpow.pop %v1835
        %v1837 = vmul.f32 %v1820, 1.442695
        %v1838 = vpow.pop %v1837
        %v1839 = vmul.f32 %v1821, 1.442695
        %v1840 = vpow.pop %v1839
        %v1841 = vmul.f32 %v1822, 1.442695
        %v1842 = vpow.pop %v1841
        %v1853 = vrot.slane %v1826, 7
        %v1854 = vsel %vm1307, %v1853, %v1824
        %v1855 = vrot.slane %v1828, 6
        %v1856 = vsel %vm1310, %v1855, %v1854
        %v1857 = vrot.slane %v1830, 5
        %v1858 = vsel %vm1313, %v1857, %v1856
        %v1859 = vrot.slane %v1832, 4
        %v1860 = vsel %vm1316, %v1859, %v1858
        %v1861 = vrot.slane %v1834, 3
        %v1862 = vsel %vm1319, %v1861, %v1860
        %v1863 = vrot.slane %v1836, 2
        %v1864 = vsel %vm1322, %v1863, %v1862
        %v1865 = vrot.slane %v1838, 1
        %v1866 = vsel %vm1325, %v1865, %v1864
        %v1867 = vrot.slane %v1842, 7
        %v1868 = vsel %vm1307, %v1867, %v1840
        %v1871 = vsel %vm836, %v1868, 0.0
        %v1872 = vadd.f32 %v1866, %v1871
        %v1873 = vrot.slane %v1872, 4
        %v1874 = vadd.f32 %v1872, %v1873
        %v1875 = vrot.slane %v1874, 2
        %v1876 = vadd.f32 %v1874, %v1875
        %v1877 = vrot.slane %v1876, 1
        %v1878 = vadd.f32 %v1876, %v1877
        %v1879 = vlaneseq
        %v1880 = vshrl.u32 %v1879, 7
        %v1881 = vsub.s32 0, %v1880
        %v1882 = vrot.slane %v1878, %v1881
        %v1883 = vrcp.pop %v1882
        %v1884 = vmul.f32 %v1824, %v1883
        %v1885 = vmul.f32 %v1826, %v1883
        %v1886 = vmul.f32 %v1828, %v1883
        %v1887 = vmul.f32 %v1830, %v1883
        %v1888 = vmul.f32 %v1832, %v1883
        %v1889 = vmul.f32 %v1834, %v1883
        %v1890 = vmul.f32 %v1836, %v1883
        %v1891 = vmul.f32 %v1838, %v1883
        %v1892 = vmul.f32 %v1840, %v1883
        %v1893 = vmul.f32 %v1842, %v1883
        %v1894 = vlaneseq
        %v1895 = vshrl.u32 %v1894, 7
        %v1896 = vsub.s32 0, %v1895
        %v1897 = vrot.slane %v1884, %v1896
        %v1898 = vlaneseq
        %v1899 = vshrl.u32 %v1898, 7
        %v1900 = vsub.s32 0, %v1899
        %v1901 = vrot.slane %v1885, %v1900
        %v1902 = vlaneseq
        %v1903 = vshrl.u32 %v1902, 7
        %v1904 = vsub.s32 0, %v1903
        %v1905 = vrot.slane %v1886, %v1904
        %v1906 = vlaneseq
        %v1907 = vshrl.u32 %v1906, 7
        %v1908 = vsub.s32 0, %v1907
        %v1909 = vrot.slane %v1887, %v1908
        %v1910 = vlaneseq
        %v1911 = vshrl.u32 %v1910, 7
        %v1912 = vsub.s32 0, %v1911
        %v1913 = vrot.slane %v1888, %v1912
        %v1914 = vlaneseq
        %v1915 = vshrl.u32 %v1914, 7
        %v1916 = vsub.s32 0, %v1915
        %v1917 = vrot.slane %v1889, %v1916
        %v1918 = vlaneseq
        %v1919 = vshrl.u32 %v1918, 7
        %v1920 = vsub.s32 0, %v1919
        %v1921 = vrot.slane %v1890, %v1920
        %v1922 = vlaneseq
        %v1923 = vshrl.u32 %v1922, 7
        %v1924 = vsub.s32 0, %v1923
        %v1925 = vrot.slane %v1891, %v1924
        %v1926 = vlaneseq
        %v1927 = vshrl.u32 %v1926, 7
        %v1928 = vsub.s32 0, %v1927
        %v1929 = vrot.slane %v1892, %v1928
        %v1930 = vlaneseq
        %v1931 = vshrl.u32 %v1930, 7
        %v1932 = vsub.s32 0, %v1931
        %v1933 = vrot.slane %v1893, %v1932
        %v1934 = vmul.f32 %v1897, %v816
        %v1935 = vmul.f32 %v1897, %v817
        %v1936 = vmul.f32 %v1901, %v818
        %v1937 = vmul.f32 %v1901, %v819
        %v1938 = vmul.f32 %v1905, %v820
        %v1939 = vmul.f32 %v1905, %v821
        %v1940 = vmul.f32 %v1909, %v822
        %v1941 = vmul.f32 %v1909, %v823
        %v1942 = vmul.f32 %v1913, %v824
        %v1943 = vmul.f32 %v1913, %v825
        %v1944 = vmul.f32 %v1917, %v826
        %v1945 = vmul.f32 %v1917, %v827
        %v1946 = vmul.f32 %v1921, %v828
        %v1947 = vmul.f32 %v1921, %v829
        %v1948 = vmul.f32 %v1925, %v830
        %v1949 = vmul.f32 %v1925, %v831
        %v1950 = vmul.f32 %v1929, %v832
        %v1951 = vmul.f32 %v1929, %v833
        %v1952 = vmul.f32 %v1933, %v834
        %v1953 = vmul.f32 %v1933, %v835
        %1954 = vadd.xlane.f32.xlu0 %v1934
        %v1955 = vpop.xlane.xlu0 %1954
        %1956 = vadd.xlane.f32.xlu0 %v1935
        %v1957 = vpop.xlane.xlu0 %1956
        %1958 = vadd.xlane.f32.xlu0 %v1936
        %v1959 = vpop.xlane.xlu0 %1958
        %1960 = vadd.xlane.f32.xlu0 %v1937
        %v1961 = vpop.xlane.xlu0 %1960
        %1962 = vadd.xlane.f32.xlu0 %v1938
        %v1963 = vpop.xlane.xlu0 %1962
        %1964 = vadd.xlane.f32.xlu0 %v1939
        %v1965 = vpop.xlane.xlu0 %1964
        %1966 = vadd.xlane.f32.xlu0 %v1940
        %v1967 = vpop.xlane.xlu0 %1966
        %1968 = vadd.xlane.f32.xlu0 %v1941
        %v1969 = vpop.xlane.xlu0 %1968
        %1970 = vadd.xlane.f32.xlu0 %v1942
        %v1971 = vpop.xlane.xlu0 %1970
        %1972 = vadd.xlane.f32.xlu0 %v1943
        %v1973 = vpop.xlane.xlu0 %1972
        %1974 = vadd.xlane.f32.xlu0 %v1944
        %v1975 = vpop.xlane.xlu0 %1974
        %1976 = vadd.xlane.f32.xlu0 %v1945
        %v1977 = vpop.xlane.xlu0 %1976
        %1978 = vadd.xlane.f32.xlu0 %v1946
        %v1979 = vpop.xlane.xlu0 %1978
        %1980 = vadd.xlane.f32.xlu0 %v1947
        %v1981 = vpop.xlane.xlu0 %1980
        %1982 = vadd.xlane.f32.xlu0 %v1948
        %v1983 = vpop.xlane.xlu0 %1982
        %1984 = vadd.xlane.f32.xlu0 %v1949
        %v1985 = vpop.xlane.xlu0 %1984
        %1986 = vadd.xlane.f32.xlu0 %v1950
        %v1987 = vpop.xlane.xlu0 %1986
        %1988 = vadd.xlane.f32.xlu0 %v1951
        %v1989 = vpop.xlane.xlu0 %1988
        %1990 = vadd.xlane.f32.xlu0 %v1952
        %v1991 = vpop.xlane.xlu0 %1990
        %1992 = vadd.xlane.f32.xlu0 %v1953
        %v1993 = vpop.xlane.xlu0 %1992
        %v1996 = vlaneseq
        %v1997 = vshrl.u32 %v1996, 7
        %v1998 = vsub.s32 0, %v1997
        %v1999 = vrot.slane %v224, %v1998
        %2001 = vbcast.lane.b32.xlu0 %v1999, 256
        %v2002 = vpop.permute.xlu0 %2001
        %s2004 = sor.u32 256, 8
        %2005 = vbcast.lane.b32.xlu0 %v1999, %s2004
        %v2006 = vpop.permute.xlu0 %2005
        %v2007 = vlaneseq
        %v2008 = vshrl.u32 %v2007, 7
        %v2009 = vsub.s32 1, %v2008
        %v2010 = vrot.slane %v224, %v2009
        %2012 = vbcast.lane.b32.xlu0 %v2010, 256
        %v2013 = vpop.permute.xlu0 %2012
        %s2015 = sor.u32 256, 8
        %2016 = vbcast.lane.b32.xlu0 %v2010, %s2015
        %v2017 = vpop.permute.xlu0 %2016
        %v2018 = vlaneseq
        %v2019 = vshrl.u32 %v2018, 7
        %v2020 = vsub.s32 2, %v2019
        %v2021 = vrot.slane %v224, %v2020
        %2023 = vbcast.lane.b32.xlu0 %v2021, 256
        %v2024 = vpop.permute.xlu0 %2023
        %s2026 = sor.u32 256, 8
        %2027 = vbcast.lane.b32.xlu0 %v2021, %s2026
        %v2028 = vpop.permute.xlu0 %2027
        %v2029 = vlaneseq
        %v2030 = vshrl.u32 %v2029, 7
        %v2031 = vsub.s32 3, %v2030
        %v2032 = vrot.slane %v224, %v2031
        %2034 = vbcast.lane.b32.xlu0 %v2032, 256
        %v2035 = vpop.permute.xlu0 %2034
        %s2037 = sor.u32 256, 8
        %2038 = vbcast.lane.b32.xlu0 %v2032, %s2037
        %v2039 = vpop.permute.xlu0 %2038
        %v2040 = vlaneseq
        %v2041 = vshrl.u32 %v2040, 7
        %v2042 = vsub.s32 4, %v2041
        %v2043 = vrot.slane %v224, %v2042
        %2045 = vbcast.lane.b32.xlu0 %v2043, 256
        %v2046 = vpop.permute.xlu0 %2045
        %s2048 = sor.u32 256, 8
        %2049 = vbcast.lane.b32.xlu0 %v2043, %s2048
        %v2050 = vpop.permute.xlu0 %2049
        %v2051 = vlaneseq
        %v2052 = vshrl.u32 %v2051, 7
        %v2053 = vsub.s32 5, %v2052
        %v2054 = vrot.slane %v224, %v2053
        %2056 = vbcast.lane.b32.xlu0 %v2054, 256
        %v2057 = vpop.permute.xlu0 %2056
        %s2059 = sor.u32 256, 8
        %2060 = vbcast.lane.b32.xlu0 %v2054, %s2059
        %v2061 = vpop.permute.xlu0 %2060
        %v2062 = vlaneseq
        %v2063 = vshrl.u32 %v2062, 7
        %v2064 = vsub.s32 6, %v2063
        %v2065 = vrot.slane %v224, %v2064
        %2067 = vbcast.lane.b32.xlu0 %v2065, 256
        %v2068 = vpop.permute.xlu0 %2067
        %s2070 = sor.u32 256, 8
        %2071 = vbcast.lane.b32.xlu0 %v2065, %s2070
        %v2072 = vpop.permute.xlu0 %2071
        %v2073 = vlaneseq
        %v2074 = vshrl.u32 %v2073, 7
        %v2075 = vsub.s32 7, %v2074
        %v2076 = vrot.slane %v224, %v2075
        %2078 = vbcast.lane.b32.xlu0 %v2076, 256
        %v2079 = vpop.permute.xlu0 %2078
        %s2081 = sor.u32 256, 8
        %2082 = vbcast.lane.b32.xlu0 %v2076, %s2081
        %v2083 = vpop.permute.xlu0 %2082
        %v2084 = vlaneseq
        %v2085 = vshrl.u32 %v2084, 7
        %v2086 = vsub.s32 0, %v2085
        %v2087 = vrot.slane %v225, %v2086
        %2089 = vbcast.lane.b32.xlu0 %v2087, 256
        %v2090 = vpop.permute.xlu0 %2089
        %s2092 = sor.u32 256, 8
        %2093 = vbcast.lane.b32.xlu0 %v2087, %s2092
        %v2094 = vpop.permute.xlu0 %2093
        %v2095 = vlaneseq
        %v2096 = vshrl.u32 %v2095, 7
        %v2097 = vsub.s32 1, %v2096
        %v2098 = vrot.slane %v225, %v2097
        %2100 = vbcast.lane.b32.xlu0 %v2098, 256
        %v2101 = vpop.permute.xlu0 %2100
        %s2103 = sor.u32 256, 8
        %2104 = vbcast.lane.b32.xlu0 %v2098, %s2103
        %v2105 = vpop.permute.xlu0 %2104
        %v2126 = vadd.f32 %v1955, %v2002
        %v2127 = vadd.f32 %v1957, %v2006
        %v2128 = vadd.f32 %v1959, %v2013
        %v2129 = vadd.f32 %v1961, %v2017
        %v2130 = vadd.f32 %v1963, %v2024
        %v2131 = vadd.f32 %v1965, %v2028
        %v2132 = vadd.f32 %v1967, %v2035
        %v2133 = vadd.f32 %v1969, %v2039
        %v2134 = vadd.f32 %v1971, %v2046
        %v2135 = vadd.f32 %v1973, %v2050
        %v2136 = vadd.f32 %v1975, %v2057
        %v2137 = vadd.f32 %v1977, %v2061
        %v2138 = vadd.f32 %v1979, %v2068
        %v2139 = vadd.f32 %v1981, %v2072
        %v2140 = vadd.f32 %v1983, %v2079
        %v2141 = vadd.f32 %v1985, %v2083
        %v2142 = vadd.f32 %v1987, %v2090
        %v2143 = vadd.f32 %v1989, %v2094
        %v2144 = vadd.f32 %v1991, %v2101
        %v2145 = vadd.f32 %v1993, %v2105
        %v2146 = vmul.f32 %v2126, %v2126
        %v2147 = vmul.f32 %v2127, %v2127
        %v2148 = vmul.f32 %v2128, %v2128
        %v2149 = vmul.f32 %v2129, %v2129
        %v2150 = vmul.f32 %v2130, %v2130
        %v2151 = vmul.f32 %v2131, %v2131
        %v2152 = vmul.f32 %v2132, %v2132
        %v2153 = vmul.f32 %v2133, %v2133
        %v2154 = vmul.f32 %v2134, %v2134
        %v2155 = vmul.f32 %v2135, %v2135
        %v2156 = vmul.f32 %v2136, %v2136
        %v2157 = vmul.f32 %v2137, %v2137
        %v2158 = vmul.f32 %v2138, %v2138
        %v2159 = vmul.f32 %v2139, %v2139
        %v2160 = vmul.f32 %v2140, %v2140
        %v2161 = vmul.f32 %v2141, %v2141
        %v2162 = vmul.f32 %v2142, %v2142
        %v2163 = vmul.f32 %v2143, %v2143
        %v2164 = vmul.f32 %v2144, %v2144
        %v2165 = vmul.f32 %v2145, %v2145
        %2186 = vset.pattern.permute.xlu0 0
        %2187 = vperm.xlu0 %2186, %v2146
        %v2188 = vpop.permute.xlu0 %2187
        %2189 = vset.pattern.permute.xlu0 0
        %2190 = vperm.xlu0 %2189, %v2147
        %v2191 = vpop.permute.xlu0 %2190
        %2192 = vset.pattern.permute.xlu0 0
        %2193 = vperm.xlu0 %2192, %v2148
        %v2194 = vpop.permute.xlu0 %2193
        %2195 = vset.pattern.permute.xlu0 0
        %2196 = vperm.xlu0 %2195, %v2149
        %v2197 = vpop.permute.xlu0 %2196
        %2198 = vset.pattern.permute.xlu0 0
        %2199 = vperm.xlu0 %2198, %v2150
        %v2200 = vpop.permute.xlu0 %2199
        %2201 = vset.pattern.permute.xlu0 0
        %2202 = vperm.xlu0 %2201, %v2151
        %v2203 = vpop.permute.xlu0 %2202
        %2204 = vset.pattern.permute.xlu0 0
        %2205 = vperm.xlu0 %2204, %v2152
        %v2206 = vpop.permute.xlu0 %2205
        %2207 = vset.pattern.permute.xlu0 0
        %2208 = vperm.xlu0 %2207, %v2153
        %v2209 = vpop.permute.xlu0 %2208
        %2210 = vset.pattern.permute.xlu0 0
        %2211 = vperm.xlu0 %2210, %v2154
        %v2212 = vpop.permute.xlu0 %2211
        %2213 = vset.pattern.permute.xlu0 0
        %2214 = vperm.xlu0 %2213, %v2155
        %v2215 = vpop.permute.xlu0 %2214
        %2216 = vset.pattern.permute.xlu0 0
        %2217 = vperm.xlu0 %2216, %v2156
        %v2218 = vpop.permute.xlu0 %2217
        %2219 = vset.pattern.permute.xlu0 0
        %2220 = vperm.xlu0 %2219, %v2157
        %v2221 = vpop.permute.xlu0 %2220
        %2222 = vset.pattern.permute.xlu0 0
        %2223 = vperm.xlu0 %2222, %v2158
        %v2224 = vpop.permute.xlu0 %2223
        %2225 = vset.pattern.permute.xlu0 0
        %2226 = vperm.xlu0 %2225, %v2159
        %v2227 = vpop.permute.xlu0 %2226
        %2228 = vset.pattern.permute.xlu0 0
        %2229 = vperm.xlu0 %2228, %v2160
        %v2230 = vpop.permute.xlu0 %2229
        %2231 = vset.pattern.permute.xlu0 0
        %2232 = vperm.xlu0 %2231, %v2161
        %v2233 = vpop.permute.xlu0 %2232
        %2234 = vset.pattern.permute.xlu0 0
        %2235 = vperm.xlu0 %2234, %v2162
        %v2236 = vpop.permute.xlu0 %2235
        %2237 = vset.pattern.permute.xlu0 0
        %2238 = vperm.xlu0 %2237, %v2163
        %v2239 = vpop.permute.xlu0 %2238
        %2240 = vset.pattern.permute.xlu0 0
        %2241 = vperm.xlu0 %2240, %v2164
        %v2242 = vpop.permute.xlu0 %2241
        %2243 = vset.pattern.permute.xlu0 0
        %2244 = vperm.xlu0 %2243, %v2165
        %v2245 = vpop.permute.xlu0 %2244
        %v2246 = vlaneseq
        %v2247 = vand.u32 %v2246, 127
        %v2248 = vlaneseq
        %v2249 = vshrl.u32 %v2248, 7
        %v2250 = vsub.s32 %v2247, %v2249
        %v2251 = vrot.slane %v2188, %v2250
        %v2252 = vadd.s32 %v2247, 4294967288
        %v2253 = vlaneseq
        %v2254 = vshrl.u32 %v2253, 7
        %v2255 = vsub.s32 %v2252, %v2254
        %v2256 = vrot.slane %v2191, %v2255
        %vm2257 = vcmask 130112
        %v2258 = vsel %vm2257, %v2256, %v2251
        %v2259 = vlaneseq
        %v2260 = vshrl.u32 %v2259, 7
        %v2261 = vsub.s32 %v2247, %v2260
        %v2262 = vrot.slane %v2194, %v2261
        %v2263 = vlaneseq
        %v2264 = vshrl.u32 %v2263, 7
        %v2265 = vsub.s32 %v2252, %v2264
        %v2266 = vrot.slane %v2197, %v2265
        %v2267 = vsel %vm2257, %v2266, %v2262
        %v2268 = vlaneseq
        %v2269 = vshrl.u32 %v2268, 7
        %v2270 = vsub.s32 %v2247, %v2269
        %v2271 = vrot.slane %v2200, %v2270
        %v2272 = vlaneseq
        %v2273 = vshrl.u32 %v2272, 7
        %v2274 = vsub.s32 %v2252, %v2273
        %v2275 = vrot.slane %v2203, %v2274
        %v2276 = vsel %vm2257, %v2275, %v2271
        %v2277 = vlaneseq
        %v2278 = vshrl.u32 %v2277, 7
        %v2279 = vsub.s32 %v2247, %v2278
        %v2280 = vrot.slane %v2206, %v2279
        %v2281 = vlaneseq
        %v2282 = vshrl.u32 %v2281, 7
        %v2283 = vsub.s32 %v2252, %v2282
        %v2284 = vrot.slane %v2209, %v2283
        %v2285 = vsel %vm2257, %v2284, %v2280
        %v2286 = vlaneseq
        %v2287 = vshrl.u32 %v2286, 7
        %v2288 = vsub.s32 %v2247, %v2287
        %v2289 = vrot.slane %v2212, %v2288
        %v2290 = vlaneseq
        %v2291 = vshrl.u32 %v2290, 7
        %v2292 = vsub.s32 %v2252, %v2291
        %v2293 = vrot.slane %v2215, %v2292
        %v2294 = vsel %vm2257, %v2293, %v2289
        %v2295 = vlaneseq
        %v2296 = vshrl.u32 %v2295, 7
        %v2297 = vsub.s32 %v2247, %v2296
        %v2298 = vrot.slane %v2218, %v2297
        %v2299 = vlaneseq
        %v2300 = vshrl.u32 %v2299, 7
        %v2301 = vsub.s32 %v2252, %v2300
        %v2302 = vrot.slane %v2221, %v2301
        %v2303 = vsel %vm2257, %v2302, %v2298
        %v2304 = vlaneseq
        %v2305 = vshrl.u32 %v2304, 7
        %v2306 = vsub.s32 %v2247, %v2305
        %v2307 = vrot.slane %v2224, %v2306
        %v2308 = vlaneseq
        %v2309 = vshrl.u32 %v2308, 7
        %v2310 = vsub.s32 %v2252, %v2309
        %v2311 = vrot.slane %v2227, %v2310
        %v2312 = vsel %vm2257, %v2311, %v2307
        %v2313 = vlaneseq
        %v2314 = vshrl.u32 %v2313, 7
        %v2315 = vsub.s32 %v2247, %v2314
        %v2316 = vrot.slane %v2230, %v2315
        %v2317 = vlaneseq
        %v2318 = vshrl.u32 %v2317, 7
        %v2319 = vsub.s32 %v2252, %v2318
        %v2320 = vrot.slane %v2233, %v2319
        %v2321 = vsel %vm2257, %v2320, %v2316
        %v2322 = vlaneseq
        %v2323 = vshrl.u32 %v2322, 7
        %v2324 = vsub.s32 %v2247, %v2323
        %v2325 = vrot.slane %v2236, %v2324
        %v2326 = vlaneseq
        %v2327 = vshrl.u32 %v2326, 7
        %v2328 = vsub.s32 %v2252, %v2327
        %v2329 = vrot.slane %v2239, %v2328
        %v2330 = vsel %vm2257, %v2329, %v2325
        %v2331 = vlaneseq
        %v2332 = vshrl.u32 %v2331, 7
        %v2333 = vsub.s32 %v2247, %v2332
        %v2334 = vrot.slane %v2242, %v2333
        %v2335 = vlaneseq
        %v2336 = vshrl.u32 %v2335, 7
        %v2337 = vsub.s32 %v2252, %v2336
        %v2338 = vrot.slane %v2245, %v2337
        %v2339 = vsel %vm2257, %v2338, %v2334
        %v2340 = vsel %vm1307, %v2267, %v2258
        %v2341 = vsel %vm1310, %v2276, %v2340
        %v2342 = vsel %vm1313, %v2285, %v2341
        %v2343 = vsel %vm1316, %v2294, %v2342
        %v2344 = vsel %vm1319, %v2303, %v2343
        %v2345 = vsel %vm1322, %v2312, %v2344
        %v2346 = vsel %vm1325, %v2321, %v2345
        %v2347 = vsel %vm1307, %v2339, %v2330
        %vm2350 = vcmask 130048
        %v2351 = vsel %vm2350, %v2346, 0.0
        %2352 = vadd.xlane.f32.xlu0 %v2351
        %v2353 = vpop.xlane.xlu0 %2352
        %vm2354 = vcmask 123904
        %v2355 = vsel %vm2354, %v2347, 0.0
        %2356 = vadd.xlane.f32.xlu0 %v2355
        %v2357 = vpop.xlane.xlu0 %2356
        %v2360 = vlaneseq
        %v2361 = vshrl.u32 %v2360, 7
        %v2362 = vsub.s32 0, %v2361
        %v2363 = vrot.slane %v2353, %v2362
        %v2364 = vlaneseq
        %v2365 = vshrl.u32 %v2364, 7
        %v2366 = vsub.s32 1, %v2365
        %v2367 = vrot.slane %v2353, %v2366
        %v2368 = vlaneseq
        %v2369 = vshrl.u32 %v2368, 7
        %v2370 = vsub.s32 2, %v2369
        %v2371 = vrot.slane %v2353, %v2370
        %v2372 = vlaneseq
        %v2373 = vshrl.u32 %v2372, 7
        %v2374 = vsub.s32 3, %v2373
        %v2375 = vrot.slane %v2353, %v2374
        %v2376 = vlaneseq
        %v2377 = vshrl.u32 %v2376, 7
        %v2378 = vsub.s32 4, %v2377
        %v2379 = vrot.slane %v2353, %v2378
        %v2380 = vlaneseq
        %v2381 = vshrl.u32 %v2380, 7
        %v2382 = vsub.s32 5, %v2381
        %v2383 = vrot.slane %v2353, %v2382
        %v2384 = vlaneseq
        %v2385 = vshrl.u32 %v2384, 7
        %v2386 = vsub.s32 6, %v2385
        %v2387 = vrot.slane %v2353, %v2386
        %v2388 = vlaneseq
        %v2389 = vshrl.u32 %v2388, 7
        %v2390 = vsub.s32 7, %v2389
        %v2391 = vrot.slane %v2353, %v2390
        %v2392 = vlaneseq
        %v2393 = vshrl.u32 %v2392, 7
        %v2394 = vsub.s32 0, %v2393
        %v2395 = vrot.slane %v2357, %v2394
        %v2396 = vlaneseq
        %v2397 = vshrl.u32 %v2396, 7
        %v2398 = vsub.s32 1, %v2397
        %v2399 = vrot.slane %v2357, %v2398
        %v2410 = vmul.f32 %v2126, %v2363
        %v2411 = vmul.f32 %v2127, %v2363
        %v2412 = vmul.f32 %v2128, %v2367
        %v2413 = vmul.f32 %v2129, %v2367
        %v2414 = vmul.f32 %v2130, %v2371
        %v2415 = vmul.f32 %v2131, %v2371
        %v2416 = vmul.f32 %v2132, %v2375
        %v2417 = vmul.f32 %v2133, %v2375
        %v2418 = vmul.f32 %v2134, %v2379
        %v2419 = vmul.f32 %v2135, %v2379
        %v2420 = vmul.f32 %v2136, %v2383
        %v2421 = vmul.f32 %v2137, %v2383
        %v2422 = vmul.f32 %v2138, %v2387
        %v2423 = vmul.f32 %v2139, %v2387
        %v2424 = vmul.f32 %v2140, %v2391
        %v2425 = vmul.f32 %v2141, %v2391
        %v2426 = vmul.f32 %v2142, %v2395
        %v2427 = vmul.f32 %v2143, %v2395
        %v2428 = vmul.f32 %v2144, %v2399
        %v2429 = vmul.f32 %v2145, %v2399
        %v2430 = vadd.f32 %v2353, 1.0
        %v2431 = vadd.f32 %v2357, 1.0
        %v2432 = vrsqrt.pop %v2353
        %v2433 = vmul.f32 %v2353, %v2432
        %vm2434 = vcmp.eq.f32.partialorder %v2353, inf
        %v2435 = vsel %vm2434, %v2353, %v2433
        %vm2436 = vcmp.eq.f32.partialorder %v2353, 0.0
        %v2437 = vand.u32 %v2353, 2147483648
        %v2438 = vsel %vm2436, %v2437, %v2435
        %v2439 = vrsqrt.pop %v2357
        %v2440 = vmul.f32 %v2357, %v2439
        %vm2441 = vcmp.eq.f32.partialorder %v2357, inf
        %v2442 = vsel %vm2441, %v2357, %v2440
        %vm2443 = vcmp.eq.f32.partialorder %v2357, 0.0
        %v2444 = vand.u32 %v2357, 2147483648
        %v2445 = vsel %vm2443, %v2444, %v2442
        %v2446 = vmul.f32 %v2430, %v2438
        %v2447 = vmul.f32 %v2431, %v2445
        %v2450 = vlaneseq
        %v2451 = vshrl.u32 %v2450, 7
        %v2452 = vsub.s32 0, %v2451
        %v2453 = vrot.slane %v2446, %v2452
        %v2454 = vlaneseq
        %v2455 = vshrl.u32 %v2454, 7
        %v2456 = vsub.s32 1, %v2455
        %v2457 = vrot.slane %v2446, %v2456
        %v2458 = vlaneseq
        %v2459 = vshrl.u32 %v2458, 7
        %v2460 = vsub.s32 2, %v2459
        %v2461 = vrot.slane %v2446, %v2460
        %v2462 = vlaneseq
        %v2463 = vshrl.u32 %v2462, 7
        %v2464 = vsub.s32 3, %v2463
        %v2465 = vrot.slane %v2446, %v2464
        %v2466 = vlaneseq
        %v2467 = vshrl.u32 %v2466, 7
        %v2468 = vsub.s32 4, %v2467
        %v2469 = vrot.slane %v2446, %v2468
        %v2470 = vlaneseq
        %v2471 = vshrl.u32 %v2470, 7
        %v2472 = vsub.s32 5, %v2471
        %v2473 = vrot.slane %v2446, %v2472
        %v2474 = vlaneseq
        %v2475 = vshrl.u32 %v2474, 7
        %v2476 = vsub.s32 6, %v2475
        %v2477 = vrot.slane %v2446, %v2476
        %v2478 = vlaneseq
        %v2479 = vshrl.u32 %v2478, 7
        %v2480 = vsub.s32 7, %v2479
        %v2481 = vrot.slane %v2446, %v2480
        %v2482 = vlaneseq
        %v2483 = vshrl.u32 %v2482, 7
        %v2484 = vsub.s32 0, %v2483
        %v2485 = vrot.slane %v2447, %v2484
        %v2486 = vlaneseq
        %v2487 = vshrl.u32 %v2486, 7
        %v2488 = vsub.s32 1, %v2487
        %v2489 = vrot.slane %v2447, %v2488
        %v2500 = vrcp.pop %v2453
        %v2501 = vmul.f32 %v2410, %v2500
        %v2502 = vmul.f32 %v2411, %v2500
        %v2503 = vrcp.pop %v2457
        %v2504 = vmul.f32 %v2412, %v2503
        %v2505 = vmul.f32 %v2413, %v2503
        %v2506 = vrcp.pop %v2461
        %v2507 = vmul.f32 %v2414, %v2506
        %v2508 = vmul.f32 %v2415, %v2506
        %v2509 = vrcp.pop %v2465
        %v2510 = vmul.f32 %v2416, %v2509
        %v2511 = vmul.f32 %v2417, %v2509
        %v2512 = vrcp.pop %v2469
        %v2513 = vmul.f32 %v2418, %v2512
        %v2514 = vmul.f32 %v2419, %v2512
        %v2515 = vrcp.pop %v2473
        %v2516 = vmul.f32 %v2420, %v2515
        %v2517 = vmul.f32 %v2421, %v2515
        %v2518 = vrcp.pop %v2477
        %v2519 = vmul.f32 %v2422, %v2518
        %v2520 = vmul.f32 %v2423, %v2518
        %v2521 = vrcp.pop %v2481
        %v2522 = vmul.f32 %v2424, %v2521
        %v2523 = vmul.f32 %v2425, %v2521
        %v2524 = vrcp.pop %v2485
        %v2525 = vmul.f32 %v2426, %v2524
        %v2526 = vmul.f32 %v2427, %v2524
        %v2527 = vrcp.pop %v2489
        %v2528 = vmul.f32 %v2428, %v2527
        %v2529 = vmul.f32 %v2429, %v2527
        %2550 = vset.pattern.permute.xlu0 0
        %2551 = vperm.xlu0 %2550, %v2501
        %v2552 = vpop.permute.xlu0 %2551
        %2553 = vset.pattern.permute.xlu0 0
        %2554 = vperm.xlu0 %2553, %v2502
        %v2555 = vpop.permute.xlu0 %2554
        %2556 = vset.pattern.permute.xlu0 0
        %2557 = vperm.xlu0 %2556, %v2504
        %v2558 = vpop.permute.xlu0 %2557
        %2559 = vset.pattern.permute.xlu0 0
        %2560 = vperm.xlu0 %2559, %v2505
        %v2561 = vpop.permute.xlu0 %2560
        %2562 = vset.pattern.permute.xlu0 0
        %2563 = vperm.xlu0 %2562, %v2507
        %v2564 = vpop.permute.xlu0 %2563
        %2565 = vset.pattern.permute.xlu0 0
        %2566 = vperm.xlu0 %2565, %v2508
        %v2567 = vpop.permute.xlu0 %2566
        %2568 = vset.pattern.permute.xlu0 0
        %2569 = vperm.xlu0 %2568, %v2510
        %v2570 = vpop.permute.xlu0 %2569
        %2571 = vset.pattern.permute.xlu0 0
        %2572 = vperm.xlu0 %2571, %v2511
        %v2573 = vpop.permute.xlu0 %2572
        %2574 = vset.pattern.permute.xlu0 0
        %2575 = vperm.xlu0 %2574, %v2513
        %v2576 = vpop.permute.xlu0 %2575
        %2577 = vset.pattern.permute.xlu0 0
        %2578 = vperm.xlu0 %2577, %v2514
        %v2579 = vpop.permute.xlu0 %2578
        %2580 = vset.pattern.permute.xlu0 0
        %2581 = vperm.xlu0 %2580, %v2516
        %v2582 = vpop.permute.xlu0 %2581
        %2583 = vset.pattern.permute.xlu0 0
        %2584 = vperm.xlu0 %2583, %v2517
        %v2585 = vpop.permute.xlu0 %2584
        %2586 = vset.pattern.permute.xlu0 0
        %2587 = vperm.xlu0 %2586, %v2519
        %v2588 = vpop.permute.xlu0 %2587
        %2589 = vset.pattern.permute.xlu0 0
        %2590 = vperm.xlu0 %2589, %v2520
        %v2591 = vpop.permute.xlu0 %2590
        %2592 = vset.pattern.permute.xlu0 0
        %2593 = vperm.xlu0 %2592, %v2522
        %v2594 = vpop.permute.xlu0 %2593
        %2595 = vset.pattern.permute.xlu0 0
        %2596 = vperm.xlu0 %2595, %v2523
        %v2597 = vpop.permute.xlu0 %2596
        %2598 = vset.pattern.permute.xlu0 0
        %2599 = vperm.xlu0 %2598, %v2525
        %v2600 = vpop.permute.xlu0 %2599
        %2601 = vset.pattern.permute.xlu0 0
        %2602 = vperm.xlu0 %2601, %v2526
        %v2603 = vpop.permute.xlu0 %2602
        %2604 = vset.pattern.permute.xlu0 0
        %2605 = vperm.xlu0 %2604, %v2528
        %v2606 = vpop.permute.xlu0 %2605
        %2607 = vset.pattern.permute.xlu0 0
        %2608 = vperm.xlu0 %2607, %v2529
        %v2609 = vpop.permute.xlu0 %2608
        %v2610 = vlaneseq
        %v2611 = vshrl.u32 %v2610, 7
        %v2612 = vsub.s32 %v2247, %v2611
        %v2613 = vrot.slane %v2552, %v2612
        %v2614 = vlaneseq
        %v2615 = vshrl.u32 %v2614, 7
        %v2616 = vsub.s32 %v2252, %v2615
        %v2617 = vrot.slane %v2555, %v2616
        %v2618 = vsel %vm2257, %v2617, %v2613
        %v2619 = vlaneseq
        %v2620 = vshrl.u32 %v2619, 7
        %v2621 = vsub.s32 %v2247, %v2620
        %v2622 = vrot.slane %v2558, %v2621
        %v2623 = vlaneseq
        %v2624 = vshrl.u32 %v2623, 7
        %v2625 = vsub.s32 %v2252, %v2624
        %v2626 = vrot.slane %v2561, %v2625
        %v2627 = vsel %vm2257, %v2626, %v2622
        %v2628 = vlaneseq
        %v2629 = vshrl.u32 %v2628, 7
        %v2630 = vsub.s32 %v2247, %v2629
        %v2631 = vrot.slane %v2564, %v2630
        %v2632 = vlaneseq
        %v2633 = vshrl.u32 %v2632, 7
        %v2634 = vsub.s32 %v2252, %v2633
        %v2635 = vrot.slane %v2567, %v2634
        %v2636 = vsel %vm2257, %v2635, %v2631
        %v2637 = vlaneseq
        %v2638 = vshrl.u32 %v2637, 7
        %v2639 = vsub.s32 %v2247, %v2638
        %v2640 = vrot.slane %v2570, %v2639
        %v2641 = vlaneseq
        %v2642 = vshrl.u32 %v2641, 7
        %v2643 = vsub.s32 %v2252, %v2642
        %v2644 = vrot.slane %v2573, %v2643
        %v2645 = vsel %vm2257, %v2644, %v2640
        %v2646 = vlaneseq
        %v2647 = vshrl.u32 %v2646, 7
        %v2648 = vsub.s32 %v2247, %v2647
        %v2649 = vrot.slane %v2576, %v2648
        %v2650 = vlaneseq
        %v2651 = vshrl.u32 %v2650, 7
        %v2652 = vsub.s32 %v2252, %v2651
        %v2653 = vrot.slane %v2579, %v2652
        %v2654 = vsel %vm2257, %v2653, %v2649
        %v2655 = vlaneseq
        %v2656 = vshrl.u32 %v2655, 7
        %v2657 = vsub.s32 %v2247, %v2656
        %v2658 = vrot.slane %v2582, %v2657
        %v2659 = vlaneseq
        %v2660 = vshrl.u32 %v2659, 7
        %v2661 = vsub.s32 %v2252, %v2660
        %v2662 = vrot.slane %v2585, %v2661
        %v2663 = vsel %vm2257, %v2662, %v2658
        %v2664 = vlaneseq
        %v2665 = vshrl.u32 %v2664, 7
        %v2666 = vsub.s32 %v2247, %v2665
        %v2667 = vrot.slane %v2588, %v2666
        %v2668 = vlaneseq
        %v2669 = vshrl.u32 %v2668, 7
        %v2670 = vsub.s32 %v2252, %v2669
        %v2671 = vrot.slane %v2591, %v2670
        %v2672 = vsel %vm2257, %v2671, %v2667
        %v2673 = vlaneseq
        %v2674 = vshrl.u32 %v2673, 7
        %v2675 = vsub.s32 %v2247, %v2674
        %v2676 = vrot.slane %v2594, %v2675
        %v2677 = vlaneseq
        %v2678 = vshrl.u32 %v2677, 7
        %v2679 = vsub.s32 %v2252, %v2678
        %v2680 = vrot.slane %v2597, %v2679
        %v2681 = vsel %vm2257, %v2680, %v2676
        %v2682 = vlaneseq
        %v2683 = vshrl.u32 %v2682, 7
        %v2684 = vsub.s32 %v2247, %v2683
        %v2685 = vrot.slane %v2600, %v2684
        %v2686 = vlaneseq
        %v2687 = vshrl.u32 %v2686, 7
        %v2688 = vsub.s32 %v2252, %v2687
        %v2689 = vrot.slane %v2603, %v2688
        %v2690 = vsel %vm2257, %v2689, %v2685
        %v2691 = vlaneseq
        %v2692 = vshrl.u32 %v2691, 7
        %v2693 = vsub.s32 %v2247, %v2692
        %v2694 = vrot.slane %v2606, %v2693
        %v2695 = vlaneseq
        %v2696 = vshrl.u32 %v2695, 7
        %v2697 = vsub.s32 %v2252, %v2696
        %v2698 = vrot.slane %v2609, %v2697
        %v2699 = vsel %vm2257, %v2698, %v2694
        %v2700 = vsel %vm1307, %v2627, %v2618
        %v2701 = vsel %vm1310, %v2636, %v2700
        %v2702 = vsel %vm1313, %v2645, %v2701
        %v2703 = vsel %vm1316, %v2654, %v2702
        %v2704 = vsel %vm1319, %v2663, %v2703
        %v2705 = vsel %vm1322, %v2672, %v2704
        %v2706 = vsel %vm1325, %v2681, %v2705
        %v2707 = vsel %vm1307, %v2699, %v2690
        %2710 = vst.msk [vmem:[%s222] sm:$0xff] %vm2350, %v2706
        %2711 = vst.msk [vmem:[%s222 + $0x8] sm:$0x3] %vm2354, %v2707
        %s2712 = scalar_lea.vmem %s184, 8 [#allocation2]
        %v2713 = vld [vmem:[%s2712] sm:$0xff]
        %v2714 = vld [vmem:[#allocation4] sm:$0xff]
        %v2715 = vld [vmem:[#allocation4 + $0x8] sm:$0xff]
        %v2716 = vld [vmem:[#allocation4 + $0x10] sm:$0xff]
        %v2717 = vld [vmem:[#allocation4 + $0x18] sm:$0xff]
        %v2718 = vld [vmem:[#allocation4 + $0x20] sm:$0xff]
        %v2719 = vld [vmem:[#allocation4 + $0x28] sm:$0xff]
        %v2720 = vld [vmem:[#allocation4 + $0x30] sm:$0xff]
        %v2721 = vld [vmem:[#allocation4 + $0x38] sm:$0xff]
        %v2722 = vld [vmem:[#allocation4 + $0x40] sm:$0xff]
        %v2723 = vld [vmem:[#allocation4 + $0x48] sm:$0xff]
        %v2724 = vld [vmem:[#allocation4 + $0x50] sm:$0xff]
        %v2725 = vld [vmem:[#allocation4 + $0x58] sm:$0xff]
        %v2726 = vld [vmem:[#allocation4 + $0x60] sm:$0xff]
        %v2727 = vld [vmem:[#allocation4 + $0x68] sm:$0xff]
        %v2728 = vld [vmem:[#allocation4 + $0x70] sm:$0xff]
        %v2729 = vld [vmem:[#allocation4 + $0x78] sm:$0xff]
        %v2730 = vld [vmem:[#allocation4 + $0x80] sm:$0xff]
        %v2731 = vld [vmem:[#allocation4 + $0x88] sm:$0xff]
        %v2732 = vld [vmem:[#allocation4 + $0x90] sm:$0xff]
        %v2733 = vld [vmem:[#allocation4 + $0x98] sm:$0xff]
        %v2734 = vlaneseq
        %v2735 = vshrl.u32 %v2734, 7
        %v2736 = vsub.s32 0, %v2735
        %v2737 = vrot.slane %v2713, %v2736
        %v2738 = vmul.f32 %v2737, %v2714
        %v2739 = vmul.f32 %v2737, %v2715
        %v2740 = vmul.f32 %v2737, %v2716
        %v2741 = vmul.f32 %v2737, %v2717
        %v2742 = vmul.f32 %v2737, %v2718
        %v2743 = vmul.f32 %v2737, %v2719
        %v2744 = vmul.f32 %v2737, %v2720
        %v2745 = vmul.f32 %v2737, %v2721
        %v2746 = vmul.f32 %v2737, %v2722
        %v2747 = vmul.f32 %v2737, %v2723
        %v2748 = vmul.f32 %v2737, %v2724
        %v2749 = vmul.f32 %v2737, %v2725
        %v2750 = vmul.f32 %v2737, %v2726
        %v2751 = vmul.f32 %v2737, %v2727
        %v2752 = vmul.f32 %v2737, %v2728
        %v2753 = vmul.f32 %v2737, %v2729
        %v2754 = vmul.f32 %v2737, %v2730
        %v2755 = vmul.f32 %v2737, %v2731
        %v2756 = vmul.f32 %v2737, %v2732
        %v2757 = vmul.f32 %v2737, %v2733
        %v2758 = vld [vmem:[%s381] sm:$0xff]
        %v2759 = vld [vmem:[%s381 + $0x8] sm:$0xff]
        %v2760 = vld [vmem:[%s381 + $0x10] sm:$0xff]
        %v2761 = vld [vmem:[%s381 + $0x18] sm:$0xff]
        %v2762 = vld [vmem:[%s381 + $0x20] sm:$0xff]
        %v2763 = vld [vmem:[%s381 + $0x28] sm:$0xff]
        %v2764 = vld [vmem:[%s381 + $0x30] sm:$0xff]
        %v2765 = vld [vmem:[%s381 + $0x38] sm:$0xff]
        %v2766 = vld [vmem:[%s381 + $0x40] sm:$0xff]
        %v2767 = vld [vmem:[%s381 + $0x48] sm:$0xff]
        %v2768 = vld [vmem:[%s381 + $0x50] sm:$0xff]
        %v2769 = vld [vmem:[%s381 + $0x58] sm:$0xff]
        %v2770 = vld [vmem:[%s381 + $0x60] sm:$0xff]
        %v2771 = vld [vmem:[%s381 + $0x68] sm:$0xff]
        %v2772 = vld [vmem:[%s381 + $0x70] sm:$0xff]
        %v2773 = vld [vmem:[%s381 + $0x78] sm:$0xff]
        %v2774 = vld [vmem:[%s381 + $0x80] sm:$0xff]
        %v2775 = vld [vmem:[%s381 + $0x88] sm:$0xff]
        %v2776 = vld [vmem:[%s381 + $0x90] sm:$0xff]
        %v2777 = vld [vmem:[%s381 + $0x98] sm:$0xff]
        %v2778 = vlaneseq
        %v2779 = vshrl.u32 %v2778, 7
        %v2780 = vsub.s32 1, %v2779
        %v2781 = vrot.slane %v2713, %v2780
        %v2782 = vmul.f32 %v2781, %v2758
        %v2783 = vmul.f32 %v2781, %v2759
        %v2784 = vmul.f32 %v2781, %v2760
        %v2785 = vmul.f32 %v2781, %v2761
        %v2786 = vmul.f32 %v2781, %v2762
        %v2787 = vmul.f32 %v2781, %v2763
        %v2788 = vmul.f32 %v2781, %v2764
        %v2789 = vmul.f32 %v2781, %v2765
        %v2790 = vmul.f32 %v2781, %v2766
        %v2791 = vmul.f32 %v2781, %v2767
        %v2792 = vmul.f32 %v2781, %v2768
        %v2793 = vmul.f32 %v2781, %v2769
        %v2794 = vmul.f32 %v2781, %v2770
        %v2795 = vmul.f32 %v2781, %v2771
        %v2796 = vmul.f32 %v2781, %v2772
        %v2797 = vmul.f32 %v2781, %v2773
        %v2798 = vmul.f32 %v2781, %v2774
        %v2799 = vmul.f32 %v2781, %v2775
        %v2800 = vmul.f32 %v2781, %v2776
        %v2801 = vmul.f32 %v2781, %v2777
        %v2802 = vadd.f32 %v2738, %v2782
        %v2803 = vadd.f32 %v2739, %v2783
        %v2804 = vadd.f32 %v2740, %v2784
        %v2805 = vadd.f32 %v2741, %v2785
        %v2806 = vadd.f32 %v2742, %v2786
        %v2807 = vadd.f32 %v2743, %v2787
        %v2808 = vadd.f32 %v2744, %v2788
        %v2809 = vadd.f32 %v2745, %v2789
        %v2810 = vadd.f32 %v2746, %v2790
        %v2811 = vadd.f32 %v2747, %v2791
        %v2812 = vadd.f32 %v2748, %v2792
        %v2813 = vadd.f32 %v2749, %v2793
        %v2814 = vadd.f32 %v2750, %v2794
        %v2815 = vadd.f32 %v2751, %v2795
        %v2816 = vadd.f32 %v2752, %v2796
        %v2817 = vadd.f32 %v2753, %v2797
        %v2818 = vadd.f32 %v2754, %v2798
        %v2819 = vadd.f32 %v2755, %v2799
        %v2820 = vadd.f32 %v2756, %v2800
        %v2821 = vadd.f32 %v2757, %v2801
        %v2822 = vld [vmem:[%s446] sm:$0xff]
        %v2823 = vld [vmem:[%s446 + $0x8] sm:$0xff]
        %v2824 = vld [vmem:[%s446 + $0x10] sm:$0xff]
        %v2825 = vld [vmem:[%s446 + $0x18] sm:$0xff]
        %v2826 = vld [vmem:[%s446 + $0x20] sm:$0xff]
        %v2827 = vld [vmem:[%s446 + $0x28] sm:$0xff]
        %v2828 = vld [vmem:[%s446 + $0x30] sm:$0xff]
        %v2829 = vld [vmem:[%s446 + $0x38] sm:$0xff]
        %v2830 = vld [vmem:[%s446 + $0x40] sm:$0xff]
        %v2831 = vld [vmem:[%s446 + $0x48] sm:$0xff]
        %v2832 = vld [vmem:[%s446 + $0x50] sm:$0xff]
        %v2833 = vld [vmem:[%s446 + $0x58] sm:$0xff]
        %v2834 = vld [vmem:[%s446 + $0x60] sm:$0xff]
        %v2835 = vld [vmem:[%s446 + $0x68] sm:$0xff]
        %v2836 = vld [vmem:[%s446 + $0x70] sm:$0xff]
        %v2837 = vld [vmem:[%s446 + $0x78] sm:$0xff]
        %v2838 = vld [vmem:[%s446 + $0x80] sm:$0xff]
        %v2839 = vld [vmem:[%s446 + $0x88] sm:$0xff]
        %v2840 = vld [vmem:[%s446 + $0x90] sm:$0xff]
        %v2841 = vld [vmem:[%s446 + $0x98] sm:$0xff]
        %v2842 = vlaneseq
        %v2843 = vshrl.u32 %v2842, 7
        %v2844 = vsub.s32 2, %v2843
        %v2845 = vrot.slane %v2713, %v2844
        %v2846 = vmul.f32 %v2845, %v2822
        %v2847 = vmul.f32 %v2845, %v2823
        %v2848 = vmul.f32 %v2845, %v2824
        %v2849 = vmul.f32 %v2845, %v2825
        %v2850 = vmul.f32 %v2845, %v2826
        %v2851 = vmul.f32 %v2845, %v2827
        %v2852 = vmul.f32 %v2845, %v2828
        %v2853 = vmul.f32 %v2845, %v2829
        %v2854 = vmul.f32 %v2845, %v2830
        %v2855 = vmul.f32 %v2845, %v2831
        %v2856 = vmul.f32 %v2845, %v2832
        %v2857 = vmul.f32 %v2845, %v2833
        %v2858 = vmul.f32 %v2845, %v2834
        %v2859 = vmul.f32 %v2845, %v2835
        %v2860 = vmul.f32 %v2845, %v2836
        %v2861 = vmul.f32 %v2845, %v2837
        %v2862 = vmul.f32 %v2845, %v2838
        %v2863 = vmul.f32 %v2845, %v2839
        %v2864 = vmul.f32 %v2845, %v2840
        %v2865 = vmul.f32 %v2845, %v2841
        %v2866 = vadd.f32 %v2802, %v2846
        %v2867 = vadd.f32 %v2803, %v2847
        %v2868 = vadd.f32 %v2804, %v2848
        %v2869 = vadd.f32 %v2805, %v2849
        %v2870 = vadd.f32 %v2806, %v2850
        %v2871 = vadd.f32 %v2807, %v2851
        %v2872 = vadd.f32 %v2808, %v2852
        %v2873 = vadd.f32 %v2809, %v2853
        %v2874 = vadd.f32 %v2810, %v2854
        %v2875 = vadd.f32 %v2811, %v2855
        %v2876 = vadd.f32 %v2812, %v2856
        %v2877 = vadd.f32 %v2813, %v2857
        %v2878 = vadd.f32 %v2814, %v2858
        %v2879 = vadd.f32 %v2815, %v2859
        %v2880 = vadd.f32 %v2816, %v2860
        %v2881 = vadd.f32 %v2817, %v2861
        %v2882 = vadd.f32 %v2818, %v2862
        %v2883 = vadd.f32 %v2819, %v2863
        %v2884 = vadd.f32 %v2820, %v2864
        %v2885 = vadd.f32 %v2821, %v2865
        %v2886 = vld [vmem:[%s511] sm:$0xff]
        %v2887 = vld [vmem:[%s511 + $0x8] sm:$0xff]
        %v2888 = vld [vmem:[%s511 + $0x10] sm:$0xff]
        %v2889 = vld [vmem:[%s511 + $0x18] sm:$0xff]
        %v2890 = vld [vmem:[%s511 + $0x20] sm:$0xff]
        %v2891 = vld [vmem:[%s511 + $0x28] sm:$0xff]
        %v2892 = vld [vmem:[%s511 + $0x30] sm:$0xff]
        %v2893 = vld [vmem:[%s511 + $0x38] sm:$0xff]
        %v2894 = vld [vmem:[%s511 + $0x40] sm:$0xff]
        %v2895 = vld [vmem:[%s511 + $0x48] sm:$0xff]
        %v2896 = vld [vmem:[%s511 + $0x50] sm:$0xff]
        %v2897 = vld [vmem:[%s511 + $0x58] sm:$0xff]
        %v2898 = vld [vmem:[%s511 + $0x60] sm:$0xff]
        %v2899 = vld [vmem:[%s511 + $0x68] sm:$0xff]
        %v2900 = vld [vmem:[%s511 + $0x70] sm:$0xff]
        %v2901 = vld [vmem:[%s511 + $0x78] sm:$0xff]
        %v2902 = vld [vmem:[%s511 + $0x80] sm:$0xff]
        %v2903 = vld [vmem:[%s511 + $0x88] sm:$0xff]
        %v2904 = vld [vmem:[%s511 + $0x90] sm:$0xff]
        %v2905 = vld [vmem:[%s511 + $0x98] sm:$0xff]
        %v2906 = vlaneseq
        %v2907 = vshrl.u32 %v2906, 7
        %v2908 = vsub.s32 3, %v2907
        %v2909 = vrot.slane %v2713, %v2908
        %v2910 = vmul.f32 %v2909, %v2886
        %v2911 = vmul.f32 %v2909, %v2887
        %v2912 = vmul.f32 %v2909, %v2888
        %v2913 = vmul.f32 %v2909, %v2889
        %v2914 = vmul.f32 %v2909, %v2890
        %v2915 = vmul.f32 %v2909, %v2891
        %v2916 = vmul.f32 %v2909, %v2892
        %v2917 = vmul.f32 %v2909, %v2893
        %v2918 = vmul.f32 %v2909, %v2894
        %v2919 = vmul.f32 %v2909, %v2895
        %v2920 = vmul.f32 %v2909, %v2896
        %v2921 = vmul.f32 %v2909, %v2897
        %v2922 = vmul.f32 %v2909, %v2898
        %v2923 = vmul.f32 %v2909, %v2899
        %v2924 = vmul.f32 %v2909, %v2900
        %v2925 = vmul.f32 %v2909, %v2901
        %v2926 = vmul.f32 %v2909, %v2902
        %v2927 = vmul.f32 %v2909, %v2903
        %v2928 = vmul.f32 %v2909, %v2904
        %v2929 = vmul.f32 %v2909, %v2905
        %v2930 = vadd.f32 %v2866, %v2910
        %v2931 = vadd.f32 %v2867, %v2911
        %v2932 = vadd.f32 %v2868, %v2912
        %v2933 = vadd.f32 %v2869, %v2913
        %v2934 = vadd.f32 %v2870, %v2914
        %v2935 = vadd.f32 %v2871, %v2915
        %v2936 = vadd.f32 %v2872, %v2916
        %v2937 = vadd.f32 %v2873, %v2917
        %v2938 = vadd.f32 %v2874, %v2918
        %v2939 = vadd.f32 %v2875, %v2919
        %v2940 = vadd.f32 %v2876, %v2920
        %v2941 = vadd.f32 %v2877, %v2921
        %v2942 = vadd.f32 %v2878, %v2922
        %v2943 = vadd.f32 %v2879, %v2923
        %v2944 = vadd.f32 %v2880, %v2924
        %v2945 = vadd.f32 %v2881, %v2925
        %v2946 = vadd.f32 %v2882, %v2926
        %v2947 = vadd.f32 %v2883, %v2927
        %v2948 = vadd.f32 %v2884, %v2928
        %v2949 = vadd.f32 %v2885, %v2929
        %v2950 = vld [vmem:[%s576] sm:$0xff]
        %v2951 = vld [vmem:[%s576 + $0x8] sm:$0xff]
        %v2952 = vld [vmem:[%s576 + $0x10] sm:$0xff]
        %v2953 = vld [vmem:[%s576 + $0x18] sm:$0xff]
        %v2954 = vld [vmem:[%s576 + $0x20] sm:$0xff]
        %v2955 = vld [vmem:[%s576 + $0x28] sm:$0xff]
        %v2956 = vld [vmem:[%s576 + $0x30] sm:$0xff]
        %v2957 = vld [vmem:[%s576 + $0x38] sm:$0xff]
        %v2958 = vld [vmem:[%s576 + $0x40] sm:$0xff]
        %v2959 = vld [vmem:[%s576 + $0x48] sm:$0xff]
        %v2960 = vld [vmem:[%s576 + $0x50] sm:$0xff]
        %v2961 = vld [vmem:[%s576 + $0x58] sm:$0xff]
        %v2962 = vld [vmem:[%s576 + $0x60] sm:$0xff]
        %v2963 = vld [vmem:[%s576 + $0x68] sm:$0xff]
        %v2964 = vld [vmem:[%s576 + $0x70] sm:$0xff]
        %v2965 = vld [vmem:[%s576 + $0x78] sm:$0xff]
        %v2966 = vld [vmem:[%s576 + $0x80] sm:$0xff]
        %v2967 = vld [vmem:[%s576 + $0x88] sm:$0xff]
        %v2968 = vld [vmem:[%s576 + $0x90] sm:$0xff]
        %v2969 = vld [vmem:[%s576 + $0x98] sm:$0xff]
        %v2970 = vlaneseq
        %v2971 = vshrl.u32 %v2970, 7
        %v2972 = vsub.s32 4, %v2971
        %v2973 = vrot.slane %v2713, %v2972
        %v2974 = vmul.f32 %v2973, %v2950
        %v2975 = vmul.f32 %v2973, %v2951
        %v2976 = vmul.f32 %v2973, %v2952
        %v2977 = vmul.f32 %v2973, %v2953
        %v2978 = vmul.f32 %v2973, %v2954
        %v2979 = vmul.f32 %v2973, %v2955
        %v2980 = vmul.f32 %v2973, %v2956
        %v2981 = vmul.f32 %v2973, %v2957
        %v2982 = vmul.f32 %v2973, %v2958
        %v2983 = vmul.f32 %v2973, %v2959
        %v2984 = vmul.f32 %v2973, %v2960
        %v2985 = vmul.f32 %v2973, %v2961
        %v2986 = vmul.f32 %v2973, %v2962
        %v2987 = vmul.f32 %v2973, %v2963
        %v2988 = vmul.f32 %v2973, %v2964
        %v2989 = vmul.f32 %v2973, %v2965
        %v2990 = vmul.f32 %v2973, %v2966
        %v2991 = vmul.f32 %v2973, %v2967
        %v2992 = vmul.f32 %v2973, %v2968
        %v2993 = vmul.f32 %v2973, %v2969
        %v2994 = vadd.f32 %v2930, %v2974
        %v2995 = vadd.f32 %v2931, %v2975
        %v2996 = vadd.f32 %v2932, %v2976
        %v2997 = vadd.f32 %v2933, %v2977
        %v2998 = vadd.f32 %v2934, %v2978
        %v2999 = vadd.f32 %v2935, %v2979
        %v3000 = vadd.f32 %v2936, %v2980
        %v3001 = vadd.f32 %v2937, %v2981
        %v3002 = vadd.f32 %v2938, %v2982
        %v3003 = vadd.f32 %v2939, %v2983
        %v3004 = vadd.f32 %v2940, %v2984
        %v3005 = vadd.f32 %v2941, %v2985
        %v3006 = vadd.f32 %v2942, %v2986
        %v3007 = vadd.f32 %v2943, %v2987
        %v3008 = vadd.f32 %v2944, %v2988
        %v3009 = vadd.f32 %v2945, %v2989
        %v3010 = vadd.f32 %v2946, %v2990
        %v3011 = vadd.f32 %v2947, %v2991
        %v3012 = vadd.f32 %v2948, %v2992
        %v3013 = vadd.f32 %v2949, %v2993
        %v3014 = vld [vmem:[%s641] sm:$0xff]
        %v3015 = vld [vmem:[%s641 + $0x8] sm:$0xff]
        %v3016 = vld [vmem:[%s641 + $0x10] sm:$0xff]
        %v3017 = vld [vmem:[%s641 + $0x18] sm:$0xff]
        %v3018 = vld [vmem:[%s641 + $0x20] sm:$0xff]
        %v3019 = vld [vmem:[%s641 + $0x28] sm:$0xff]
        %v3020 = vld [vmem:[%s641 + $0x30] sm:$0xff]
        %v3021 = vld [vmem:[%s641 + $0x38] sm:$0xff]
        %v3022 = vld [vmem:[%s641 + $0x40] sm:$0xff]
        %v3023 = vld [vmem:[%s641 + $0x48] sm:$0xff]
        %v3024 = vld [vmem:[%s641 + $0x50] sm:$0xff]
        %v3025 = vld [vmem:[%s641 + $0x58] sm:$0xff]
        %v3026 = vld [vmem:[%s641 + $0x60] sm:$0xff]
        %v3027 = vld [vmem:[%s641 + $0x68] sm:$0xff]
        %v3028 = vld [vmem:[%s641 + $0x70] sm:$0xff]
        %v3029 = vld [vmem:[%s641 + $0x78] sm:$0xff]
        %v3030 = vld [vmem:[%s641 + $0x80] sm:$0xff]
        %v3031 = vld [vmem:[%s641 + $0x88] sm:$0xff]
        %v3032 = vld [vmem:[%s641 + $0x90] sm:$0xff]
        %v3033 = vld [vmem:[%s641 + $0x98] sm:$0xff]
        %v3034 = vlaneseq
        %v3035 = vshrl.u32 %v3034, 7
        %v3036 = vsub.s32 5, %v3035
        %v3037 = vrot.slane %v2713, %v3036
        %v3038 = vmul.f32 %v3037, %v3014
        %v3039 = vmul.f32 %v3037, %v3015
        %v3040 = vmul.f32 %v3037, %v3016
        %v3041 = vmul.f32 %v3037, %v3017
        %v3042 = vmul.f32 %v3037, %v3018
        %v3043 = vmul.f32 %v3037, %v3019
        %v3044 = vmul.f32 %v3037, %v3020
        %v3045 = vmul.f32 %v3037, %v3021
        %v3046 = vmul.f32 %v3037, %v3022
        %v3047 = vmul.f32 %v3037, %v3023
        %v3048 = vmul.f32 %v3037, %v3024
        %v3049 = vmul.f32 %v3037, %v3025
        %v3050 = vmul.f32 %v3037, %v3026
        %v3051 = vmul.f32 %v3037, %v3027
        %v3052 = vmul.f32 %v3037, %v3028
        %v3053 = vmul.f32 %v3037, %v3029
        %v3054 = vmul.f32 %v3037, %v3030
        %v3055 = vmul.f32 %v3037, %v3031
        %v3056 = vmul.f32 %v3037, %v3032
        %v3057 = vmul.f32 %v3037, %v3033
        %v3058 = vadd.f32 %v2994, %v3038
        %v3059 = vadd.f32 %v2995, %v3039
        %v3060 = vadd.f32 %v2996, %v3040
        %v3061 = vadd.f32 %v2997, %v3041
        %v3062 = vadd.f32 %v2998, %v3042
        %v3063 = vadd.f32 %v2999, %v3043
        %v3064 = vadd.f32 %v3000, %v3044
        %v3065 = vadd.f32 %v3001, %v3045
        %v3066 = vadd.f32 %v3002, %v3046
        %v3067 = vadd.f32 %v3003, %v3047
        %v3068 = vadd.f32 %v3004, %v3048
        %v3069 = vadd.f32 %v3005, %v3049
        %v3070 = vadd.f32 %v3006, %v3050
        %v3071 = vadd.f32 %v3007, %v3051
        %v3072 = vadd.f32 %v3008, %v3052
        %v3073 = vadd.f32 %v3009, %v3053
        %v3074 = vadd.f32 %v3010, %v3054
        %v3075 = vadd.f32 %v3011, %v3055
        %v3076 = vadd.f32 %v3012, %v3056
        %v3077 = vadd.f32 %v3013, %v3057
        %v3078 = vld [vmem:[%s706] sm:$0xff]
        %v3079 = vld [vmem:[%s706 + $0x8] sm:$0xff]
        %v3080 = vld [vmem:[%s706 + $0x10] sm:$0xff]
        %v3081 = vld [vmem:[%s706 + $0x18] sm:$0xff]
        %v3082 = vld [vmem:[%s706 + $0x20] sm:$0xff]
        %v3083 = vld [vmem:[%s706 + $0x28] sm:$0xff]
        %v3084 = vld [vmem:[%s706 + $0x30] sm:$0xff]
        %v3085 = vld [vmem:[%s706 + $0x38] sm:$0xff]
        %v3086 = vld [vmem:[%s706 + $0x40] sm:$0xff]
        %v3087 = vld [vmem:[%s706 + $0x48] sm:$0xff]
        %v3088 = vld [vmem:[%s706 + $0x50] sm:$0xff]
        %v3089 = vld [vmem:[%s706 + $0x58] sm:$0xff]
        %v3090 = vld [vmem:[%s706 + $0x60] sm:$0xff]
        %v3091 = vld [vmem:[%s706 + $0x68] sm:$0xff]
        %v3092 = vld [vmem:[%s706 + $0x70] sm:$0xff]
        %v3093 = vld [vmem:[%s706 + $0x78] sm:$0xff]
        %v3094 = vld [vmem:[%s706 + $0x80] sm:$0xff]
        %v3095 = vld [vmem:[%s706 + $0x88] sm:$0xff]
        %v3096 = vld [vmem:[%s706 + $0x90] sm:$0xff]
        %v3097 = vld [vmem:[%s706 + $0x98] sm:$0xff]
        %v3098 = vlaneseq
        %v3099 = vshrl.u32 %v3098, 7
        %v3100 = vsub.s32 6, %v3099
        %v3101 = vrot.slane %v2713, %v3100
        %v3102 = vmul.f32 %v3101, %v3078
        %v3103 = vmul.f32 %v3101, %v3079
        %v3104 = vmul.f32 %v3101, %v3080
        %v3105 = vmul.f32 %v3101, %v3081
        %v3106 = vmul.f32 %v3101, %v3082
        %v3107 = vmul.f32 %v3101, %v3083
        %v3108 = vmul.f32 %v3101, %v3084
        %v3109 = vmul.f32 %v3101, %v3085
        %v3110 = vmul.f32 %v3101, %v3086
        %v3111 = vmul.f32 %v3101, %v3087
        %v3112 = vmul.f32 %v3101, %v3088
        %v3113 = vmul.f32 %v3101, %v3089
        %v3114 = vmul.f32 %v3101, %v3090
        %v3115 = vmul.f32 %v3101, %v3091
        %v3116 = vmul.f32 %v3101, %v3092
        %v3117 = vmul.f32 %v3101, %v3093
        %v3118 = vmul.f32 %v3101, %v3094
        %v3119 = vmul.f32 %v3101, %v3095
        %v3120 = vmul.f32 %v3101, %v3096
        %v3121 = vmul.f32 %v3101, %v3097
        %v3122 = vadd.f32 %v3058, %v3102
        %v3123 = vadd.f32 %v3059, %v3103
        %v3124 = vadd.f32 %v3060, %v3104
        %v3125 = vadd.f32 %v3061, %v3105
        %v3126 = vadd.f32 %v3062, %v3106
        %v3127 = vadd.f32 %v3063, %v3107
        %v3128 = vadd.f32 %v3064, %v3108
        %v3129 = vadd.f32 %v3065, %v3109
        %v3130 = vadd.f32 %v3066, %v3110
        %v3131 = vadd.f32 %v3067, %v3111
        %v3132 = vadd.f32 %v3068, %v3112
        %v3133 = vadd.f32 %v3069, %v3113
        %v3134 = vadd.f32 %v3070, %v3114
        %v3135 = vadd.f32 %v3071, %v3115
        %v3136 = vadd.f32 %v3072, %v3116
        %v3137 = vadd.f32 %v3073, %v3117
        %v3138 = vadd.f32 %v3074, %v3118
        %v3139 = vadd.f32 %v3075, %v3119
        %v3140 = vadd.f32 %v3076, %v3120
        %v3141 = vadd.f32 %v3077, %v3121
        %v3142 = vld [vmem:[%s771] sm:$0xff]
        %v3143 = vld [vmem:[%s771 + $0x8] sm:$0xff]
        %v3144 = vld [vmem:[%s771 + $0x10] sm:$0xff]
        %v3145 = vld [vmem:[%s771 + $0x18] sm:$0xff]
        %v3146 = vld [vmem:[%s771 + $0x20] sm:$0xff]
        %v3147 = vld [vmem:[%s771 + $0x28] sm:$0xff]
        %v3148 = vld [vmem:[%s771 + $0x30] sm:$0xff]
        %v3149 = vld [vmem:[%s771 + $0x38] sm:$0xff]
        %v3150 = vld [vmem:[%s771 + $0x40] sm:$0xff]
        %v3151 = vld [vmem:[%s771 + $0x48] sm:$0xff]
        %v3152 = vld [vmem:[%s771 + $0x50] sm:$0xff]
        %v3153 = vld [vmem:[%s771 + $0x58] sm:$0xff]
        %v3154 = vld [vmem:[%s771 + $0x60] sm:$0xff]
        %v3155 = vld [vmem:[%s771 + $0x68] sm:$0xff]
        %v3156 = vld [vmem:[%s771 + $0x70] sm:$0xff]
        %v3157 = vld [vmem:[%s771 + $0x78] sm:$0xff]
        %v3158 = vld [vmem:[%s771 + $0x80] sm:$0xff]
        %v3159 = vld [vmem:[%s771 + $0x88] sm:$0xff]
        %v3160 = vld [vmem:[%s771 + $0x90] sm:$0xff]
        %v3161 = vld [vmem:[%s771 + $0x98] sm:$0xff]
        %v3162 = vlaneseq
        %v3163 = vshrl.u32 %v3162, 7
        %v3164 = vsub.s32 7, %v3163
        %v3165 = vrot.slane %v2713, %v3164
        %v3166 = vmul.f32 %v3165, %v3142
        %v3167 = vmul.f32 %v3165, %v3143
        %v3168 = vmul.f32 %v3165, %v3144
        %v3169 = vmul.f32 %v3165, %v3145
        %v3170 = vmul.f32 %v3165, %v3146
        %v3171 = vmul.f32 %v3165, %v3147
        %v3172 = vmul.f32 %v3165, %v3148
        %v3173 = vmul.f32 %v3165, %v3149
        %v3174 = vmul.f32 %v3165, %v3150
        %v3175 = vmul.f32 %v3165, %v3151
        %v3176 = vmul.f32 %v3165, %v3152
        %v3177 = vmul.f32 %v3165, %v3153
        %v3178 = vmul.f32 %v3165, %v3154
        %v3179 = vmul.f32 %v3165, %v3155
        %v3180 = vmul.f32 %v3165, %v3156
        %v3181 = vmul.f32 %v3165, %v3157
        %v3182 = vmul.f32 %v3165, %v3158
        %v3183 = vmul.f32 %v3165, %v3159
        %v3184 = vmul.f32 %v3165, %v3160
        %v3185 = vmul.f32 %v3165, %v3161
        %v3186 = vadd.f32 %v3122, %v3166
        %v3187 = vadd.f32 %v3123, %v3167
        %v3188 = vadd.f32 %v3124, %v3168
        %v3189 = vadd.f32 %v3125, %v3169
        %v3190 = vadd.f32 %v3126, %v3170
        %v3191 = vadd.f32 %v3127, %v3171
        %v3192 = vadd.f32 %v3128, %v3172
        %v3193 = vadd.f32 %v3129, %v3173
        %v3194 = vadd.f32 %v3130, %v3174
        %v3195 = vadd.f32 %v3131, %v3175
        %v3196 = vadd.f32 %v3132, %v3176
        %v3197 = vadd.f32 %v3133, %v3177
        %v3198 = vadd.f32 %v3134, %v3178
        %v3199 = vadd.f32 %v3135, %v3179
        %v3200 = vadd.f32 %v3136, %v3180
        %v3201 = vadd.f32 %v3137, %v3181
        %v3202 = vadd.f32 %v3138, %v3182
        %v3203 = vadd.f32 %v3139, %v3183
        %v3204 = vadd.f32 %v3140, %v3184
        %v3205 = vadd.f32 %v3141, %v3185
        %v3206 = vmul.f32 %v846, %v3186
        %v3207 = vmul.f32 %v846, %v3187
        %v3208 = vmul.f32 %v846, %v3188
        %v3209 = vmul.f32 %v846, %v3189
        %v3210 = vmul.f32 %v846, %v3190
        %v3211 = vmul.f32 %v846, %v3191
        %v3212 = vmul.f32 %v846, %v3192
        %v3213 = vmul.f32 %v846, %v3193
        %v3214 = vmul.f32 %v846, %v3194
        %v3215 = vmul.f32 %v846, %v3195
        %v3216 = vmul.f32 %v846, %v3196
        %v3217 = vmul.f32 %v846, %v3197
        %v3218 = vmul.f32 %v846, %v3198
        %v3219 = vmul.f32 %v846, %v3199
        %v3220 = vmul.f32 %v846, %v3200
        %v3221 = vmul.f32 %v846, %v3201
        %v3222 = vmul.f32 %v846, %v3202
        %v3223 = vmul.f32 %v846, %v3203
        %v3224 = vmul.f32 %v846, %v3204
        %v3225 = vmul.f32 %v846, %v3205
        %3226 = vadd.xlane.f32.xlu0 %v3206
        %v3227 = vpop.xlane.xlu0 %3226
        %3228 = vadd.xlane.f32.xlu0 %v3207
        %v3229 = vpop.xlane.xlu0 %3228
        %3230 = vadd.xlane.f32.xlu0 %v3208
        %v3231 = vpop.xlane.xlu0 %3230
        %3232 = vadd.xlane.f32.xlu0 %v3209
        %v3233 = vpop.xlane.xlu0 %3232
        %3234 = vadd.xlane.f32.xlu0 %v3210
        %v3235 = vpop.xlane.xlu0 %3234
        %3236 = vadd.xlane.f32.xlu0 %v3211
        %v3237 = vpop.xlane.xlu0 %3236
        %3238 = vadd.xlane.f32.xlu0 %v3212
        %v3239 = vpop.xlane.xlu0 %3238
        %3240 = vadd.xlane.f32.xlu0 %v3213
        %v3241 = vpop.xlane.xlu0 %3240
        %3242 = vadd.xlane.f32.xlu0 %v3214
        %v3243 = vpop.xlane.xlu0 %3242
        %3244 = vadd.xlane.f32.xlu0 %v3215
        %v3245 = vpop.xlane.xlu0 %3244
        %3246 = vadd.xlane.f32.xlu0 %v3216
        %v3247 = vpop.xlane.xlu0 %3246
        %3248 = vadd.xlane.f32.xlu0 %v3217
        %v3249 = vpop.xlane.xlu0 %3248
        %3250 = vadd.xlane.f32.xlu0 %v3218
        %v3251 = vpop.xlane.xlu0 %3250
        %3252 = vadd.xlane.f32.xlu0 %v3219
        %v3253 = vpop.xlane.xlu0 %3252
        %3254 = vadd.xlane.f32.xlu0 %v3220
        %v3255 = vpop.xlane.xlu0 %3254
        %3256 = vadd.xlane.f32.xlu0 %v3221
        %v3257 = vpop.xlane.xlu0 %3256
        %3258 = vadd.xlane.f32.xlu0 %v3222
        %v3259 = vpop.xlane.xlu0 %3258
        %3260 = vadd.xlane.f32.xlu0 %v3223
        %v3261 = vpop.xlane.xlu0 %3260
        %3262 = vadd.xlane.f32.xlu0 %v3224
        %v3263 = vpop.xlane.xlu0 %3262
        %3264 = vadd.xlane.f32.xlu0 %v3225
        %v3265 = vpop.xlane.xlu0 %3264
        %v3266 = vadd.f32 %v3227, %v232
        %v3267 = vadd.f32 %v3229, %v236
        %v3268 = vadd.f32 %v3231, %v243
        %v3269 = vadd.f32 %v3233, %v247
        %v3270 = vadd.f32 %v3235, %v254
        %v3271 = vadd.f32 %v3237, %v258
        %v3272 = vadd.f32 %v3239, %v265
        %v3273 = vadd.f32 %v3241, %v269
        %v3274 = vadd.f32 %v3243, %v276
        %v3275 = vadd.f32 %v3245, %v280
        %v3276 = vadd.f32 %v3247, %v287
        %v3277 = vadd.f32 %v3249, %v291
        %v3278 = vadd.f32 %v3251, %v298
        %v3279 = vadd.f32 %v3253, %v302
        %v3280 = vadd.f32 %v3255, %v309
        %v3281 = vadd.f32 %v3257, %v313
        %v3282 = vadd.f32 %v3259, %v320
        %v3283 = vadd.f32 %v3261, %v324
        %v3284 = vadd.f32 %v3263, %v331
        %v3285 = vadd.f32 %v3265, %v335
        %v3286 = vmul.f32 %v3266, %v3266
        %v3287 = vmul.f32 %v3267, %v3267
        %v3288 = vmul.f32 %v3268, %v3268
        %v3289 = vmul.f32 %v3269, %v3269
        %v3290 = vmul.f32 %v3270, %v3270
        %v3291 = vmul.f32 %v3271, %v3271
        %v3292 = vmul.f32 %v3272, %v3272
        %v3293 = vmul.f32 %v3273, %v3273
        %v3294 = vmul.f32 %v3274, %v3274
        %v3295 = vmul.f32 %v3275, %v3275
        %v3296 = vmul.f32 %v3276, %v3276
        %v3297 = vmul.f32 %v3277, %v3277
        %v3298 = vmul.f32 %v3278, %v3278
        %v3299 = vmul.f32 %v3279, %v3279
        %v3300 = vmul.f32 %v3280, %v3280
        %v3301 = vmul.f32 %v3281, %v3281
        %v3302 = vmul.f32 %v3282, %v3282
        %v3303 = vmul.f32 %v3283, %v3283
        %v3304 = vmul.f32 %v3284, %v3284
        %v3305 = vmul.f32 %v3285, %v3285
        %v3306 = vadd.f32 %v3286, %v3287
        %v3307 = vrot.slane %v3306, 4
        %v3308 = vadd.f32 %v3306, %v3307
        %v3309 = vrot.slane %v3308, 2
        %v3310 = vadd.f32 %v3308, %v3309
        %v3311 = vrot.slane %v3310, 1
        %v3312 = vadd.f32 %v3310, %v3311
        %v3313 = vadd.f32 %v3288, %v3289
        %v3314 = vrot.slane %v3313, 4
        %v3315 = vadd.f32 %v3313, %v3314
        %v3316 = vrot.slane %v3315, 2
        %v3317 = vadd.f32 %v3315, %v3316
        %v3318 = vrot.slane %v3317, 1
        %v3319 = vadd.f32 %v3317, %v3318
        %v3320 = vadd.f32 %v3290, %v3291
        %v3321 = vrot.slane %v3320, 4
        %v3322 = vadd.f32 %v3320, %v3321
        %v3323 = vrot.slane %v3322, 2
        %v3324 = vadd.f32 %v3322, %v3323
        %v3325 = vrot.slane %v3324, 1
        %v3326 = vadd.f32 %v3324, %v3325
        %v3327 = vadd.f32 %v3292, %v3293
        %v3328 = vrot.slane %v3327, 4
        %v3329 = vadd.f32 %v3327, %v3328
        %v3330 = vrot.slane %v3329, 2
        %v3331 = vadd.f32 %v3329, %v3330
        %v3332 = vrot.slane %v3331, 1
        %v3333 = vadd.f32 %v3331, %v3332
        %v3334 = vadd.f32 %v3294, %v3295
        %v3335 = vrot.slane %v3334, 4
        %v3336 = vadd.f32 %v3334, %v3335
        %v3337 = vrot.slane %v3336, 2
        %v3338 = vadd.f32 %v3336, %v3337
        %v3339 = vrot.slane %v3338, 1
        %v3340 = vadd.f32 %v3338, %v3339
        %v3341 = vadd.f32 %v3296, %v3297
        %v3342 = vrot.slane %v3341, 4
        %v3343 = vadd.f32 %v3341, %v3342
        %v3344 = vrot.slane %v3343, 2
        %v3345 = vadd.f32 %v3343, %v3344
        %v3346 = vrot.slane %v3345, 1
        %v3347 = vadd.f32 %v3345, %v3346
        %v3348 = vadd.f32 %v3298, %v3299
        %v3349 = vrot.slane %v3348, 4
        %v3350 = vadd.f32 %v3348, %v3349
        %v3351 = vrot.slane %v3350, 2
        %v3352 = vadd.f32 %v3350, %v3351
        %v3353 = vrot.slane %v3352, 1
        %v3354 = vadd.f32 %v3352, %v3353
        %v3355 = vadd.f32 %v3300, %v3301
        %v3356 = vrot.slane %v3355, 4
        %v3357 = vadd.f32 %v3355, %v3356
        %v3358 = vrot.slane %v3357, 2
        %v3359 = vadd.f32 %v3357, %v3358
        %v3360 = vrot.slane %v3359, 1
        %v3361 = vadd.f32 %v3359, %v3360
        %v3362 = vadd.f32 %v3302, %v3303
        %v3363 = vrot.slane %v3362, 4
        %v3364 = vadd.f32 %v3362, %v3363
        %v3365 = vrot.slane %v3364, 2
        %v3366 = vadd.f32 %v3364, %v3365
        %v3367 = vrot.slane %v3366, 1
        %v3368 = vadd.f32 %v3366, %v3367
        %v3369 = vadd.f32 %v3304, %v3305
        %v3370 = vrot.slane %v3369, 4
        %v3371 = vadd.f32 %v3369, %v3370
        %v3372 = vrot.slane %v3371, 2
        %v3373 = vadd.f32 %v3371, %v3372
        %v3374 = vrot.slane %v3373, 1
        %v3375 = vadd.f32 %v3373, %v3374
        %v3376 = vmul.f32 %v3266, %v3312
        %v3377 = vmul.f32 %v3267, %v3312
        %v3378 = vmul.f32 %v3268, %v3319
        %v3379 = vmul.f32 %v3269, %v3319
        %v3380 = vmul.f32 %v3270, %v3326
        %v3381 = vmul.f32 %v3271, %v3326
        %v3382 = vmul.f32 %v3272, %v3333
        %v3383 = vmul.f32 %v3273, %v3333
        %v3384 = vmul.f32 %v3274, %v3340
        %v3385 = vmul.f32 %v3275, %v3340
        %v3386 = vmul.f32 %v3276, %v3347
        %v3387 = vmul.f32 %v3277, %v3347
        %v3388 = vmul.f32 %v3278, %v3354
        %v3389 = vmul.f32 %v3279, %v3354
        %v3390 = vmul.f32 %v3280, %v3361
        %v3391 = vmul.f32 %v3281, %v3361
        %v3392 = vmul.f32 %v3282, %v3368
        %v3393 = vmul.f32 %v3283, %v3368
        %v3394 = vmul.f32 %v3284, %v3375
        %v3395 = vmul.f32 %v3285, %v3375
        %v3396 = vadd.f32 %v3312, 1.0
        %v3397 = vadd.f32 %v3319, 1.0
        %v3398 = vadd.f32 %v3326, 1.0
        %v3399 = vadd.f32 %v3333, 1.0
        %v3400 = vadd.f32 %v3340, 1.0
        %v3401 = vadd.f32 %v3347, 1.0
        %v3402 = vadd.f32 %v3354, 1.0
        %v3403 = vadd.f32 %v3361, 1.0
        %v3404 = vadd.f32 %v3368, 1.0
        %v3405 = vadd.f32 %v3375, 1.0
        %v3406 = vrsqrt.pop %v3312
        %v3407 = vmul.f32 %v3312, %v3406
        %vm3408 = vcmp.eq.f32.partialorder %v3312, inf
        %v3409 = vsel %vm3408, %v3312, %v3407
        %vm3410 = vcmp.eq.f32.partialorder %v3312, 0.0
        %v3411 = vand.u32 %v3312, 2147483648
        %v3412 = vsel %vm3410, %v3411, %v3409
        %v3413 = vrsqrt.pop %v3319
        %v3414 = vmul.f32 %v3319, %v3413
        %vm3415 = vcmp.eq.f32.partialorder %v3319, inf
        %v3416 = vsel %vm3415, %v3319, %v3414
        %vm3417 = vcmp.eq.f32.partialorder %v3319, 0.0
        %v3418 = vand.u32 %v3319, 2147483648
        %v3419 = vsel %vm3417, %v3418, %v3416
        %v3420 = vrsqrt.pop %v3326
        %v3421 = vmul.f32 %v3326, %v3420
        %vm3422 = vcmp.eq.f32.partialorder %v3326, inf
        %v3423 = vsel %vm3422, %v3326, %v3421
        %vm3424 = vcmp.eq.f32.partialorder %v3326, 0.0
        %v3425 = vand.u32 %v3326, 2147483648
        %v3426 = vsel %vm3424, %v3425, %v3423
        %v3427 = vrsqrt.pop %v3333
        %v3428 = vmul.f32 %v3333, %v3427
        %vm3429 = vcmp.eq.f32.partialorder %v3333, inf
        %v3430 = vsel %vm3429, %v3333, %v3428
        %vm3431 = vcmp.eq.f32.partialorder %v3333, 0.0
        %v3432 = vand.u32 %v3333, 2147483648
        %v3433 = vsel %vm3431, %v3432, %v3430
        %v3434 = vrsqrt.pop %v3340
        %v3435 = vmul.f32 %v3340, %v3434
        %vm3436 = vcmp.eq.f32.partialorder %v3340, inf
        %v3437 = vsel %vm3436, %v3340, %v3435
        %vm3438 = vcmp.eq.f32.partialorder %v3340, 0.0
        %v3439 = vand.u32 %v3340, 2147483648
        %v3440 = vsel %vm3438, %v3439, %v3437
        %v3441 = vrsqrt.pop %v3347
        %v3442 = vmul.f32 %v3347, %v3441
        %vm3443 = vcmp.eq.f32.partialorder %v3347, inf
        %v3444 = vsel %vm3443, %v3347, %v3442
        %vm3445 = vcmp.eq.f32.partialorder %v3347, 0.0
        %v3446 = vand.u32 %v3347, 2147483648
        %v3447 = vsel %vm3445, %v3446, %v3444
        %v3448 = vrsqrt.pop %v3354
        %v3449 = vmul.f32 %v3354, %v3448
        %vm3450 = vcmp.eq.f32.partialorder %v3354, inf
        %v3451 = vsel %vm3450, %v3354, %v3449
        %vm3452 = vcmp.eq.f32.partialorder %v3354, 0.0
        %v3453 = vand.u32 %v3354, 2147483648
        %v3454 = vsel %vm3452, %v3453, %v3451
        %v3455 = vrsqrt.pop %v3361
        %v3456 = vmul.f32 %v3361, %v3455
        %vm3457 = vcmp.eq.f32.partialorder %v3361, inf
        %v3458 = vsel %vm3457, %v3361, %v3456
        %vm3459 = vcmp.eq.f32.partialorder %v3361, 0.0
        %v3460 = vand.u32 %v3361, 2147483648
        %v3461 = vsel %vm3459, %v3460, %v3458
        %v3462 = vrsqrt.pop %v3368
        %v3463 = vmul.f32 %v3368, %v3462
        %vm3464 = vcmp.eq.f32.partialorder %v3368, inf
        %v3465 = vsel %vm3464, %v3368, %v3463
        %vm3466 = vcmp.eq.f32.partialorder %v3368, 0.0
        %v3467 = vand.u32 %v3368, 2147483648
        %v3468 = vsel %vm3466, %v3467, %v3465
        %v3469 = vrsqrt.pop %v3375
        %v3470 = vmul.f32 %v3375, %v3469
        %vm3471 = vcmp.eq.f32.partialorder %v3375, inf
        %v3472 = vsel %vm3471, %v3375, %v3470
        %vm3473 = vcmp.eq.f32.partialorder %v3375, 0.0
        %v3474 = vand.u32 %v3375, 2147483648
        %v3475 = vsel %vm3473, %v3474, %v3472
        %v3476 = vmul.f32 %v3396, %v3412
        %v3477 = vmul.f32 %v3397, %v3419
        %v3478 = vmul.f32 %v3398, %v3426
        %v3479 = vmul.f32 %v3399, %v3433
        %v3480 = vmul.f32 %v3400, %v3440
        %v3481 = vmul.f32 %v3401, %v3447
        %v3482 = vmul.f32 %v3402, %v3454
        %v3483 = vmul.f32 %v3403, %v3461
        %v3484 = vmul.f32 %v3404, %v3468
        %v3485 = vmul.f32 %v3405, %v3475
        %v3486 = vrcp.pop %v3476
        %v3487 = vmul.f32 %v3376, %v3486
        %v3488 = vmul.f32 %v3377, %v3486
        %v3489 = vrcp.pop %v3477
        %v3490 = vmul.f32 %v3378, %v3489
        %v3491 = vmul.f32 %v3379, %v3489
        %v3492 = vrcp.pop %v3478
        %v3493 = vmul.f32 %v3380, %v3492
        %v3494 = vmul.f32 %v3381, %v3492
        %v3495 = vrcp.pop %v3479
        %v3496 = vmul.f32 %v3382, %v3495
        %v3497 = vmul.f32 %v3383, %v3495
        %v3498 = vrcp.pop %v3480
        %v3499 = vmul.f32 %v3384, %v3498
        %v3500 = vmul.f32 %v3385, %v3498
        %v3501 = vrcp.pop %v3481
        %v3502 = vmul.f32 %v3386, %v3501
        %v3503 = vmul.f32 %v3387, %v3501
        %v3504 = vrcp.pop %v3482
        %v3505 = vmul.f32 %v3388, %v3504
        %v3506 = vmul.f32 %v3389, %v3504
        %v3507 = vrcp.pop %v3483
        %v3508 = vmul.f32 %v3390, %v3507
        %v3509 = vmul.f32 %v3391, %v3507
        %v3510 = vrcp.pop %v3484
        %v3511 = vmul.f32 %v3392, %v3510
        %v3512 = vmul.f32 %v3393, %v3510
        %v3513 = vrcp.pop %v3485
        %v3514 = vmul.f32 %v3394, %v3513
        %v3515 = vmul.f32 %v3395, %v3513
        %v3516 = vmul.f32 %v3186, %v3487
        %v3517 = vmul.f32 %v3187, %v3488
        %v3518 = vmul.f32 %v3188, %v3490
        %v3519 = vmul.f32 %v3189, %v3491
        %v3520 = vmul.f32 %v3190, %v3493
        %v3521 = vmul.f32 %v3191, %v3494
        %v3522 = vmul.f32 %v3192, %v3496
        %v3523 = vmul.f32 %v3193, %v3497
        %v3524 = vmul.f32 %v3194, %v3499
        %v3525 = vmul.f32 %v3195, %v3500
        %v3526 = vmul.f32 %v3196, %v3502
        %v3527 = vmul.f32 %v3197, %v3503
        %v3528 = vmul.f32 %v3198, %v3505
        %v3529 = vmul.f32 %v3199, %v3506
        %v3530 = vmul.f32 %v3200, %v3508
        %v3531 = vmul.f32 %v3201, %v3509
        %v3532 = vmul.f32 %v3202, %v3511
        %v3533 = vmul.f32 %v3203, %v3512
        %v3534 = vmul.f32 %v3204, %v3514
        %v3535 = vmul.f32 %v3205, %v3515
        %v3536 = vadd.f32 %v3516, %v3517
        %v3537 = vrot.slane %v3536, 4
        %v3538 = vadd.f32 %v3536, %v3537
        %v3539 = vrot.slane %v3538, 2
        %v3540 = vadd.f32 %v3538, %v3539
        %v3541 = vrot.slane %v3540, 1
        %v3542 = vadd.f32 %v3540, %v3541
        %v3543 = vadd.f32 %v3518, %v3519
        %v3544 = vrot.slane %v3543, 4
        %v3545 = vadd.f32 %v3543, %v3544
        %v3546 = vrot.slane %v3545, 2
        %v3547 = vadd.f32 %v3545, %v3546
        %v3548 = vrot.slane %v3547, 1
        %v3549 = vadd.f32 %v3547, %v3548
        %v3550 = vadd.f32 %v3520, %v3521
        %v3551 = vrot.slane %v3550, 4
        %v3552 = vadd.f32 %v3550, %v3551
        %v3553 = vrot.slane %v3552, 2
        %v3554 = vadd.f32 %v3552, %v3553
        %v3555 = vrot.slane %v3554, 1
        %v3556 = vadd.f32 %v3554, %v3555
        %v3557 = vadd.f32 %v3522, %v3523
        %v3558 = vrot.slane %v3557, 4
        %v3559 = vadd.f32 %v3557, %v3558
        %v3560 = vrot.slane %v3559, 2
        %v3561 = vadd.f32 %v3559, %v3560
        %v3562 = vrot.slane %v3561, 1
        %v3563 = vadd.f32 %v3561, %v3562
        %v3564 = vadd.f32 %v3524, %v3525
        %v3565 = vrot.slane %v3564, 4
        %v3566 = vadd.f32 %v3564, %v3565
        %v3567 = vrot.slane %v3566, 2
        %v3568 = vadd.f32 %v3566, %v3567
        %v3569 = vrot.slane %v3568, 1
        %v3570 = vadd.f32 %v3568, %v3569
        %v3571 = vadd.f32 %v3526, %v3527
        %v3572 = vrot.slane %v3571, 4
        %v3573 = vadd.f32 %v3571, %v3572
        %v3574 = vrot.slane %v3573, 2
        %v3575 = vadd.f32 %v3573, %v3574
        %v3576 = vrot.slane %v3575, 1
        %v3577 = vadd.f32 %v3575, %v3576
        %v3578 = vadd.f32 %v3528, %v3529
        %v3579 = vrot.slane %v3578, 4
        %v3580 = vadd.f32 %v3578, %v3579
        %v3581 = vrot.slane %v3580, 2
        %v3582 = vadd.f32 %v3580, %v3581
        %v3583 = vrot.slane %v3582, 1
        %v3584 = vadd.f32 %v3582, %v3583
        %v3585 = vadd.f32 %v3530, %v3531
        %v3586 = vrot.slane %v3585, 4
        %v3587 = vadd.f32 %v3585, %v3586
        %v3588 = vrot.slane %v3587, 2
        %v3589 = vadd.f32 %v3587, %v3588
        %v3590 = vrot.slane %v3589, 1
        %v3591 = vadd.f32 %v3589, %v3590
        %v3592 = vadd.f32 %v3532, %v3533
        %v3593 = vrot.slane %v3592, 4
        %v3594 = vadd.f32 %v3592, %v3593
        %v3595 = vrot.slane %v3594, 2
        %v3596 = vadd.f32 %v3594, %v3595
        %v3597 = vrot.slane %v3596, 1
        %v3598 = vadd.f32 %v3596, %v3597
        %v3599 = vadd.f32 %v3534, %v3535
        %v3600 = vrot.slane %v3599, 4
        %v3601 = vadd.f32 %v3599, %v3600
        %v3602 = vrot.slane %v3601, 2
        %v3603 = vadd.f32 %v3601, %v3602
        %v3604 = vrot.slane %v3603, 1
        %v3605 = vadd.f32 %v3603, %v3604
        %v3606 = vadd.f32 %v3542, 0.0
        %v3607 = vadd.f32 %v3549, 0.0
        %v3608 = vadd.f32 %v3556, 0.0
        %v3609 = vadd.f32 %v3563, 0.0
        %v3610 = vadd.f32 %v3570, 0.0
        %v3611 = vadd.f32 %v3577, 0.0
        %v3612 = vadd.f32 %v3584, 0.0
        %v3613 = vadd.f32 %v3591, 0.0
        %v3614 = vadd.f32 %v3598, 0.0
        %v3615 = vadd.f32 %v3605, 0.0
        %v3616 = vmax.f32 %v3606, %v3610
        %v3617 = vmax.f32 %v3607, %v3611
        %v3618 = vmax.f32 %v3608, %v3612
        %v3619 = vmax.f32 %v3609, %v3613
        %v3620 = vmax.f32 %v3616, %v3614
        %v3621 = vmax.f32 %v3617, %v3615
        %v3622 = vmax.f32 %v3620, %v3621
        %v3623 = vmax.f32 %v3618, %v3619
        %v3624 = vmax.f32 %v3622, %v3623
        %v3625 = vsub.f32 %v3606, %v3624
        %v3626 = vsub.f32 %v3607, %v3624
        %v3627 = vsub.f32 %v3608, %v3624
        %v3628 = vsub.f32 %v3609, %v3624
        %v3629 = vsub.f32 %v3610, %v3624
        %v3630 = vsub.f32 %v3611, %v3624
        %v3631 = vsub.f32 %v3612, %v3624
        %v3632 = vsub.f32 %v3613, %v3624
        %v3633 = vsub.f32 %v3614, %v3624
        %v3634 = vsub.f32 %v3615, %v3624
        %v3635 = vmul.f32 %v3625, 1.442695
        %v3636 = vpow.pop %v3635
        %v3637 = vmul.f32 %v3626, 1.442695
        %v3638 = vpow.pop %v3637
        %v3639 = vmul.f32 %v3627, 1.442695
        %v3640 = vpow.pop %v3639
        %v3641 = vmul.f32 %v3628, 1.442695
        %v3642 = vpow.pop %v3641
        %v3643 = vmul.f32 %v3629, 1.442695
        %v3644 = vpow.pop %v3643
        %v3645 = vmul.f32 %v3630, 1.442695
        %v3646 = vpow.pop %v3645
        %v3647 = vmul.f32 %v3631, 1.442695
        %v3648 = vpow.pop %v3647
        %v3649 = vmul.f32 %v3632, 1.442695
        %v3650 = vpow.pop %v3649
        %v3651 = vmul.f32 %v3633, 1.442695
        %v3652 = vpow.pop %v3651
        %v3653 = vmul.f32 %v3634, 1.442695
        %v3654 = vpow.pop %v3653
        %v3665 = vrot.slane %v3638, 7
        %v3666 = vsel %vm1307, %v3665, %v3636
        %v3667 = vrot.slane %v3640, 6
        %v3668 = vsel %vm1310, %v3667, %v3666
        %v3669 = vrot.slane %v3642, 5
        %v3670 = vsel %vm1313, %v3669, %v3668
        %v3671 = vrot.slane %v3644, 4
        %v3672 = vsel %vm1316, %v3671, %v3670
        %v3673 = vrot.slane %v3646, 3
        %v3674 = vsel %vm1319, %v3673, %v3672
        %v3675 = vrot.slane %v3648, 2
        %v3676 = vsel %vm1322, %v3675, %v3674
        %v3677 = vrot.slane %v3650, 1
        %v3678 = vsel %vm1325, %v3677, %v3676
        %v3679 = vrot.slane %v3654, 7
        %v3680 = vsel %vm1307, %v3679, %v3652
        %v3683 = vsel %vm836, %v3680, 0.0
        %v3684 = vadd.f32 %v3678, %v3683
        %v3685 = vrot.slane %v3684, 4
        %v3686 = vadd.f32 %v3684, %v3685
        %v3687 = vrot.slane %v3686, 2
        %v3688 = vadd.f32 %v3686, %v3687
        %v3689 = vrot.slane %v3688, 1
        %v3690 = vadd.f32 %v3688, %v3689
        %v3691 = vlaneseq
        %v3692 = vshrl.u32 %v3691, 7
        %v3693 = vsub.s32 0, %v3692
        %v3694 = vrot.slane %v3690, %v3693
        %v3695 = vrcp.pop %v3694
        %v3696 = vmul.f32 %v3636, %v3695
        %v3697 = vmul.f32 %v3638, %v3695
        %v3698 = vmul.f32 %v3640, %v3695
        %v3699 = vmul.f32 %v3642, %v3695
        %v3700 = vmul.f32 %v3644, %v3695
        %v3701 = vmul.f32 %v3646, %v3695
        %v3702 = vmul.f32 %v3648, %v3695
        %v3703 = vmul.f32 %v3650, %v3695
        %v3704 = vmul.f32 %v3652, %v3695
        %v3705 = vmul.f32 %v3654, %v3695
        %v3706 = vlaneseq
        %v3707 = vshrl.u32 %v3706, 7
        %v3708 = vsub.s32 0, %v3707
        %v3709 = vrot.slane %v3696, %v3708
        %v3710 = vlaneseq
        %v3711 = vshrl.u32 %v3710, 7
        %v3712 = vsub.s32 0, %v3711
        %v3713 = vrot.slane %v3697, %v3712
        %v3714 = vlaneseq
        %v3715 = vshrl.u32 %v3714, 7
        %v3716 = vsub.s32 0, %v3715
        %v3717 = vrot.slane %v3698, %v3716
        %v3718 = vlaneseq
        %v3719 = vshrl.u32 %v3718, 7
        %v3720 = vsub.s32 0, %v3719
        %v3721 = vrot.slane %v3699, %v3720
        %v3722 = vlaneseq
        %v3723 = vshrl.u32 %v3722, 7
        %v3724 = vsub.s32 0, %v3723
        %v3725 = vrot.slane %v3700, %v3724
        %v3726 = vlaneseq
        %v3727 = vshrl.u32 %v3726, 7
        %v3728 = vsub.s32 0, %v3727
        %v3729 = vrot.slane %v3701, %v3728
        %v3730 = vlaneseq
        %v3731 = vshrl.u32 %v3730, 7
        %v3732 = vsub.s32 0, %v3731
        %v3733 = vrot.slane %v3702, %v3732
        %v3734 = vlaneseq
        %v3735 = vshrl.u32 %v3734, 7
        %v3736 = vsub.s32 0, %v3735
        %v3737 = vrot.slane %v3703, %v3736
        %v3738 = vlaneseq
        %v3739 = vshrl.u32 %v3738, 7
        %v3740 = vsub.s32 0, %v3739
        %v3741 = vrot.slane %v3704, %v3740
        %v3742 = vlaneseq
        %v3743 = vshrl.u32 %v3742, 7
        %v3744 = vsub.s32 0, %v3743
        %v3745 = vrot.slane %v3705, %v3744
        %v3746 = vmul.f32 %v3709, %v3186
        %v3747 = vmul.f32 %v3709, %v3187
        %v3748 = vmul.f32 %v3713, %v3188
        %v3749 = vmul.f32 %v3713, %v3189
        %v3750 = vmul.f32 %v3717, %v3190
        %v3751 = vmul.f32 %v3717, %v3191
        %v3752 = vmul.f32 %v3721, %v3192
        %v3753 = vmul.f32 %v3721, %v3193
        %v3754 = vmul.f32 %v3725, %v3194
        %v3755 = vmul.f32 %v3725, %v3195
        %v3756 = vmul.f32 %v3729, %v3196
        %v3757 = vmul.f32 %v3729, %v3197
        %v3758 = vmul.f32 %v3733, %v3198
        %v3759 = vmul.f32 %v3733, %v3199
        %v3760 = vmul.f32 %v3737, %v3200
        %v3761 = vmul.f32 %v3737, %v3201
        %v3762 = vmul.f32 %v3741, %v3202
        %v3763 = vmul.f32 %v3741, %v3203
        %v3764 = vmul.f32 %v3745, %v3204
        %v3765 = vmul.f32 %v3745, %v3205
        %3766 = vadd.xlane.f32.xlu0 %v3746
        %v3767 = vpop.xlane.xlu0 %3766
        %3768 = vadd.xlane.f32.xlu0 %v3747
        %v3769 = vpop.xlane.xlu0 %3768
        %3770 = vadd.xlane.f32.xlu0 %v3748
        %v3771 = vpop.xlane.xlu0 %3770
        %3772 = vadd.xlane.f32.xlu0 %v3749
        %v3773 = vpop.xlane.xlu0 %3772
        %3774 = vadd.xlane.f32.xlu0 %v3750
        %v3775 = vpop.xlane.xlu0 %3774
        %3776 = vadd.xlane.f32.xlu0 %v3751
        %v3777 = vpop.xlane.xlu0 %3776
        %3778 = vadd.xlane.f32.xlu0 %v3752
        %v3779 = vpop.xlane.xlu0 %3778
        %3780 = vadd.xlane.f32.xlu0 %v3753
        %v3781 = vpop.xlane.xlu0 %3780
        %3782 = vadd.xlane.f32.xlu0 %v3754
        %v3783 = vpop.xlane.xlu0 %3782
        %3784 = vadd.xlane.f32.xlu0 %v3755
        %v3785 = vpop.xlane.xlu0 %3784
        %3786 = vadd.xlane.f32.xlu0 %v3756
        %v3787 = vpop.xlane.xlu0 %3786
        %3788 = vadd.xlane.f32.xlu0 %v3757
        %v3789 = vpop.xlane.xlu0 %3788
        %3790 = vadd.xlane.f32.xlu0 %v3758
        %v3791 = vpop.xlane.xlu0 %3790
        %3792 = vadd.xlane.f32.xlu0 %v3759
        %v3793 = vpop.xlane.xlu0 %3792
        %3794 = vadd.xlane.f32.xlu0 %v3760
        %v3795 = vpop.xlane.xlu0 %3794
        %3796 = vadd.xlane.f32.xlu0 %v3761
        %v3797 = vpop.xlane.xlu0 %3796
        %3798 = vadd.xlane.f32.xlu0 %v3762
        %v3799 = vpop.xlane.xlu0 %3798
        %3800 = vadd.xlane.f32.xlu0 %v3763
        %v3801 = vpop.xlane.xlu0 %3800
        %3802 = vadd.xlane.f32.xlu0 %v3764
        %v3803 = vpop.xlane.xlu0 %3802
        %3804 = vadd.xlane.f32.xlu0 %v3765
        %v3805 = vpop.xlane.xlu0 %3804
        %v3806 = vadd.f32 %v3767, %v232
        %v3807 = vadd.f32 %v3769, %v236
        %v3808 = vadd.f32 %v3771, %v243
        %v3809 = vadd.f32 %v3773, %v247
        %v3810 = vadd.f32 %v3775, %v254
        %v3811 = vadd.f32 %v3777, %v258
        %v3812 = vadd.f32 %v3779, %v265
        %v3813 = vadd.f32 %v3781, %v269
        %v3814 = vadd.f32 %v3783, %v276
        %v3815 = vadd.f32 %v3785, %v280
        %v3816 = vadd.f32 %v3787, %v287
        %v3817 = vadd.f32 %v3789, %v291
        %v3818 = vadd.f32 %v3791, %v298
        %v3819 = vadd.f32 %v3793, %v302
        %v3820 = vadd.f32 %v3795, %v309
        %v3821 = vadd.f32 %v3797, %v313
        %v3822 = vadd.f32 %v3799, %v320
        %v3823 = vadd.f32 %v3801, %v324
        %v3824 = vadd.f32 %v3803, %v331
        %v3825 = vadd.f32 %v3805, %v335
        %v3826 = vmul.f32 %v3806, %v3806
        %v3827 = vmul.f32 %v3807, %v3807
        %v3828 = vmul.f32 %v3808, %v3808
        %v3829 = vmul.f32 %v3809, %v3809
        %v3830 = vmul.f32 %v3810, %v3810
        %v3831 = vmul.f32 %v3811, %v3811
        %v3832 = vmul.f32 %v3812, %v3812
        %v3833 = vmul.f32 %v3813, %v3813
        %v3834 = vmul.f32 %v3814, %v3814
        %v3835 = vmul.f32 %v3815, %v3815
        %v3836 = vmul.f32 %v3816, %v3816
        %v3837 = vmul.f32 %v3817, %v3817
        %v3838 = vmul.f32 %v3818, %v3818
        %v3839 = vmul.f32 %v3819, %v3819
        %v3840 = vmul.f32 %v3820, %v3820
        %v3841 = vmul.f32 %v3821, %v3821
        %v3842 = vmul.f32 %v3822, %v3822
        %v3843 = vmul.f32 %v3823, %v3823
        %v3844 = vmul.f32 %v3824, %v3824
        %v3845 = vmul.f32 %v3825, %v3825
        %v3846 = vadd.f32 %v3826, %v3827
        %v3847 = vrot.slane %v3846, 4
        %v3848 = vadd.f32 %v3846, %v3847
        %v3849 = vrot.slane %v3848, 2
        %v3850 = vadd.f32 %v3848, %v3849
        %v3851 = vrot.slane %v3850, 1
        %v3852 = vadd.f32 %v3850, %v3851
        %v3853 = vadd.f32 %v3828, %v3829
        %v3854 = vrot.slane %v3853, 4
        %v3855 = vadd.f32 %v3853, %v3854
        %v3856 = vrot.slane %v3855, 2
        %v3857 = vadd.f32 %v3855, %v3856
        %v3858 = vrot.slane %v3857, 1
        %v3859 = vadd.f32 %v3857, %v3858
        %v3860 = vadd.f32 %v3830, %v3831
        %v3861 = vrot.slane %v3860, 4
        %v3862 = vadd.f32 %v3860, %v3861
        %v3863 = vrot.slane %v3862, 2
        %v3864 = vadd.f32 %v3862, %v3863
        %v3865 = vrot.slane %v3864, 1
        %v3866 = vadd.f32 %v3864, %v3865
        %v3867 = vadd.f32 %v3832, %v3833
        %v3868 = vrot.slane %v3867, 4
        %v3869 = vadd.f32 %v3867, %v3868
        %v3870 = vrot.slane %v3869, 2
        %v3871 = vadd.f32 %v3869, %v3870
        %v3872 = vrot.slane %v3871, 1
        %v3873 = vadd.f32 %v3871, %v3872
        %v3874 = vadd.f32 %v3834, %v3835
        %v3875 = vrot.slane %v3874, 4
        %v3876 = vadd.f32 %v3874, %v3875
        %v3877 = vrot.slane %v3876, 2
        %v3878 = vadd.f32 %v3876, %v3877
        %v3879 = vrot.slane %v3878, 1
        %v3880 = vadd.f32 %v3878, %v3879
        %v3881 = vadd.f32 %v3836, %v3837
        %v3882 = vrot.slane %v3881, 4
        %v3883 = vadd.f32 %v3881, %v3882
        %v3884 = vrot.slane %v3883, 2
        %v3885 = vadd.f32 %v3883, %v3884
        %v3886 = vrot.slane %v3885, 1
        %v3887 = vadd.f32 %v3885, %v3886
        %v3888 = vadd.f32 %v3838, %v3839
        %v3889 = vrot.slane %v3888, 4
        %v3890 = vadd.f32 %v3888, %v3889
        %v3891 = vrot.slane %v3890, 2
        %v3892 = vadd.f32 %v3890, %v3891
        %v3893 = vrot.slane %v3892, 1
        %v3894 = vadd.f32 %v3892, %v3893
        %v3895 = vadd.f32 %v3840, %v3841
        %v3896 = vrot.slane %v3895, 4
        %v3897 = vadd.f32 %v3895, %v3896
        %v3898 = vrot.slane %v3897, 2
        %v3899 = vadd.f32 %v3897, %v3898
        %v3900 = vrot.slane %v3899, 1
        %v3901 = vadd.f32 %v3899, %v3900
        %v3902 = vadd.f32 %v3842, %v3843
        %v3903 = vrot.slane %v3902, 4
        %v3904 = vadd.f32 %v3902, %v3903
        %v3905 = vrot.slane %v3904, 2
        %v3906 = vadd.f32 %v3904, %v3905
        %v3907 = vrot.slane %v3906, 1
        %v3908 = vadd.f32 %v3906, %v3907
        %v3909 = vadd.f32 %v3844, %v3845
        %v3910 = vrot.slane %v3909, 4
        %v3911 = vadd.f32 %v3909, %v3910
        %v3912 = vrot.slane %v3911, 2
        %v3913 = vadd.f32 %v3911, %v3912
        %v3914 = vrot.slane %v3913, 1
        %v3915 = vadd.f32 %v3913, %v3914
        %v3916 = vmul.f32 %v3806, %v3852
        %v3917 = vmul.f32 %v3807, %v3852
        %v3918 = vmul.f32 %v3808, %v3859
        %v3919 = vmul.f32 %v3809, %v3859
        %v3920 = vmul.f32 %v3810, %v3866
        %v3921 = vmul.f32 %v3811, %v3866
        %v3922 = vmul.f32 %v3812, %v3873
        %v3923 = vmul.f32 %v3813, %v3873
        %v3924 = vmul.f32 %v3814, %v3880
        %v3925 = vmul.f32 %v3815, %v3880
        %v3926 = vmul.f32 %v3816, %v3887
        %v3927 = vmul.f32 %v3817, %v3887
        %v3928 = vmul.f32 %v3818, %v3894
        %v3929 = vmul.f32 %v3819, %v3894
        %v3930 = vmul.f32 %v3820, %v3901
        %v3931 = vmul.f32 %v3821, %v3901
        %v3932 = vmul.f32 %v3822, %v3908
        %v3933 = vmul.f32 %v3823, %v3908
        %v3934 = vmul.f32 %v3824, %v3915
        %v3935 = vmul.f32 %v3825, %v3915
        %v3936 = vadd.f32 %v3852, 1.0
        %v3937 = vadd.f32 %v3859, 1.0
        %v3938 = vadd.f32 %v3866, 1.0
        %v3939 = vadd.f32 %v3873, 1.0
        %v3940 = vadd.f32 %v3880, 1.0
        %v3941 = vadd.f32 %v3887, 1.0
        %v3942 = vadd.f32 %v3894, 1.0
        %v3943 = vadd.f32 %v3901, 1.0
        %v3944 = vadd.f32 %v3908, 1.0
        %v3945 = vadd.f32 %v3915, 1.0
        %v3946 = vrsqrt.pop %v3852
        %v3947 = vmul.f32 %v3852, %v3946
        %vm3948 = vcmp.eq.f32.partialorder %v3852, inf
        %v3949 = vsel %vm3948, %v3852, %v3947
        %vm3950 = vcmp.eq.f32.partialorder %v3852, 0.0
        %v3951 = vand.u32 %v3852, 2147483648
        %v3952 = vsel %vm3950, %v3951, %v3949
        %v3953 = vrsqrt.pop %v3859
        %v3954 = vmul.f32 %v3859, %v3953
        %vm3955 = vcmp.eq.f32.partialorder %v3859, inf
        %v3956 = vsel %vm3955, %v3859, %v3954
        %vm3957 = vcmp.eq.f32.partialorder %v3859, 0.0
        %v3958 = vand.u32 %v3859, 2147483648
        %v3959 = vsel %vm3957, %v3958, %v3956
        %v3960 = vrsqrt.pop %v3866
        %v3961 = vmul.f32 %v3866, %v3960
        %vm3962 = vcmp.eq.f32.partialorder %v3866, inf
        %v3963 = vsel %vm3962, %v3866, %v3961
        %vm3964 = vcmp.eq.f32.partialorder %v3866, 0.0
        %v3965 = vand.u32 %v3866, 2147483648
        %v3966 = vsel %vm3964, %v3965, %v3963
        %v3967 = vrsqrt.pop %v3873
        %v3968 = vmul.f32 %v3873, %v3967
        %vm3969 = vcmp.eq.f32.partialorder %v3873, inf
        %v3970 = vsel %vm3969, %v3873, %v3968
        %vm3971 = vcmp.eq.f32.partialorder %v3873, 0.0
        %v3972 = vand.u32 %v3873, 2147483648
        %v3973 = vsel %vm3971, %v3972, %v3970
        %v3974 = vrsqrt.pop %v3880
        %v3975 = vmul.f32 %v3880, %v3974
        %vm3976 = vcmp.eq.f32.partialorder %v3880, inf
        %v3977 = vsel %vm3976, %v3880, %v3975
        %vm3978 = vcmp.eq.f32.partialorder %v3880, 0.0
        %v3979 = vand.u32 %v3880, 2147483648
        %v3980 = vsel %vm3978, %v3979, %v3977
        %v3981 = vrsqrt.pop %v3887
        %v3982 = vmul.f32 %v3887, %v3981
        %vm3983 = vcmp.eq.f32.partialorder %v3887, inf
        %v3984 = vsel %vm3983, %v3887, %v3982
        %vm3985 = vcmp.eq.f32.partialorder %v3887, 0.0
        %v3986 = vand.u32 %v3887, 2147483648
        %v3987 = vsel %vm3985, %v3986, %v3984
        %v3988 = vrsqrt.pop %v3894
        %v3989 = vmul.f32 %v3894, %v3988
        %vm3990 = vcmp.eq.f32.partialorder %v3894, inf
        %v3991 = vsel %vm3990, %v3894, %v3989
        %vm3992 = vcmp.eq.f32.partialorder %v3894, 0.0
        %v3993 = vand.u32 %v3894, 2147483648
        %v3994 = vsel %vm3992, %v3993, %v3991
        %v3995 = vrsqrt.pop %v3901
        %v3996 = vmul.f32 %v3901, %v3995
        %vm3997 = vcmp.eq.f32.partialorder %v3901, inf
        %v3998 = vsel %vm3997, %v3901, %v3996
        %vm3999 = vcmp.eq.f32.partialorder %v3901, 0.0
        %v4000 = vand.u32 %v3901, 2147483648
        %v4001 = vsel %vm3999, %v4000, %v3998
        %v4002 = vrsqrt.pop %v3908
        %v4003 = vmul.f32 %v3908, %v4002
        %vm4004 = vcmp.eq.f32.partialorder %v3908, inf
        %v4005 = vsel %vm4004, %v3908, %v4003
        %vm4006 = vcmp.eq.f32.partialorder %v3908, 0.0
        %v4007 = vand.u32 %v3908, 2147483648
        %v4008 = vsel %vm4006, %v4007, %v4005
        %v4009 = vrsqrt.pop %v3915
        %v4010 = vmul.f32 %v3915, %v4009
        %vm4011 = vcmp.eq.f32.partialorder %v3915, inf
        %v4012 = vsel %vm4011, %v3915, %v4010
        %vm4013 = vcmp.eq.f32.partialorder %v3915, 0.0
        %v4014 = vand.u32 %v3915, 2147483648
        %v4015 = vsel %vm4013, %v4014, %v4012
        %v4016 = vmul.f32 %v3936, %v3952
        %v4017 = vmul.f32 %v3937, %v3959
        %v4018 = vmul.f32 %v3938, %v3966
        %v4019 = vmul.f32 %v3939, %v3973
        %v4020 = vmul.f32 %v3940, %v3980
        %v4021 = vmul.f32 %v3941, %v3987
        %v4022 = vmul.f32 %v3942, %v3994
        %v4023 = vmul.f32 %v3943, %v4001
        %v4024 = vmul.f32 %v3944, %v4008
        %v4025 = vmul.f32 %v3945, %v4015
        %v4026 = vrcp.pop %v4016
        %v4027 = vmul.f32 %v3916, %v4026
        %v4028 = vmul.f32 %v3917, %v4026
        %v4029 = vrcp.pop %v4017
        %v4030 = vmul.f32 %v3918, %v4029
        %v4031 = vmul.f32 %v3919, %v4029
        %v4032 = vrcp.pop %v4018
        %v4033 = vmul.f32 %v3920, %v4032
        %v4034 = vmul.f32 %v3921, %v4032
        %v4035 = vrcp.pop %v4019
        %v4036 = vmul.f32 %v3922, %v4035
        %v4037 = vmul.f32 %v3923, %v4035
        %v4038 = vrcp.pop %v4020
        %v4039 = vmul.f32 %v3924, %v4038
        %v4040 = vmul.f32 %v3925, %v4038
        %v4041 = vrcp.pop %v4021
        %v4042 = vmul.f32 %v3926, %v4041
        %v4043 = vmul.f32 %v3927, %v4041
        %v4044 = vrcp.pop %v4022
        %v4045 = vmul.f32 %v3928, %v4044
        %v4046 = vmul.f32 %v3929, %v4044
        %v4047 = vrcp.pop %v4023
        %v4048 = vmul.f32 %v3930, %v4047
        %v4049 = vmul.f32 %v3931, %v4047
        %v4050 = vrcp.pop %v4024
        %v4051 = vmul.f32 %v3932, %v4050
        %v4052 = vmul.f32 %v3933, %v4050
        %v4053 = vrcp.pop %v4025
        %v4054 = vmul.f32 %v3934, %v4053
        %v4055 = vmul.f32 %v3935, %v4053
        %v4056 = vmul.f32 %v3186, %v4027
        %v4057 = vmul.f32 %v3187, %v4028
        %v4058 = vmul.f32 %v3188, %v4030
        %v4059 = vmul.f32 %v3189, %v4031
        %v4060 = vmul.f32 %v3190, %v4033
        %v4061 = vmul.f32 %v3191, %v4034
        %v4062 = vmul.f32 %v3192, %v4036
        %v4063 = vmul.f32 %v3193, %v4037
        %v4064 = vmul.f32 %v3194, %v4039
        %v4065 = vmul.f32 %v3195, %v4040
        %v4066 = vmul.f32 %v3196, %v4042
        %v4067 = vmul.f32 %v3197, %v4043
        %v4068 = vmul.f32 %v3198, %v4045
        %v4069 = vmul.f32 %v3199, %v4046
        %v4070 = vmul.f32 %v3200, %v4048
        %v4071 = vmul.f32 %v3201, %v4049
        %v4072 = vmul.f32 %v3202, %v4051
        %v4073 = vmul.f32 %v3203, %v4052
        %v4074 = vmul.f32 %v3204, %v4054
        %v4075 = vmul.f32 %v3205, %v4055
        %v4076 = vadd.f32 %v4056, %v4057
        %v4077 = vrot.slane %v4076, 4
        %v4078 = vadd.f32 %v4076, %v4077
        %v4079 = vrot.slane %v4078, 2
        %v4080 = vadd.f32 %v4078, %v4079
        %v4081 = vrot.slane %v4080, 1
        %v4082 = vadd.f32 %v4080, %v4081
        %v4083 = vadd.f32 %v4058, %v4059
        %v4084 = vrot.slane %v4083, 4
        %v4085 = vadd.f32 %v4083, %v4084
        %v4086 = vrot.slane %v4085, 2
        %v4087 = vadd.f32 %v4085, %v4086
        %v4088 = vrot.slane %v4087, 1
        %v4089 = vadd.f32 %v4087, %v4088
        %v4090 = vadd.f32 %v4060, %v4061
        %v4091 = vrot.slane %v4090, 4
        %v4092 = vadd.f32 %v4090, %v4091
        %v4093 = vrot.slane %v4092, 2
        %v4094 = vadd.f32 %v4092, %v4093
        %v4095 = vrot.slane %v4094, 1
        %v4096 = vadd.f32 %v4094, %v4095
        %v4097 = vadd.f32 %v4062, %v4063
        %v4098 = vrot.slane %v4097, 4
        %v4099 = vadd.f32 %v4097, %v4098
        %v4100 = vrot.slane %v4099, 2
        %v4101 = vadd.f32 %v4099, %v4100
        %v4102 = vrot.slane %v4101, 1
        %v4103 = vadd.f32 %v4101, %v4102
        %v4104 = vadd.f32 %v4064, %v4065
        %v4105 = vrot.slane %v4104, 4
        %v4106 = vadd.f32 %v4104, %v4105
        %v4107 = vrot.slane %v4106, 2
        %v4108 = vadd.f32 %v4106, %v4107
        %v4109 = vrot.slane %v4108, 1
        %v4110 = vadd.f32 %v4108, %v4109
        %v4111 = vadd.f32 %v4066, %v4067
        %v4112 = vrot.slane %v4111, 4
        %v4113 = vadd.f32 %v4111, %v4112
        %v4114 = vrot.slane %v4113, 2
        %v4115 = vadd.f32 %v4113, %v4114
        %v4116 = vrot.slane %v4115, 1
        %v4117 = vadd.f32 %v4115, %v4116
        %v4118 = vadd.f32 %v4068, %v4069
        %v4119 = vrot.slane %v4118, 4
        %v4120 = vadd.f32 %v4118, %v4119
        %v4121 = vrot.slane %v4120, 2
        %v4122 = vadd.f32 %v4120, %v4121
        %v4123 = vrot.slane %v4122, 1
        %v4124 = vadd.f32 %v4122, %v4123
        %v4125 = vadd.f32 %v4070, %v4071
        %v4126 = vrot.slane %v4125, 4
        %v4127 = vadd.f32 %v4125, %v4126
        %v4128 = vrot.slane %v4127, 2
        %v4129 = vadd.f32 %v4127, %v4128
        %v4130 = vrot.slane %v4129, 1
        %v4131 = vadd.f32 %v4129, %v4130
        %v4132 = vadd.f32 %v4072, %v4073
        %v4133 = vrot.slane %v4132, 4
        %v4134 = vadd.f32 %v4132, %v4133
        %v4135 = vrot.slane %v4134, 2
        %v4136 = vadd.f32 %v4134, %v4135
        %v4137 = vrot.slane %v4136, 1
        %v4138 = vadd.f32 %v4136, %v4137
        %v4139 = vadd.f32 %v4074, %v4075
        %v4140 = vrot.slane %v4139, 4
        %v4141 = vadd.f32 %v4139, %v4140
        %v4142 = vrot.slane %v4141, 2
        %v4143 = vadd.f32 %v4141, %v4142
        %v4144 = vrot.slane %v4143, 1
        %v4145 = vadd.f32 %v4143, %v4144
        %v4146 = vadd.f32 %v3606, %v4082
        %v4147 = vadd.f32 %v3607, %v4089
        %v4148 = vadd.f32 %v3608, %v4096
        %v4149 = vadd.f32 %v3609, %v4103
        %v4150 = vadd.f32 %v3610, %v4110
        %v4151 = vadd.f32 %v3611, %v4117
        %v4152 = vadd.f32 %v3612, %v4124
        %v4153 = vadd.f32 %v3613, %v4131
        %v4154 = vadd.f32 %v3614, %v4138
        %v4155 = vadd.f32 %v3615, %v4145
        %v4156 = vmax.f32 %v4146, %v4150
        %v4157 = vmax.f32 %v4147, %v4151
        %v4158 = vmax.f32 %v4148, %v4152
        %v4159 = vmax.f32 %v4149, %v4153
        %v4160 = vmax.f32 %v4156, %v4154
        %v4161 = vmax.f32 %v4157, %v4155
        %v4162 = vmax.f32 %v4160, %v4161
        %v4163 = vmax.f32 %v4158, %v4159
        %v4164 = vmax.f32 %v4162, %v4163
        %v4165 = vsub.f32 %v4146, %v4164
        %v4166 = vsub.f32 %v4147, %v4164
        %v4167 = vsub.f32 %v4148, %v4164
        %v4168 = vsub.f32 %v4149, %v4164
        %v4169 = vsub.f32 %v4150, %v4164
        %v4170 = vsub.f32 %v4151, %v4164
        %v4171 = vsub.f32 %v4152, %v4164
        %v4172 = vsub.f32 %v4153, %v4164
        %v4173 = vsub.f32 %v4154, %v4164
        %v4174 = vsub.f32 %v4155, %v4164
        %v4175 = vmul.f32 %v4165, 1.442695
        %v4176 = vpow.pop %v4175
        %v4177 = vmul.f32 %v4166, 1.442695
        %v4178 = vpow.pop %v4177
        %v4179 = vmul.f32 %v4167, 1.442695
        %v4180 = vpow.pop %v4179
        %v4181 = vmul.f32 %v4168, 1.442695
        %v4182 = vpow.pop %v4181
        %v4183 = vmul.f32 %v4169, 1.442695
        %v4184 = vpow.pop %v4183
        %v4185 = vmul.f32 %v4170, 1.442695
        %v4186 = vpow.pop %v4185
        %v4187 = vmul.f32 %v4171, 1.442695
        %v4188 = vpow.pop %v4187
        %v4189 = vmul.f32 %v4172, 1.442695
        %v4190 = vpow.pop %v4189
        %v4191 = vmul.f32 %v4173, 1.442695
        %v4192 = vpow.pop %v4191
        %v4193 = vmul.f32 %v4174, 1.442695
        %v4194 = vpow.pop %v4193
        %v4205 = vrot.slane %v4178, 7
        %v4206 = vsel %vm1307, %v4205, %v4176
        %v4207 = vrot.slane %v4180, 6
        %v4208 = vsel %vm1310, %v4207, %v4206
        %v4209 = vrot.slane %v4182, 5
        %v4210 = vsel %vm1313, %v4209, %v4208
        %v4211 = vrot.slane %v4184, 4
        %v4212 = vsel %vm1316, %v4211, %v4210
        %v4213 = vrot.slane %v4186, 3
        %v4214 = vsel %vm1319, %v4213, %v4212
        %v4215 = vrot.slane %v4188, 2
        %v4216 = vsel %vm1322, %v4215, %v4214
        %v4217 = vrot.slane %v4190, 1
        %v4218 = vsel %vm1325, %v4217, %v4216
        %v4219 = vrot.slane %v4194, 7
        %v4220 = vsel %vm1307, %v4219, %v4192
        %v4223 = vsel %vm836, %v4220, 0.0
        %v4224 = vadd.f32 %v4218, %v4223
        %v4225 = vrot.slane %v4224, 4
        %v4226 = vadd.f32 %v4224, %v4225
        %v4227 = vrot.slane %v4226, 2
        %v4228 = vadd.f32 %v4226, %v4227
        %v4229 = vrot.slane %v4228, 1
        %v4230 = vadd.f32 %v4228, %v4229
        %v4231 = vlaneseq
        %v4232 = vshrl.u32 %v4231, 7
        %v4233 = vsub.s32 0, %v4232
        %v4234 = vrot.slane %v4230, %v4233
        %v4235 = vrcp.pop %v4234
        %v4236 = vmul.f32 %v4176, %v4235
        %v4237 = vmul.f32 %v4178, %v4235
        %v4238 = vmul.f32 %v4180, %v4235
        %v4239 = vmul.f32 %v4182, %v4235
        %v4240 = vmul.f32 %v4184, %v4235
        %v4241 = vmul.f32 %v4186, %v4235
        %v4242 = vmul.f32 %v4188, %v4235
        %v4243 = vmul.f32 %v4190, %v4235
        %v4244 = vmul.f32 %v4192, %v4235
        %v4245 = vmul.f32 %v4194, %v4235
        %v4246 = vlaneseq
        %v4247 = vshrl.u32 %v4246, 7
        %v4248 = vsub.s32 0, %v4247
        %v4249 = vrot.slane %v4236, %v4248
        %v4250 = vlaneseq
        %v4251 = vshrl.u32 %v4250, 7
        %v4252 = vsub.s32 0, %v4251
        %v4253 = vrot.slane %v4237, %v4252
        %v4254 = vlaneseq
        %v4255 = vshrl.u32 %v4254, 7
        %v4256 = vsub.s32 0, %v4255
        %v4257 = vrot.slane %v4238, %v4256
        %v4258 = vlaneseq
        %v4259 = vshrl.u32 %v4258, 7
        %v4260 = vsub.s32 0, %v4259
        %v4261 = vrot.slane %v4239, %v4260
        %v4262 = vlaneseq
        %v4263 = vshrl.u32 %v4262, 7
        %v4264 = vsub.s32 0, %v4263
        %v4265 = vrot.slane %v4240, %v4264
        %v4266 = vlaneseq
        %v4267 = vshrl.u32 %v4266, 7
        %v4268 = vsub.s32 0, %v4267
        %v4269 = vrot.slane %v4241, %v4268
        %v4270 = vlaneseq
        %v4271 = vshrl.u32 %v4270, 7
        %v4272 = vsub.s32 0, %v4271
        %v4273 = vrot.slane %v4242, %v4272
        %v4274 = vlaneseq
        %v4275 = vshrl.u32 %v4274, 7
        %v4276 = vsub.s32 0, %v4275
        %v4277 = vrot.slane %v4243, %v4276
        %v4278 = vlaneseq
        %v4279 = vshrl.u32 %v4278, 7
        %v4280 = vsub.s32 0, %v4279
        %v4281 = vrot.slane %v4244, %v4280
        %v4282 = vlaneseq
        %v4283 = vshrl.u32 %v4282, 7
        %v4284 = vsub.s32 0, %v4283
        %v4285 = vrot.slane %v4245, %v4284
        %v4286 = vmul.f32 %v4249, %v3186
        %v4287 = vmul.f32 %v4249, %v3187
        %v4288 = vmul.f32 %v4253, %v3188
        %v4289 = vmul.f32 %v4253, %v3189
        %v4290 = vmul.f32 %v4257, %v3190
        %v4291 = vmul.f32 %v4257, %v3191
        %v4292 = vmul.f32 %v4261, %v3192
        %v4293 = vmul.f32 %v4261, %v3193
        %v4294 = vmul.f32 %v4265, %v3194
        %v4295 = vmul.f32 %v4265, %v3195
        %v4296 = vmul.f32 %v4269, %v3196
        %v4297 = vmul.f32 %v4269, %v3197
        %v4298 = vmul.f32 %v4273, %v3198
        %v4299 = vmul.f32 %v4273, %v3199
        %v4300 = vmul.f32 %v4277, %v3200
        %v4301 = vmul.f32 %v4277, %v3201
        %v4302 = vmul.f32 %v4281, %v3202
        %v4303 = vmul.f32 %v4281, %v3203
        %v4304 = vmul.f32 %v4285, %v3204
        %v4305 = vmul.f32 %v4285, %v3205
        %4306 = vadd.xlane.f32.xlu0 %v4286
        %v4307 = vpop.xlane.xlu0 %4306
        %4308 = vadd.xlane.f32.xlu0 %v4287
        %v4309 = vpop.xlane.xlu0 %4308
        %4310 = vadd.xlane.f32.xlu0 %v4288
        %v4311 = vpop.xlane.xlu0 %4310
        %4312 = vadd.xlane.f32.xlu0 %v4289
        %v4313 = vpop.xlane.xlu0 %4312
        %4314 = vadd.xlane.f32.xlu0 %v4290
        %v4315 = vpop.xlane.xlu0 %4314
        %4316 = vadd.xlane.f32.xlu0 %v4291
        %v4317 = vpop.xlane.xlu0 %4316
        %4318 = vadd.xlane.f32.xlu0 %v4292
        %v4319 = vpop.xlane.xlu0 %4318
        %4320 = vadd.xlane.f32.xlu0 %v4293
        %v4321 = vpop.xlane.xlu0 %4320
        %4322 = vadd.xlane.f32.xlu0 %v4294
        %v4323 = vpop.xlane.xlu0 %4322
        %4324 = vadd.xlane.f32.xlu0 %v4295
        %v4325 = vpop.xlane.xlu0 %4324
        %4326 = vadd.xlane.f32.xlu0 %v4296
        %v4327 = vpop.xlane.xlu0 %4326
        %4328 = vadd.xlane.f32.xlu0 %v4297
        %v4329 = vpop.xlane.xlu0 %4328
        %4330 = vadd.xlane.f32.xlu0 %v4298
        %v4331 = vpop.xlane.xlu0 %4330
        %4332 = vadd.xlane.f32.xlu0 %v4299
        %v4333 = vpop.xlane.xlu0 %4332
        %4334 = vadd.xlane.f32.xlu0 %v4300
        %v4335 = vpop.xlane.xlu0 %4334
        %4336 = vadd.xlane.f32.xlu0 %v4301
        %v4337 = vpop.xlane.xlu0 %4336
        %4338 = vadd.xlane.f32.xlu0 %v4302
        %v4339 = vpop.xlane.xlu0 %4338
        %4340 = vadd.xlane.f32.xlu0 %v4303
        %v4341 = vpop.xlane.xlu0 %4340
        %4342 = vadd.xlane.f32.xlu0 %v4304
        %v4343 = vpop.xlane.xlu0 %4342
        %4344 = vadd.xlane.f32.xlu0 %v4305
        %v4345 = vpop.xlane.xlu0 %4344
        %v4346 = vadd.f32 %v4307, %v2002
        %v4347 = vadd.f32 %v4309, %v2006
        %v4348 = vadd.f32 %v4311, %v2013
        %v4349 = vadd.f32 %v4313, %v2017
        %v4350 = vadd.f32 %v4315, %v2024
        %v4351 = vadd.f32 %v4317, %v2028
        %v4352 = vadd.f32 %v4319, %v2035
        %v4353 = vadd.f32 %v4321, %v2039
        %v4354 = vadd.f32 %v4323, %v2046
        %v4355 = vadd.f32 %v4325, %v2050
        %v4356 = vadd.f32 %v4327, %v2057
        %v4357 = vadd.f32 %v4329, %v2061
        %v4358 = vadd.f32 %v4331, %v2068
        %v4359 = vadd.f32 %v4333, %v2072
        %v4360 = vadd.f32 %v4335, %v2079
        %v4361 = vadd.f32 %v4337, %v2083
        %v4362 = vadd.f32 %v4339, %v2090
        %v4363 = vadd.f32 %v4341, %v2094
        %v4364 = vadd.f32 %v4343, %v2101
        %v4365 = vadd.f32 %v4345, %v2105
        %v4366 = vmul.f32 %v4346, %v4346
        %v4367 = vmul.f32 %v4347, %v4347
        %v4368 = vmul.f32 %v4348, %v4348
        %v4369 = vmul.f32 %v4349, %v4349
        %v4370 = vmul.f32 %v4350, %v4350
        %v4371 = vmul.f32 %v4351, %v4351
        %v4372 = vmul.f32 %v4352, %v4352
        %v4373 = vmul.f32 %v4353, %v4353
        %v4374 = vmul.f32 %v4354, %v4354
        %v4375 = vmul.f32 %v4355, %v4355
        %v4376 = vmul.f32 %v4356, %v4356
        %v4377 = vmul.f32 %v4357, %v4357
        %v4378 = vmul.f32 %v4358, %v4358
        %v4379 = vmul.f32 %v4359, %v4359
        %v4380 = vmul.f32 %v4360, %v4360
        %v4381 = vmul.f32 %v4361, %v4361
        %v4382 = vmul.f32 %v4362, %v4362
        %v4383 = vmul.f32 %v4363, %v4363
        %v4384 = vmul.f32 %v4364, %v4364
        %v4385 = vmul.f32 %v4365, %v4365
        %4406 = vset.pattern.permute.xlu0 0
        %4407 = vperm.xlu0 %4406, %v4366
        %v4408 = vpop.permute.xlu0 %4407
        %4409 = vset.pattern.permute.xlu0 0
        %4410 = vperm.xlu0 %4409, %v4367
        %v4411 = vpop.permute.xlu0 %4410
        %4412 = vset.pattern.permute.xlu0 0
        %4413 = vperm.xlu0 %4412, %v4368
        %v4414 = vpop.permute.xlu0 %4413
        %4415 = vset.pattern.permute.xlu0 0
        %4416 = vperm.xlu0 %4415, %v4369
        %v4417 = vpop.permute.xlu0 %4416
        %4418 = vset.pattern.permute.xlu0 0
        %4419 = vperm.xlu0 %4418, %v4370
        %v4420 = vpop.permute.xlu0 %4419
        %4421 = vset.pattern.permute.xlu0 0
        %4422 = vperm.xlu0 %4421, %v4371
        %v4423 = vpop.permute.xlu0 %4422
        %4424 = vset.pattern.permute.xlu0 0
        %4425 = vperm.xlu0 %4424, %v4372
        %v4426 = vpop.permute.xlu0 %4425
        %4427 = vset.pattern.permute.xlu0 0
        %4428 = vperm.xlu0 %4427, %v4373
        %v4429 = vpop.permute.xlu0 %4428
        %4430 = vset.pattern.permute.xlu0 0
        %4431 = vperm.xlu0 %4430, %v4374
        %v4432 = vpop.permute.xlu0 %4431
        %4433 = vset.pattern.permute.xlu0 0
        %4434 = vperm.xlu0 %4433, %v4375
        %v4435 = vpop.permute.xlu0 %4434
        %4436 = vset.pattern.permute.xlu0 0
        %4437 = vperm.xlu0 %4436, %v4376
        %v4438 = vpop.permute.xlu0 %4437
        %4439 = vset.pattern.permute.xlu0 0
        %4440 = vperm.xlu0 %4439, %v4377
        %v4441 = vpop.permute.xlu0 %4440
        %4442 = vset.pattern.permute.xlu0 0
        %4443 = vperm.xlu0 %4442, %v4378
        %v4444 = vpop.permute.xlu0 %4443
        %4445 = vset.pattern.permute.xlu0 0
        %4446 = vperm.xlu0 %4445, %v4379
        %v4447 = vpop.permute.xlu0 %4446
        %4448 = vset.pattern.permute.xlu0 0
        %4449 = vperm.xlu0 %4448, %v4380
        %v4450 = vpop.permute.xlu0 %4449
        %4451 = vset.pattern.permute.xlu0 0
        %4452 = vperm.xlu0 %4451, %v4381
        %v4453 = vpop.permute.xlu0 %4452
        %4454 = vset.pattern.permute.xlu0 0
        %4455 = vperm.xlu0 %4454, %v4382
        %v4456 = vpop.permute.xlu0 %4455
        %4457 = vset.pattern.permute.xlu0 0
        %4458 = vperm.xlu0 %4457, %v4383
        %v4459 = vpop.permute.xlu0 %4458
        %4460 = vset.pattern.permute.xlu0 0
        %4461 = vperm.xlu0 %4460, %v4384
        %v4462 = vpop.permute.xlu0 %4461
        %4463 = vset.pattern.permute.xlu0 0
        %4464 = vperm.xlu0 %4463, %v4385
        %v4465 = vpop.permute.xlu0 %4464
        %v4466 = vlaneseq
        %v4467 = vshrl.u32 %v4466, 7
        %v4468 = vsub.s32 %v2247, %v4467
        %v4469 = vrot.slane %v4408, %v4468
        %v4470 = vlaneseq
        %v4471 = vshrl.u32 %v4470, 7
        %v4472 = vsub.s32 %v2252, %v4471
        %v4473 = vrot.slane %v4411, %v4472
        %v4474 = vsel %vm2257, %v4473, %v4469
        %v4475 = vlaneseq
        %v4476 = vshrl.u32 %v4475, 7
        %v4477 = vsub.s32 %v2247, %v4476
        %v4478 = vrot.slane %v4414, %v4477
        %v4479 = vlaneseq
        %v4480 = vshrl.u32 %v4479, 7
        %v4481 = vsub.s32 %v2252, %v4480
        %v4482 = vrot.slane %v4417, %v4481
        %v4483 = vsel %vm2257, %v4482, %v4478
        %v4484 = vlaneseq
        %v4485 = vshrl.u32 %v4484, 7
        %v4486 = vsub.s32 %v2247, %v4485
        %v4487 = vrot.slane %v4420, %v4486
        %v4488 = vlaneseq
        %v4489 = vshrl.u32 %v4488, 7
        %v4490 = vsub.s32 %v2252, %v4489
        %v4491 = vrot.slane %v4423, %v4490
        %v4492 = vsel %vm2257, %v4491, %v4487
        %v4493 = vlaneseq
        %v4494 = vshrl.u32 %v4493, 7
        %v4495 = vsub.s32 %v2247, %v4494
        %v4496 = vrot.slane %v4426, %v4495
        %v4497 = vlaneseq
        %v4498 = vshrl.u32 %v4497, 7
        %v4499 = vsub.s32 %v2252, %v4498
        %v4500 = vrot.slane %v4429, %v4499
        %v4501 = vsel %vm2257, %v4500, %v4496
        %v4502 = vlaneseq
        %v4503 = vshrl.u32 %v4502, 7
        %v4504 = vsub.s32 %v2247, %v4503
        %v4505 = vrot.slane %v4432, %v4504
        %v4506 = vlaneseq
        %v4507 = vshrl.u32 %v4506, 7
        %v4508 = vsub.s32 %v2252, %v4507
        %v4509 = vrot.slane %v4435, %v4508
        %v4510 = vsel %vm2257, %v4509, %v4505
        %v4511 = vlaneseq
        %v4512 = vshrl.u32 %v4511, 7
        %v4513 = vsub.s32 %v2247, %v4512
        %v4514 = vrot.slane %v4438, %v4513
        %v4515 = vlaneseq
        %v4516 = vshrl.u32 %v4515, 7
        %v4517 = vsub.s32 %v2252, %v4516
        %v4518 = vrot.slane %v4441, %v4517
        %v4519 = vsel %vm2257, %v4518, %v4514
        %v4520 = vlaneseq
        %v4521 = vshrl.u32 %v4520, 7
        %v4522 = vsub.s32 %v2247, %v4521
        %v4523 = vrot.slane %v4444, %v4522
        %v4524 = vlaneseq
        %v4525 = vshrl.u32 %v4524, 7
        %v4526 = vsub.s32 %v2252, %v4525
        %v4527 = vrot.slane %v4447, %v4526
        %v4528 = vsel %vm2257, %v4527, %v4523
        %v4529 = vlaneseq
        %v4530 = vshrl.u32 %v4529, 7
        %v4531 = vsub.s32 %v2247, %v4530
        %v4532 = vrot.slane %v4450, %v4531
        %v4533 = vlaneseq
        %v4534 = vshrl.u32 %v4533, 7
        %v4535 = vsub.s32 %v2252, %v4534
        %v4536 = vrot.slane %v4453, %v4535
        %v4537 = vsel %vm2257, %v4536, %v4532
        %v4538 = vlaneseq
        %v4539 = vshrl.u32 %v4538, 7
        %v4540 = vsub.s32 %v2247, %v4539
        %v4541 = vrot.slane %v4456, %v4540
        %v4542 = vlaneseq
        %v4543 = vshrl.u32 %v4542, 7
        %v4544 = vsub.s32 %v2252, %v4543
        %v4545 = vrot.slane %v4459, %v4544
        %v4546 = vsel %vm2257, %v4545, %v4541
        %v4547 = vlaneseq
        %v4548 = vshrl.u32 %v4547, 7
        %v4549 = vsub.s32 %v2247, %v4548
        %v4550 = vrot.slane %v4462, %v4549
        %v4551 = vlaneseq
        %v4552 = vshrl.u32 %v4551, 7
        %v4553 = vsub.s32 %v2252, %v4552
        %v4554 = vrot.slane %v4465, %v4553
        %v4555 = vsel %vm2257, %v4554, %v4550
        %v4556 = vsel %vm1307, %v4483, %v4474
        %v4557 = vsel %vm1310, %v4492, %v4556
        %v4558 = vsel %vm1313, %v4501, %v4557
        %v4559 = vsel %vm1316, %v4510, %v4558
        %v4560 = vsel %vm1319, %v4519, %v4559
        %v4561 = vsel %vm1322, %v4528, %v4560
        %v4562 = vsel %vm1325, %v4537, %v4561
        %v4563 = vsel %vm1307, %v4555, %v4546
        %v4566 = vsel %vm2350, %v4562, 0.0
        %4567 = vadd.xlane.f32.xlu0 %v4566
        %v4568 = vpop.xlane.xlu0 %4567
        %v4569 = vsel %vm2354, %v4563, 0.0
        %4570 = vadd.xlane.f32.xlu0 %v4569
        %v4571 = vpop.xlane.xlu0 %4570
        %v4574 = vlaneseq
        %v4575 = vshrl.u32 %v4574, 7
        %v4576 = vsub.s32 0, %v4575
        %v4577 = vrot.slane %v4568, %v4576
        %v4578 = vlaneseq
        %v4579 = vshrl.u32 %v4578, 7
        %v4580 = vsub.s32 1, %v4579
        %v4581 = vrot.slane %v4568, %v4580
        %v4582 = vlaneseq
        %v4583 = vshrl.u32 %v4582, 7
        %v4584 = vsub.s32 2, %v4583
        %v4585 = vrot.slane %v4568, %v4584
        %v4586 = vlaneseq
        %v4587 = vshrl.u32 %v4586, 7
        %v4588 = vsub.s32 3, %v4587
        %v4589 = vrot.slane %v4568, %v4588
        %v4590 = vlaneseq
        %v4591 = vshrl.u32 %v4590, 7
        %v4592 = vsub.s32 4, %v4591
        %v4593 = vrot.slane %v4568, %v4592
        %v4594 = vlaneseq
        %v4595 = vshrl.u32 %v4594, 7
        %v4596 = vsub.s32 5, %v4595
        %v4597 = vrot.slane %v4568, %v4596
        %v4598 = vlaneseq
        %v4599 = vshrl.u32 %v4598, 7
        %v4600 = vsub.s32 6, %v4599
        %v4601 = vrot.slane %v4568, %v4600
        %v4602 = vlaneseq
        %v4603 = vshrl.u32 %v4602, 7
        %v4604 = vsub.s32 7, %v4603
        %v4605 = vrot.slane %v4568, %v4604
        %v4606 = vlaneseq
        %v4607 = vshrl.u32 %v4606, 7
        %v4608 = vsub.s32 0, %v4607
        %v4609 = vrot.slane %v4571, %v4608
        %v4610 = vlaneseq
        %v4611 = vshrl.u32 %v4610, 7
        %v4612 = vsub.s32 1, %v4611
        %v4613 = vrot.slane %v4571, %v4612
        %v4624 = vmul.f32 %v4346, %v4577
        %v4625 = vmul.f32 %v4347, %v4577
        %v4626 = vmul.f32 %v4348, %v4581
        %v4627 = vmul.f32 %v4349, %v4581
        %v4628 = vmul.f32 %v4350, %v4585
        %v4629 = vmul.f32 %v4351, %v4585
        %v4630 = vmul.f32 %v4352, %v4589
        %v4631 = vmul.f32 %v4353, %v4589
        %v4632 = vmul.f32 %v4354, %v4593
        %v4633 = vmul.f32 %v4355, %v4593
        %v4634 = vmul.f32 %v4356, %v4597
        %v4635 = vmul.f32 %v4357, %v4597
        %v4636 = vmul.f32 %v4358, %v4601
        %v4637 = vmul.f32 %v4359, %v4601
        %v4638 = vmul.f32 %v4360, %v4605
        %v4639 = vmul.f32 %v4361, %v4605
        %v4640 = vmul.f32 %v4362, %v4609
        %v4641 = vmul.f32 %v4363, %v4609
        %v4642 = vmul.f32 %v4364, %v4613
        %v4643 = vmul.f32 %v4365, %v4613
        %v4644 = vadd.f32 %v4568, 1.0
        %v4645 = vadd.f32 %v4571, 1.0
        %v4646 = vrsqrt.pop %v4568
        %v4647 = vmul.f32 %v4568, %v4646
        %vm4648 = vcmp.eq.f32.partialorder %v4568, inf
        %v4649 = vsel %vm4648, %v4568, %v4647
        %vm4650 = vcmp.eq.f32.partialorder %v4568, 0.0
        %v4651 = vand.u32 %v4568, 2147483648
        %v4652 = vsel %vm4650, %v4651, %v4649
        %v4653 = vrsqrt.pop %v4571
        %v4654 = vmul.f32 %v4571, %v4653
        %vm4655 = vcmp.eq.f32.partialorder %v4571, inf
        %v4656 = vsel %vm4655, %v4571, %v4654
        %vm4657 = vcmp.eq.f32.partialorder %v4571, 0.0
        %v4658 = vand.u32 %v4571, 2147483648
        %v4659 = vsel %vm4657, %v4658, %v4656
        %v4660 = vmul.f32 %v4644, %v4652
        %v4661 = vmul.f32 %v4645, %v4659
        %v4664 = vlaneseq
        %v4665 = vshrl.u32 %v4664, 7
        %v4666 = vsub.s32 0, %v4665
        %v4667 = vrot.slane %v4660, %v4666
        %v4668 = vlaneseq
        %v4669 = vshrl.u32 %v4668, 7
        %v4670 = vsub.s32 1, %v4669
        %v4671 = vrot.slane %v4660, %v4670
        %v4672 = vlaneseq
        %v4673 = vshrl.u32 %v4672, 7
        %v4674 = vsub.s32 2, %v4673
        %v4675 = vrot.slane %v4660, %v4674
        %v4676 = vlaneseq
        %v4677 = vshrl.u32 %v4676, 7
        %v4678 = vsub.s32 3, %v4677
        %v4679 = vrot.slane %v4660, %v4678
        %v4680 = vlaneseq
        %v4681 = vshrl.u32 %v4680, 7
        %v4682 = vsub.s32 4, %v4681
        %v4683 = vrot.slane %v4660, %v4682
        %v4684 = vlaneseq
        %v4685 = vshrl.u32 %v4684, 7
        %v4686 = vsub.s32 5, %v4685
        %v4687 = vrot.slane %v4660, %v4686
        %v4688 = vlaneseq
        %v4689 = vshrl.u32 %v4688, 7
        %v4690 = vsub.s32 6, %v4689
        %v4691 = vrot.slane %v4660, %v4690
        %v4692 = vlaneseq
        %v4693 = vshrl.u32 %v4692, 7
        %v4694 = vsub.s32 7, %v4693
        %v4695 = vrot.slane %v4660, %v4694
        %v4696 = vlaneseq
        %v4697 = vshrl.u32 %v4696, 7
        %v4698 = vsub.s32 0, %v4697
        %v4699 = vrot.slane %v4661, %v4698
        %v4700 = vlaneseq
        %v4701 = vshrl.u32 %v4700, 7
        %v4702 = vsub.s32 1, %v4701
        %v4703 = vrot.slane %v4661, %v4702
        %v4714 = vrcp.pop %v4667
        %v4715 = vmul.f32 %v4624, %v4714
        %v4716 = vmul.f32 %v4625, %v4714
        %v4717 = vrcp.pop %v4671
        %v4718 = vmul.f32 %v4626, %v4717
        %v4719 = vmul.f32 %v4627, %v4717
        %v4720 = vrcp.pop %v4675
        %v4721 = vmul.f32 %v4628, %v4720
        %v4722 = vmul.f32 %v4629, %v4720
        %v4723 = vrcp.pop %v4679
        %v4724 = vmul.f32 %v4630, %v4723
        %v4725 = vmul.f32 %v4631, %v4723
        %v4726 = vrcp.pop %v4683
        %v4727 = vmul.f32 %v4632, %v4726
        %v4728 = vmul.f32 %v4633, %v4726
        %v4729 = vrcp.pop %v4687
        %v4730 = vmul.f32 %v4634, %v4729
        %v4731 = vmul.f32 %v4635, %v4729
        %v4732 = vrcp.pop %v4691
        %v4733 = vmul.f32 %v4636, %v4732
        %v4734 = vmul.f32 %v4637, %v4732
        %v4735 = vrcp.pop %v4695
        %v4736 = vmul.f32 %v4638, %v4735
        %v4737 = vmul.f32 %v4639, %v4735
        %v4738 = vrcp.pop %v4699
        %v4739 = vmul.f32 %v4640, %v4738
        %v4740 = vmul.f32 %v4641, %v4738
        %v4741 = vrcp.pop %v4703
        %v4742 = vmul.f32 %v4642, %v4741
        %v4743 = vmul.f32 %v4643, %v4741
        %4764 = vset.pattern.permute.xlu0 0
        %4765 = vperm.xlu0 %4764, %v4715
        %v4766 = vpop.permute.xlu0 %4765
        %4767 = vset.pattern.permute.xlu0 0
        %4768 = vperm.xlu0 %4767, %v4716
        %v4769 = vpop.permute.xlu0 %4768
        %4770 = vset.pattern.permute.xlu0 0
        %4771 = vperm.xlu0 %4770, %v4718
        %v4772 = vpop.permute.xlu0 %4771
        %4773 = vset.pattern.permute.xlu0 0
        %4774 = vperm.xlu0 %4773, %v4719
        %v4775 = vpop.permute.xlu0 %4774
        %4776 = vset.pattern.permute.xlu0 0
        %4777 = vperm.xlu0 %4776, %v4721
        %v4778 = vpop.permute.xlu0 %4777
        %4779 = vset.pattern.permute.xlu0 0
        %4780 = vperm.xlu0 %4779, %v4722
        %v4781 = vpop.permute.xlu0 %4780
        %4782 = vset.pattern.permute.xlu0 0
        %4783 = vperm.xlu0 %4782, %v4724
        %v4784 = vpop.permute.xlu0 %4783
        %4785 = vset.pattern.permute.xlu0 0
        %4786 = vperm.xlu0 %4785, %v4725
        %v4787 = vpop.permute.xlu0 %4786
        %4788 = vset.pattern.permute.xlu0 0
        %4789 = vperm.xlu0 %4788, %v4727
        %v4790 = vpop.permute.xlu0 %4789
        %4791 = vset.pattern.permute.xlu0 0
        %4792 = vperm.xlu0 %4791, %v4728
        %v4793 = vpop.permute.xlu0 %4792
        %4794 = vset.pattern.permute.xlu0 0
        %4795 = vperm.xlu0 %4794, %v4730
        %v4796 = vpop.permute.xlu0 %4795
        %4797 = vset.pattern.permute.xlu0 0
        %4798 = vperm.xlu0 %4797, %v4731
        %v4799 = vpop.permute.xlu0 %4798
        %4800 = vset.pattern.permute.xlu0 0
        %4801 = vperm.xlu0 %4800, %v4733
        %v4802 = vpop.permute.xlu0 %4801
        %4803 = vset.pattern.permute.xlu0 0
        %4804 = vperm.xlu0 %4803, %v4734
        %v4805 = vpop.permute.xlu0 %4804
        %4806 = vset.pattern.permute.xlu0 0
        %4807 = vperm.xlu0 %4806, %v4736
        %v4808 = vpop.permute.xlu0 %4807
        %4809 = vset.pattern.permute.xlu0 0
        %4810 = vperm.xlu0 %4809, %v4737
        %v4811 = vpop.permute.xlu0 %4810
        %4812 = vset.pattern.permute.xlu0 0
        %4813 = vperm.xlu0 %4812, %v4739
        %v4814 = vpop.permute.xlu0 %4813
        %4815 = vset.pattern.permute.xlu0 0
        %4816 = vperm.xlu0 %4815, %v4740
        %v4817 = vpop.permute.xlu0 %4816
        %4818 = vset.pattern.permute.xlu0 0
        %4819 = vperm.xlu0 %4818, %v4742
        %v4820 = vpop.permute.xlu0 %4819
        %4821 = vset.pattern.permute.xlu0 0
        %4822 = vperm.xlu0 %4821, %v4743
        %v4823 = vpop.permute.xlu0 %4822
        %v4824 = vlaneseq
        %v4825 = vshrl.u32 %v4824, 7
        %v4826 = vsub.s32 %v2247, %v4825
        %v4827 = vrot.slane %v4766, %v4826
        %v4828 = vlaneseq
        %v4829 = vshrl.u32 %v4828, 7
        %v4830 = vsub.s32 %v2252, %v4829
        %v4831 = vrot.slane %v4769, %v4830
        %v4832 = vsel %vm2257, %v4831, %v4827
        %v4833 = vlaneseq
        %v4834 = vshrl.u32 %v4833, 7
        %v4835 = vsub.s32 %v2247, %v4834
        %v4836 = vrot.slane %v4772, %v4835
        %v4837 = vlaneseq
        %v4838 = vshrl.u32 %v4837, 7
        %v4839 = vsub.s32 %v2252, %v4838
        %v4840 = vrot.slane %v4775, %v4839
        %v4841 = vsel %vm2257, %v4840, %v4836
        %v4842 = vlaneseq
        %v4843 = vshrl.u32 %v4842, 7
        %v4844 = vsub.s32 %v2247, %v4843
        %v4845 = vrot.slane %v4778, %v4844
        %v4846 = vlaneseq
        %v4847 = vshrl.u32 %v4846, 7
        %v4848 = vsub.s32 %v2252, %v4847
        %v4849 = vrot.slane %v4781, %v4848
        %v4850 = vsel %vm2257, %v4849, %v4845
        %v4851 = vlaneseq
        %v4852 = vshrl.u32 %v4851, 7
        %v4853 = vsub.s32 %v2247, %v4852
        %v4854 = vrot.slane %v4784, %v4853
        %v4855 = vlaneseq
        %v4856 = vshrl.u32 %v4855, 7
        %v4857 = vsub.s32 %v2252, %v4856
        %v4858 = vrot.slane %v4787, %v4857
        %v4859 = vsel %vm2257, %v4858, %v4854
        %v4860 = vlaneseq
        %v4861 = vshrl.u32 %v4860, 7
        %v4862 = vsub.s32 %v2247, %v4861
        %v4863 = vrot.slane %v4790, %v4862
        %v4864 = vlaneseq
        %v4865 = vshrl.u32 %v4864, 7
        %v4866 = vsub.s32 %v2252, %v4865
        %v4867 = vrot.slane %v4793, %v4866
        %v4868 = vsel %vm2257, %v4867, %v4863
        %v4869 = vlaneseq
        %v4870 = vshrl.u32 %v4869, 7
        %v4871 = vsub.s32 %v2247, %v4870
        %v4872 = vrot.slane %v4796, %v4871
        %v4873 = vlaneseq
        %v4874 = vshrl.u32 %v4873, 7
        %v4875 = vsub.s32 %v2252, %v4874
        %v4876 = vrot.slane %v4799, %v4875
        %v4877 = vsel %vm2257, %v4876, %v4872
        %v4878 = vlaneseq
        %v4879 = vshrl.u32 %v4878, 7
        %v4880 = vsub.s32 %v2247, %v4879
        %v4881 = vrot.slane %v4802, %v4880
        %v4882 = vlaneseq
        %v4883 = vshrl.u32 %v4882, 7
        %v4884 = vsub.s32 %v2252, %v4883
        %v4885 = vrot.slane %v4805, %v4884
        %v4886 = vsel %vm2257, %v4885, %v4881
        %v4887 = vlaneseq
        %v4888 = vshrl.u32 %v4887, 7
        %v4889 = vsub.s32 %v2247, %v4888
        %v4890 = vrot.slane %v4808, %v4889
        %v4891 = vlaneseq
        %v4892 = vshrl.u32 %v4891, 7
        %v4893 = vsub.s32 %v2252, %v4892
        %v4894 = vrot.slane %v4811, %v4893
        %v4895 = vsel %vm2257, %v4894, %v4890
        %v4896 = vlaneseq
        %v4897 = vshrl.u32 %v4896, 7
        %v4898 = vsub.s32 %v2247, %v4897
        %v4899 = vrot.slane %v4814, %v4898
        %v4900 = vlaneseq
        %v4901 = vshrl.u32 %v4900, 7
        %v4902 = vsub.s32 %v2252, %v4901
        %v4903 = vrot.slane %v4817, %v4902
        %v4904 = vsel %vm2257, %v4903, %v4899
        %v4905 = vlaneseq
        %v4906 = vshrl.u32 %v4905, 7
        %v4907 = vsub.s32 %v2247, %v4906
        %v4908 = vrot.slane %v4820, %v4907
        %v4909 = vlaneseq
        %v4910 = vshrl.u32 %v4909, 7
        %v4911 = vsub.s32 %v2252, %v4910
        %v4912 = vrot.slane %v4823, %v4911
        %v4913 = vsel %vm2257, %v4912, %v4908
        %v4914 = vsel %vm1307, %v4841, %v4832
        %v4915 = vsel %vm1310, %v4850, %v4914
        %v4916 = vsel %vm1313, %v4859, %v4915
        %v4917 = vsel %vm1316, %v4868, %v4916
        %v4918 = vsel %vm1319, %v4877, %v4917
        %v4919 = vsel %vm1322, %v4886, %v4918
        %v4920 = vsel %vm1325, %v4895, %v4919
        %v4921 = vsel %vm1307, %v4913, %v4904
        %s4924 = scalar_lea.vmem %s222, 16
        %4925 = vst.msk [vmem:[%s4924] sm:$0xff] %vm2350, %v4920
        %4926 = vst.msk [vmem:[%s4924 + $0x8] sm:$0x3] %vm2354, %v4921
        %s4927 = smul.u32 2, %s18
        %p4928 = scmp.lt.s32.totalorder %s4927, 3
        %s4929 = scalar_select %p4928, %s4927, 3
        %s4930 = smul.addr %s4929, 2
        %s4931 = smul.addr %s4930, 8
        %s4932 = scalar_lea.vmem %s3, %s4931
        // Predicated region
        $region45: #{tpu_custom_call.1} parent=31 // pred_check
          %p4933 = pneg %p104
        $region46: #{tpu_custom_call.1} parent=31 // pred_check_branch
          %4935 = sbr.rel (%p4933) target = $region48
        $region47: #{tpu_custom_call.1} parent=31 // pred_region
          %s4936 = smul.u32 2, %s18
        $region48: #{tpu_custom_call.1} parent=31 // pred_fallthru
          _
      $region32: #{tpu_custom_call.1} parent=5 // pred_fallthru
        _
      %p4937 = scmp.le.s32.totalorder 2, %s13
      // Predicated region
      $region49: #{tpu_custom_call.1} parent=5 // pred_check
        %p4938 = pneg %p4937
      $region50: #{tpu_custom_call.1} parent=5 // pred_check_branch
        %4940 = sbr.rel (%p4938) target = $region52
      $region51: #{tpu_custom_call.1} parent=5 // pred_region
        %s4941 = ssub.s32 %s13, 2
        // Predicated region
        $region53: #{tpu_custom_call.1} parent=51 // pred_check
          %p4942 = pneg %p110
        $region54: #{tpu_custom_call.1} parent=51 // pred_check_branch
          %4944 = sbr.rel (%p4942) target = $region56
        $region55: #{tpu_custom_call.1} parent=51 // pred_region
          %s4945 = smul.u32 2, %s19
          %p4946 = scmp.lt.s32.totalorder %s4945, 3
          %s4947 = scalar_select %p4946, %s4945, 3
          %s4948 = smul.addr %s4947, 2
          %s4949 = smul.addr %s4948, 8
          %s4950 = scalar_lea.vmem %s3, %s4949
        $region56: #{tpu_custom_call.1} parent=51 // pred_fallthru
          _
      $region52: #{tpu_custom_call.1} parent=5 // pred_fallthru
        _
    $region6: #{tpu_custom_call.1} parent=1 // loop_footer
      %s17 = sadd.s32 1, %s13
    $region7: #{tpu_custom_call.1} parent=1 // loop_footer_branch
      %12 = sbr.rel target = $region3
    $region8: #{tpu_custom_call.1} parent=1 // loop_exit
      _
    %4951 = vsyncpa [#allocation3], 1
    %s4952 = scalar_lea.sflag [#allocation3], 1
    %4953 = vsyncpa %s4952, 1
    %4954 = vsyncpa [#allocation5], 1

</llo_original>
